<compile_context>
chip_gen: v6e
topology: v6e:2x2x1
jax: 0.10.0
libtpu: 0.0.40
codegen_flags: <defaults>
</compile_context>

<pallas_src>
import functools

import numpy as np
import jax
import jax.numpy as jnp
from jax.experimental import pallas as pl
from jax.experimental.pallas import tpu as pltpu


def _round_up(x, m):
    return (x + m - 1) // m * m


# ---------------------------------------------------------------------------
# Fused encoder kernel: conv1+ReLU -> conv2+ReLU -> conv3, all in VMEM.
# ---------------------------------------------------------------------------
def _encoder_kernel(xc1_ref, w1_ref, b1_ref, p2_ref, w2_ref, b2_ref,
                    w3_ref, b3_ref, out_ref, hb_ref, a2s_ref, a2f_ref,
                    *, batch):
    f32 = jnp.float32
    bf16 = jnp.bfloat16

    # ---- conv1 + ReLU:  (B*196, 9) @ (9, 16)  ------------------------------
    a1 = jnp.dot(xc1_ref[...], w1_ref[...], preferred_element_type=f32)
    a1 = jnp.maximum(a1 + b1_ref[...], 0.0)            # (B*196, 16), rows (b,y,x)

    # ---- conv2 stage 1: hoisted tap-weight matmul (bf16 MXU path) ----------
    # hb[b*196+yx, k*32+co] = sum_ci a1[b,yx,ci] * w2[k,ci,co]
    hb_ref[...] = jnp.dot(a1.astype(bf16), w2_ref[...],
                          preferred_element_type=f32).astype(bf16)

    # ---- conv2 stage 2: 9 bf16 selection matmuls (gather + zero padding) ---
    # p2_ref[k] rows are ordered (s=oy*7+ox, b); rows >= 49*batch are all-zero
    # padding and never read below.
    acc2 = None
    for k in range(9):
        ck = jnp.dot(p2_ref[k], hb_ref[:, k * 32:(k + 1) * 32],
                     preferred_element_type=f32)        # (m2p, 32)
        acc2 = ck if acc2 is None else acc2 + ck
    a2 = jnp.maximum(acc2 + b2_ref[...], 0.0)           # (m2p, 32) f32
    a2s_ref[...] = a2

    # ---- relayout (s,b)-rows x ci-cols -> (b, s*32+ci) ---------------------
    # 49 independent static column-block copies; no MXU, no serial chain.
    for s in range(49):
        a2f_ref[:, s * 32:(s + 1) * 32] = a2s_ref[s * batch:(s + 1) * batch, :]

    # ---- conv3: one (B, 1568) @ (1568, 64) bf16 matmul ---------------------
    out_ref[...] = (jnp.dot(a2f_ref[...].astype(bf16), w3_ref[...],
                            preferred_element_type=f32) + b3_ref[...])


# ---------------------------------------------------------------------------
# Host-side (cheap) prep: conv1 im2col, selection tensor, weight reshapes.
# ---------------------------------------------------------------------------
def _im2col_conv1(x_nhwc):
    """conv1 im2col (3x3, stride 2, pad 1, Cin=1).

    Returns (B*14*14, 9) f32 with rows ordered (b, oy, ox), cols (ky, kx).
    """
    B = x_nhwc.shape[0]
    xp = jnp.pad(x_nhwc, ((0, 0), (1, 1), (1, 1), (0, 0)))      # (B, 30, 30, 1)
    cols = []
    for ky in range(3):
        for kx in range(3):
            cols.append(xp[:, ky:ky + 28:2, kx:kx + 28:2, 0])   # (B, 14, 14)
    p = jnp.stack(cols, axis=-1)                                # (B, 14, 14, 9)
    return p.reshape(B * 14 * 14, 9)


def _build_conv2_selection(batch, m2p):
    """0/1 tensor gathering conv2 im2col rows from the conv1 activation.

    Shape (9, m2p, batch*196); p2[k, s*batch + b, b*196 + y*14 + x] = 1 with
    k = ky*3+kx, s = oy*7+ox, (y,x) the conv1 position feeding conv2 output
    (oy,ox) through tap (ky,kx).  All-zero rows implement both the spatial
    zero padding and the sublane-alignment pad.  Exact in bf16 (values 0/1).
    """
    m1 = batch * 196
    p2 = np.zeros((9, m2p, m1), np.float32)
    for ky in range(3):
        for kx in range(3):
            k = ky * 3 + kx
            for oy in range(7):
                for ox in range(7):
                    s = oy * 7 + ox
                    y = 2 * oy - 1 + ky
                    x = 2 * ox - 1 + kx
                    if 0 <= y < 14 and 0 <= x < 14:
                        for b in range(batch):
                            p2[k, s * batch + b, b * 196 + y * 14 + x] = 1.0
    return jnp.asarray(p2, dtype=jnp.bfloat16)


def _full_spec(shape):
    ndim = len(shape)
    return pl.BlockSpec(shape, lambda i: (0,) * ndim,
                        memory_space=pltpu.MemorySpace.VMEM)


def encoder_forward(x_nchw, params):
    (w1, b1), (w2, b2), (w3, b3) = params
    B = x_nchw.shape[0]
    m1 = B * 196
    m2p = _round_up(B * 49, 16)          # sublane/bf16-tile aligned row count

    x_nhwc = jnp.transpose(x_nchw, (0, 2, 3, 1))                # NCHW -> NHWC
    xc1 = _im2col_conv1(x_nhwc)                                 # (B*196, 9) f32
    p2 = _build_conv2_selection(B, m2p)                         # (9, m2p, m1) bf16

    # Weight layouts matching the kernel's column/row orderings.
    # w1m: (ky*3+kx, co);  w2m: (ci, k*32+co);  w3m: (s*32+ci, co)
    w1m = jnp.transpose(w1, (2, 3, 1, 0)).reshape(9, 16)                        # f32
    w2m = jnp.transpose(w2, (1, 2, 3, 0)).reshape(16, 9 * 32).astype(jnp.bfloat16)
    w3m = jnp.transpose(w3, (2, 3, 1, 0)).reshape(49 * 32, 64).astype(jnp.bfloat16)
    b1r = b1.reshape(1, 16)
    b2r = b2.reshape(1, 32)
    b3r = b3.reshape(1, 64)

    flops = 2 * (m1 * 9 * 16                 # conv1
                 + m1 * 16 * 288             # conv2 hoisted tap-weight matmul
                 + 9 * m2p * m1 * 32         # conv2 selection matmuls
                 + B * 1568 * 64)            # conv3 single matmul
    bytes_accessed = (xc1.size * 4 + w1m.size * 4 + b1r.size * 4
                      + p2.size * 2 + w2m.size * 2 + b2r.size * 4
                      + w3m.size * 2 + b3r.size * 4 + B * 64 * 4)

    out = pl.pallas_call(
        functools.partial(_encoder_kernel, batch=B),
        out_shape=jax.ShapeDtypeStruct((B, 64), jnp.float32),
        grid=(1,),
        in_specs=[
            _full_spec(xc1.shape),       # im2col'd input (f32)
            _full_spec((9, 16)),         # w1 (f32)
            _full_spec((1, 16)),         # b1
            _full_spec(p2.shape),        # conv2 selection (bf16, 0/1)
            _full_spec((16, 288)),       # w2 taps stacked along columns (bf16)
            _full_spec((1, 32)),         # b2
            _full_spec((1568, 64)),      # w3 taps stacked along rows (bf16)
            _full_spec((1, 64)),         # b3
        ],
        out_specs=_full_spec((B, 64)),
        scratch_shapes=[
            pltpu.VMEM((m1, 288), jnp.bfloat16),   # hoisted h (all taps)
            pltpu.VMEM((m2p, 32), jnp.float32),    # conv2 act, rows (s, b)
            pltpu.VMEM((B, 49 * 32), jnp.float32), # relayout target for conv3
        ],
        compiler_params=pltpu.CompilerParams(
            dimension_semantics=("arbitrary",)),
        cost_estimate=pl.CostEstimate(flops=int(flops), transcendentals=0,
                                      bytes_accessed=int(bytes_accessed)),
    )(xc1, w1m, b1r, p2, w2m, b2r, w3m, b3r)

    return out.reshape(B, 64, 1, 1)                             # NCHW, H=W=1


# ---------------------------------------------------------------------------
# Parameter init (PyTorch Conv2d default: U(-1/sqrt(fan_in), 1/sqrt(fan_in)))
# ---------------------------------------------------------------------------
def init_conv_params(key, c_out, c_in, kh, kw):
    fan_in = c_in * kh * kw
    bound = 1.0 / float(np.sqrt(fan_in))
    k_w, k_b = jax.random.split(key)
    w = jax.random.uniform(k_w, (c_out, c_in, kh, kw), jnp.float32, -bound, bound)
    b = jax.random.uniform(k_b, (c_out,), jnp.float32, -bound, bound)
    return w, b


# Pure-JAX reference for correctness checking
def encoder_ref(x_nchw, params):
    def conv(x, w, b, stride, pad):
        y = jax.lax.conv_general_dilated(
            x, w, (stride, stride), [(pad, pad), (pad, pad)],
            dimension_numbers=("NCHW", "OIHW", "NCHW"),
        )
        return y + b[None, :, None, None]

    (w1, b1), (w2, b2), (w3, b3) = params
    x = jax.nn.relu(conv(x_nchw, w1, b1, 2, 1))
    x = jax.nn.relu(conv(x, w2, b2, 2, 1))
    return conv(x, w3, b3, 1, 0)


if __name__ == "__main__":
    key = jax.random.PRNGKey(0)
    k_x, k1, k2, k3 = jax.random.split(key, 4)

    # MNIST-like input: batch=2, 1 channel, 28x28 (required for the 7x7 conv3)
    x = jax.random.normal(k_x, (2, 1, 28, 28), jnp.float32)

    params = (
        init_conv_params(k1, 16, 1, 3, 3),
        init_conv_params(k2, 32, 16, 3, 3),
        init_conv_params(k3, 64, 32, 7, 7),
    )

    fwd = jax.jit(encoder_forward)
    out = jax.block_until_ready(fwd(x, params))
    assert out.shape == (2, 64, 1, 1), out.shape

    ref = jax.block_until_ready(encoder_ref(x, params))
    max_err = float(jnp.max(jnp.abs(out - ref)))
    # bf16 weights / activations on the MXU path leave ~5e-3 of rounding noise
    # vs. the f32 reference; any structural bug would show up as O(0.1-1).
    assert max_err < 2e-2, f"mismatch vs reference: {max_err}"

    print("KERNEL_OK")
</pallas_src>

<mosaic_0001>
module attributes {stable_mosaic.version = 11 : i64} {
  func.func @_encoder_kernel(%arg0: i32, %arg1: memref<392x9xf32, #tpu.memory_space<vmem>>, %arg2: memref<9x16xf32, #tpu.memory_space<vmem>>, %arg3: memref<1x16xf32, #tpu.memory_space<vmem>>, %arg4: memref<9x112x392xbf16, #tpu.memory_space<vmem>>, %arg5: memref<16x288xbf16, #tpu.memory_space<vmem>>, %arg6: memref<1x32xf32, #tpu.memory_space<vmem>>, %arg7: memref<1568x64xbf16, #tpu.memory_space<vmem>>, %arg8: memref<1x64xf32, #tpu.memory_space<vmem>>, %arg9: memref<2x64xf32, #tpu.memory_space<vmem>>, %arg10: memref<392x288xbf16, #tpu.memory_space<vmem>>, %arg11: memref<112x32xf32, #tpu.memory_space<vmem>>, %arg12: memref<2x1568xf32, #tpu.memory_space<vmem>>) attributes {dimension_semantics = [#tpu.dimension_semantics<arbitrary>], iteration_bounds = array<i64: 1>, scalar_prefetch = 0 : i64, scratch_operands = 3 : i64, tpu.core_type = #tpu.core_type<tc>, window_params = [{pipeline_mode = #tpu.pipeline_mode<synchronous>, transform_indices = @transform_0, window_bounds = array<i64: 392, 9>}, {pipeline_mode = #tpu.pipeline_mode<synchronous>, transform_indices = @transform_1, window_bounds = array<i64: 9, 16>}, {pipeline_mode = #tpu.pipeline_mode<synchronous>, transform_indices = @transform_2, window_bounds = array<i64: 1, 16>}, {pipeline_mode = #tpu.pipeline_mode<synchronous>, transform_indices = @transform_3, window_bounds = array<i64: 9, 112, 392>}, {pipeline_mode = #tpu.pipeline_mode<synchronous>, transform_indices = @transform_4, window_bounds = array<i64: 16, 288>}, {pipeline_mode = #tpu.pipeline_mode<synchronous>, transform_indices = @transform_5, window_bounds = array<i64: 1, 32>}, {pipeline_mode = #tpu.pipeline_mode<synchronous>, transform_indices = @transform_6, window_bounds = array<i64: 1568, 64>}, {pipeline_mode = #tpu.pipeline_mode<synchronous>, transform_indices = @transform_7, window_bounds = array<i64: 1, 64>}, {pipeline_mode = #tpu.pipeline_mode<synchronous>, transform_indices = @transform_8, window_bounds = array<i64: 2, 64>}]} {
    %c0 = arith.constant 0 : index
    %c0_0 = arith.constant 0 : index
    %0 = vector.load %arg1[%c0, %c0_0] : memref<392x9xf32, #tpu.memory_space<vmem>>, vector<392x9xf32>
    %c0_1 = arith.constant 0 : index
    %c0_2 = arith.constant 0 : index
    %1 = vector.load %arg2[%c0_1, %c0_2] : memref<9x16xf32, #tpu.memory_space<vmem>>, vector<9x16xf32>
    %cst = arith.constant dense<0.000000e+00> : vector<392x16xf32>
    %2 = tpu.matmul %0, %1, %cst {dimension_numbers = #tpu.dot_dimension_numbers<[1], [0], [0], [1], [0, 0, 1, 1], [], []>} : vector<392x9xf32>, vector<9x16xf32>, vector<392x16xf32> -> vector<392x16xf32>
    %c0_3 = arith.constant 0 : index
    %c0_4 = arith.constant 0 : index
    %3 = vector.load %arg3[%c0_3, %c0_4] : memref<1x16xf32, #tpu.memory_space<vmem>>, vector<1x16xf32>
    %4 = vector.broadcast %3 : vector<1x16xf32> to vector<392x16xf32>
    %5 = arith.addf %2, %4 : vector<392x16xf32>
    %cst_5 = arith.constant 0.000000e+00 : f32
    %6 = vector.broadcast %cst_5 : f32 to vector<392x16xf32>
    %7 = arith.maximumf %5, %6 : vector<392x16xf32>
    %8 = arith.truncf %7 : vector<392x16xf32> to vector<392x16xbf16>
    %c0_6 = arith.constant 0 : index
    %c0_7 = arith.constant 0 : index
    %9 = vector.load %arg5[%c0_6, %c0_7] : memref<16x288xbf16, #tpu.memory_space<vmem>>, vector<16x288xbf16>
    %cst_8 = arith.constant dense<0.000000e+00> : vector<392x288xf32>
    %10 = tpu.matmul %8, %9, %cst_8 {dimension_numbers = #tpu.dot_dimension_numbers<[1], [0], [0], [1], [0, 0, 1, 1], [], []>} : vector<392x16xbf16>, vector<16x288xbf16>, vector<392x288xf32> -> vector<392x288xf32>
    %11 = arith.truncf %10 : vector<392x288xf32> to vector<392x288xbf16>
    %c0_9 = arith.constant 0 : index
    %c0_10 = arith.constant 0 : index
    %12 = vector.load %arg10[%c0_9, %c0_10] : memref<392x288xbf16, #tpu.memory_space<vmem>>, vector<392x288xbf16>
    tpu.vector_store %arg10[%c0_9, %c0_10], %11 {strides = array<i32>} : memref<392x288xbf16, #tpu.memory_space<vmem>>, vector<392x288xbf16>,
    %c0_11 = arith.constant 0 : index
    %c0_12 = arith.constant 0 : index
    %c0_13 = arith.constant 0 : index
    %13 = vector.load %arg4[%c0_11, %c0_12, %c0_13] : memref<9x112x392xbf16, #tpu.memory_space<vmem>>, vector<1x112x392xbf16>
    %14 = vector.shape_cast %13 : vector<1x112x392xbf16> to vector<112x392xbf16>
    %c0_14 = arith.constant 0 : index
    %c0_15 = arith.constant 0 : index
    %15 = vector.load %arg10[%c0_14, %c0_15] : memref<392x288xbf16, #tpu.memory_space<vmem>>, vector<392x32xbf16>
    %cst_16 = arith.constant dense<0.000000e+00> : vector<112x32xf32>
    %16 = tpu.matmul %14, %15, %cst_16 {dimension_numbers = #tpu.dot_dimension_numbers<[1], [0], [0], [1], [0, 0, 1, 1], [], []>} : vector<112x392xbf16>, vector<392x32xbf16>, vector<112x32xf32> -> vector<112x32xf32>
    %c1 = arith.constant 1 : index
    %c0_17 = arith.constant 0 : index
    %c0_18 = arith.constant 0 : index
    %17 = vector.load %arg4[%c1, %c0_17, %c0_18] : memref<9x112x392xbf16, #tpu.memory_space<vmem>>, vector<1x112x392xbf16>
    %18 = vector.shape_cast %17 : vector<1x112x392xbf16> to vector<112x392xbf16>
    %c0_19 = arith.constant 0 : index
    %c32 = arith.constant 32 : index
    %19 = vector.load %arg10[%c0_19, %c32] : memref<392x288xbf16, #tpu.memory_space<vmem>>, vector<392x32xbf16>
    %cst_20 = arith.constant dense<0.000000e+00> : vector<112x32xf32>
    %20 = tpu.matmul %18, %19, %cst_20 {dimension_numbers = #tpu.dot_dimension_numbers<[1], [0], [0], [1], [0, 0, 1, 1], [], []>} : vector<112x392xbf16>, vector<392x32xbf16>, vector<112x32xf32> -> vector<112x32xf32>
    %21 = arith.addf %16, %20 : vector<112x32xf32>
    %c2 = arith.constant 2 : index
    %c0_21 = arith.constant 0 : index
    %c0_22 = arith.constant 0 : index
    %22 = vector.load %arg4[%c2, %c0_21, %c0_22] : memref<9x112x392xbf16, #tpu.memory_space<vmem>>, vector<1x112x392xbf16>
    %23 = vector.shape_cast %22 : vector<1x112x392xbf16> to vector<112x392xbf16>
    %c0_23 = arith.constant 0 : index
    %c64 = arith.constant 64 : index
    %24 = vector.load %arg10[%c0_23, %c64] : memref<392x288xbf16, #tpu.memory_space<vmem>>, vector<392x32xbf16>
    %cst_24 = arith.constant dense<0.000000e+00> : vector<112x32xf32>
    %25 = tpu.matmul %23, %24, %cst_24 {dimension_numbers = #tpu.dot_dimension_numbers<[1], [0], [0], [1], [0, 0, 1, 1], [], []>} : vector<112x392xbf16>, vector<392x32xbf16>, vector<112x32xf32> -> vector<112x32xf32>
    %26 = arith.addf %21, %25 : vector<112x32xf32>
    %c3 = arith.constant 3 : index
    %c0_25 = arith.constant 0 : index
    %c0_26 = arith.constant 0 : index
    %27 = vector.load %arg4[%c3, %c0_25, %c0_26] : memref<9x112x392xbf16, #tpu.memory_space<vmem>>, vector<1x112x392xbf16>
    %28 = vector.shape_cast %27 : vector<1x112x392xbf16> to vector<112x392xbf16>
    %c0_27 = arith.constant 0 : index
    %c96 = arith.constant 96 : index
    %29 = vector.load %arg10[%c0_27, %c96] : memref<392x288xbf16, #tpu.memory_space<vmem>>, vector<392x32xbf16>
    %cst_28 = arith.constant dense<0.000000e+00> : vector<112x32xf32>
    %30 = tpu.matmul %28, %29, %cst_28 {dimension_numbers = #tpu.dot_dimension_numbers<[1], [0], [0], [1], [0, 0, 1, 1], [], []>} : vector<112x392xbf16>, vector<392x32xbf16>, vector<112x32xf32> -> vector<112x32xf32>
    %31 = arith.addf %26, %30 : vector<112x32xf32>
    %c4 = arith.constant 4 : index
    %c0_29 = arith.constant 0 : index
    %c0_30 = arith.constant 0 : index
    %32 = vector.load %arg4[%c4, %c0_29, %c0_30] : memref<9x112x392xbf16, #tpu.memory_space<vmem>>, vector<1x112x392xbf16>
    %33 = vector.shape_cast %32 : vector<1x112x392xbf16> to vector<112x392xbf16>
    %c0_31 = arith.constant 0 : index
    %c128 = arith.constant 128 : index
    %34 = vector.load %arg10[%c0_31, %c128] : memref<392x288xbf16, #tpu.memory_space<vmem>>, vector<392x32xbf16>
    %cst_32 = arith.constant dense<0.000000e+00> : vector<112x32xf32>
    %35 = tpu.matmul %33, %34, %cst_32 {dimension_numbers = #tpu.dot_dimension_numbers<[1], [0], [0], [1], [0, 0, 1, 1], [], []>} : vector<112x392xbf16>, vector<392x32xbf16>, vector<112x32xf32> -> vector<112x32xf32>
    %36 = arith.addf %31, %35 : vector<112x32xf32>
    %c5 = arith.constant 5 : index
    %c0_33 = arith.constant 0 : index
    %c0_34 = arith.constant 0 : index
    %37 = vector.load %arg4[%c5, %c0_33, %c0_34] : memref<9x112x392xbf16, #tpu.memory_space<vmem>>, vector<1x112x392xbf16>
    %38 = vector.shape_cast %37 : vector<1x112x392xbf16> to vector<112x392xbf16>
    %c0_35 = arith.constant 0 : index
    %c160 = arith.constant 160 : index
    %39 = vector.load %arg10[%c0_35, %c160] : memref<392x288xbf16, #tpu.memory_space<vmem>>, vector<392x32xbf16>
    %cst_36 = arith.constant dense<0.000000e+00> : vector<112x32xf32>
    %40 = tpu.matmul %38, %39, %cst_36 {dimension_numbers = #tpu.dot_dimension_numbers<[1], [0], [0], [1], [0, 0, 1, 1], [], []>} : vector<112x392xbf16>, vector<392x32xbf16>, vector<112x32xf32> -> vector<112x32xf32>
    %41 = arith.addf %36, %40 : vector<112x32xf32>
    %c6 = arith.constant 6 : index
    %c0_37 = arith.constant 0 : index
    %c0_38 = arith.constant 0 : index
    %42 = vector.load %arg4[%c6, %c0_37, %c0_38] : memref<9x112x392xbf16, #tpu.memory_space<vmem>>, vector<1x112x392xbf16>
    %43 = vector.shape_cast %42 : vector<1x112x392xbf16> to vector<112x392xbf16>
    %c0_39 = arith.constant 0 : index
    %c192 = arith.constant 192 : index
    %44 = vector.load %arg10[%c0_39, %c192] : memref<392x288xbf16, #tpu.memory_space<vmem>>, vector<392x32xbf16>
    %cst_40 = arith.constant dense<0.000000e+00> : vector<112x32xf32>
    %45 = tpu.matmul %43, %44, %cst_40 {dimension_numbers = #tpu.dot_dimension_numbers<[1], [0], [0], [1], [0, 0, 1, 1], [], []>} : vector<112x392xbf16>, vector<392x32xbf16>, vector<112x32xf32> -> vector<112x32xf32>
    %46 = arith.addf %41, %45 : vector<112x32xf32>
    %c7 = arith.constant 7 : index
    %c0_41 = arith.constant 0 : index
    %c0_42 = arith.constant 0 : index
    %47 = vector.load %arg4[%c7, %c0_41, %c0_42] : memref<9x112x392xbf16, #tpu.memory_space<vmem>>, vector<1x112x392xbf16>
    %48 = vector.shape_cast %47 : vector<1x112x392xbf16> to vector<112x392xbf16>
    %c0_43 = arith.constant 0 : index
    %c224 = arith.constant 224 : index
    %49 = vector.load %arg10[%c0_43, %c224] : memref<392x288xbf16, #tpu.memory_space<vmem>>, vector<392x32xbf16>
    %cst_44 = arith.constant dense<0.000000e+00> : vector<112x32xf32>
    %50 = tpu.matmul %48, %49, %cst_44 {dimension_numbers = #tpu.dot_dimension_numbers<[1], [0], [0], [1], [0, 0, 1, 1], [], []>} : vector<112x392xbf16>, vector<392x32xbf16>, vector<112x32xf32> -> vector<112x32xf32>
    %51 = arith.addf %46, %50 : vector<112x32xf32>
    %c8 = arith.constant 8 : index
    %c0_45 = arith.constant 0 : index
    %c0_46 = arith.constant 0 : index
    %52 = vector.load %arg4[%c8, %c0_45, %c0_46] : memref<9x112x392xbf16, #tpu.memory_space<vmem>>, vector<1x112x392xbf16>
    %53 = vector.shape_cast %52 : vector<1x112x392xbf16> to vector<112x392xbf16>
    %c0_47 = arith.constant 0 : index
    %c256 = arith.constant 256 : index
    %54 = vector.load %arg10[%c0_47, %c256] : memref<392x288xbf16, #tpu.memory_space<vmem>>, vector<392x32xbf16>
    %cst_48 = arith.constant dense<0.000000e+00> : vector<112x32xf32>
    %55 = tpu.matmul %53, %54, %cst_48 {dimension_numbers = #tpu.dot_dimension_numbers<[1], [0], [0], [1], [0, 0, 1, 1], [], []>} : vector<112x392xbf16>, vector<392x32xbf16>, vector<112x32xf32> -> vector<112x32xf32>
    %56 = arith.addf %51, %55 : vector<112x32xf32>
    %c0_49 = arith.constant 0 : index
    %c0_50 = arith.constant 0 : index
    %57 = vector.load %arg6[%c0_49, %c0_50] : memref<1x32xf32, #tpu.memory_space<vmem>>, vector<1x32xf32>
    %58 = vector.broadcast %57 : vector<1x32xf32> to vector<112x32xf32>
    %59 = arith.addf %56, %58 : vector<112x32xf32>
    %cst_51 = arith.constant 0.000000e+00 : f32
    %60 = vector.broadcast %cst_51 : f32 to vector<112x32xf32>
    %61 = arith.maximumf %59, %60 : vector<112x32xf32>
    %c0_52 = arith.constant 0 : index
    %c0_53 = arith.constant 0 : index
    %62 = vector.load %arg11[%c0_52, %c0_53] : memref<112x32xf32, #tpu.memory_space<vmem>>, vector<112x32xf32>
    tpu.vector_store %arg11[%c0_52, %c0_53], %61 {strides = array<i32>} : memref<112x32xf32, #tpu.memory_space<vmem>>, vector<112x32xf32>,
    %c0_54 = arith.constant 0 : index
    %c0_55 = arith.constant 0 : index
    %63 = vector.load %arg11[%c0_54, %c0_55] : memref<112x32xf32, #tpu.memory_space<vmem>>, vector<2x32xf32>
    %c0_56 = arith.constant 0 : index
    %c0_57 = arith.constant 0 : index
    %64 = vector.load %arg12[%c0_56, %c0_57] : memref<2x1568xf32, #tpu.memory_space<vmem>>, vector<2x32xf32>
    tpu.vector_store %arg12[%c0_56, %c0_57], %63 {strides = array<i32>} : memref<2x1568xf32, #tpu.memory_space<vmem>>, vector<2x32xf32>,
    %c2_58 = arith.constant 2 : index
    %c0_59 = arith.constant 0 : index
    %65 = vector.load %arg11[%c2_58, %c0_59] : memref<112x32xf32, #tpu.memory_space<vmem>>, vector<2x32xf32>
    %c0_60 = arith.constant 0 : index
    %c32_61 = arith.constant 32 : index
    %66 = vector.load %arg12[%c0_60, %c32_61] : memref<2x1568xf32, #tpu.memory_space<vmem>>, vector<2x32xf32>
    tpu.vector_store %arg12[%c0_60, %c32_61], %65 {strides = array<i32>} : memref<2x1568xf32, #tpu.memory_space<vmem>>, vector<2x32xf32>,
    %c4_62 = arith.constant 4 : index
    %c0_63 = arith.constant 0 : index
    %67 = vector.load %arg11[%c4_62, %c0_63] : memref<112x32xf32, #tpu.memory_space<vmem>>, vector<2x32xf32>
    %c0_64 = arith.constant 0 : index
    %c64_65 = arith.constant 64 : index
    %68 = vector.load %arg12[%c0_64, %c64_65] : memref<2x1568xf32, #tpu.memory_space<vmem>>, vector<2x32xf32>
    tpu.vector_store %arg12[%c0_64, %c64_65], %67 {strides = array<i32>} : memref<2x1568xf32, #tpu.memory_space<vmem>>, vector<2x32xf32>,
    %c6_66 = arith.constant 6 : index
    %c0_67 = arith.constant 0 : index
    %69 = vector.load %arg11[%c6_66, %c0_67] : memref<112x32xf32, #tpu.memory_space<vmem>>, vector<2x32xf32>
    %c0_68 = arith.constant 0 : index
    %c96_69 = arith.constant 96 : index
    %70 = vector.load %arg12[%c0_68, %c96_69] : memref<2x1568xf32, #tpu.memory_space<vmem>>, vector<2x32xf32>
    tpu.vector_store %arg12[%c0_68, %c96_69], %69 {strides = array<i32>} : memref<2x1568xf32, #tpu.memory_space<vmem>>, vector<2x32xf32>,
    %c8_70 = arith.constant 8 : index
    %c0_71 = arith.constant 0 : index
    %71 = vector.load %arg11[%c8_70, %c0_71] : memref<112x32xf32, #tpu.memory_space<vmem>>, vector<2x32xf32>
    %c0_72 = arith.constant 0 : index
    %c128_73 = arith.constant 128 : index
    %72 = vector.load %arg12[%c0_72, %c128_73] : memref<2x1568xf32, #tpu.memory_space<vmem>>, vector<2x32xf32>
    tpu.vector_store %arg12[%c0_72, %c128_73], %71 {strides = array<i32>} : memref<2x1568xf32, #tpu.memory_space<vmem>>, vector<2x32xf32>,
    %c10 = arith.constant 10 : index
    %c0_74 = arith.constant 0 : index
    %73 = vector.load %arg11[%c10, %c0_74] : memref<112x32xf32, #tpu.memory_space<vmem>>, vector<2x32xf32>
    %c0_75 = arith.constant 0 : index
    %c160_76 = arith.constant 160 : index
    %74 = vector.load %arg12[%c0_75, %c160_76] : memref<2x1568xf32, #tpu.memory_space<vmem>>, vector<2x32xf32>
    tpu.vector_store %arg12[%c0_75, %c160_76], %73 {strides = array<i32>} : memref<2x1568xf32, #tpu.memory_space<vmem>>, vector<2x32xf32>,
    %c12 = arith.constant 12 : index
    %c0_77 = arith.constant 0 : index
    %75 = vector.load %arg11[%c12, %c0_77] : memref<112x32xf32, #tpu.memory_space<vmem>>, vector<2x32xf32>
    %c0_78 = arith.constant 0 : index
    %c192_79 = arith.constant 192 : index
    %76 = vector.load %arg12[%c0_78, %c192_79] : memref<2x1568xf32, #tpu.memory_space<vmem>>, vector<2x32xf32>
    tpu.vector_store %arg12[%c0_78, %c192_79], %75 {strides = array<i32>} : memref<2x1568xf32, #tpu.memory_space<vmem>>, vector<2x32xf32>,
    %c14 = arith.constant 14 : index
    %c0_80 = arith.constant 0 : index
    %77 = vector.load %arg11[%c14, %c0_80] : memref<112x32xf32, #tpu.memory_space<vmem>>, vector<2x32xf32>
    %c0_81 = arith.constant 0 : index
    %c224_82 = arith.constant 224 : index
    %78 = vector.load %arg12[%c0_81, %c224_82] : memref<2x1568xf32, #tpu.memory_space<vmem>>, vector<2x32xf32>
    tpu.vector_store %arg12[%c0_81, %c224_82], %77 {strides = array<i32>} : memref<2x1568xf32, #tpu.memory_space<vmem>>, vector<2x32xf32>,
    %c16 = arith.constant 16 : index
    %c0_83 = arith.constant 0 : index
    %79 = vector.load %arg11[%c16, %c0_83] : memref<112x32xf32, #tpu.memory_space<vmem>>, vector<2x32xf32>
    %c0_84 = arith.constant 0 : index
    %c256_85 = arith.constant 256 : index
    %80 = vector.load %arg12[%c0_84, %c256_85] : memref<2x1568xf32, #tpu.memory_space<vmem>>, vector<2x32xf32>
    tpu.vector_store %arg12[%c0_84, %c256_85], %79 {strides = array<i32>} : memref<2x1568xf32, #tpu.memory_space<vmem>>, vector<2x32xf32>,
    %c18 = arith.constant 18 : index
    %c0_86 = arith.constant 0 : index
    %81 = vector.load %arg11[%c18, %c0_86] : memref<112x32xf32, #tpu.memory_space<vmem>>, vector<2x32xf32>
    %c0_87 = arith.constant 0 : index
    %c288 = arith.constant 288 : index
    %82 = vector.load %arg12[%c0_87, %c288] : memref<2x1568xf32, #tpu.memory_space<vmem>>, vector<2x32xf32>
    tpu.vector_store %arg12[%c0_87, %c288], %81 {strides = array<i32>} : memref<2x1568xf32, #tpu.memory_space<vmem>>, vector<2x32xf32>,
    %c20 = arith.constant 20 : index
    %c0_88 = arith.constant 0 : index
    %83 = vector.load %arg11[%c20, %c0_88] : memref<112x32xf32, #tpu.memory_space<vmem>>, vector<2x32xf32>
    %c0_89 = arith.constant 0 : index
    %c320 = arith.constant 320 : index
    %84 = vector.load %arg12[%c0_89, %c320] : memref<2x1568xf32, #tpu.memory_space<vmem>>, vector<2x32xf32>
    tpu.vector_store %arg12[%c0_89, %c320], %83 {strides = array<i32>} : memref<2x1568xf32, #tpu.memory_space<vmem>>, vector<2x32xf32>,
    %c22 = arith.constant 22 : index
    %c0_90 = arith.constant 0 : index
    %85 = vector.load %arg11[%c22, %c0_90] : memref<112x32xf32, #tpu.memory_space<vmem>>, vector<2x32xf32>
    %c0_91 = arith.constant 0 : index
    %c352 = arith.constant 352 : index
    %86 = vector.load %arg12[%c0_91, %c352] : memref<2x1568xf32, #tpu.memory_space<vmem>>, vector<2x32xf32>
    tpu.vector_store %arg12[%c0_91, %c352], %85 {strides = array<i32>} : memref<2x1568xf32, #tpu.memory_space<vmem>>, vector<2x32xf32>,
    %c24 = arith.constant 24 : index
    %c0_92 = arith.constant 0 : index
    %87 = vector.load %arg11[%c24, %c0_92] : memref<112x32xf32, #tpu.memory_space<vmem>>, vector<2x32xf32>
    %c0_93 = arith.constant 0 : index
    %c384 = arith.constant 384 : index
    %88 = vector.load %arg12[%c0_93, %c384] : memref<2x1568xf32, #tpu.memory_space<vmem>>, vector<2x32xf32>
    tpu.vector_store %arg12[%c0_93, %c384], %87 {strides = array<i32>} : memref<2x1568xf32, #tpu.memory_space<vmem>>, vector<2x32xf32>,
    %c26 = arith.constant 26 : index
    %c0_94 = arith.constant 0 : index
    %89 = vector.load %arg11[%c26, %c0_94] : memref<112x32xf32, #tpu.memory_space<vmem>>, vector<2x32xf32>
    %c0_95 = arith.constant 0 : index
    %c416 = arith.constant 416 : index
    %90 = vector.load %arg12[%c0_95, %c416] : memref<2x1568xf32, #tpu.memory_space<vmem>>, vector<2x32xf32>
    tpu.vector_store %arg12[%c0_95, %c416], %89 {strides = array<i32>} : memref<2x1568xf32, #tpu.memory_space<vmem>>, vector<2x32xf32>,
    %c28 = arith.constant 28 : index
    %c0_96 = arith.constant 0 : index
    %91 = vector.load %arg11[%c28, %c0_96] : memref<112x32xf32, #tpu.memory_space<vmem>>, vector<2x32xf32>
    %c0_97 = arith.constant 0 : index
    %c448 = arith.constant 448 : index
    %92 = vector.load %arg12[%c0_97, %c448] : memref<2x1568xf32, #tpu.memory_space<vmem>>, vector<2x32xf32>
    tpu.vector_store %arg12[%c0_97, %c448], %91 {strides = array<i32>} : memref<2x1568xf32, #tpu.memory_space<vmem>>, vector<2x32xf32>,
    %c30 = arith.constant 30 : index
    %c0_98 = arith.constant 0 : index
    %93 = vector.load %arg11[%c30, %c0_98] : memref<112x32xf32, #tpu.memory_space<vmem>>, vector<2x32xf32>
    %c0_99 = arith.constant 0 : index
    %c480 = arith.constant 480 : index
    %94 = vector.load %arg12[%c0_99, %c480] : memref<2x1568xf32, #tpu.memory_space<vmem>>, vector<2x32xf32>
    tpu.vector_store %arg12[%c0_99, %c480], %93 {strides = array<i32>} : memref<2x1568xf32, #tpu.memory_space<vmem>>, vector<2x32xf32>,
    %c32_100 = arith.constant 32 : index
    %c0_101 = arith.constant 0 : index
    %95 = vector.load %arg11[%c32_100, %c0_101] : memref<112x32xf32, #tpu.memory_space<vmem>>, vector<2x32xf32>
    %c0_102 = arith.constant 0 : index
    %c512 = arith.constant 512 : index
    %96 = vector.load %arg12[%c0_102, %c512] : memref<2x1568xf32, #tpu.memory_space<vmem>>, vector<2x32xf32>
    tpu.vector_store %arg12[%c0_102, %c512], %95 {strides = array<i32>} : memref<2x1568xf32, #tpu.memory_space<vmem>>, vector<2x32xf32>,
    %c34 = arith.constant 34 : index
    %c0_103 = arith.constant 0 : index
    %97 = vector.load %arg11[%c34, %c0_103] : memref<112x32xf32, #tpu.memory_space<vmem>>, vector<2x32xf32>
    %c0_104 = arith.constant 0 : index
    %c544 = arith.constant 544 : index
    %98 = vector.load %arg12[%c0_104, %c544] : memref<2x1568xf32, #tpu.memory_space<vmem>>, vector<2x32xf32>
    tpu.vector_store %arg12[%c0_104, %c544], %97 {strides = array<i32>} : memref<2x1568xf32, #tpu.memory_space<vmem>>, vector<2x32xf32>,
    %c36 = arith.constant 36 : index
    %c0_105 = arith.constant 0 : index
    %99 = vector.load %arg11[%c36, %c0_105] : memref<112x32xf32, #tpu.memory_space<vmem>>, vector<2x32xf32>
    %c0_106 = arith.constant 0 : index
    %c576 = arith.constant 576 : index
    %100 = vector.load %arg12[%c0_106, %c576] : memref<2x1568xf32, #tpu.memory_space<vmem>>, vector<2x32xf32>
    tpu.vector_store %arg12[%c0_106, %c576], %99 {strides = array<i32>} : memref<2x1568xf32, #tpu.memory_space<vmem>>, vector<2x32xf32>,
    %c38 = arith.constant 38 : index
    %c0_107 = arith.constant 0 : index
    %101 = vector.load %arg11[%c38, %c0_107] : memref<112x32xf32, #tpu.memory_space<vmem>>, vector<2x32xf32>
    %c0_108 = arith.constant 0 : index
    %c608 = arith.constant 608 : index
    %102 = vector.load %arg12[%c0_108, %c608] : memref<2x1568xf32, #tpu.memory_space<vmem>>, vector<2x32xf32>
    tpu.vector_store %arg12[%c0_108, %c608], %101 {strides = array<i32>} : memref<2x1568xf32, #tpu.memory_space<vmem>>, vector<2x32xf32>,
    %c40 = arith.constant 40 : index
    %c0_109 = arith.constant 0 : index
    %103 = vector.load %arg11[%c40, %c0_109] : memref<112x32xf32, #tpu.memory_space<vmem>>, vector<2x32xf32>
    %c0_110 = arith.constant 0 : index
    %c640 = arith.constant 640 : index
    %104 = vector.load %arg12[%c0_110, %c640] : memref<2x1568xf32, #tpu.memory_space<vmem>>, vector<2x32xf32>
    tpu.vector_store %arg12[%c0_110, %c640], %103 {strides = array<i32>} : memref<2x1568xf32, #tpu.memory_space<vmem>>, vector<2x32xf32>,
    %c42 = arith.constant 42 : index
    %c0_111 = arith.constant 0 : index
    %105 = vector.load %arg11[%c42, %c0_111] : memref<112x32xf32, #tpu.memory_space<vmem>>, vector<2x32xf32>
    %c0_112 = arith.constant 0 : index
    %c672 = arith.constant 672 : index
    %106 = vector.load %arg12[%c0_112, %c672] : memref<2x1568xf32, #tpu.memory_space<vmem>>, vector<2x32xf32>
    tpu.vector_store %arg12[%c0_112, %c672], %105 {strides = array<i32>} : memref<2x1568xf32, #tpu.memory_space<vmem>>, vector<2x32xf32>,
    %c44 = arith.constant 44 : index
    %c0_113 = arith.constant 0 : index
    %107 = vector.load %arg11[%c44, %c0_113] : memref<112x32xf32, #tpu.memory_space<vmem>>, vector<2x32xf32>
    %c0_114 = arith.constant 0 : index
    %c704 = arith.constant 704 : index
    %108 = vector.load %arg12[%c0_114, %c704] : memref<2x1568xf32, #tpu.memory_space<vmem>>, vector<2x32xf32>
    tpu.vector_store %arg12[%c0_114, %c704], %107 {strides = array<i32>} : memref<2x1568xf32, #tpu.memory_space<vmem>>, vector<2x32xf32>,
    %c46 = arith.constant 46 : index
    %c0_115 = arith.constant 0 : index
    %109 = vector.load %arg11[%c46, %c0_115] : memref<112x32xf32, #tpu.memory_space<vmem>>, vector<2x32xf32>
    %c0_116 = arith.constant 0 : index
    %c736 = arith.constant 736 : index
    %110 = vector.load %arg12[%c0_116, %c736] : memref<2x1568xf32, #tpu.memory_space<vmem>>, vector<2x32xf32>
    tpu.vector_store %arg12[%c0_116, %c736], %109 {strides = array<i32>} : memref<2x1568xf32, #tpu.memory_space<vmem>>, vector<2x32xf32>,
    %c48 = arith.constant 48 : index
    %c0_117 = arith.constant 0 : index
    %111 = vector.load %arg11[%c48, %c0_117] : memref<112x32xf32, #tpu.memory_space<vmem>>, vector<2x32xf32>
    %c0_118 = arith.constant 0 : index
    %c768 = arith.constant 768 : index
    %112 = vector.load %arg12[%c0_118, %c768] : memref<2x1568xf32, #tpu.memory_space<vmem>>, vector<2x32xf32>
    tpu.vector_store %arg12[%c0_118, %c768], %111 {strides = array<i32>} : memref<2x1568xf32, #tpu.memory_space<vmem>>, vector<2x32xf32>,
    %c50 = arith.constant 50 : index
    %c0_119 = arith.constant 0 : index
    %113 = vector.load %arg11[%c50, %c0_119] : memref<112x32xf32, #tpu.memory_space<vmem>>, vector<2x32xf32>
    %c0_120 = arith.constant 0 : index
    %c800 = arith.constant 800 : index
    %114 = vector.load %arg12[%c0_120, %c800] : memref<2x1568xf32, #tpu.memory_space<vmem>>, vector<2x32xf32>
    tpu.vector_store %arg12[%c0_120, %c800], %113 {strides = array<i32>} : memref<2x1568xf32, #tpu.memory_space<vmem>>, vector<2x32xf32>,
    %c52 = arith.constant 52 : index
    %c0_121 = arith.constant 0 : index
    %115 = vector.load %arg11[%c52, %c0_121] : memref<112x32xf32, #tpu.memory_space<vmem>>, vector<2x32xf32>
    %c0_122 = arith.constant 0 : index
    %c832 = arith.constant 832 : index
    %116 = vector.load %arg12[%c0_122, %c832] : memref<2x1568xf32, #tpu.memory_space<vmem>>, vector<2x32xf32>
    tpu.vector_store %arg12[%c0_122, %c832], %115 {strides = array<i32>} : memref<2x1568xf32, #tpu.memory_space<vmem>>, vector<2x32xf32>,
    %c54 = arith.constant 54 : index
    %c0_123 = arith.constant 0 : index
    %117 = vector.load %arg11[%c54, %c0_123] : memref<112x32xf32, #tpu.memory_space<vmem>>, vector<2x32xf32>
    %c0_124 = arith.constant 0 : index
    %c864 = arith.constant 864 : index
    %118 = vector.load %arg12[%c0_124, %c864] : memref<2x1568xf32, #tpu.memory_space<vmem>>, vector<2x32xf32>
    tpu.vector_store %arg12[%c0_124, %c864], %117 {strides = array<i32>} : memref<2x1568xf32, #tpu.memory_space<vmem>>, vector<2x32xf32>,
    %c56 = arith.constant 56 : index
    %c0_125 = arith.constant 0 : index
    %119 = vector.load %arg11[%c56, %c0_125] : memref<112x32xf32, #tpu.memory_space<vmem>>, vector<2x32xf32>
    %c0_126 = arith.constant 0 : index
    %c896 = arith.constant 896 : index
    %120 = vector.load %arg12[%c0_126, %c896] : memref<2x1568xf32, #tpu.memory_space<vmem>>, vector<2x32xf32>
    tpu.vector_store %arg12[%c0_126, %c896], %119 {strides = array<i32>} : memref<2x1568xf32, #tpu.memory_space<vmem>>, vector<2x32xf32>,
    %c58 = arith.constant 58 : index
    %c0_127 = arith.constant 0 : index
    %121 = vector.load %arg11[%c58, %c0_127] : memref<112x32xf32, #tpu.memory_space<vmem>>, vector<2x32xf32>
    %c0_128 = arith.constant 0 : index
    %c928 = arith.constant 928 : index
    %122 = vector.load %arg12[%c0_128, %c928] : memref<2x1568xf32, #tpu.memory_space<vmem>>, vector<2x32xf32>
    tpu.vector_store %arg12[%c0_128, %c928], %121 {strides = array<i32>} : memref<2x1568xf32, #tpu.memory_space<vmem>>, vector<2x32xf32>,
    %c60 = arith.constant 60 : index
    %c0_129 = arith.constant 0 : index
    %123 = vector.load %arg11[%c60, %c0_129] : memref<112x32xf32, #tpu.memory_space<vmem>>, vector<2x32xf32>
    %c0_130 = arith.constant 0 : index
    %c960 = arith.constant 960 : index
    %124 = vector.load %arg12[%c0_130, %c960] : memref<2x1568xf32, #tpu.memory_space<vmem>>, vector<2x32xf32>
    tpu.vector_store %arg12[%c0_130, %c960], %123 {strides = array<i32>} : memref<2x1568xf32, #tpu.memory_space<vmem>>, vector<2x32xf32>,
    %c62 = arith.constant 62 : index
    %c0_131 = arith.constant 0 : index
    %125 = vector.load %arg11[%c62, %c0_131] : memref<112x32xf32, #tpu.memory_space<vmem>>, vector<2x32xf32>
    %c0_132 = arith.constant 0 : index
    %c992 = arith.constant 992 : index
    %126 = vector.load %arg12[%c0_132, %c992] : memref<2x1568xf32, #tpu.memory_space<vmem>>, vector<2x32xf32>
    tpu.vector_store %arg12[%c0_132, %c992], %125 {strides = array<i32>} : memref<2x1568xf32, #tpu.memory_space<vmem>>, vector<2x32xf32>,
    %c64_133 = arith.constant 64 : index
    %c0_134 = arith.constant 0 : index
    %127 = vector.load %arg11[%c64_133, %c0_134] : memref<112x32xf32, #tpu.memory_space<vmem>>, vector<2x32xf32>
    %c0_135 = arith.constant 0 : index
    %c1024 = arith.constant 1024 : index
    %128 = vector.load %arg12[%c0_135, %c1024] : memref<2x1568xf32, #tpu.memory_space<vmem>>, vector<2x32xf32>
    tpu.vector_store %arg12[%c0_135, %c1024], %127 {strides = array<i32>} : memref<2x1568xf32, #tpu.memory_space<vmem>>, vector<2x32xf32>,
    %c66 = arith.constant 66 : index
    %c0_136 = arith.constant 0 : index
    %129 = vector.load %arg11[%c66, %c0_136] : memref<112x32xf32, #tpu.memory_space<vmem>>, vector<2x32xf32>
    %c0_137 = arith.constant 0 : index
    %c1056 = arith.constant 1056 : index
    %130 = vector.load %arg12[%c0_137, %c1056] : memref<2x1568xf32, #tpu.memory_space<vmem>>, vector<2x32xf32>
    tpu.vector_store %arg12[%c0_137, %c1056], %129 {strides = array<i32>} : memref<2x1568xf32, #tpu.memory_space<vmem>>, vector<2x32xf32>,
    %c68 = arith.constant 68 : index
    %c0_138 = arith.constant 0 : index
    %131 = vector.load %arg11[%c68, %c0_138] : memref<112x32xf32, #tpu.memory_space<vmem>>, vector<2x32xf32>
    %c0_139 = arith.constant 0 : index
    %c1088 = arith.constant 1088 : index
    %132 = vector.load %arg12[%c0_139, %c1088] : memref<2x1568xf32, #tpu.memory_space<vmem>>, vector<2x32xf32>
    tpu.vector_store %arg12[%c0_139, %c1088], %131 {strides = array<i32>} : memref<2x1568xf32, #tpu.memory_space<vmem>>, vector<2x32xf32>,
    %c70 = arith.constant 70 : index
    %c0_140 = arith.constant 0 : index
    %133 = vector.load %arg11[%c70, %c0_140] : memref<112x32xf32, #tpu.memory_space<vmem>>, vector<2x32xf32>
    %c0_141 = arith.constant 0 : index
    %c1120 = arith.constant 1120 : index
    %134 = vector.load %arg12[%c0_141, %c1120] : memref<2x1568xf32, #tpu.memory_space<vmem>>, vector<2x32xf32>
    tpu.vector_store %arg12[%c0_141, %c1120], %133 {strides = array<i32>} : memref<2x1568xf32, #tpu.memory_space<vmem>>, vector<2x32xf32>,
    %c72 = arith.constant 72 : index
    %c0_142 = arith.constant 0 : index
    %135 = vector.load %arg11[%c72, %c0_142] : memref<112x32xf32, #tpu.memory_space<vmem>>, vector<2x32xf32>
    %c0_143 = arith.constant 0 : index
    %c1152 = arith.constant 1152 : index
    %136 = vector.load %arg12[%c0_143, %c1152] : memref<2x1568xf32, #tpu.memory_space<vmem>>, vector<2x32xf32>
    tpu.vector_store %arg12[%c0_143, %c1152], %135 {strides = array<i32>} : memref<2x1568xf32, #tpu.memory_space<vmem>>, vector<2x32xf32>,
    %c74 = arith.constant 74 : index
    %c0_144 = arith.constant 0 : index
    %137 = vector.load %arg11[%c74, %c0_144] : memref<112x32xf32, #tpu.memory_space<vmem>>, vector<2x32xf32>
    %c0_145 = arith.constant 0 : index
    %c1184 = arith.constant 1184 : index
    %138 = vector.load %arg12[%c0_145, %c1184] : memref<2x1568xf32, #tpu.memory_space<vmem>>, vector<2x32xf32>
    tpu.vector_store %arg12[%c0_145, %c1184], %137 {strides = array<i32>} : memref<2x1568xf32, #tpu.memory_space<vmem>>, vector<2x32xf32>,
    %c76 = arith.constant 76 : index
    %c0_146 = arith.constant 0 : index
    %139 = vector.load %arg11[%c76, %c0_146] : memref<112x32xf32, #tpu.memory_space<vmem>>, vector<2x32xf32>
    %c0_147 = arith.constant 0 : index
    %c1216 = arith.constant 1216 : index
    %140 = vector.load %arg12[%c0_147, %c1216] : memref<2x1568xf32, #tpu.memory_space<vmem>>, vector<2x32xf32>
    tpu.vector_store %arg12[%c0_147, %c1216], %139 {strides = array<i32>} : memref<2x1568xf32, #tpu.memory_space<vmem>>, vector<2x32xf32>,
    %c78 = arith.constant 78 : index
    %c0_148 = arith.constant 0 : index
    %141 = vector.load %arg11[%c78, %c0_148] : memref<112x32xf32, #tpu.memory_space<vmem>>, vector<2x32xf32>
    %c0_149 = arith.constant 0 : index
    %c1248 = arith.constant 1248 : index
    %142 = vector.load %arg12[%c0_149, %c1248] : memref<2x1568xf32, #tpu.memory_space<vmem>>, vector<2x32xf32>
    tpu.vector_store %arg12[%c0_149, %c1248], %141 {strides = array<i32>} : memref<2x1568xf32, #tpu.memory_space<vmem>>, vector<2x32xf32>,
    %c80 = arith.constant 80 : index
    %c0_150 = arith.constant 0 : index
    %143 = vector.load %arg11[%c80, %c0_150] : memref<112x32xf32, #tpu.memory_space<vmem>>, vector<2x32xf32>
    %c0_151 = arith.constant 0 : index
    %c1280 = arith.constant 1280 : index
    %144 = vector.load %arg12[%c0_151, %c1280] : memref<2x1568xf32, #tpu.memory_space<vmem>>, vector<2x32xf32>
    tpu.vector_store %arg12[%c0_151, %c1280], %143 {strides = array<i32>} : memref<2x1568xf32, #tpu.memory_space<vmem>>, vector<2x32xf32>,
    %c82 = arith.constant 82 : index
    %c0_152 = arith.constant 0 : index
    %145 = vector.load %arg11[%c82, %c0_152] : memref<112x32xf32, #tpu.memory_space<vmem>>, vector<2x32xf32>
    %c0_153 = arith.constant 0 : index
    %c1312 = arith.constant 1312 : index
    %146 = vector.load %arg12[%c0_153, %c1312] : memref<2x1568xf32, #tpu.memory_space<vmem>>, vector<2x32xf32>
    tpu.vector_store %arg12[%c0_153, %c1312], %145 {strides = array<i32>} : memref<2x1568xf32, #tpu.memory_space<vmem>>, vector<2x32xf32>,
    %c84 = arith.constant 84 : index
    %c0_154 = arith.constant 0 : index
    %147 = vector.load %arg11[%c84, %c0_154] : memref<112x32xf32, #tpu.memory_space<vmem>>, vector<2x32xf32>
    %c0_155 = arith.constant 0 : index
    %c1344 = arith.constant 1344 : index
    %148 = vector.load %arg12[%c0_155, %c1344] : memref<2x1568xf32, #tpu.memory_space<vmem>>, vector<2x32xf32>
    tpu.vector_store %arg12[%c0_155, %c1344], %147 {strides = array<i32>} : memref<2x1568xf32, #tpu.memory_space<vmem>>, vector<2x32xf32>,
    %c86 = arith.constant 86 : index
    %c0_156 = arith.constant 0 : index
    %149 = vector.load %arg11[%c86, %c0_156] : memref<112x32xf32, #tpu.memory_space<vmem>>, vector<2x32xf32>
    %c0_157 = arith.constant 0 : index
    %c1376 = arith.constant 1376 : index
    %150 = vector.load %arg12[%c0_157, %c1376] : memref<2x1568xf32, #tpu.memory_space<vmem>>, vector<2x32xf32>
    tpu.vector_store %arg12[%c0_157, %c1376], %149 {strides = array<i32>} : memref<2x1568xf32, #tpu.memory_space<vmem>>, vector<2x32xf32>,
    %c88 = arith.constant 88 : index
    %c0_158 = arith.constant 0 : index
    %151 = vector.load %arg11[%c88, %c0_158] : memref<112x32xf32, #tpu.memory_space<vmem>>, vector<2x32xf32>
    %c0_159 = arith.constant 0 : index
    %c1408 = arith.constant 1408 : index
    %152 = vector.load %arg12[%c0_159, %c1408] : memref<2x1568xf32, #tpu.memory_space<vmem>>, vector<2x32xf32>
    tpu.vector_store %arg12[%c0_159, %c1408], %151 {strides = array<i32>} : memref<2x1568xf32, #tpu.memory_space<vmem>>, vector<2x32xf32>,
    %c90 = arith.constant 90 : index
    %c0_160 = arith.constant 0 : index
    %153 = vector.load %arg11[%c90, %c0_160] : memref<112x32xf32, #tpu.memory_space<vmem>>, vector<2x32xf32>
    %c0_161 = arith.constant 0 : index
    %c1440 = arith.constant 1440 : index
    %154 = vector.load %arg12[%c0_161, %c1440] : memref<2x1568xf32, #tpu.memory_space<vmem>>, vector<2x32xf32>
    tpu.vector_store %arg12[%c0_161, %c1440], %153 {strides = array<i32>} : memref<2x1568xf32, #tpu.memory_space<vmem>>, vector<2x32xf32>,
    %c92 = arith.constant 92 : index
    %c0_162 = arith.constant 0 : index
    %155 = vector.load %arg11[%c92, %c0_162] : memref<112x32xf32, #tpu.memory_space<vmem>>, vector<2x32xf32>
    %c0_163 = arith.constant 0 : index
    %c1472 = arith.constant 1472 : index
    %156 = vector.load %arg12[%c0_163, %c1472] : memref<2x1568xf32, #tpu.memory_space<vmem>>, vector<2x32xf32>
    tpu.vector_store %arg12[%c0_163, %c1472], %155 {strides = array<i32>} : memref<2x1568xf32, #tpu.memory_space<vmem>>, vector<2x32xf32>,
    %c94 = arith.constant 94 : index
    %c0_164 = arith.constant 0 : index
    %157 = vector.load %arg11[%c94, %c0_164] : memref<112x32xf32, #tpu.memory_space<vmem>>, vector<2x32xf32>
    %c0_165 = arith.constant 0 : index
    %c1504 = arith.constant 1504 : index
    %158 = vector.load %arg12[%c0_165, %c1504] : memref<2x1568xf32, #tpu.memory_space<vmem>>, vector<2x32xf32>
    tpu.vector_store %arg12[%c0_165, %c1504], %157 {strides = array<i32>} : memref<2x1568xf32, #tpu.memory_space<vmem>>, vector<2x32xf32>,
    %c96_166 = arith.constant 96 : index
    %c0_167 = arith.constant 0 : index
    %159 = vector.load %arg11[%c96_166, %c0_167] : memref<112x32xf32, #tpu.memory_space<vmem>>, vector<2x32xf32>
    %c0_168 = arith.constant 0 : index
    %c1536 = arith.constant 1536 : index
    %160 = vector.load %arg12[%c0_168, %c1536] : memref<2x1568xf32, #tpu.memory_space<vmem>>, vector<2x32xf32>
    tpu.vector_store %arg12[%c0_168, %c1536], %159 {strides = array<i32>} : memref<2x1568xf32, #tpu.memory_space<vmem>>, vector<2x32xf32>,
    %c0_169 = arith.constant 0 : index
    %c0_170 = arith.constant 0 : index
    %161 = vector.load %arg12[%c0_169, %c0_170] : memref<2x1568xf32, #tpu.memory_space<vmem>>, vector<2x1568xf32>
    %162 = arith.truncf %161 : vector<2x1568xf32> to vector<2x1568xbf16>
    %c0_171 = arith.constant 0 : index
    %c0_172 = arith.constant 0 : index
    %163 = vector.load %arg7[%c0_171, %c0_172] : memref<1568x64xbf16, #tpu.memory_space<vmem>>, vector<1568x64xbf16>
    %cst_173 = arith.constant dense<0.000000e+00> : vector<2x64xf32>
    %164 = tpu.matmul %162, %163, %cst_173 {dimension_numbers = #tpu.dot_dimension_numbers<[1], [0], [0], [1], [0, 0, 1, 1], [], []>} : vector<2x1568xbf16>, vector<1568x64xbf16>, vector<2x64xf32> -> vector<2x64xf32>
    %c0_174 = arith.constant 0 : index
    %c0_175 = arith.constant 0 : index
    %165 = vector.load %arg8[%c0_174, %c0_175] : memref<1x64xf32, #tpu.memory_space<vmem>>, vector<1x64xf32>
    %166 = vector.broadcast %165 : vector<1x64xf32> to vector<2x64xf32>
    %167 = arith.addf %164, %166 : vector<2x64xf32>
    %c0_176 = arith.constant 0 : index
    %c0_177 = arith.constant 0 : index
    %168 = vector.load %arg9[%c0_176, %c0_177] : memref<2x64xf32, #tpu.memory_space<vmem>>, vector<2x64xf32>
    tpu.vector_store %arg9[%c0_176, %c0_177], %167 {strides = array<i32>} : memref<2x64xf32, #tpu.memory_space<vmem>>, vector<2x64xf32>,
    return
  }
  func.func @transform_0(%arg0: i32) -> (i32, i32) {
    %c0_i32 = arith.constant 0 : i32
    %c0_i32_0 = arith.constant 0 : i32
    %c0_i32_1 = arith.constant 0 : i32
    return %c0_i32, %c0_i32_0 : i32, i32
  }
  func.func @transform_1(%arg0: i32) -> (i32, i32) {
    %c0_i32 = arith.constant 0 : i32
    %c0_i32_0 = arith.constant 0 : i32
    %c0_i32_1 = arith.constant 0 : i32
    return %c0_i32, %c0_i32_0 : i32, i32
  }
  func.func @transform_2(%arg0: i32) -> (i32, i32) {
    %c0_i32 = arith.constant 0 : i32
    %c0_i32_0 = arith.constant 0 : i32
    %c0_i32_1 = arith.constant 0 : i32
    return %c0_i32, %c0_i32_0 : i32, i32
  }
  func.func @transform_3(%arg0: i32) -> (i32, i32, i32) {
    %c0_i32 = arith.constant 0 : i32
    %c0_i32_0 = arith.constant 0 : i32
    %c0_i32_1 = arith.constant 0 : i32
    %c0_i32_2 = arith.constant 0 : i32
    return %c0_i32, %c0_i32_0, %c0_i32_1 : i32, i32, i32
  }
  func.func @transform_4(%arg0: i32) -> (i32, i32) {
    %c0_i32 = arith.constant 0 : i32
    %c0_i32_0 = arith.constant 0 : i32
    %c0_i32_1 = arith.constant 0 : i32
    return %c0_i32, %c0_i32_0 : i32, i32
  }
  func.func @transform_5(%arg0: i32) -> (i32, i32) {
    %c0_i32 = arith.constant 0 : i32
    %c0_i32_0 = arith.constant 0 : i32
    %c0_i32_1 = arith.constant 0 : i32
    return %c0_i32, %c0_i32_0 : i32, i32
  }
  func.func @transform_6(%arg0: i32) -> (i32, i32) {
    %c0_i32 = arith.constant 0 : i32
    %c0_i32_0 = arith.constant 0 : i32
    %c0_i32_1 = arith.constant 0 : i32
    return %c0_i32, %c0_i32_0 : i32, i32
  }
  func.func @transform_7(%arg0: i32) -> (i32, i32) {
    %c0_i32 = arith.constant 0 : i32
    %c0_i32_0 = arith.constant 0 : i32
    %c0_i32_1 = arith.constant 0 : i32
    return %c0_i32, %c0_i32_0 : i32, i32
  }
  func.func @transform_8(%arg0: i32) -> (i32, i32) {
    %c0_i32 = arith.constant 0 : i32
    %c0_i32_0 = arith.constant 0 : i32
    %c0_i32_1 = arith.constant 0 : i32
    return %c0_i32, %c0_i32_0 : i32, i32
  }
}

</mosaic_0001>

<llo_original>
// kernel: encoder_forward.1
$region0: #{encoder_forward.1}
  #allocation0 [shape = 'u32[]', space=smem, size = 0x4, offset = 0x4, fixed_abs, tag = 'smem constant byte address 0x4 - core index']
  #allocation1 [shape = 'u32[144,128]{1,0:T(1,128)}', space=vmem, size = 0x12000, scoped, tag = 'internal scratch']
  #allocation2 [shape = 'bf16[392,288]{1,0:T(8,128)(2,1)}', space=vmem, size = 0x49800, scoped, tag = 'scratch operand']
  #allocation3 [shape = 'f32[112,32]{1,0:T(8,128)}', space=vmem, size = 0xe000, scoped, tag = 'scratch operand']
  #allocation4 [shape = 'f32[2,1568]{1,0:T(2,128)}', space=vmem, size = 0x3400, scoped, tag = 'scratch operand']
  %s0 = inlined_call_operand.vmem [shape: f32[392,9], index: 0, kind: input, shape index: {}]
  %s1 = inlined_call_operand.vmem [shape: f32[9,16], index: 1, kind: input, shape index: {}]
  %s2 = inlined_call_operand.vmem [shape: f32[1,16], index: 2, kind: input, shape index: {}]
  %s3 = inlined_call_operand.vmem [shape: bf16[9,112,392], index: 3, kind: input, shape index: {}]
  %s4 = inlined_call_operand.vmem [shape: bf16[16,288], index: 4, kind: input, shape index: {}]
  %s5 = inlined_call_operand.vmem [shape: f32[1,32], index: 5, kind: input, shape index: {}]
  %s6 = inlined_call_operand.vmem [shape: bf16[1568,64], index: 6, kind: input, shape index: {}]
  %s7 = inlined_call_operand.vmem [shape: f32[1,64], index: 7, kind: input, shape index: {}]
  %s8 = inlined_call_operand.hbm [shape: f32[2,64], index: 8, kind: output, shape index: {}]
  %s9 = sld [smem:[#allocation0]]
  $region42: #{encoder_forward.1} parent=0
    _
  %s11 = ssub.s32 1, %s9
  %s12 = scalar_select 0, %s11, %s9
  $region1: #{encoder_forward.1} parent=0
    #allocation5 [shape = 'u8[1024]{0}', space=vmem, size = 0x400, scoped, tag = 'output window, operand 0, single buffered']
    #allocation6 [shape = 's32[1]{0}', space=sflag, size = 0x4, scoped, tag = 'scoped memory for encoder_forward.1']
    %13 = vsyncpa [#allocation6], 0
    // Predicated region
    $region2: #{encoder_forward.1} parent=1 // pred_check
      _
    $region3: #{encoder_forward.1} parent=1 // pred_check_branch
      %15 = sbr.rel (0) target = $region5
    $region4: #{encoder_forward.1} parent=1 // pred_region
      _
    $region5: #{encoder_forward.1} parent=1 // pred_fallthru
      _
    // Predicated region
    $region6: #{encoder_forward.1} parent=1 // pred_check
      _
    $region7: #{encoder_forward.1} parent=1 // pred_check_branch
      %17 = sbr.rel (0) target = $region9
    $region8: #{encoder_forward.1} parent=1 // pred_region
      _
    $region9: #{encoder_forward.1} parent=1 // pred_fallthru
      _
    // Predicated region
    $region10: #{encoder_forward.1} parent=1 // pred_check
      _
    $region11: #{encoder_forward.1} parent=1 // pred_check_branch
      %19 = sbr.rel (0) target = $region13
    $region12: #{encoder_forward.1} parent=1 // pred_region
      _
    $region13: #{encoder_forward.1} parent=1 // pred_fallthru
      _
    // Predicated region
    $region14: #{encoder_forward.1} parent=1 // pred_check
      _
    $region15: #{encoder_forward.1} parent=1 // pred_check_branch
      %21 = sbr.rel (0) target = $region17
    $region16: #{encoder_forward.1} parent=1 // pred_region
      _
    $region17: #{encoder_forward.1} parent=1 // pred_fallthru
      _
    // Predicated region
    $region18: #{encoder_forward.1} parent=1 // pred_check
      _
    $region19: #{encoder_forward.1} parent=1 // pred_check_branch
      %23 = sbr.rel (0) target = $region21
    $region20: #{encoder_forward.1} parent=1 // pred_region
      _
    $region21: #{encoder_forward.1} parent=1 // pred_fallthru
      _
    // Predicated region
    $region22: #{encoder_forward.1} parent=1 // pred_check
      _
    $region23: #{encoder_forward.1} parent=1 // pred_check_branch
      %25 = sbr.rel (0) target = $region25
    $region24: #{encoder_forward.1} parent=1 // pred_region
      _
    $region25: #{encoder_forward.1} parent=1 // pred_fallthru
      _
    // Predicated region
    $region26: #{encoder_forward.1} parent=1 // pred_check
      _
    $region27: #{encoder_forward.1} parent=1 // pred_check_branch
      %27 = sbr.rel (0) target = $region29
    $region28: #{encoder_forward.1} parent=1 // pred_region
      _
    $region29: #{encoder_forward.1} parent=1 // pred_fallthru
      _
    // Predicated region
    $region30: #{encoder_forward.1} parent=1 // pred_check
      _
    $region31: #{encoder_forward.1} parent=1 // pred_check_branch
      %29 = sbr.rel (0) target = $region33
    $region32: #{encoder_forward.1} parent=1 // pred_region
      _
    $region33: #{encoder_forward.1} parent=1 // pred_fallthru
      _
    %v31 = vld [vmem:[%s0] sm:$0xff]
    %v32 = vld [vmem:[%s0 + $0x8] sm:$0xff]
    %v33 = vld [vmem:[%s0 + $0x10] sm:$0xff]
    %v34 = vld [vmem:[%s0 + $0x18] sm:$0xff]
    %v35 = vld [vmem:[%s0 + $0x20] sm:$0xff]
    %v36 = vld [vmem:[%s0 + $0x28] sm:$0xff]
    %v37 = vld [vmem:[%s0 + $0x30] sm:$0xff]
    %v38 = vld [vmem:[%s0 + $0x38] sm:$0xff]
    %v39 = vld [vmem:[%s0 + $0x40] sm:$0xff]
    %v40 = vld [vmem:[%s0 + $0x48] sm:$0xff]
    %v41 = vld [vmem:[%s0 + $0x50] sm:$0xff]
    %v42 = vld [vmem:[%s0 + $0x58] sm:$0xff]
    %v43 = vld [vmem:[%s0 + $0x60] sm:$0xff]
    %v44 = vld [vmem:[%s0 + $0x68] sm:$0xff]
    %v45 = vld [vmem:[%s0 + $0x70] sm:$0xff]
    %v46 = vld [vmem:[%s0 + $0x78] sm:$0xff]
    %v47 = vld [vmem:[%s0 + $0x80] sm:$0xff]
    %v48 = vld [vmem:[%s0 + $0x88] sm:$0xff]
    %v49 = vld [vmem:[%s0 + $0x90] sm:$0xff]
    %v50 = vld [vmem:[%s0 + $0x98] sm:$0xff]
    %v51 = vld [vmem:[%s0 + $0xa0] sm:$0xff]
    %v52 = vld [vmem:[%s0 + $0xa8] sm:$0xff]
    %v53 = vld [vmem:[%s0 + $0xb0] sm:$0xff]
    %v54 = vld [vmem:[%s0 + $0xb8] sm:$0xff]
    %v55 = vld [vmem:[%s0 + $0xc0] sm:$0xff]
    %v56 = vld [vmem:[%s0 + $0xc8] sm:$0xff]
    %v57 = vld [vmem:[%s0 + $0xd0] sm:$0xff]
    %v58 = vld [vmem:[%s0 + $0xd8] sm:$0xff]
    %v59 = vld [vmem:[%s0 + $0xe0] sm:$0xff]
    %v60 = vld [vmem:[%s0 + $0xe8] sm:$0xff]
    %v61 = vld [vmem:[%s0 + $0xf0] sm:$0xff]
    %v62 = vld [vmem:[%s0 + $0xf8] sm:$0xff]
    %v63 = vld [vmem:[%s0 + $0x100] sm:$0xff]
    %v64 = vld [vmem:[%s0 + $0x108] sm:$0xff]
    %v65 = vld [vmem:[%s0 + $0x110] sm:$0xff]
    %v66 = vld [vmem:[%s0 + $0x118] sm:$0xff]
    %v67 = vld [vmem:[%s0 + $0x120] sm:$0xff]
    %v68 = vld [vmem:[%s0 + $0x128] sm:$0xff]
    %v69 = vld [vmem:[%s0 + $0x130] sm:$0xff]
    %v70 = vld [vmem:[%s0 + $0x138] sm:$0xff]
    %v71 = vld [vmem:[%s0 + $0x140] sm:$0xff]
    %v72 = vld [vmem:[%s0 + $0x148] sm:$0xff]
    %v73 = vld [vmem:[%s0 + $0x150] sm:$0xff]
    %v74 = vld [vmem:[%s0 + $0x158] sm:$0xff]
    %v75 = vld [vmem:[%s0 + $0x160] sm:$0xff]
    %v76 = vld [vmem:[%s0 + $0x168] sm:$0xff]
    %v77 = vld [vmem:[%s0 + $0x170] sm:$0xff]
    %v78 = vld [vmem:[%s0 + $0x178] sm:$0xff]
    %v79 = vld [vmem:[%s0 + $0x180] sm:$0xff]
    %v80 = vld [vmem:[%s1] sm:$0xff]
    %v81 = vld [vmem:[%s1 + $0x8] sm:$0x1]
    %v82 = vld [vmem:[%s2] sm:$0x1]
    %v84 = vlaneseq
    %v85 = vshrl.u32 %v84, 7
    %v86 = vsub.s32 0, %v85
    %v87 = vrot.slane %v82, %v86
    %vm89 = vcmask 72704
    %v91 = vsel %vm89, %v31, 0
    %v94 = vsel %vm89, %v32, 0
    %v97 = vsel %vm89, %v33, 0
    %v100 = vsel %vm89, %v34, 0
    %v103 = vsel %vm89, %v35, 0
    %v106 = vsel %vm89, %v36, 0
    %v109 = vsel %vm89, %v37, 0
    %v112 = vsel %vm89, %v38, 0
    %v115 = vsel %vm89, %v39, 0
    %v118 = vsel %vm89, %v40, 0
    %v121 = vsel %vm89, %v41, 0
    %v124 = vsel %vm89, %v42, 0
    %v127 = vsel %vm89, %v43, 0
    %v130 = vsel %vm89, %v44, 0
    %v133 = vsel %vm89, %v45, 0
    %v136 = vsel %vm89, %v46, 0
    %v139 = vsel %vm89, %v47, 0
    %v142 = vsel %vm89, %v48, 0
    %v145 = vsel %vm89, %v49, 0
    %v148 = vsel %vm89, %v50, 0
    %v151 = vsel %vm89, %v51, 0
    %v154 = vsel %vm89, %v52, 0
    %v157 = vsel %vm89, %v53, 0
    %v160 = vsel %vm89, %v54, 0
    %v163 = vsel %vm89, %v55, 0
    %v166 = vsel %vm89, %v56, 0
    %v169 = vsel %vm89, %v57, 0
    %v172 = vsel %vm89, %v58, 0
    %v175 = vsel %vm89, %v59, 0
    %v178 = vsel %vm89, %v60, 0
    %v181 = vsel %vm89, %v61, 0
    %v184 = vsel %vm89, %v62, 0
    %v187 = vsel %vm89, %v63, 0
    %v190 = vsel %vm89, %v64, 0
    %v193 = vsel %vm89, %v65, 0
    %v196 = vsel %vm89, %v66, 0
    %v199 = vsel %vm89, %v67, 0
    %v202 = vsel %vm89, %v68, 0
    %v205 = vsel %vm89, %v69, 0
    %v208 = vsel %vm89, %v70, 0
    %v211 = vsel %vm89, %v71, 0
    %v214 = vsel %vm89, %v72, 0
    %v217 = vsel %vm89, %v73, 0
    %v220 = vsel %vm89, %v74, 0
    %v223 = vsel %vm89, %v75, 0
    %v226 = vsel %vm89, %v76, 0
    %v229 = vsel %vm89, %v77, 0
    %v232 = vsel %vm89, %v78, 0
    %v235 = vsel %vm89, %v79, 0
    %vm237 = vcmask 1040384
    %v239 = vsel %vm237, %v81, 0
    %241 = vmatprep.subr.mxu0 0.0
    %242 = vmatpush1.msra.mxu0 0.0
    %243 = vmatprep.subr.mxu0 0.0
    %244 = vmatpush1.msra.mxu0 0.0
    %245 = vmatprep.subr.mxu0 0.0
    %246 = vmatpush1.msra.mxu0 0.0
    %247 = vmatprep.subr.mxu0 0.0
    %248 = vmatpush1.msra.mxu0 0.0
    %249 = vmatprep.subr.mxu0 0.0
    %250 = vmatpush1.msra.mxu0 0.0
    %251 = vmatprep.subr.mxu0 0.0
    %252 = vmatpush1.msra.mxu0 0.0
    %253 = vmatprep.subr.mxu0 0.0
    %254 = vmatpush1.msra.mxu0 0.0
    %255 = vmatprep.subr.mxu0 0.0
    %256 = vmatpush1.msra.mxu0 0.0
    %257 = vmatprep.subr.mxu0 0.0
    %258 = vmatpush1.msra.mxu0 0.0
    %259 = vmatprep.subr.mxu0 0.0
    %260 = vmatpush1.msra.mxu0 0.0
    %261 = vmatprep.subr.mxu0 0.0
    %262 = vmatpush1.msra.mxu0 0.0
    %263 = vmatprep.subr.mxu0 0.0
    %264 = vmatpush1.msra.mxu0 0.0
    %265 = vmatprep.subr.mxu0 0.0
    %266 = vmatpush1.msra.mxu0 0.0
    %267 = vmatprep.subr.mxu0 0.0
    %268 = vmatpush1.msra.mxu0 0.0
    %269 = vmatprep.subr.mxu0 0.0
    %270 = vmatpush1.msra.mxu0 %v239
    %271 = vmatprep.subr.mxu0 0.0
    %272 = vmatpush1.msra.mxu0 %v80
    %273 = vmatprep.subr.mxu0 0.0
    %274 = vmatpush2.msra.mxu0 0.0
    %275 = vmatprep.subr.mxu0 0.0
    %276 = vmatpush2.msra.mxu0 0.0
    %277 = vmatprep.subr.mxu0 0.0
    %278 = vmatpush2.msra.mxu0 0.0
    %279 = vmatprep.subr.mxu0 0.0
    %280 = vmatpush2.msra.mxu0 0.0
    %281 = vmatprep.subr.mxu0 0.0
    %282 = vmatpush2.msra.mxu0 0.0
    %283 = vmatprep.subr.mxu0 0.0
    %284 = vmatpush2.msra.mxu0 0.0
    %285 = vmatprep.subr.mxu0 0.0
    %286 = vmatpush2.msra.mxu0 0.0
    %287 = vmatprep.subr.mxu0 0.0
    %288 = vmatpush2.msra.mxu0 0.0
    %289 = vmatprep.subr.mxu0 0.0
    %290 = vmatpush2.msra.mxu0 0.0
    %291 = vmatprep.subr.mxu0 0.0
    %292 = vmatpush2.msra.mxu0 0.0
    %293 = vmatprep.subr.mxu0 0.0
    %294 = vmatpush2.msra.mxu0 0.0
    %295 = vmatprep.subr.mxu0 0.0
    %296 = vmatpush2.msra.mxu0 0.0
    %297 = vmatprep.subr.mxu0 0.0
    %298 = vmatpush2.msra.mxu0 0.0
    %299 = vmatprep.subr.mxu0 0.0
    %300 = vmatpush2.msra.mxu0 0.0
    %301 = vmatprep.subr.mxu0 0.0
    %302 = vmatpush2.msra.mxu0 0.0
    %303 = vmatprep.subr.mxu0 0.0
    %304 = vmatpush2.msra.mxu0 0.0
    %305 = vmatprep.mubr.f32.mxu0 0.0
    %306 = vmatmul.mubr.f32.gmra.mxu0 %v91
    %v307 = vpop.f32.mrf.mxu0
    %v308 = vadd.f32 %v87, %v307
    %v309 = vpop.f32.mrf.mxu0
    %310 = vmatprep.mubr.f32.mxu0 0.0
    %311 = vmatmul.mubr.f32.gmra.mxu0 %v94
    %v312 = vpop.f32.mrf.mxu0
    %v313 = vadd.f32 %v87, %v312
    %v314 = vpop.f32.mrf.mxu0
    %315 = vmatprep.mubr.f32.mxu0 0.0
    %316 = vmatmul.mubr.f32.gmra.mxu0 %v97
    %v317 = vpop.f32.mrf.mxu0
    %v318 = vadd.f32 %v87, %v317
    %v319 = vpop.f32.mrf.mxu0
    %320 = vmatprep.mubr.f32.mxu0 0.0
    %321 = vmatmul.mubr.f32.gmra.mxu0 %v100
    %v322 = vpop.f32.mrf.mxu0
    %v323 = vadd.f32 %v87, %v322
    %v324 = vpop.f32.mrf.mxu0
    %325 = vmatprep.mubr.f32.mxu0 0.0
    %326 = vmatmul.mubr.f32.gmra.mxu0 %v103
    %v327 = vpop.f32.mrf.mxu0
    %v328 = vadd.f32 %v87, %v327
    %v329 = vpop.f32.mrf.mxu0
    %330 = vmatprep.mubr.f32.mxu0 0.0
    %331 = vmatmul.mubr.f32.gmra.mxu0 %v106
    %v332 = vpop.f32.mrf.mxu0
    %v333 = vadd.f32 %v87, %v332
    %v334 = vpop.f32.mrf.mxu0
    %335 = vmatprep.mubr.f32.mxu0 0.0
    %336 = vmatmul.mubr.f32.gmra.mxu0 %v109
    %v337 = vpop.f32.mrf.mxu0
    %v338 = vadd.f32 %v87, %v337
    %v339 = vpop.f32.mrf.mxu0
    %340 = vmatprep.mubr.f32.mxu0 0.0
    %341 = vmatmul.mubr.f32.gmra.mxu0 %v112
    %v342 = vpop.f32.mrf.mxu0
    %v343 = vadd.f32 %v87, %v342
    %v344 = vpop.f32.mrf.mxu0
    %345 = vmatprep.mubr.f32.mxu0 0.0
    %346 = vmatmul.mubr.f32.gmra.mxu0 %v115
    %v347 = vpop.f32.mrf.mxu0
    %v348 = vadd.f32 %v87, %v347
    %v349 = vpop.f32.mrf.mxu0
    %350 = vmatprep.mubr.f32.mxu0 0.0
    %351 = vmatmul.mubr.f32.gmra.mxu0 %v118
    %v352 = vpop.f32.mrf.mxu0
    %v353 = vadd.f32 %v87, %v352
    %v354 = vpop.f32.mrf.mxu0
    %355 = vmatprep.mubr.f32.mxu0 0.0
    %356 = vmatmul.mubr.f32.gmra.mxu0 %v121
    %v357 = vpop.f32.mrf.mxu0
    %v358 = vadd.f32 %v87, %v357
    %v359 = vpop.f32.mrf.mxu0
    %360 = vmatprep.mubr.f32.mxu0 0.0
    %361 = vmatmul.mubr.f32.gmra.mxu0 %v124
    %v362 = vpop.f32.mrf.mxu0
    %v363 = vadd.f32 %v87, %v362
    %v364 = vpop.f32.mrf.mxu0
    %365 = vmatprep.mubr.f32.mxu0 0.0
    %366 = vmatmul.mubr.f32.gmra.mxu0 %v127
    %v367 = vpop.f32.mrf.mxu0
    %v368 = vadd.f32 %v87, %v367
    %v369 = vpop.f32.mrf.mxu0
    %370 = vmatprep.mubr.f32.mxu0 0.0
    %371 = vmatmul.mubr.f32.gmra.mxu0 %v130
    %v372 = vpop.f32.mrf.mxu0
    %v373 = vadd.f32 %v87, %v372
    %v374 = vpop.f32.mrf.mxu0
    %375 = vmatprep.mubr.f32.mxu0 0.0
    %376 = vmatmul.mubr.f32.gmra.mxu0 %v133
    %v377 = vpop.f32.mrf.mxu0
    %v378 = vadd.f32 %v87, %v377
    %v379 = vpop.f32.mrf.mxu0
    %380 = vmatprep.mubr.f32.mxu0 0.0
    %381 = vmatmul.mubr.f32.gmra.mxu0 %v136
    %v382 = vpop.f32.mrf.mxu0
    %v383 = vadd.f32 %v87, %v382
    %v384 = vpop.f32.mrf.mxu0
    %385 = vmatprep.mubr.f32.mxu0 0.0
    %386 = vmatmul.mubr.f32.gmra.mxu0 %v139
    %v387 = vpop.f32.mrf.mxu0
    %v388 = vadd.f32 %v87, %v387
    %v389 = vpop.f32.mrf.mxu0
    %390 = vmatprep.mubr.f32.mxu0 0.0
    %391 = vmatmul.mubr.f32.gmra.mxu0 %v142
    %v392 = vpop.f32.mrf.mxu0
    %v393 = vadd.f32 %v87, %v392
    %v394 = vpop.f32.mrf.mxu0
    %395 = vmatprep.mubr.f32.mxu0 0.0
    %396 = vmatmul.mubr.f32.gmra.mxu0 %v145
    %v397 = vpop.f32.mrf.mxu0
    %v398 = vadd.f32 %v87, %v397
    %v399 = vpop.f32.mrf.mxu0
    %400 = vmatprep.mubr.f32.mxu0 0.0
    %401 = vmatmul.mubr.f32.gmra.mxu0 %v148
    %v402 = vpop.f32.mrf.mxu0
    %v403 = vadd.f32 %v87, %v402
    %v404 = vpop.f32.mrf.mxu0
    %405 = vmatprep.mubr.f32.mxu0 0.0
    %406 = vmatmul.mubr.f32.gmra.mxu0 %v151
    %v407 = vpop.f32.mrf.mxu0
    %v408 = vadd.f32 %v87, %v407
    %v409 = vpop.f32.mrf.mxu0
    %410 = vmatprep.mubr.f32.mxu0 0.0
    %411 = vmatmul.mubr.f32.gmra.mxu0 %v154
    %v412 = vpop.f32.mrf.mxu0
    %v413 = vadd.f32 %v87, %v412
    %v414 = vpop.f32.mrf.mxu0
    %415 = vmatprep.mubr.f32.mxu0 0.0
    %416 = vmatmul.mubr.f32.gmra.mxu0 %v157
    %v417 = vpop.f32.mrf.mxu0
    %v418 = vadd.f32 %v87, %v417
    %v419 = vpop.f32.mrf.mxu0
    %420 = vmatprep.mubr.f32.mxu0 0.0
    %421 = vmatmul.mubr.f32.gmra.mxu0 %v160
    %v422 = vpop.f32.mrf.mxu0
    %v423 = vadd.f32 %v87, %v422
    %v424 = vpop.f32.mrf.mxu0
    %425 = vmatprep.mubr.f32.mxu0 0.0
    %426 = vmatmul.mubr.f32.gmra.mxu0 %v163
    %v427 = vpop.f32.mrf.mxu0
    %v428 = vadd.f32 %v87, %v427
    %v429 = vpop.f32.mrf.mxu0
    %430 = vmatprep.mubr.f32.mxu0 0.0
    %431 = vmatmul.mubr.f32.gmra.mxu0 %v166
    %v432 = vpop.f32.mrf.mxu0
    %v433 = vadd.f32 %v87, %v432
    %v434 = vpop.f32.mrf.mxu0
    %435 = vmatprep.mubr.f32.mxu0 0.0
    %436 = vmatmul.mubr.f32.gmra.mxu0 %v169
    %v437 = vpop.f32.mrf.mxu0
    %v438 = vadd.f32 %v87, %v437
    %v439 = vpop.f32.mrf.mxu0
    %440 = vmatprep.mubr.f32.mxu0 0.0
    %441 = vmatmul.mubr.f32.gmra.mxu0 %v172
    %v442 = vpop.f32.mrf.mxu0
    %v443 = vadd.f32 %v87, %v442
    %v444 = vpop.f32.mrf.mxu0
    %445 = vmatprep.mubr.f32.mxu0 0.0
    %446 = vmatmul.mubr.f32.gmra.mxu0 %v175
    %v447 = vpop.f32.mrf.mxu0
    %v448 = vadd.f32 %v87, %v447
    %v449 = vpop.f32.mrf.mxu0
    %450 = vmatprep.mubr.f32.mxu0 0.0
    %451 = vmatmul.mubr.f32.gmra.mxu0 %v178
    %v452 = vpop.f32.mrf.mxu0
    %v453 = vadd.f32 %v87, %v452
    %v454 = vpop.f32.mrf.mxu0
    %455 = vmatprep.mubr.f32.mxu0 0.0
    %456 = vmatmul.mubr.f32.gmra.mxu0 %v181
    %v457 = vpop.f32.mrf.mxu0
    %v458 = vadd.f32 %v87, %v457
    %v459 = vpop.f32.mrf.mxu0
    %460 = vmatprep.mubr.f32.mxu0 0.0
    %461 = vmatmul.mubr.f32.gmra.mxu0 %v184
    %v462 = vpop.f32.mrf.mxu0
    %v463 = vadd.f32 %v87, %v462
    %v464 = vpop.f32.mrf.mxu0
    %465 = vmatprep.mubr.f32.mxu0 0.0
    %466 = vmatmul.mubr.f32.gmra.mxu0 %v187
    %v467 = vpop.f32.mrf.mxu0
    %v468 = vadd.f32 %v87, %v467
    %v469 = vpop.f32.mrf.mxu0
    %470 = vmatprep.mubr.f32.mxu0 0.0
    %471 = vmatmul.mubr.f32.gmra.mxu0 %v190
    %v472 = vpop.f32.mrf.mxu0
    %v473 = vadd.f32 %v87, %v472
    %v474 = vpop.f32.mrf.mxu0
    %475 = vmatprep.mubr.f32.mxu0 0.0
    %476 = vmatmul.mubr.f32.gmra.mxu0 %v193
    %v477 = vpop.f32.mrf.mxu0
    %v478 = vadd.f32 %v87, %v477
    %v479 = vpop.f32.mrf.mxu0
    %480 = vmatprep.mubr.f32.mxu0 0.0
    %481 = vmatmul.mubr.f32.gmra.mxu0 %v196
    %v482 = vpop.f32.mrf.mxu0
    %v483 = vadd.f32 %v87, %v482
    %v484 = vpop.f32.mrf.mxu0
    %485 = vmatprep.mubr.f32.mxu0 0.0
    %486 = vmatmul.mubr.f32.gmra.mxu0 %v199
    %v487 = vpop.f32.mrf.mxu0
    %v488 = vadd.f32 %v87, %v487
    %v489 = vpop.f32.mrf.mxu0
    %490 = vmatprep.mubr.f32.mxu0 0.0
    %491 = vmatmul.mubr.f32.gmra.mxu0 %v202
    %v492 = vpop.f32.mrf.mxu0
    %v493 = vadd.f32 %v87, %v492
    %v494 = vpop.f32.mrf.mxu0
    %495 = vmatprep.mubr.f32.mxu0 0.0
    %496 = vmatmul.mubr.f32.gmra.mxu0 %v205
    %v497 = vpop.f32.mrf.mxu0
    %v498 = vadd.f32 %v87, %v497
    %v499 = vpop.f32.mrf.mxu0
    %500 = vmatprep.mubr.f32.mxu0 0.0
    %501 = vmatmul.mubr.f32.gmra.mxu0 %v208
    %v502 = vpop.f32.mrf.mxu0
    %v503 = vadd.f32 %v87, %v502
    %v504 = vpop.f32.mrf.mxu0
    %505 = vmatprep.mubr.f32.mxu0 0.0
    %506 = vmatmul.mubr.f32.gmra.mxu0 %v211
    %v507 = vpop.f32.mrf.mxu0
    %v508 = vadd.f32 %v87, %v507
    %v509 = vpop.f32.mrf.mxu0
    %510 = vmatprep.mubr.f32.mxu0 0.0
    %511 = vmatmul.mubr.f32.gmra.mxu0 %v214
    %v512 = vpop.f32.mrf.mxu0
    %v513 = vadd.f32 %v87, %v512
    %v514 = vpop.f32.mrf.mxu0
    %515 = vmatprep.mubr.f32.mxu0 0.0
    %516 = vmatmul.mubr.f32.gmra.mxu0 %v217
    %v517 = vpop.f32.mrf.mxu0
    %v518 = vadd.f32 %v87, %v517
    %v519 = vpop.f32.mrf.mxu0
    %520 = vmatprep.mubr.f32.mxu0 0.0
    %521 = vmatmul.mubr.f32.gmra.mxu0 %v220
    %v522 = vpop.f32.mrf.mxu0
    %v523 = vadd.f32 %v87, %v522
    %v524 = vpop.f32.mrf.mxu0
    %525 = vmatprep.mubr.f32.mxu0 0.0
    %526 = vmatmul.mubr.f32.gmra.mxu0 %v223
    %v527 = vpop.f32.mrf.mxu0
    %v528 = vadd.f32 %v87, %v527
    %v529 = vpop.f32.mrf.mxu0
    %530 = vmatprep.mubr.f32.mxu0 0.0
    %531 = vmatmul.mubr.f32.gmra.mxu0 %v226
    %v532 = vpop.f32.mrf.mxu0
    %v533 = vadd.f32 %v87, %v532
    %v534 = vpop.f32.mrf.mxu0
    %535 = vmatprep.mubr.f32.mxu0 0.0
    %536 = vmatmul.mubr.f32.gmra.mxu0 %v229
    %v537 = vpop.f32.mrf.mxu0
    %v538 = vadd.f32 %v87, %v537
    %v539 = vpop.f32.mrf.mxu0
    %540 = vmatprep.mubr.f32.mxu0 0.0
    %541 = vmatmul.mubr.f32.gmra.mxu0 %v232
    %v542 = vpop.f32.mrf.mxu0
    %v543 = vadd.f32 %v87, %v542
    %v544 = vpop.f32.mrf.mxu0
    %545 = vmatprep.mubr.f32.mxu0 0.0
    %546 = vmatmul.mubr.f32.gmra.mxu0 %v235
    %v547 = vpop.f32.mrf.mxu0
    %v548 = vadd.f32 %v87, %v547
    %v549 = vpop.f32.mrf.mxu0
    %550 = vdwg.mxu0
    %v551 = vmax.f32 %v308, 0.0
    %v552 = vmax.f32 %v313, 0.0
    %v553 = vmax.f32 %v318, 0.0
    %v554 = vmax.f32 %v323, 0.0
    %v555 = vmax.f32 %v328, 0.0
    %v556 = vmax.f32 %v333, 0.0
    %v557 = vmax.f32 %v338, 0.0
    %v558 = vmax.f32 %v343, 0.0
    %v559 = vmax.f32 %v348, 0.0
    %v560 = vmax.f32 %v353, 0.0
    %v561 = vmax.f32 %v358, 0.0
    %v562 = vmax.f32 %v363, 0.0
    %v563 = vmax.f32 %v368, 0.0
    %v564 = vmax.f32 %v373, 0.0
    %v565 = vmax.f32 %v378, 0.0
    %v566 = vmax.f32 %v383, 0.0
    %v567 = vmax.f32 %v388, 0.0
    %v568 = vmax.f32 %v393, 0.0
    %v569 = vmax.f32 %v398, 0.0
    %v570 = vmax.f32 %v403, 0.0
    %v571 = vmax.f32 %v408, 0.0
    %v572 = vmax.f32 %v413, 0.0
    %v573 = vmax.f32 %v418, 0.0
    %v574 = vmax.f32 %v423, 0.0
    %v575 = vmax.f32 %v428, 0.0
    %v576 = vmax.f32 %v433, 0.0
    %v577 = vmax.f32 %v438, 0.0
    %v578 = vmax.f32 %v443, 0.0
    %v579 = vmax.f32 %v448, 0.0
    %v580 = vmax.f32 %v453, 0.0
    %v581 = vmax.f32 %v458, 0.0
    %v582 = vmax.f32 %v463, 0.0
    %v583 = vmax.f32 %v468, 0.0
    %v584 = vmax.f32 %v473, 0.0
    %v585 = vmax.f32 %v478, 0.0
    %v586 = vmax.f32 %v483, 0.0
    %v587 = vmax.f32 %v488, 0.0
    %v588 = vmax.f32 %v493, 0.0
    %v589 = vmax.f32 %v498, 0.0
    %v590 = vmax.f32 %v503, 0.0
    %v591 = vmax.f32 %v508, 0.0
    %v592 = vmax.f32 %v513, 0.0
    %v593 = vmax.f32 %v518, 0.0
    %v594 = vmax.f32 %v523, 0.0
    %v595 = vmax.f32 %v528, 0.0
    %v596 = vmax.f32 %v533, 0.0
    %v597 = vmax.f32 %v538, 0.0
    %v598 = vmax.f32 %v543, 0.0
    %v599 = vmax.f32 %v548, 0.0
    %v600 = vpack.c.bf16 %v552, %v551
    %v601 = vpack.c.bf16 %v554, %v553
    %v602 = vpack.c.bf16 %v556, %v555
    %v603 = vpack.c.bf16 %v558, %v557
    %v604 = vpack.c.bf16 %v560, %v559
    %v605 = vpack.c.bf16 %v562, %v561
    %v606 = vpack.c.bf16 %v564, %v563
    %v607 = vpack.c.bf16 %v566, %v565
    %v608 = vpack.c.bf16 %v568, %v567
    %v609 = vpack.c.bf16 %v570, %v569
    %v610 = vpack.c.bf16 %v572, %v571
    %v611 = vpack.c.bf16 %v574, %v573
    %v612 = vpack.c.bf16 %v576, %v575
    %v613 = vpack.c.bf16 %v578, %v577
    %v614 = vpack.c.bf16 %v580, %v579
    %v615 = vpack.c.bf16 %v582, %v581
    %v616 = vpack.c.bf16 %v584, %v583
    %v617 = vpack.c.bf16 %v586, %v585
    %v618 = vpack.c.bf16 %v588, %v587
    %v619 = vpack.c.bf16 %v590, %v589
    %v620 = vpack.c.bf16 %v592, %v591
    %v621 = vpack.c.bf16 %v594, %v593
    %v622 = vpack.c.bf16 %v596, %v595
    %v623 = vpack.c.bf16 %v598, %v597
    %v624 = vpack.c.bf16 %v599, %v599
    %v625 = vld [vmem:[%s4] sm:$0xff]
    %v626 = vld [vmem:[%s4 + $0x8] sm:$0xf]
    %v627 = vld [vmem:[%s4 + $0xc] sm:$0xff]
    %v628 = vld [vmem:[%s4 + $0x14] sm:$0xf]
    %v633 = vunpack.c.l.b16 %v625
    %v634 = vunpack.c.h.b16 %v625
    %v635 = vunpack.c.l.b16 %v626
    %v636 = vunpack.c.l.b16 %v627
    %v637 = vunpack.c.h.b16 %v627
    %v638 = vunpack.c.l.b16 %v628
    %v639 = vpack.c.b16 %v636, %v633
    %v640 = vpack.c.b16 %v637, %v634
    %v641 = vpack.c.b16 %v638, %v635
    %vm645 = vcmask 130048
    %v647 = vsel %vm645, %v600, 0
    %v650 = vsel %vm645, %v601, 0
    %v653 = vsel %vm645, %v602, 0
    %v656 = vsel %vm645, %v603, 0
    %v659 = vsel %vm645, %v604, 0
    %v662 = vsel %vm645, %v605, 0
    %v665 = vsel %vm645, %v606, 0
    %v668 = vsel %vm645, %v607, 0
    %v671 = vsel %vm645, %v608, 0
    %v674 = vsel %vm645, %v609, 0
    %v677 = vsel %vm645, %v610, 0
    %v680 = vsel %vm645, %v611, 0
    %v683 = vsel %vm645, %v612, 0
    %v686 = vsel %vm645, %v613, 0
    %v689 = vsel %vm645, %v614, 0
    %v692 = vsel %vm645, %v615, 0
    %v695 = vsel %vm645, %v616, 0
    %v698 = vsel %vm645, %v617, 0
    %v701 = vsel %vm645, %v618, 0
    %v704 = vsel %vm645, %v619, 0
    %v707 = vsel %vm645, %v620, 0
    %v710 = vsel %vm645, %v621, 0
    %v713 = vsel %vm645, %v622, 0
    %v716 = vsel %vm645, %v623, 0
    %v719 = vsel %vm645, %v624, 0
    %721 = vmatprep.subr.bf16.mxu0 0
    %722 = vmatpush1.bf16.msra.mxu0 0
    %723 = vmatprep.subr.bf16.mxu0 0
    %724 = vmatpush1.bf16.msra.mxu0 0
    %725 = vmatprep.subr.bf16.mxu0 0
    %726 = vmatpush1.bf16.msra.mxu0 0
    %727 = vmatprep.subr.bf16.mxu0 0
    %728 = vmatpush1.bf16.msra.mxu0 0
    %729 = vmatprep.subr.bf16.mxu0 0
    %730 = vmatpush1.bf16.msra.mxu0 0
    %731 = vmatprep.subr.bf16.mxu0 0
    %732 = vmatpush1.bf16.msra.mxu0 0
    %733 = vmatprep.subr.bf16.mxu0 0
    %734 = vmatpush1.bf16.msra.mxu0 0
    %735 = vmatprep.subr.bf16.mxu0 %v640
    %736 = vmatpush1.bf16.msra.mxu0 %v639
    %737 = vmatprep.subr.bf16.mxu0 0
    %738 = vmatpush2.bf16.msra.mxu0 0
    %739 = vmatprep.subr.bf16.mxu0 0
    %740 = vmatpush2.bf16.msra.mxu0 0
    %741 = vmatprep.subr.bf16.mxu0 0
    %742 = vmatpush2.bf16.msra.mxu0 0
    %743 = vmatprep.subr.bf16.mxu0 0
    %744 = vmatpush2.bf16.msra.mxu0 0
    %745 = vmatprep.subr.bf16.mxu0 0
    %746 = vmatpush2.bf16.msra.mxu0 0
    %747 = vmatprep.subr.bf16.mxu0 0
    %748 = vmatpush2.bf16.msra.mxu0 0
    %749 = vmatprep.subr.bf16.mxu0 0
    %750 = vmatpush2.bf16.msra.mxu0 0
    %751 = vmatprep.subr.bf16.mxu0 0
    %752 = vmatpush2.bf16.msra.mxu0 0
    %753 = vmatprep.mubr.bf16.mxu0 0
    %754 = vmatmul.mubr.bf16.gmra.mxu0 %v647
    %v755 = vpop.f32.mrf.mxu0
    %v756 = vadd.f32 0.0, %v755
    %v757 = vpop.f32.mrf.mxu0
    %v758 = vadd.f32 0.0, %v757
    %v759 = vpop.f32.mrf.mxu0
    %v760 = vadd.f32 0.0, %v759
    %v761 = vpop.f32.mrf.mxu0
    %v762 = vadd.f32 0.0, %v761
    %763 = vmatprep.mubr.bf16.mxu0 0
    %764 = vmatmul.mubr.bf16.gmra.mxu0 %v650
    %v765 = vpop.f32.mrf.mxu0
    %v766 = vadd.f32 0.0, %v765
    %v767 = vpop.f32.mrf.mxu0
    %v768 = vadd.f32 0.0, %v767
    %v769 = vpop.f32.mrf.mxu0
    %v770 = vadd.f32 0.0, %v769
    %v771 = vpop.f32.mrf.mxu0
    %v772 = vadd.f32 0.0, %v771
    %773 = vmatprep.mubr.bf16.mxu0 0
    %774 = vmatmul.mubr.bf16.gmra.mxu0 %v653
    %v775 = vpop.f32.mrf.mxu0
    %v776 = vadd.f32 0.0, %v775
    %v777 = vpop.f32.mrf.mxu0
    %v778 = vadd.f32 0.0, %v777
    %v779 = vpop.f32.mrf.mxu0
    %v780 = vadd.f32 0.0, %v779
    %v781 = vpop.f32.mrf.mxu0
    %v782 = vadd.f32 0.0, %v781
    %783 = vmatprep.mubr.bf16.mxu0 0
    %784 = vmatmul.mubr.bf16.gmra.mxu0 %v656
    %v785 = vpop.f32.mrf.mxu0
    %v786 = vadd.f32 0.0, %v785
    %v787 = vpop.f32.mrf.mxu0
    %v788 = vadd.f32 0.0, %v787
    %v789 = vpop.f32.mrf.mxu0
    %v790 = vadd.f32 0.0, %v789
    %v791 = vpop.f32.mrf.mxu0
    %v792 = vadd.f32 0.0, %v791
    %793 = vmatprep.mubr.bf16.mxu0 0
    %794 = vmatmul.mubr.bf16.gmra.mxu0 %v659
    %v795 = vpop.f32.mrf.mxu0
    %v796 = vadd.f32 0.0, %v795
    %v797 = vpop.f32.mrf.mxu0
    %v798 = vadd.f32 0.0, %v797
    %v799 = vpop.f32.mrf.mxu0
    %v800 = vadd.f32 0.0, %v799
    %v801 = vpop.f32.mrf.mxu0
    %v802 = vadd.f32 0.0, %v801
    %803 = vmatprep.mubr.bf16.mxu0 0
    %804 = vmatmul.mubr.bf16.gmra.mxu0 %v662
    %v805 = vpop.f32.mrf.mxu0
    %v806 = vadd.f32 0.0, %v805
    %v807 = vpop.f32.mrf.mxu0
    %v808 = vadd.f32 0.0, %v807
    %v809 = vpop.f32.mrf.mxu0
    %v810 = vadd.f32 0.0, %v809
    %v811 = vpop.f32.mrf.mxu0
    %v812 = vadd.f32 0.0, %v811
    %813 = vmatprep.mubr.bf16.mxu0 0
    %814 = vmatmul.mubr.bf16.gmra.mxu0 %v665
    %v815 = vpop.f32.mrf.mxu0
    %v816 = vadd.f32 0.0, %v815
    %v817 = vpop.f32.mrf.mxu0
    %v818 = vadd.f32 0.0, %v817
    %v819 = vpop.f32.mrf.mxu0
    %v820 = vadd.f32 0.0, %v819
    %v821 = vpop.f32.mrf.mxu0
    %v822 = vadd.f32 0.0, %v821
    %823 = vmatprep.mubr.bf16.mxu0 0
    %824 = vmatmul.mubr.bf16.gmra.mxu0 %v668
    %v825 = vpop.f32.mrf.mxu0
    %v826 = vadd.f32 0.0, %v825
    %v827 = vpop.f32.mrf.mxu0
    %v828 = vadd.f32 0.0, %v827
    %v829 = vpop.f32.mrf.mxu0
    %v830 = vadd.f32 0.0, %v829
    %v831 = vpop.f32.mrf.mxu0
    %v832 = vadd.f32 0.0, %v831
    %833 = vmatprep.mubr.bf16.mxu0 0
    %834 = vmatmul.mubr.bf16.gmra.mxu0 %v671
    %v835 = vpop.f32.mrf.mxu0
    %v836 = vadd.f32 0.0, %v835
    %v837 = vpop.f32.mrf.mxu0
    %v838 = vadd.f32 0.0, %v837
    %v839 = vpop.f32.mrf.mxu0
    %v840 = vadd.f32 0.0, %v839
    %v841 = vpop.f32.mrf.mxu0
    %v842 = vadd.f32 0.0, %v841
    %843 = vmatprep.mubr.bf16.mxu0 0
    %844 = vmatmul.mubr.bf16.gmra.mxu0 %v674
    %v845 = vpop.f32.mrf.mxu0
    %v846 = vadd.f32 0.0, %v845
    %v847 = vpop.f32.mrf.mxu0
    %v848 = vadd.f32 0.0, %v847
    %v849 = vpop.f32.mrf.mxu0
    %v850 = vadd.f32 0.0, %v849
    %v851 = vpop.f32.mrf.mxu0
    %v852 = vadd.f32 0.0, %v851
    %853 = vmatprep.mubr.bf16.mxu0 0
    %854 = vmatmul.mubr.bf16.gmra.mxu0 %v677
    %v855 = vpop.f32.mrf.mxu0
    %v856 = vadd.f32 0.0, %v855
    %v857 = vpop.f32.mrf.mxu0
    %v858 = vadd.f32 0.0, %v857
    %v859 = vpop.f32.mrf.mxu0
    %v860 = vadd.f32 0.0, %v859
    %v861 = vpop.f32.mrf.mxu0
    %v862 = vadd.f32 0.0, %v861
    %863 = vmatprep.mubr.bf16.mxu0 0
    %864 = vmatmul.mubr.bf16.gmra.mxu0 %v680
    %v865 = vpop.f32.mrf.mxu0
    %v866 = vadd.f32 0.0, %v865
    %v867 = vpop.f32.mrf.mxu0
    %v868 = vadd.f32 0.0, %v867
    %v869 = vpop.f32.mrf.mxu0
    %v870 = vadd.f32 0.0, %v869
    %v871 = vpop.f32.mrf.mxu0
    %v872 = vadd.f32 0.0, %v871
    %873 = vmatprep.mubr.bf16.mxu0 0
    %874 = vmatmul.mubr.bf16.gmra.mxu0 %v683
    %v875 = vpop.f32.mrf.mxu0
    %v876 = vadd.f32 0.0, %v875
    %v877 = vpop.f32.mrf.mxu0
    %v878 = vadd.f32 0.0, %v877
    %v879 = vpop.f32.mrf.mxu0
    %v880 = vadd.f32 0.0, %v879
    %v881 = vpop.f32.mrf.mxu0
    %v882 = vadd.f32 0.0, %v881
    %883 = vmatprep.mubr.bf16.mxu0 0
    %884 = vmatmul.mubr.bf16.gmra.mxu0 %v686
    %v885 = vpop.f32.mrf.mxu0
    %v886 = vadd.f32 0.0, %v885
    %v887 = vpop.f32.mrf.mxu0
    %v888 = vadd.f32 0.0, %v887
    %v889 = vpop.f32.mrf.mxu0
    %v890 = vadd.f32 0.0, %v889
    %v891 = vpop.f32.mrf.mxu0
    %v892 = vadd.f32 0.0, %v891
    %893 = vmatprep.mubr.bf16.mxu0 0
    %894 = vmatmul.mubr.bf16.gmra.mxu0 %v689
    %v895 = vpop.f32.mrf.mxu0
    %v896 = vadd.f32 0.0, %v895
    %v897 = vpop.f32.mrf.mxu0
    %v898 = vadd.f32 0.0, %v897
    %v899 = vpop.f32.mrf.mxu0
    %v900 = vadd.f32 0.0, %v899
    %v901 = vpop.f32.mrf.mxu0
    %v902 = vadd.f32 0.0, %v901
    %903 = vmatprep.mubr.bf16.mxu0 0
    %904 = vmatmul.mubr.bf16.gmra.mxu0 %v692
    %v905 = vpop.f32.mrf.mxu0
    %v906 = vadd.f32 0.0, %v905
    %v907 = vpop.f32.mrf.mxu0
    %v908 = vadd.f32 0.0, %v907
    %v909 = vpop.f32.mrf.mxu0
    %v910 = vadd.f32 0.0, %v909
    %v911 = vpop.f32.mrf.mxu0
    %v912 = vadd.f32 0.0, %v911
    %913 = vmatprep.mubr.bf16.mxu0 0
    %914 = vmatmul.mubr.bf16.gmra.mxu0 %v695
    %v915 = vpop.f32.mrf.mxu0
    %v916 = vadd.f32 0.0, %v915
    %v917 = vpop.f32.mrf.mxu0
    %v918 = vadd.f32 0.0, %v917
    %v919 = vpop.f32.mrf.mxu0
    %v920 = vadd.f32 0.0, %v919
    %v921 = vpop.f32.mrf.mxu0
    %v922 = vadd.f32 0.0, %v921
    %923 = vmatprep.mubr.bf16.mxu0 0
    %924 = vmatmul.mubr.bf16.gmra.mxu0 %v698
    %v925 = vpop.f32.mrf.mxu0
    %v926 = vadd.f32 0.0, %v925
    %v927 = vpop.f32.mrf.mxu0
    %v928 = vadd.f32 0.0, %v927
    %v929 = vpop.f32.mrf.mxu0
    %v930 = vadd.f32 0.0, %v929
    %v931 = vpop.f32.mrf.mxu0
    %v932 = vadd.f32 0.0, %v931
    %933 = vmatprep.mubr.bf16.mxu0 0
    %934 = vmatmul.mubr.bf16.gmra.mxu0 %v701
    %v935 = vpop.f32.mrf.mxu0
    %v936 = vadd.f32 0.0, %v935
    %v937 = vpop.f32.mrf.mxu0
    %v938 = vadd.f32 0.0, %v937
    %v939 = vpop.f32.mrf.mxu0
    %v940 = vadd.f32 0.0, %v939
    %v941 = vpop.f32.mrf.mxu0
    %v942 = vadd.f32 0.0, %v941
    %943 = vmatprep.mubr.bf16.mxu0 0
    %944 = vmatmul.mubr.bf16.gmra.mxu0 %v704
    %v945 = vpop.f32.mrf.mxu0
    %v946 = vadd.f32 0.0, %v945
    %v947 = vpop.f32.mrf.mxu0
    %v948 = vadd.f32 0.0, %v947
    %v949 = vpop.f32.mrf.mxu0
    %v950 = vadd.f32 0.0, %v949
    %v951 = vpop.f32.mrf.mxu0
    %v952 = vadd.f32 0.0, %v951
    %953 = vmatprep.mubr.bf16.mxu0 0
    %954 = vmatmul.mubr.bf16.gmra.mxu0 %v707
    %v955 = vpop.f32.mrf.mxu0
    %v956 = vadd.f32 0.0, %v955
    %v957 = vpop.f32.mrf.mxu0
    %v958 = vadd.f32 0.0, %v957
    %v959 = vpop.f32.mrf.mxu0
    %v960 = vadd.f32 0.0, %v959
    %v961 = vpop.f32.mrf.mxu0
    %v962 = vadd.f32 0.0, %v961
    %963 = vmatprep.mubr.bf16.mxu0 0
    %964 = vmatmul.mubr.bf16.gmra.mxu0 %v710
    %v965 = vpop.f32.mrf.mxu0
    %v966 = vadd.f32 0.0, %v965
    %v967 = vpop.f32.mrf.mxu0
    %v968 = vadd.f32 0.0, %v967
    %v969 = vpop.f32.mrf.mxu0
    %v970 = vadd.f32 0.0, %v969
    %v971 = vpop.f32.mrf.mxu0
    %v972 = vadd.f32 0.0, %v971
    %973 = vmatprep.mubr.bf16.mxu0 0
    %974 = vmatmul.mubr.bf16.gmra.mxu0 %v713
    %v975 = vpop.f32.mrf.mxu0
    %v976 = vadd.f32 0.0, %v975
    %v977 = vpop.f32.mrf.mxu0
    %v978 = vadd.f32 0.0, %v977
    %v979 = vpop.f32.mrf.mxu0
    %v980 = vadd.f32 0.0, %v979
    %v981 = vpop.f32.mrf.mxu0
    %v982 = vadd.f32 0.0, %v981
    %983 = vmatprep.mubr.bf16.mxu0 0
    %984 = vmatmul.mubr.bf16.gmra.mxu0 %v716
    %v985 = vpop.f32.mrf.mxu0
    %v986 = vadd.f32 0.0, %v985
    %v987 = vpop.f32.mrf.mxu0
    %v988 = vadd.f32 0.0, %v987
    %v989 = vpop.f32.mrf.mxu0
    %v990 = vadd.f32 0.0, %v989
    %v991 = vpop.f32.mrf.mxu0
    %v992 = vadd.f32 0.0, %v991
    %993 = vmatprep.mubr.bf16.mxu0 0
    %994 = vmatmul.mubr.bf16.gmra.mxu0 %v719
    %v995 = vpop.f32.mrf.mxu0
    %v996 = vadd.f32 0.0, %v995
    %v997 = vpop.f32.mrf.mxu0
    %v998 = vadd.f32 0.0, %v997
    %v999 = vpop.f32.mrf.mxu0
    %v1000 = vpop.f32.mrf.mxu0
    %1001 = vdwg.mxu0
    %1002 = vmatprep.subr.bf16.mxu0 0
    %1003 = vmatpush1.bf16.msra.mxu0 0
    %1004 = vmatprep.subr.bf16.mxu0 0
    %1005 = vmatpush1.bf16.msra.mxu0 0
    %1006 = vmatprep.subr.bf16.mxu0 0
    %1007 = vmatpush1.bf16.msra.mxu0 0
    %1008 = vmatprep.subr.bf16.mxu0 0
    %1009 = vmatpush1.bf16.msra.mxu0 0
    %1010 = vmatprep.subr.bf16.mxu0 0
    %1011 = vmatpush1.bf16.msra.mxu0 0
    %1012 = vmatprep.subr.bf16.mxu0 0
    %1013 = vmatpush1.bf16.msra.mxu0 0
    %1014 = vmatprep.subr.bf16.mxu0 0
    %1015 = vmatpush1.bf16.msra.mxu0 0
    %1016 = vmatprep.subr.bf16.mxu0 0
    %1017 = vmatpush1.bf16.msra.mxu0 %v641
    %1018 = vmatprep.subr.bf16.mxu0 0
    %1019 = vmatpush2.bf16.msra.mxu0 0
    %1020 = vmatprep.subr.bf16.mxu0 0
    %1021 = vmatpush2.bf16.msra.mxu0 0
    %1022 = vmatprep.subr.bf16.mxu0 0
    %1023 = vmatpush2.bf16.msra.mxu0 0
    %1024 = vmatprep.subr.bf16.mxu0 0
    %1025 = vmatpush2.bf16.msra.mxu0 0
    %1026 = vmatprep.subr.bf16.mxu0 0
    %1027 = vmatpush2.bf16.msra.mxu0 0
    %1028 = vmatprep.subr.bf16.mxu0 0
    %1029 = vmatpush2.bf16.msra.mxu0 0
    %1030 = vmatprep.subr.bf16.mxu0 0
    %1031 = vmatpush2.bf16.msra.mxu0 0
    %1032 = vmatprep.subr.bf16.mxu0 0
    %1033 = vmatpush2.bf16.msra.mxu0 0
    %1034 = vmatprep.mubr.bf16.mxu0 0
    %1035 = vmatmul.mubr.bf16.gmra.mxu0 %v647
    %v1036 = vpop.f32.mrf.mxu0
    %v1037 = vadd.f32 0.0, %v1036
    %v1038 = vpop.f32.mrf.mxu0
    %v1039 = vpop.f32.mrf.mxu0
    %v1040 = vadd.f32 0.0, %v1039
    %v1041 = vpop.f32.mrf.mxu0
    %1042 = vmatprep.mubr.bf16.mxu0 0
    %1043 = vmatmul.mubr.bf16.gmra.mxu0 %v650
    %v1044 = vpop.f32.mrf.mxu0
    %v1045 = vadd.f32 0.0, %v1044
    %v1046 = vpop.f32.mrf.mxu0
    %v1047 = vpop.f32.mrf.mxu0
    %v1048 = vadd.f32 0.0, %v1047
    %v1049 = vpop.f32.mrf.mxu0
    %1050 = vmatprep.mubr.bf16.mxu0 0
    %1051 = vmatmul.mubr.bf16.gmra.mxu0 %v653
    %v1052 = vpop.f32.mrf.mxu0
    %v1053 = vadd.f32 0.0, %v1052
    %v1054 = vpop.f32.mrf.mxu0
    %v1055 = vpop.f32.mrf.mxu0
    %v1056 = vadd.f32 0.0, %v1055
    %v1057 = vpop.f32.mrf.mxu0
    %1058 = vmatprep.mubr.bf16.mxu0 0
    %1059 = vmatmul.mubr.bf16.gmra.mxu0 %v656
    %v1060 = vpop.f32.mrf.mxu0
    %v1061 = vadd.f32 0.0, %v1060
    %v1062 = vpop.f32.mrf.mxu0
    %v1063 = vpop.f32.mrf.mxu0
    %v1064 = vadd.f32 0.0, %v1063
    %v1065 = vpop.f32.mrf.mxu0
    %1066 = vmatprep.mubr.bf16.mxu0 0
    %1067 = vmatmul.mubr.bf16.gmra.mxu0 %v659
    %v1068 = vpop.f32.mrf.mxu0
    %v1069 = vadd.f32 0.0, %v1068
    %v1070 = vpop.f32.mrf.mxu0
    %v1071 = vpop.f32.mrf.mxu0
    %v1072 = vadd.f32 0.0, %v1071
    %v1073 = vpop.f32.mrf.mxu0
    %1074 = vmatprep.mubr.bf16.mxu0 0
    %1075 = vmatmul.mubr.bf16.gmra.mxu0 %v662
    %v1076 = vpop.f32.mrf.mxu0
    %v1077 = vadd.f32 0.0, %v1076
    %v1078 = vpop.f32.mrf.mxu0
    %v1079 = vpop.f32.mrf.mxu0
    %v1080 = vadd.f32 0.0, %v1079
    %v1081 = vpop.f32.mrf.mxu0
    %1082 = vmatprep.mubr.bf16.mxu0 0
    %1083 = vmatmul.mubr.bf16.gmra.mxu0 %v665
    %v1084 = vpop.f32.mrf.mxu0
    %v1085 = vadd.f32 0.0, %v1084
    %v1086 = vpop.f32.mrf.mxu0
    %v1087 = vpop.f32.mrf.mxu0
    %v1088 = vadd.f32 0.0, %v1087
    %v1089 = vpop.f32.mrf.mxu0
    %1090 = vmatprep.mubr.bf16.mxu0 0
    %1091 = vmatmul.mubr.bf16.gmra.mxu0 %v668
    %v1092 = vpop.f32.mrf.mxu0
    %v1093 = vadd.f32 0.0, %v1092
    %v1094 = vpop.f32.mrf.mxu0
    %v1095 = vpop.f32.mrf.mxu0
    %v1096 = vadd.f32 0.0, %v1095
    %v1097 = vpop.f32.mrf.mxu0
    %1098 = vmatprep.mubr.bf16.mxu0 0
    %1099 = vmatmul.mubr.bf16.gmra.mxu0 %v671
    %v1100 = vpop.f32.mrf.mxu0
    %v1101 = vadd.f32 0.0, %v1100
    %v1102 = vpop.f32.mrf.mxu0
    %v1103 = vpop.f32.mrf.mxu0
    %v1104 = vadd.f32 0.0, %v1103
    %v1105 = vpop.f32.mrf.mxu0
    %1106 = vmatprep.mubr.bf16.mxu0 0
    %1107 = vmatmul.mubr.bf16.gmra.mxu0 %v674
    %v1108 = vpop.f32.mrf.mxu0
    %v1109 = vadd.f32 0.0, %v1108
    %v1110 = vpop.f32.mrf.mxu0
    %v1111 = vpop.f32.mrf.mxu0
    %v1112 = vadd.f32 0.0, %v1111
    %v1113 = vpop.f32.mrf.mxu0
    %1114 = vmatprep.mubr.bf16.mxu0 0
    %1115 = vmatmul.mubr.bf16.gmra.mxu0 %v677
    %v1116 = vpop.f32.mrf.mxu0
    %v1117 = vadd.f32 0.0, %v1116
    %v1118 = vpop.f32.mrf.mxu0
    %v1119 = vpop.f32.mrf.mxu0
    %v1120 = vadd.f32 0.0, %v1119
    %v1121 = vpop.f32.mrf.mxu0
    %1122 = vmatprep.mubr.bf16.mxu0 0
    %1123 = vmatmul.mubr.bf16.gmra.mxu0 %v680
    %v1124 = vpop.f32.mrf.mxu0
    %v1125 = vadd.f32 0.0, %v1124
    %v1126 = vpop.f32.mrf.mxu0
    %v1127 = vpop.f32.mrf.mxu0
    %v1128 = vadd.f32 0.0, %v1127
    %v1129 = vpop.f32.mrf.mxu0
    %1130 = vmatprep.mubr.bf16.mxu0 0
    %1131 = vmatmul.mubr.bf16.gmra.mxu0 %v683
    %v1132 = vpop.f32.mrf.mxu0
    %v1133 = vadd.f32 0.0, %v1132
    %v1134 = vpop.f32.mrf.mxu0
    %v1135 = vpop.f32.mrf.mxu0
    %v1136 = vadd.f32 0.0, %v1135
    %v1137 = vpop.f32.mrf.mxu0
    %1138 = vmatprep.mubr.bf16.mxu0 0
    %1139 = vmatmul.mubr.bf16.gmra.mxu0 %v686
    %v1140 = vpop.f32.mrf.mxu0
    %v1141 = vadd.f32 0.0, %v1140
    %v1142 = vpop.f32.mrf.mxu0
    %v1143 = vpop.f32.mrf.mxu0
    %v1144 = vadd.f32 0.0, %v1143
    %v1145 = vpop.f32.mrf.mxu0
    %1146 = vmatprep.mubr.bf16.mxu0 0
    %1147 = vmatmul.mubr.bf16.gmra.mxu0 %v689
    %v1148 = vpop.f32.mrf.mxu0
    %v1149 = vadd.f32 0.0, %v1148
    %v1150 = vpop.f32.mrf.mxu0
    %v1151 = vpop.f32.mrf.mxu0
    %v1152 = vadd.f32 0.0, %v1151
    %v1153 = vpop.f32.mrf.mxu0
    %1154 = vmatprep.mubr.bf16.mxu0 0
    %1155 = vmatmul.mubr.bf16.gmra.mxu0 %v692
    %v1156 = vpop.f32.mrf.mxu0
    %v1157 = vadd.f32 0.0, %v1156
    %v1158 = vpop.f32.mrf.mxu0
    %v1159 = vpop.f32.mrf.mxu0
    %v1160 = vadd.f32 0.0, %v1159
    %v1161 = vpop.f32.mrf.mxu0
    %1162 = vmatprep.mubr.bf16.mxu0 0
    %1163 = vmatmul.mubr.bf16.gmra.mxu0 %v695
    %v1164 = vpop.f32.mrf.mxu0
    %v1165 = vadd.f32 0.0, %v1164
    %v1166 = vpop.f32.mrf.mxu0
    %v1167 = vpop.f32.mrf.mxu0
    %v1168 = vadd.f32 0.0, %v1167
    %v1169 = vpop.f32.mrf.mxu0
    %1170 = vmatprep.mubr.bf16.mxu0 0
    %1171 = vmatmul.mubr.bf16.gmra.mxu0 %v698
    %v1172 = vpop.f32.mrf.mxu0
    %v1173 = vadd.f32 0.0, %v1172
    %v1174 = vpop.f32.mrf.mxu0
    %v1175 = vpop.f32.mrf.mxu0
    %v1176 = vadd.f32 0.0, %v1175
    %v1177 = vpop.f32.mrf.mxu0
    %1178 = vmatprep.mubr.bf16.mxu0 0
    %1179 = vmatmul.mubr.bf16.gmra.mxu0 %v701
    %v1180 = vpop.f32.mrf.mxu0
    %v1181 = vadd.f32 0.0, %v1180
    %v1182 = vpop.f32.mrf.mxu0
    %v1183 = vpop.f32.mrf.mxu0
    %v1184 = vadd.f32 0.0, %v1183
    %v1185 = vpop.f32.mrf.mxu0
    %1186 = vmatprep.mubr.bf16.mxu0 0
    %1187 = vmatmul.mubr.bf16.gmra.mxu0 %v704
    %v1188 = vpop.f32.mrf.mxu0
    %v1189 = vadd.f32 0.0, %v1188
    %v1190 = vpop.f32.mrf.mxu0
    %v1191 = vpop.f32.mrf.mxu0
    %v1192 = vadd.f32 0.0, %v1191
    %v1193 = vpop.f32.mrf.mxu0
    %1194 = vmatprep.mubr.bf16.mxu0 0
    %1195 = vmatmul.mubr.bf16.gmra.mxu0 %v707
    %v1196 = vpop.f32.mrf.mxu0
    %v1197 = vadd.f32 0.0, %v1196
    %v1198 = vpop.f32.mrf.mxu0
    %v1199 = vpop.f32.mrf.mxu0
    %v1200 = vadd.f32 0.0, %v1199
    %v1201 = vpop.f32.mrf.mxu0
    %1202 = vmatprep.mubr.bf16.mxu0 0
    %1203 = vmatmul.mubr.bf16.gmra.mxu0 %v710
    %v1204 = vpop.f32.mrf.mxu0
    %v1205 = vadd.f32 0.0, %v1204
    %v1206 = vpop.f32.mrf.mxu0
    %v1207 = vpop.f32.mrf.mxu0
    %v1208 = vadd.f32 0.0, %v1207
    %v1209 = vpop.f32.mrf.mxu0
    %1210 = vmatprep.mubr.bf16.mxu0 0
    %1211 = vmatmul.mubr.bf16.gmra.mxu0 %v713
    %v1212 = vpop.f32.mrf.mxu0
    %v1213 = vadd.f32 0.0, %v1212
    %v1214 = vpop.f32.mrf.mxu0
    %v1215 = vpop.f32.mrf.mxu0
    %v1216 = vadd.f32 0.0, %v1215
    %v1217 = vpop.f32.mrf.mxu0
    %1218 = vmatprep.mubr.bf16.mxu0 0
    %1219 = vmatmul.mubr.bf16.gmra.mxu0 %v716
    %v1220 = vpop.f32.mrf.mxu0
    %v1221 = vadd.f32 0.0, %v1220
    %v1222 = vpop.f32.mrf.mxu0
    %v1223 = vpop.f32.mrf.mxu0
    %v1224 = vadd.f32 0.0, %v1223
    %v1225 = vpop.f32.mrf.mxu0
    %1226 = vmatprep.mubr.bf16.mxu0 0
    %1227 = vmatmul.mubr.bf16.gmra.mxu0 %v719
    %v1228 = vpop.f32.mrf.mxu0
    %v1229 = vadd.f32 0.0, %v1228
    %v1230 = vpop.f32.mrf.mxu0
    %v1231 = vpop.f32.mrf.mxu0
    %v1232 = vpop.f32.mrf.mxu0
    %1233 = vdwg.mxu0
    %v1234 = vpack.c.bf16 %v760, %v756
    %v1235 = vpack.c.bf16 %v762, %v758
    %v1236 = vpack.c.bf16 %v1040, %v1037
    %v1237 = vpack.c.bf16 %v770, %v766
    %v1238 = vpack.c.bf16 %v772, %v768
    %v1239 = vpack.c.bf16 %v1048, %v1045
    %v1240 = vpack.c.bf16 %v780, %v776
    %v1241 = vpack.c.bf16 %v782, %v778
    %v1242 = vpack.c.bf16 %v1056, %v1053
    %v1243 = vpack.c.bf16 %v790, %v786
    %v1244 = vpack.c.bf16 %v792, %v788
    %v1245 = vpack.c.bf16 %v1064, %v1061
    %v1246 = vpack.c.bf16 %v800, %v796
    %v1247 = vpack.c.bf16 %v802, %v798
    %v1248 = vpack.c.bf16 %v1072, %v1069
    %v1249 = vpack.c.bf16 %v810, %v806
    %v1250 = vpack.c.bf16 %v812, %v808
    %v1251 = vpack.c.bf16 %v1080, %v1077
    %v1252 = vpack.c.bf16 %v820, %v816
    %v1253 = vpack.c.bf16 %v822, %v818
    %v1254 = vpack.c.bf16 %v1088, %v1085
    %v1255 = vpack.c.bf16 %v830, %v826
    %v1256 = vpack.c.bf16 %v832, %v828
    %v1257 = vpack.c.bf16 %v1096, %v1093
    %v1258 = vpack.c.bf16 %v840, %v836
    %v1259 = vpack.c.bf16 %v842, %v838
    %v1260 = vpack.c.bf16 %v1104, %v1101
    %v1261 = vpack.c.bf16 %v850, %v846
    %v1262 = vpack.c.bf16 %v852, %v848
    %v1263 = vpack.c.bf16 %v1112, %v1109
    %v1264 = vpack.c.bf16 %v860, %v856
    %v1265 = vpack.c.bf16 %v862, %v858
    %v1266 = vpack.c.bf16 %v1120, %v1117
    %v1267 = vpack.c.bf16 %v870, %v866
    %v1268 = vpack.c.bf16 %v872, %v868
    %v1269 = vpack.c.bf16 %v1128, %v1125
    %v1270 = vpack.c.bf16 %v880, %v876
    %v1271 = vpack.c.bf16 %v882, %v878
    %v1272 = vpack.c.bf16 %v1136, %v1133
    %v1273 = vpack.c.bf16 %v890, %v886
    %v1274 = vpack.c.bf16 %v892, %v888
    %v1275 = vpack.c.bf16 %v1144, %v1141
    %v1276 = vpack.c.bf16 %v900, %v896
    %v1277 = vpack.c.bf16 %v902, %v898
    %v1278 = vpack.c.bf16 %v1152, %v1149
    %v1279 = vpack.c.bf16 %v910, %v906
    %v1280 = vpack.c.bf16 %v912, %v908
    %v1281 = vpack.c.bf16 %v1160, %v1157
    %v1282 = vpack.c.bf16 %v920, %v916
    %v1283 = vpack.c.bf16 %v922, %v918
    %v1284 = vpack.c.bf16 %v1168, %v1165
    %v1285 = vpack.c.bf16 %v930, %v926
    %v1286 = vpack.c.bf16 %v932, %v928
    %v1287 = vpack.c.bf16 %v1176, %v1173
    %v1288 = vpack.c.bf16 %v940, %v936
    %v1289 = vpack.c.bf16 %v942, %v938
    %v1290 = vpack.c.bf16 %v1184, %v1181
    %v1291 = vpack.c.bf16 %v950, %v946
    %v1292 = vpack.c.bf16 %v952, %v948
    %v1293 = vpack.c.bf16 %v1192, %v1189
    %v1294 = vpack.c.bf16 %v960, %v956
    %v1295 = vpack.c.bf16 %v962, %v958
    %v1296 = vpack.c.bf16 %v1200, %v1197
    %v1297 = vpack.c.bf16 %v970, %v966
    %v1298 = vpack.c.bf16 %v972, %v968
    %v1299 = vpack.c.bf16 %v1208, %v1205
    %v1300 = vpack.c.bf16 %v980, %v976
    %v1301 = vpack.c.bf16 %v982, %v978
    %v1302 = vpack.c.bf16 %v1216, %v1213
    %v1303 = vpack.c.bf16 %v990, %v986
    %v1304 = vpack.c.bf16 %v992, %v988
    %v1305 = vpack.c.bf16 %v1224, %v1221
    %v1306 = vpack.c.bf16 %v996, %v996
    %v1307 = vpack.c.bf16 %v998, %v998
    %v1308 = vpack.c.bf16 %v1229, %v1229
    %v1384 = vunpack.c.l.b16 %v1234
    %v1385 = vunpack.c.l.b16 %v1235
    %v1386 = vunpack.c.l.b16 %v1236
    %v1387 = vunpack.c.h.b16 %v1234
    %v1388 = vunpack.c.h.b16 %v1235
    %v1389 = vunpack.c.h.b16 %v1236
    %v1390 = vunpack.c.l.b16 %v1237
    %v1391 = vunpack.c.l.b16 %v1238
    %v1392 = vunpack.c.l.b16 %v1239
    %v1393 = vunpack.c.h.b16 %v1237
    %v1394 = vunpack.c.h.b16 %v1238
    %v1395 = vunpack.c.h.b16 %v1239
    %v1396 = vunpack.c.l.b16 %v1240
    %v1397 = vunpack.c.l.b16 %v1241
    %v1398 = vunpack.c.l.b16 %v1242
    %v1399 = vunpack.c.h.b16 %v1240
    %v1400 = vunpack.c.h.b16 %v1241
    %v1401 = vunpack.c.h.b16 %v1242
    %v1402 = vunpack.c.l.b16 %v1243
    %v1403 = vunpack.c.l.b16 %v1244
    %v1404 = vunpack.c.l.b16 %v1245
    %v1405 = vunpack.c.h.b16 %v1243
    %v1406 = vunpack.c.h.b16 %v1244
    %v1407 = vunpack.c.h.b16 %v1245
    %v1408 = vunpack.c.l.b16 %v1246
    %v1409 = vunpack.c.l.b16 %v1247
    %v1410 = vunpack.c.l.b16 %v1248
    %v1411 = vunpack.c.h.b16 %v1246
    %v1412 = vunpack.c.h.b16 %v1247
    %v1413 = vunpack.c.h.b16 %v1248
    %v1414 = vunpack.c.l.b16 %v1249
    %v1415 = vunpack.c.l.b16 %v1250
    %v1416 = vunpack.c.l.b16 %v1251
    %v1417 = vunpack.c.h.b16 %v1249
    %v1418 = vunpack.c.h.b16 %v1250
    %v1419 = vunpack.c.h.b16 %v1251
    %v1420 = vunpack.c.l.b16 %v1252
    %v1421 = vunpack.c.l.b16 %v1253
    %v1422 = vunpack.c.l.b16 %v1254
    %v1423 = vunpack.c.h.b16 %v1252
    %v1424 = vunpack.c.h.b16 %v1253
    %v1425 = vunpack.c.h.b16 %v1254
    %v1426 = vunpack.c.l.b16 %v1255
    %v1427 = vunpack.c.l.b16 %v1256
    %v1428 = vunpack.c.l.b16 %v1257
    %v1429 = vunpack.c.h.b16 %v1255
    %v1430 = vunpack.c.h.b16 %v1256
    %v1431 = vunpack.c.h.b16 %v1257
    %v1432 = vunpack.c.l.b16 %v1258
    %v1433 = vunpack.c.l.b16 %v1259
    %v1434 = vunpack.c.l.b16 %v1260
    %v1435 = vunpack.c.h.b16 %v1258
    %v1436 = vunpack.c.h.b16 %v1259
    %v1437 = vunpack.c.h.b16 %v1260
    %v1438 = vunpack.c.l.b16 %v1261
    %v1439 = vunpack.c.l.b16 %v1262
    %v1440 = vunpack.c.l.b16 %v1263
    %v1441 = vunpack.c.h.b16 %v1261
    %v1442 = vunpack.c.h.b16 %v1262
    %v1443 = vunpack.c.h.b16 %v1263
    %v1444 = vunpack.c.l.b16 %v1264
    %v1445 = vunpack.c.l.b16 %v1265
    %v1446 = vunpack.c.l.b16 %v1266
    %v1447 = vunpack.c.h.b16 %v1264
    %v1448 = vunpack.c.h.b16 %v1265
    %v1449 = vunpack.c.h.b16 %v1266
    %v1450 = vunpack.c.l.b16 %v1267
    %v1451 = vunpack.c.l.b16 %v1268
    %v1452 = vunpack.c.l.b16 %v1269
    %v1453 = vunpack.c.h.b16 %v1267
    %v1454 = vunpack.c.h.b16 %v1268
    %v1455 = vunpack.c.h.b16 %v1269
    %v1456 = vunpack.c.l.b16 %v1270
    %v1457 = vunpack.c.l.b16 %v1271
    %v1458 = vunpack.c.l.b16 %v1272
    %v1459 = vunpack.c.h.b16 %v1270
    %v1460 = vunpack.c.h.b16 %v1271
    %v1461 = vunpack.c.h.b16 %v1272
    %v1462 = vunpack.c.l.b16 %v1273
    %v1463 = vunpack.c.l.b16 %v1274
    %v1464 = vunpack.c.l.b16 %v1275
    %v1465 = vunpack.c.h.b16 %v1273
    %v1466 = vunpack.c.h.b16 %v1274
    %v1467 = vunpack.c.h.b16 %v1275
    %v1468 = vunpack.c.l.b16 %v1276
    %v1469 = vunpack.c.l.b16 %v1277
    %v1470 = vunpack.c.l.b16 %v1278
    %v1471 = vunpack.c.h.b16 %v1276
    %v1472 = vunpack.c.h.b16 %v1277
    %v1473 = vunpack.c.h.b16 %v1278
    %v1474 = vunpack.c.l.b16 %v1279
    %v1475 = vunpack.c.l.b16 %v1280
    %v1476 = vunpack.c.l.b16 %v1281
    %v1477 = vunpack.c.h.b16 %v1279
    %v1478 = vunpack.c.h.b16 %v1280
    %v1479 = vunpack.c.h.b16 %v1281
    %v1480 = vunpack.c.l.b16 %v1282
    %v1481 = vunpack.c.l.b16 %v1283
    %v1482 = vunpack.c.l.b16 %v1284
    %v1483 = vunpack.c.h.b16 %v1282
    %v1484 = vunpack.c.h.b16 %v1283
    %v1485 = vunpack.c.h.b16 %v1284
    %v1486 = vunpack.c.l.b16 %v1285
    %v1487 = vunpack.c.l.b16 %v1286
    %v1488 = vunpack.c.l.b16 %v1287
    %v1489 = vunpack.c.h.b16 %v1285
    %v1490 = vunpack.c.h.b16 %v1286
    %v1491 = vunpack.c.h.b16 %v1287
    %v1492 = vunpack.c.l.b16 %v1288
    %v1493 = vunpack.c.l.b16 %v1289
    %v1494 = vunpack.c.l.b16 %v1290
    %v1495 = vunpack.c.h.b16 %v1288
    %v1496 = vunpack.c.h.b16 %v1289
    %v1497 = vunpack.c.h.b16 %v1290
    %v1498 = vunpack.c.l.b16 %v1291
    %v1499 = vunpack.c.l.b16 %v1292
    %v1500 = vunpack.c.l.b16 %v1293
    %v1501 = vunpack.c.h.b16 %v1291
    %v1502 = vunpack.c.h.b16 %v1292
    %v1503 = vunpack.c.h.b16 %v1293
    %v1504 = vunpack.c.l.b16 %v1294
    %v1505 = vunpack.c.l.b16 %v1295
    %v1506 = vunpack.c.l.b16 %v1296
    %v1507 = vunpack.c.h.b16 %v1294
    %v1508 = vunpack.c.h.b16 %v1295
    %v1509 = vunpack.c.h.b16 %v1296
    %v1510 = vunpack.c.l.b16 %v1297
    %v1511 = vunpack.c.l.b16 %v1298
    %v1512 = vunpack.c.l.b16 %v1299
    %v1513 = vunpack.c.h.b16 %v1297
    %v1514 = vunpack.c.h.b16 %v1298
    %v1515 = vunpack.c.h.b16 %v1299
    %v1516 = vunpack.c.l.b16 %v1300
    %v1517 = vunpack.c.l.b16 %v1301
    %v1518 = vunpack.c.l.b16 %v1302
    %v1519 = vunpack.c.h.b16 %v1300
    %v1520 = vunpack.c.h.b16 %v1301
    %v1521 = vunpack.c.h.b16 %v1302
    %v1522 = vunpack.c.l.b16 %v1303
    %v1523 = vunpack.c.l.b16 %v1304
    %v1524 = vunpack.c.l.b16 %v1305
    %v1525 = vunpack.c.h.b16 %v1303
    %v1526 = vunpack.c.h.b16 %v1304
    %v1527 = vunpack.c.h.b16 %v1305
    %v1528 = vunpack.c.l.b16 %v1306
    %v1529 = vunpack.c.l.b16 %v1307
    %v1530 = vunpack.c.l.b16 %v1308
    %v1531 = vpack.c.b16 %v1385, %v1384
    %v1532 = vpack.c.b16 %v1386, %v1386
    %v1533 = vpack.c.b16 %v1388, %v1387
    %v1534 = vpack.c.b16 %v1389, %v1389
    %v1535 = vpack.c.b16 %v1391, %v1390
    %v1536 = vpack.c.b16 %v1392, %v1392
    %v1537 = vpack.c.b16 %v1394, %v1393
    %v1538 = vpack.c.b16 %v1395, %v1395
    %v1539 = vpack.c.b16 %v1397, %v1396
    %v1540 = vpack.c.b16 %v1398, %v1398
    %v1541 = vpack.c.b16 %v1400, %v1399
    %v1542 = vpack.c.b16 %v1401, %v1401
    %v1543 = vpack.c.b16 %v1403, %v1402
    %v1544 = vpack.c.b16 %v1404, %v1404
    %v1545 = vpack.c.b16 %v1406, %v1405
    %v1546 = vpack.c.b16 %v1407, %v1407
    %v1547 = vpack.c.b16 %v1409, %v1408
    %v1548 = vpack.c.b16 %v1410, %v1410
    %v1549 = vpack.c.b16 %v1412, %v1411
    %v1550 = vpack.c.b16 %v1413, %v1413
    %v1551 = vpack.c.b16 %v1415, %v1414
    %v1552 = vpack.c.b16 %v1416, %v1416
    %v1553 = vpack.c.b16 %v1418, %v1417
    %v1554 = vpack.c.b16 %v1419, %v1419
    %v1555 = vpack.c.b16 %v1421, %v1420
    %v1556 = vpack.c.b16 %v1422, %v1422
    %v1557 = vpack.c.b16 %v1424, %v1423
    %v1558 = vpack.c.b16 %v1425, %v1425
    %v1559 = vpack.c.b16 %v1427, %v1426
    %v1560 = vpack.c.b16 %v1428, %v1428
    %v1561 = vpack.c.b16 %v1430, %v1429
    %v1562 = vpack.c.b16 %v1431, %v1431
    %v1563 = vpack.c.b16 %v1433, %v1432
    %v1564 = vpack.c.b16 %v1434, %v1434
    %v1565 = vpack.c.b16 %v1436, %v1435
    %v1566 = vpack.c.b16 %v1437, %v1437
    %v1567 = vpack.c.b16 %v1439, %v1438
    %v1568 = vpack.c.b16 %v1440, %v1440
    %v1569 = vpack.c.b16 %v1442, %v1441
    %v1570 = vpack.c.b16 %v1443, %v1443
    %v1571 = vpack.c.b16 %v1445, %v1444
    %v1572 = vpack.c.b16 %v1446, %v1446
    %v1573 = vpack.c.b16 %v1448, %v1447
    %v1574 = vpack.c.b16 %v1449, %v1449
    %v1575 = vpack.c.b16 %v1451, %v1450
    %v1576 = vpack.c.b16 %v1452, %v1452
    %v1577 = vpack.c.b16 %v1454, %v1453
    %v1578 = vpack.c.b16 %v1455, %v1455
    %v1579 = vpack.c.b16 %v1457, %v1456
    %v1580 = vpack.c.b16 %v1458, %v1458
    %v1581 = vpack.c.b16 %v1460, %v1459
    %v1582 = vpack.c.b16 %v1461, %v1461
    %v1583 = vpack.c.b16 %v1463, %v1462
    %v1584 = vpack.c.b16 %v1464, %v1464
    %v1585 = vpack.c.b16 %v1466, %v1465
    %v1586 = vpack.c.b16 %v1467, %v1467
    %v1587 = vpack.c.b16 %v1469, %v1468
    %v1588 = vpack.c.b16 %v1470, %v1470
    %v1589 = vpack.c.b16 %v1472, %v1471
    %v1590 = vpack.c.b16 %v1473, %v1473
    %v1591 = vpack.c.b16 %v1475, %v1474
    %v1592 = vpack.c.b16 %v1476, %v1476
    %v1593 = vpack.c.b16 %v1478, %v1477
    %v1594 = vpack.c.b16 %v1479, %v1479
    %v1595 = vpack.c.b16 %v1481, %v1480
    %v1596 = vpack.c.b16 %v1482, %v1482
    %v1597 = vpack.c.b16 %v1484, %v1483
    %v1598 = vpack.c.b16 %v1485, %v1485
    %v1599 = vpack.c.b16 %v1487, %v1486
    %v1600 = vpack.c.b16 %v1488, %v1488
    %v1601 = vpack.c.b16 %v1490, %v1489
    %v1602 = vpack.c.b16 %v1491, %v1491
    %v1603 = vpack.c.b16 %v1493, %v1492
    %v1604 = vpack.c.b16 %v1494, %v1494
    %v1605 = vpack.c.b16 %v1496, %v1495
    %v1606 = vpack.c.b16 %v1497, %v1497
    %v1607 = vpack.c.b16 %v1499, %v1498
    %v1608 = vpack.c.b16 %v1500, %v1500
    %v1609 = vpack.c.b16 %v1502, %v1501
    %v1610 = vpack.c.b16 %v1503, %v1503
    %v1611 = vpack.c.b16 %v1505, %v1504
    %v1612 = vpack.c.b16 %v1506, %v1506
    %v1613 = vpack.c.b16 %v1508, %v1507
    %v1614 = vpack.c.b16 %v1509, %v1509
    %v1615 = vpack.c.b16 %v1511, %v1510
    %v1616 = vpack.c.b16 %v1512, %v1512
    %v1617 = vpack.c.b16 %v1514, %v1513
    %v1618 = vpack.c.b16 %v1515, %v1515
    %v1619 = vpack.c.b16 %v1517, %v1516
    %v1620 = vpack.c.b16 %v1518, %v1518
    %v1621 = vpack.c.b16 %v1520, %v1519
    %v1622 = vpack.c.b16 %v1521, %v1521
    %v1623 = vpack.c.b16 %v1523, %v1522
    %v1624 = vpack.c.b16 %v1524, %v1524
    %v1625 = vpack.c.b16 %v1526, %v1525
    %v1626 = vpack.c.b16 %v1527, %v1527
    %v1627 = vpack.c.b16 %v1529, %v1528
    %v1628 = vpack.c.b16 %v1530, %v1530
    %1727 = vst [vmem:[#allocation2] sm:$0xff] %v1531
    %vm1728 = vcmask 257024
    %1729 = vst.msk [vmem:[#allocation2 + $0x8] sm:$0xf] %vm1728, %v1532
    %1730 = vst [vmem:[#allocation2 + $0xc] sm:$0xff] %v1533
    %1731 = vst.msk [vmem:[#allocation2 + $0x14] sm:$0xf] %vm1728, %v1534
    %1732 = vst [vmem:[#allocation2 + $0x18] sm:$0xff] %v1535
    %1733 = vst.msk [vmem:[#allocation2 + $0x20] sm:$0xf] %vm1728, %v1536
    %1734 = vst [vmem:[#allocation2 + $0x24] sm:$0xff] %v1537
    %1735 = vst.msk [vmem:[#allocation2 + $0x2c] sm:$0xf] %vm1728, %v1538
    %1736 = vst [vmem:[#allocation2 + $0x30] sm:$0xff] %v1539
    %1737 = vst.msk [vmem:[#allocation2 + $0x38] sm:$0xf] %vm1728, %v1540
    %1738 = vst [vmem:[#allocation2 + $0x3c] sm:$0xff] %v1541
    %1739 = vst.msk [vmem:[#allocation2 + $0x44] sm:$0xf] %vm1728, %v1542
    %1740 = vst [vmem:[#allocation2 + $0x48] sm:$0xff] %v1543
    %1741 = vst.msk [vmem:[#allocation2 + $0x50] sm:$0xf] %vm1728, %v1544
    %1742 = vst [vmem:[#allocation2 + $0x54] sm:$0xff] %v1545
    %1743 = vst.msk [vmem:[#allocation2 + $0x5c] sm:$0xf] %vm1728, %v1546
    %1744 = vst [vmem:[#allocation2 + $0x60] sm:$0xff] %v1547
    %1745 = vst.msk [vmem:[#allocation2 + $0x68] sm:$0xf] %vm1728, %v1548
    %1746 = vst [vmem:[#allocation2 + $0x6c] sm:$0xff] %v1549
    %1747 = vst.msk [vmem:[#allocation2 + $0x74] sm:$0xf] %vm1728, %v1550
    %1748 = vst [vmem:[#allocation2 + $0x78] sm:$0xff] %v1551
    %1749 = vst.msk [vmem:[#allocation2 + $0x80] sm:$0xf] %vm1728, %v1552
    %1750 = vst [vmem:[#allocation2 + $0x84] sm:$0xff] %v1553
    %1751 = vst.msk [vmem:[#allocation2 + $0x8c] sm:$0xf] %vm1728, %v1554
    %1752 = vst [vmem:[#allocation2 + $0x90] sm:$0xff] %v1555
    %1753 = vst.msk [vmem:[#allocation2 + $0x98] sm:$0xf] %vm1728, %v1556
    %1754 = vst [vmem:[#allocation2 + $0x9c] sm:$0xff] %v1557
    %1755 = vst.msk [vmem:[#allocation2 + $0xa4] sm:$0xf] %vm1728, %v1558
    %1756 = vst [vmem:[#allocation2 + $0xa8] sm:$0xff] %v1559
    %1757 = vst.msk [vmem:[#allocation2 + $0xb0] sm:$0xf] %vm1728, %v1560
    %1758 = vst [vmem:[#allocation2 + $0xb4] sm:$0xff] %v1561
    %1759 = vst.msk [vmem:[#allocation2 + $0xbc] sm:$0xf] %vm1728, %v1562
    %1760 = vst [vmem:[#allocation2 + $0xc0] sm:$0xff] %v1563
    %1761 = vst.msk [vmem:[#allocation2 + $0xc8] sm:$0xf] %vm1728, %v1564
    %1762 = vst [vmem:[#allocation2 + $0xcc] sm:$0xff] %v1565
    %1763 = vst.msk [vmem:[#allocation2 + $0xd4] sm:$0xf] %vm1728, %v1566
    %1764 = vst [vmem:[#allocation2 + $0xd8] sm:$0xff] %v1567
    %1765 = vst.msk [vmem:[#allocation2 + $0xe0] sm:$0xf] %vm1728, %v1568
    %1766 = vst [vmem:[#allocation2 + $0xe4] sm:$0xff] %v1569
    %1767 = vst.msk [vmem:[#allocation2 + $0xec] sm:$0xf] %vm1728, %v1570
    %1768 = vst [vmem:[#allocation2 + $0xf0] sm:$0xff] %v1571
    %1769 = vst.msk [vmem:[#allocation2 + $0xf8] sm:$0xf] %vm1728, %v1572
    %1770 = vst [vmem:[#allocation2 + $0xfc] sm:$0xff] %v1573
    %1771 = vst.msk [vmem:[#allocation2 + $0x104] sm:$0xf] %vm1728, %v1574
    %1772 = vst [vmem:[#allocation2 + $0x108] sm:$0xff] %v1575
    %1773 = vst.msk [vmem:[#allocation2 + $0x110] sm:$0xf] %vm1728, %v1576
    %1774 = vst [vmem:[#allocation2 + $0x114] sm:$0xff] %v1577
    %1775 = vst.msk [vmem:[#allocation2 + $0x11c] sm:$0xf] %vm1728, %v1578
    %1776 = vst [vmem:[#allocation2 + $0x120] sm:$0xff] %v1579
    %1777 = vst.msk [vmem:[#allocation2 + $0x128] sm:$0xf] %vm1728, %v1580
    %1778 = vst [vmem:[#allocation2 + $0x12c] sm:$0xff] %v1581
    %1779 = vst.msk [vmem:[#allocation2 + $0x134] sm:$0xf] %vm1728, %v1582
    %1780 = vst [vmem:[#allocation2 + $0x138] sm:$0xff] %v1583
    %1781 = vst.msk [vmem:[#allocation2 + $0x140] sm:$0xf] %vm1728, %v1584
    %1782 = vst [vmem:[#allocation2 + $0x144] sm:$0xff] %v1585
    %1783 = vst.msk [vmem:[#allocation2 + $0x14c] sm:$0xf] %vm1728, %v1586
    %1784 = vst [vmem:[#allocation2 + $0x150] sm:$0xff] %v1587
    %1785 = vst.msk [vmem:[#allocation2 + $0x158] sm:$0xf] %vm1728, %v1588
    %1786 = vst [vmem:[#allocation2 + $0x15c] sm:$0xff] %v1589
    %1787 = vst.msk [vmem:[#allocation2 + $0x164] sm:$0xf] %vm1728, %v1590
    %1788 = vst [vmem:[#allocation2 + $0x168] sm:$0xff] %v1591
    %1789 = vst.msk [vmem:[#allocation2 + $0x170] sm:$0xf] %vm1728, %v1592
    %1790 = vst [vmem:[#allocation2 + $0x174] sm:$0xff] %v1593
    %1791 = vst.msk [vmem:[#allocation2 + $0x17c] sm:$0xf] %vm1728, %v1594
    %1792 = vst [vmem:[#allocation2 + $0x180] sm:$0xff] %v1595
    %1793 = vst.msk [vmem:[#allocation2 + $0x188] sm:$0xf] %vm1728, %v1596
    %1794 = vst [vmem:[#allocation2 + $0x18c] sm:$0xff] %v1597
    %1795 = vst.msk [vmem:[#allocation2 + $0x194] sm:$0xf] %vm1728, %v1598
    %1796 = vst [vmem:[#allocation2 + $0x198] sm:$0xff] %v1599
    %1797 = vst.msk [vmem:[#allocation2 + $0x1a0] sm:$0xf] %vm1728, %v1600
    %1798 = vst [vmem:[#allocation2 + $0x1a4] sm:$0xff] %v1601
    %1799 = vst.msk [vmem:[#allocation2 + $0x1ac] sm:$0xf] %vm1728, %v1602
    %1800 = vst [vmem:[#allocation2 + $0x1b0] sm:$0xff] %v1603
    %1801 = vst.msk [vmem:[#allocation2 + $0x1b8] sm:$0xf] %vm1728, %v1604
    %1802 = vst [vmem:[#allocation2 + $0x1bc] sm:$0xff] %v1605
    %1803 = vst.msk [vmem:[#allocation2 + $0x1c4] sm:$0xf] %vm1728, %v1606
    %1804 = vst [vmem:[#allocation2 + $0x1c8] sm:$0xff] %v1607
    %1805 = vst.msk [vmem:[#allocation2 + $0x1d0] sm:$0xf] %vm1728, %v1608
    %1806 = vst [vmem:[#allocation2 + $0x1d4] sm:$0xff] %v1609
    %1807 = vst.msk [vmem:[#allocation2 + $0x1dc] sm:$0xf] %vm1728, %v1610
    %1808 = vst [vmem:[#allocation2 + $0x1e0] sm:$0xff] %v1611
    %1809 = vst.msk [vmem:[#allocation2 + $0x1e8] sm:$0xf] %vm1728, %v1612
    %1810 = vst [vmem:[#allocation2 + $0x1ec] sm:$0xff] %v1613
    %1811 = vst.msk [vmem:[#allocation2 + $0x1f4] sm:$0xf] %vm1728, %v1614
    %1812 = vst [vmem:[#allocation2 + $0x1f8] sm:$0xff] %v1615
    %1813 = vst.msk [vmem:[#allocation2 + $0x200] sm:$0xf] %vm1728, %v1616
    %1814 = vst [vmem:[#allocation2 + $0x204] sm:$0xff] %v1617
    %1815 = vst.msk [vmem:[#allocation2 + $0x20c] sm:$0xf] %vm1728, %v1618
    %1816 = vst [vmem:[#allocation2 + $0x210] sm:$0xff] %v1619
    %1817 = vst.msk [vmem:[#allocation2 + $0x218] sm:$0xf] %vm1728, %v1620
    %1818 = vst [vmem:[#allocation2 + $0x21c] sm:$0xff] %v1621
    %1819 = vst.msk [vmem:[#allocation2 + $0x224] sm:$0xf] %vm1728, %v1622
    %1820 = vst [vmem:[#allocation2 + $0x228] sm:$0xff] %v1623
    %1821 = vst.msk [vmem:[#allocation2 + $0x230] sm:$0xf] %vm1728, %v1624
    %1822 = vst [vmem:[#allocation2 + $0x234] sm:$0xff] %v1625
    %1823 = vst.msk [vmem:[#allocation2 + $0x23c] sm:$0xf] %vm1728, %v1626
    %1824 = vst [vmem:[#allocation2 + $0x240] sm:$0xff] %v1627
    %1825 = vst.msk [vmem:[#allocation2 + $0x248] sm:$0xf] %vm1728, %v1628
    %v1826 = vld [vmem:[%s3] sm:$0xff]
    %v1827 = vld [vmem:[%s3 + $0x8] sm:$0xff]
    %v1828 = vld [vmem:[%s3 + $0x10] sm:$0xff]
    %v1829 = vld [vmem:[%s3 + $0x18] sm:$0xff]
    %v1830 = vld [vmem:[%s3 + $0x20] sm:$0xff]
    %v1831 = vld [vmem:[%s3 + $0x28] sm:$0xff]
    %v1832 = vld [vmem:[%s3 + $0x30] sm:$0xff]
    %v1833 = vld [vmem:[%s3 + $0x38] sm:$0xff]
    %v1834 = vld [vmem:[%s3 + $0x40] sm:$0xff]
    %v1835 = vld [vmem:[%s3 + $0x48] sm:$0xff]
    %v1836 = vld [vmem:[%s3 + $0x50] sm:$0xff]
    %v1837 = vld [vmem:[%s3 + $0x58] sm:$0xff]
    %v1838 = vld [vmem:[%s3 + $0x60] sm:$0xff]
    %v1839 = vld [vmem:[%s3 + $0x68] sm:$0xff]
    %v1840 = vld [vmem:[%s3 + $0x70] sm:$0xff]
    %v1841 = vld [vmem:[%s3 + $0x78] sm:$0xff]
    %v1842 = vld [vmem:[%s3 + $0x80] sm:$0xff]
    %v1843 = vld [vmem:[%s3 + $0x88] sm:$0xff]
    %v1844 = vld [vmem:[%s3 + $0x90] sm:$0xff]
    %v1845 = vld [vmem:[%s3 + $0x98] sm:$0xff]
    %v1846 = vld [vmem:[%s3 + $0xa0] sm:$0xff]
    %v1847 = vld [vmem:[%s3 + $0xa8] sm:$0xff]
    %v1848 = vld [vmem:[%s3 + $0xb0] sm:$0xff]
    %v1849 = vld [vmem:[%s3 + $0xb8] sm:$0xff]
    %v1850 = vld [vmem:[%s3 + $0xc0] sm:$0xff]
    %v1851 = vld [vmem:[%s3 + $0xc8] sm:$0xff]
    %v1852 = vld [vmem:[%s3 + $0xd0] sm:$0xff]
    %v1853 = vld [vmem:[%s3 + $0xd8] sm:$0xff]
    %v1854 = vld [vmem:[#allocation2] sm:$0xf]
    %v1855 = vld [vmem:[#allocation2 + $0xc] sm:$0xf]
    %v1856 = vld [vmem:[#allocation2 + $0x18] sm:$0xf]
    %v1857 = vld [vmem:[#allocation2 + $0x24] sm:$0xf]
    %v1858 = vld [vmem:[#allocation2 + $0x30] sm:$0xf]
    %v1859 = vld [vmem:[#allocation2 + $0x3c] sm:$0xf]
    %v1860 = vld [vmem:[#allocation2 + $0x48] sm:$0xf]
    %v1861 = vld [vmem:[#allocation2 + $0x54] sm:$0xf]
    %v1862 = vld [vmem:[#allocation2 + $0x60] sm:$0xf]
    %v1863 = vld [vmem:[#allocation2 + $0x6c] sm:$0xf]
    %v1864 = vld [vmem:[#allocation2 + $0x78] sm:$0xf]
    %v1865 = vld [vmem:[#allocation2 + $0x84] sm:$0xf]
    %v1866 = vld [vmem:[#allocation2 + $0x90] sm:$0xf]
    %v1867 = vld [vmem:[#allocation2 + $0x9c] sm:$0xf]
    %v1868 = vld [vmem:[#allocation2 + $0xa8] sm:$0xf]
    %v1869 = vld [vmem:[#allocation2 + $0xb4] sm:$0xf]
    %v1870 = vld [vmem:[#allocation2 + $0xc0] sm:$0xf]
    %v1871 = vld [vmem:[#allocation2 + $0xcc] sm:$0xf]
    %v1872 = vld [vmem:[#allocation2 + $0xd8] sm:$0xf]
    %v1873 = vld [vmem:[#allocation2 + $0xe4] sm:$0xf]
    %v1874 = vld [vmem:[#allocation2 + $0xf0] sm:$0xf]
    %v1875 = vld [vmem:[#allocation2 + $0xfc] sm:$0xf]
    %v1876 = vld [vmem:[#allocation2 + $0x108] sm:$0xf]
    %v1877 = vld [vmem:[#allocation2 + $0x114] sm:$0xf]
    %v1878 = vld [vmem:[#allocation2 + $0x120] sm:$0xf]
    %v1879 = vld [vmem:[#allocation2 + $0x12c] sm:$0xf]
    %v1880 = vld [vmem:[#allocation2 + $0x138] sm:$0xf]
    %v1881 = vld [vmem:[#allocation2 + $0x144] sm:$0xf]
    %v1882 = vld [vmem:[#allocation2 + $0x150] sm:$0xf]
    %v1883 = vld [vmem:[#allocation2 + $0x15c] sm:$0xf]
    %v1884 = vld [vmem:[#allocation2 + $0x168] sm:$0xf]
    %v1885 = vld [vmem:[#allocation2 + $0x174] sm:$0xf]
    %v1886 = vld [vmem:[#allocation2 + $0x180] sm:$0xf]
    %v1887 = vld [vmem:[#allocation2 + $0x18c] sm:$0xf]
    %v1888 = vld [vmem:[#allocation2 + $0x198] sm:$0xf]
    %v1889 = vld [vmem:[#allocation2 + $0x1a4] sm:$0xf]
    %v1890 = vld [vmem:[#allocation2 + $0x1b0] sm:$0xf]
    %v1891 = vld [vmem:[#allocation2 + $0x1bc] sm:$0xf]
    %v1892 = vld [vmem:[#allocation2 + $0x1c8] sm:$0xf]
    %v1893 = vld [vmem:[#allocation2 + $0x1d4] sm:$0xf]
    %v1894 = vld [vmem:[#allocation2 + $0x1e0] sm:$0xf]
    %v1895 = vld [vmem:[#allocation2 + $0x1ec] sm:$0xf]
    %v1896 = vld [vmem:[#allocation2 + $0x1f8] sm:$0xf]
    %v1897 = vld [vmem:[#allocation2 + $0x204] sm:$0xf]
    %v1898 = vld [vmem:[#allocation2 + $0x210] sm:$0xf]
    %v1899 = vld [vmem:[#allocation2 + $0x21c] sm:$0xf]
    %v1900 = vld [vmem:[#allocation2 + $0x228] sm:$0xf]
    %v1901 = vld [vmem:[#allocation2 + $0x234] sm:$0xf]
    %v1902 = vld [vmem:[#allocation2 + $0x240] sm:$0xf]
    %s1903 = scalar_lea.vmem %s3, 224
    %v1904 = vld [vmem:[%s1903] sm:$0xff]
    %v1905 = vld [vmem:[%s1903 + $0x8] sm:$0xff]
    %v1906 = vld [vmem:[%s1903 + $0x10] sm:$0xff]
    %v1907 = vld [vmem:[%s1903 + $0x18] sm:$0xff]
    %v1908 = vld [vmem:[%s1903 + $0x20] sm:$0xff]
    %v1909 = vld [vmem:[%s1903 + $0x28] sm:$0xff]
    %v1910 = vld [vmem:[%s1903 + $0x30] sm:$0xff]
    %v1911 = vld [vmem:[%s1903 + $0x38] sm:$0xff]
    %v1912 = vld [vmem:[%s1903 + $0x40] sm:$0xff]
    %v1913 = vld [vmem:[%s1903 + $0x48] sm:$0xff]
    %v1914 = vld [vmem:[%s1903 + $0x50] sm:$0xff]
    %v1915 = vld [vmem:[%s1903 + $0x58] sm:$0xff]
    %v1916 = vld [vmem:[%s1903 + $0x60] sm:$0xff]
    %v1917 = vld [vmem:[%s1903 + $0x68] sm:$0xff]
    %v1918 = vld [vmem:[%s1903 + $0x70] sm:$0xff]
    %v1919 = vld [vmem:[%s1903 + $0x78] sm:$0xff]
    %v1920 = vld [vmem:[%s1903 + $0x80] sm:$0xff]
    %v1921 = vld [vmem:[%s1903 + $0x88] sm:$0xff]
    %v1922 = vld [vmem:[%s1903 + $0x90] sm:$0xff]
    %v1923 = vld [vmem:[%s1903 + $0x98] sm:$0xff]
    %v1924 = vld [vmem:[%s1903 + $0xa0] sm:$0xff]
    %v1925 = vld [vmem:[%s1903 + $0xa8] sm:$0xff]
    %v1926 = vld [vmem:[%s1903 + $0xb0] sm:$0xff]
    %v1927 = vld [vmem:[%s1903 + $0xb8] sm:$0xff]
    %v1928 = vld [vmem:[%s1903 + $0xc0] sm:$0xff]
    %v1929 = vld [vmem:[%s1903 + $0xc8] sm:$0xff]
    %v1930 = vld [vmem:[%s1903 + $0xd0] sm:$0xff]
    %v1931 = vld [vmem:[%s1903 + $0xd8] sm:$0xff]
    %v1960 = vunpack.c.l.b16 %v1904
    %v1961 = vunpack.c.h.b16 %v1904
    %v1962 = vunpack.c.l.b16 %v1905
    %v1963 = vunpack.c.h.b16 %v1905
    %v1964 = vunpack.c.l.b16 %v1906
    %v1965 = vunpack.c.h.b16 %v1906
    %v1966 = vunpack.c.l.b16 %v1907
    %v1967 = vunpack.c.h.b16 %v1907
    %v1968 = vunpack.c.l.b16 %v1908
    %v1969 = vunpack.c.h.b16 %v1908
    %v1970 = vunpack.c.l.b16 %v1909
    %v1971 = vunpack.c.h.b16 %v1909
    %v1972 = vunpack.c.l.b16 %v1910
    %v1973 = vunpack.c.h.b16 %v1910
    %v1974 = vunpack.c.l.b16 %v1911
    %v1975 = vunpack.c.h.b16 %v1911
    %v1976 = vunpack.c.l.b16 %v1912
    %v1977 = vunpack.c.h.b16 %v1912
    %v1978 = vunpack.c.l.b16 %v1913
    %v1979 = vunpack.c.h.b16 %v1913
    %v1980 = vunpack.c.l.b16 %v1914
    %v1981 = vunpack.c.h.b16 %v1914
    %v1982 = vunpack.c.l.b16 %v1915
    %v1983 = vunpack.c.h.b16 %v1915
    %v1984 = vunpack.c.l.b16 %v1916
    %v1985 = vunpack.c.h.b16 %v1916
    %v1986 = vunpack.c.l.b16 %v1917
    %v1987 = vunpack.c.h.b16 %v1917
    %v1988 = vunpack.c.l.b16 %v1918
    %v1989 = vunpack.c.h.b16 %v1918
    %v1990 = vunpack.c.l.b16 %v1919
    %v1991 = vunpack.c.h.b16 %v1919
    %v1992 = vunpack.c.l.b16 %v1920
    %v1993 = vunpack.c.h.b16 %v1920
    %v1994 = vunpack.c.l.b16 %v1921
    %v1995 = vunpack.c.h.b16 %v1921
    %v1996 = vunpack.c.l.b16 %v1922
    %v1997 = vunpack.c.h.b16 %v1922
    %v1998 = vunpack.c.l.b16 %v1923
    %v1999 = vunpack.c.h.b16 %v1923
    %v2000 = vunpack.c.l.b16 %v1924
    %v2001 = vunpack.c.h.b16 %v1924
    %v2002 = vunpack.c.l.b16 %v1925
    %v2003 = vunpack.c.h.b16 %v1925
    %v2004 = vunpack.c.l.b16 %v1926
    %v2005 = vunpack.c.h.b16 %v1926
    %v2006 = vunpack.c.l.b16 %v1927
    %v2007 = vunpack.c.h.b16 %v1927
    %v2008 = vunpack.c.l.b16 %v1928
    %v2009 = vunpack.c.h.b16 %v1928
    %v2010 = vunpack.c.l.b16 %v1929
    %v2011 = vunpack.c.h.b16 %v1929
    %v2012 = vunpack.c.l.b16 %v1930
    %v2013 = vunpack.c.h.b16 %v1930
    %v2014 = vunpack.c.l.b16 %v1931
    %v2015 = vunpack.c.h.b16 %v1931
    %v2016 = vpack.c.b16 %v1964, %v1960
    %v2017 = vpack.c.b16 %v1965, %v1961
    %v2018 = vpack.c.b16 %v1966, %v1962
    %v2019 = vpack.c.b16 %v1967, %v1963
    %v2020 = vpack.c.b16 %v1972, %v1968
    %v2021 = vpack.c.b16 %v1973, %v1969
    %v2022 = vpack.c.b16 %v1974, %v1970
    %v2023 = vpack.c.b16 %v1975, %v1971
    %v2024 = vpack.c.b16 %v1980, %v1976
    %v2025 = vpack.c.b16 %v1981, %v1977
    %v2026 = vpack.c.b16 %v1982, %v1978
    %v2027 = vpack.c.b16 %v1983, %v1979
    %v2028 = vpack.c.b16 %v1988, %v1984
    %v2029 = vpack.c.b16 %v1989, %v1985
    %v2030 = vpack.c.b16 %v1990, %v1986
    %v2031 = vpack.c.b16 %v1991, %v1987
    %v2032 = vpack.c.b16 %v1996, %v1992
    %v2033 = vpack.c.b16 %v1997, %v1993
    %v2034 = vpack.c.b16 %v1998, %v1994
    %v2035 = vpack.c.b16 %v1999, %v1995
    %v2036 = vpack.c.b16 %v2004, %v2000
    %v2037 = vpack.c.b16 %v2005, %v2001
    %v2038 = vpack.c.b16 %v2006, %v2002
    %v2039 = vpack.c.b16 %v2007, %v2003
    %v2040 = vpack.c.b16 %v2012, %v2008
    %v2041 = vpack.c.b16 %v2013, %v2009
    %v2042 = vpack.c.b16 %v2014, %v2010
    %v2043 = vpack.c.b16 %v2015, %v2011
    %v2114 = vunpack.c.l.b16 %v1854
    %v2115 = vunpack.c.l.b16 %v1855
    %v2116 = vunpack.c.l.b16 %v1856
    %v2117 = vunpack.c.l.b16 %v1857
    %v2118 = vunpack.c.l.b16 %v1858
    %v2119 = vunpack.c.l.b16 %v1859
    %v2120 = vunpack.c.l.b16 %v1860
    %v2121 = vunpack.c.l.b16 %v1861
    %v2122 = vunpack.c.l.b16 %v1862
    %v2123 = vunpack.c.l.b16 %v1863
    %v2124 = vunpack.c.l.b16 %v1864
    %v2125 = vunpack.c.l.b16 %v1865
    %v2126 = vunpack.c.l.b16 %v1866
    %v2127 = vunpack.c.l.b16 %v1867
    %v2128 = vunpack.c.l.b16 %v1868
    %v2129 = vunpack.c.l.b16 %v1869
    %v2130 = vunpack.c.l.b16 %v1870
    %v2131 = vunpack.c.l.b16 %v1871
    %v2132 = vunpack.c.l.b16 %v1872
    %v2133 = vunpack.c.l.b16 %v1873
    %v2134 = vunpack.c.l.b16 %v1874
    %v2135 = vunpack.c.l.b16 %v1875
    %v2136 = vunpack.c.l.b16 %v1876
    %v2137 = vunpack.c.l.b16 %v1877
    %v2138 = vunpack.c.l.b16 %v1878
    %v2139 = vunpack.c.l.b16 %v1879
    %v2140 = vunpack.c.l.b16 %v1880
    %v2141 = vunpack.c.l.b16 %v1881
    %v2142 = vunpack.c.l.b16 %v1882
    %v2143 = vunpack.c.l.b16 %v1883
    %v2144 = vunpack.c.l.b16 %v1884
    %v2145 = vunpack.c.l.b16 %v1885
    %v2146 = vunpack.c.l.b16 %v1886
    %v2147 = vunpack.c.l.b16 %v1887
    %v2148 = vunpack.c.l.b16 %v1888
    %v2149 = vunpack.c.l.b16 %v1889
    %v2150 = vunpack.c.l.b16 %v1890
    %v2151 = vunpack.c.l.b16 %v1891
    %v2152 = vunpack.c.l.b16 %v1892
    %v2153 = vunpack.c.l.b16 %v1893
    %v2154 = vunpack.c.l.b16 %v1894
    %v2155 = vunpack.c.l.b16 %v1895
    %v2156 = vunpack.c.l.b16 %v1896
    %v2157 = vunpack.c.l.b16 %v1897
    %v2158 = vunpack.c.l.b16 %v1898
    %v2159 = vunpack.c.l.b16 %v1899
    %v2160 = vunpack.c.l.b16 %v1900
    %v2161 = vunpack.c.l.b16 %v1901
    %v2162 = vunpack.c.l.b16 %v1902
    %v2163 = vpack.c.b16 %v2115, %v2114
    %v2164 = vpack.c.b16 %v2117, %v2116
    %v2165 = vpack.c.b16 %v2119, %v2118
    %v2166 = vpack.c.b16 %v2121, %v2120
    %v2167 = vpack.c.b16 %v2123, %v2122
    %v2168 = vpack.c.b16 %v2125, %v2124
    %v2169 = vpack.c.b16 %v2127, %v2126
    %v2170 = vpack.c.b16 %v2129, %v2128
    %v2171 = vpack.c.b16 %v2131, %v2130
    %v2172 = vpack.c.b16 %v2133, %v2132
    %v2173 = vpack.c.b16 %v2135, %v2134
    %v2174 = vpack.c.b16 %v2137, %v2136
    %v2175 = vpack.c.b16 %v2139, %v2138
    %v2176 = vpack.c.b16 %v2141, %v2140
    %v2177 = vpack.c.b16 %v2143, %v2142
    %v2178 = vpack.c.b16 %v2145, %v2144
    %v2179 = vpack.c.b16 %v2147, %v2146
    %v2180 = vpack.c.b16 %v2149, %v2148
    %v2181 = vpack.c.b16 %v2151, %v2150
    %v2182 = vpack.c.b16 %v2153, %v2152
    %v2183 = vpack.c.b16 %v2155, %v2154
    %v2184 = vpack.c.b16 %v2157, %v2156
    %v2185 = vpack.c.b16 %v2159, %v2158
    %v2186 = vpack.c.b16 %v2161, %v2160
    %v2187 = vpack.c.b16 %v2162, %v2162
    %2188 = vrot.lane.b32.xlu0 %v2163, 96
    %v2189 = vpop.permute.xlu0 %2188
    %2190 = vrot.lane.b32.xlu0 %v2164, 96
    %v2191 = vpop.permute.xlu0 %2190
    %2192 = vrot.lane.b32.xlu0 %v2165, 96
    %v2193 = vpop.permute.xlu0 %2192
    %2194 = vrot.lane.b32.xlu0 %v2166, 96
    %v2195 = vpop.permute.xlu0 %2194
    %2196 = vrot.lane.b32.xlu0 %v2167, 96
    %v2197 = vpop.permute.xlu0 %2196
    %2198 = vrot.lane.b32.xlu0 %v2168, 96
    %v2199 = vpop.permute.xlu0 %2198
    %2200 = vrot.lane.b32.xlu0 %v2169, 96
    %v2201 = vpop.permute.xlu0 %2200
    %2202 = vrot.lane.b32.xlu0 %v2170, 96
    %v2203 = vpop.permute.xlu0 %2202
    %2204 = vrot.lane.b32.xlu0 %v2171, 96
    %v2205 = vpop.permute.xlu0 %2204
    %2206 = vrot.lane.b32.xlu0 %v2172, 96
    %v2207 = vpop.permute.xlu0 %2206
    %2208 = vrot.lane.b32.xlu0 %v2173, 96
    %v2209 = vpop.permute.xlu0 %2208
    %2210 = vrot.lane.b32.xlu0 %v2174, 96
    %v2211 = vpop.permute.xlu0 %2210
    %2212 = vrot.lane.b32.xlu0 %v2175, 96
    %v2213 = vpop.permute.xlu0 %2212
    %2214 = vrot.lane.b32.xlu0 %v2176, 96
    %v2215 = vpop.permute.xlu0 %2214
    %2216 = vrot.lane.b32.xlu0 %v2177, 96
    %v2217 = vpop.permute.xlu0 %2216
    %2218 = vrot.lane.b32.xlu0 %v2178, 96
    %v2219 = vpop.permute.xlu0 %2218
    %2220 = vrot.lane.b32.xlu0 %v2179, 96
    %v2221 = vpop.permute.xlu0 %2220
    %2222 = vrot.lane.b32.xlu0 %v2180, 96
    %v2223 = vpop.permute.xlu0 %2222
    %2224 = vrot.lane.b32.xlu0 %v2181, 96
    %v2225 = vpop.permute.xlu0 %2224
    %2226 = vrot.lane.b32.xlu0 %v2182, 96
    %v2227 = vpop.permute.xlu0 %2226
    %2228 = vrot.lane.b32.xlu0 %v2183, 96
    %v2229 = vpop.permute.xlu0 %2228
    %2230 = vrot.lane.b32.xlu0 %v2184, 96
    %v2231 = vpop.permute.xlu0 %2230
    %2232 = vrot.lane.b32.xlu0 %v2185, 96
    %v2233 = vpop.permute.xlu0 %2232
    %2234 = vrot.lane.b32.xlu0 %v2186, 96
    %v2235 = vpop.permute.xlu0 %2234
    %2236 = vrot.lane.b32.xlu0 %v2187, 96
    %v2237 = vpop.permute.xlu0 %2236
    %vm2262 = vcmask 64512
    %v2264 = vsel %vm2262, %v2019, 0
    %v2267 = vsel %vm2262, %v2023, 0
    %v2270 = vsel %vm2262, %v2027, 0
    %v2273 = vsel %vm2262, %v2031, 0
    %v2276 = vsel %vm2262, %v2035, 0
    %v2279 = vsel %vm2262, %v2039, 0
    %v2282 = vsel %vm2262, %v2043, 0
    %vm2284 = vcmask 1043456
    %v2286 = vsel %vm2284, %v2237, 0
    %2288 = vmatprep.subr.bf16.mxu0 0
    %2289 = vmatpush1.bf16.msra.mxu0 %v2203
    %2290 = vmatprep.subr.bf16.mxu0 0
    %2291 = vmatpush1.bf16.msra.mxu0 %v2201
    %2292 = vmatprep.subr.bf16.mxu0 0
    %2293 = vmatpush1.bf16.msra.mxu0 %v2199
    %2294 = vmatprep.subr.bf16.mxu0 0
    %2295 = vmatpush1.bf16.msra.mxu0 %v2197
    %2296 = vmatprep.subr.bf16.mxu0 0
    %2297 = vmatpush1.bf16.msra.mxu0 %v2195
    %2298 = vmatprep.subr.bf16.mxu0 0
    %2299 = vmatpush1.bf16.msra.mxu0 %v2193
    %2300 = vmatprep.subr.bf16.mxu0 0
    %2301 = vmatpush1.bf16.msra.mxu0 %v2191
    %2302 = vmatprep.subr.bf16.mxu0 0
    %2303 = vmatpush1.bf16.msra.mxu0 %v2189
    %2304 = vmatprep.subr.bf16.mxu0 0
    %2305 = vmatpush2.bf16.msra.mxu0 %v2219
    %2306 = vmatprep.subr.bf16.mxu0 0
    %2307 = vmatpush2.bf16.msra.mxu0 %v2217
    %2308 = vmatprep.subr.bf16.mxu0 0
    %2309 = vmatpush2.bf16.msra.mxu0 %v2215
    %2310 = vmatprep.subr.bf16.mxu0 0
    %2311 = vmatpush2.bf16.msra.mxu0 %v2213
    %2312 = vmatprep.subr.bf16.mxu0 0
    %2313 = vmatpush2.bf16.msra.mxu0 %v2211
    %2314 = vmatprep.subr.bf16.mxu0 0
    %2315 = vmatpush2.bf16.msra.mxu0 %v2209
    %2316 = vmatprep.subr.bf16.mxu0 0
    %2317 = vmatpush2.bf16.msra.mxu0 %v2207
    %2318 = vmatprep.subr.bf16.mxu0 0
    %2319 = vmatpush2.bf16.msra.mxu0 %v2205
    %2320 = vmatprep.mubr.bf16.mxu0 %v2017
    %2321 = vmatmul.mubr.bf16.gmra.mxu0 %v2016
    %v2322 = vpop.f32.mrf.mxu0
    %v2323 = vadd.f32 0.0, %v2322
    %v2324 = vpop.f32.mrf.mxu0
    %v2325 = vpop.f32.mrf.mxu0
    %v2326 = vadd.f32 0.0, %v2325
    %v2327 = vpop.f32.mrf.mxu0
    %2328 = vmatprep.mubr.bf16.mxu0 %v2021
    %2329 = vmatmul.mubr.bf16.gmra.mxu0 %v2020
    %v2330 = vpop.f32.mrf.mxu0
    %v2331 = vadd.f32 0.0, %v2330
    %v2332 = vpop.f32.mrf.mxu0
    %v2333 = vpop.f32.mrf.mxu0
    %v2334 = vadd.f32 0.0, %v2333
    %v2335 = vpop.f32.mrf.mxu0
    %2336 = vmatprep.mubr.bf16.mxu0 %v2025
    %2337 = vmatmul.mubr.bf16.gmra.mxu0 %v2024
    %v2338 = vpop.f32.mrf.mxu0
    %v2339 = vadd.f32 0.0, %v2338
    %v2340 = vpop.f32.mrf.mxu0
    %v2341 = vpop.f32.mrf.mxu0
    %v2342 = vadd.f32 0.0, %v2341
    %v2343 = vpop.f32.mrf.mxu0
    %2344 = vmatprep.mubr.bf16.mxu0 %v2029
    %2345 = vmatmul.mubr.bf16.gmra.mxu0 %v2028
    %v2346 = vpop.f32.mrf.mxu0
    %v2347 = vadd.f32 0.0, %v2346
    %v2348 = vpop.f32.mrf.mxu0
    %v2349 = vpop.f32.mrf.mxu0
    %v2350 = vadd.f32 0.0, %v2349
    %v2351 = vpop.f32.mrf.mxu0
    %2352 = vmatprep.mubr.bf16.mxu0 %v2033
    %2353 = vmatmul.mubr.bf16.gmra.mxu0 %v2032
    %v2354 = vpop.f32.mrf.mxu0
    %v2355 = vadd.f32 0.0, %v2354
    %v2356 = vpop.f32.mrf.mxu0
    %v2357 = vpop.f32.mrf.mxu0
    %v2358 = vadd.f32 0.0, %v2357
    %v2359 = vpop.f32.mrf.mxu0
    %2360 = vmatprep.mubr.bf16.mxu0 %v2037
    %2361 = vmatmul.mubr.bf16.gmra.mxu0 %v2036
    %v2362 = vpop.f32.mrf.mxu0
    %v2363 = vadd.f32 0.0, %v2362
    %v2364 = vpop.f32.mrf.mxu0
    %v2365 = vpop.f32.mrf.mxu0
    %v2366 = vadd.f32 0.0, %v2365
    %v2367 = vpop.f32.mrf.mxu0
    %2368 = vmatprep.mubr.bf16.mxu0 %v2041
    %2369 = vmatmul.mubr.bf16.gmra.mxu0 %v2040
    %v2370 = vpop.f32.mrf.mxu0
    %v2371 = vadd.f32 0.0, %v2370
    %v2372 = vpop.f32.mrf.mxu0
    %v2373 = vpop.f32.mrf.mxu0
    %v2374 = vadd.f32 0.0, %v2373
    %v2375 = vpop.f32.mrf.mxu0
    %2376 = vdwg.mxu0
    %2377 = vmatprep.subr.bf16.mxu0 0
    %2378 = vmatpush1.bf16.msra.mxu0 %v2235
    %2379 = vmatprep.subr.bf16.mxu0 0
    %2380 = vmatpush1.bf16.msra.mxu0 %v2233
    %2381 = vmatprep.subr.bf16.mxu0 0
    %2382 = vmatpush1.bf16.msra.mxu0 %v2231
    %2383 = vmatprep.subr.bf16.mxu0 0
    %2384 = vmatpush1.bf16.msra.mxu0 %v2229
    %2385 = vmatprep.subr.bf16.mxu0 0
    %2386 = vmatpush1.bf16.msra.mxu0 %v2227
    %2387 = vmatprep.subr.bf16.mxu0 0
    %2388 = vmatpush1.bf16.msra.mxu0 %v2225
    %2389 = vmatprep.subr.bf16.mxu0 0
    %2390 = vmatpush1.bf16.msra.mxu0 %v2223
    %2391 = vmatprep.subr.bf16.mxu0 0
    %2392 = vmatpush1.bf16.msra.mxu0 %v2221
    %2393 = vmatprep.subr.bf16.mxu0 0
    %2394 = vmatpush2.bf16.msra.mxu0 0
    %2395 = vmatprep.subr.bf16.mxu0 0
    %2396 = vmatpush2.bf16.msra.mxu0 0
    %2397 = vmatprep.subr.bf16.mxu0 0
    %2398 = vmatpush2.bf16.msra.mxu0 0
    %2399 = vmatprep.subr.bf16.mxu0 0
    %2400 = vmatpush2.bf16.msra.mxu0 0
    %2401 = vmatprep.subr.bf16.mxu0 0
    %2402 = vmatpush2.bf16.msra.mxu0 0
    %2403 = vmatprep.subr.bf16.mxu0 0
    %2404 = vmatpush2.bf16.msra.mxu0 0
    %2405 = vmatprep.subr.bf16.mxu0 0
    %2406 = vmatpush2.bf16.msra.mxu0 0
    %2407 = vmatprep.subr.bf16.mxu0 0
    %2408 = vmatpush2.bf16.msra.mxu0 %v2286
    %2409 = vmatprep.mubr.bf16.mxu0 %v2264
    %2410 = vmatmul.mubr.bf16.gmra.mxu0 %v2018
    %v2411 = vpop.f32.mrf.mxu0
    %v2412 = vadd.f32 %v2323, %v2411
    %v2413 = vpop.f32.mrf.mxu0
    %v2414 = vpop.f32.mrf.mxu0
    %v2415 = vadd.f32 %v2326, %v2414
    %v2416 = vpop.f32.mrf.mxu0
    %2417 = vmatprep.mubr.bf16.mxu0 %v2267
    %2418 = vmatmul.mubr.bf16.gmra.mxu0 %v2022
    %v2419 = vpop.f32.mrf.mxu0
    %v2420 = vadd.f32 %v2331, %v2419
    %v2421 = vpop.f32.mrf.mxu0
    %v2422 = vpop.f32.mrf.mxu0
    %v2423 = vadd.f32 %v2334, %v2422
    %v2424 = vpop.f32.mrf.mxu0
    %2425 = vmatprep.mubr.bf16.mxu0 %v2270
    %2426 = vmatmul.mubr.bf16.gmra.mxu0 %v2026
    %v2427 = vpop.f32.mrf.mxu0
    %v2428 = vadd.f32 %v2339, %v2427
    %v2429 = vpop.f32.mrf.mxu0
    %v2430 = vpop.f32.mrf.mxu0
    %v2431 = vadd.f32 %v2342, %v2430
    %v2432 = vpop.f32.mrf.mxu0
    %2433 = vmatprep.mubr.bf16.mxu0 %v2273
    %2434 = vmatmul.mubr.bf16.gmra.mxu0 %v2030
    %v2435 = vpop.f32.mrf.mxu0
    %v2436 = vadd.f32 %v2347, %v2435
    %v2437 = vpop.f32.mrf.mxu0
    %v2438 = vpop.f32.mrf.mxu0
    %v2439 = vadd.f32 %v2350, %v2438
    %v2440 = vpop.f32.mrf.mxu0
    %2441 = vmatprep.mubr.bf16.mxu0 %v2276
    %2442 = vmatmul.mubr.bf16.gmra.mxu0 %v2034
    %v2443 = vpop.f32.mrf.mxu0
    %v2444 = vadd.f32 %v2355, %v2443
    %v2445 = vpop.f32.mrf.mxu0
    %v2446 = vpop.f32.mrf.mxu0
    %v2447 = vadd.f32 %v2358, %v2446
    %v2448 = vpop.f32.mrf.mxu0
    %2449 = vmatprep.mubr.bf16.mxu0 %v2279
    %2450 = vmatmul.mubr.bf16.gmra.mxu0 %v2038
    %v2451 = vpop.f32.mrf.mxu0
    %v2452 = vadd.f32 %v2363, %v2451
    %v2453 = vpop.f32.mrf.mxu0
    %v2454 = vpop.f32.mrf.mxu0
    %v2455 = vadd.f32 %v2366, %v2454
    %v2456 = vpop.f32.mrf.mxu0
    %2457 = vmatprep.mubr.bf16.mxu0 %v2282
    %2458 = vmatmul.mubr.bf16.gmra.mxu0 %v2042
    %v2459 = vpop.f32.mrf.mxu0
    %v2460 = vadd.f32 %v2371, %v2459
    %v2461 = vpop.f32.mrf.mxu0
    %v2462 = vpop.f32.mrf.mxu0
    %v2463 = vadd.f32 %v2374, %v2462
    %v2464 = vpop.f32.mrf.mxu0
    %2465 = vdwg.mxu0
    %v2494 = vunpack.c.l.b16 %v1826
    %v2495 = vunpack.c.h.b16 %v1826
    %v2496 = vunpack.c.l.b16 %v1827
    %v2497 = vunpack.c.h.b16 %v1827
    %v2498 = vunpack.c.l.b16 %v1828
    %v2499 = vunpack.c.h.b16 %v1828
    %v2500 = vunpack.c.l.b16 %v1829
    %v2501 = vunpack.c.h.b16 %v1829
    %v2502 = vunpack.c.l.b16 %v1830
    %v2503 = vunpack.c.h.b16 %v1830
    %v2504 = vunpack.c.l.b16 %v1831
    %v2505 = vunpack.c.h.b16 %v1831
    %v2506 = vunpack.c.l.b16 %v1832
    %v2507 = vunpack.c.h.b16 %v1832
    %v2508 = vunpack.c.l.b16 %v1833
    %v2509 = vunpack.c.h.b16 %v1833
    %v2510 = vunpack.c.l.b16 %v1834
    %v2511 = vunpack.c.h.b16 %v1834
    %v2512 = vunpack.c.l.b16 %v1835
    %v2513 = vunpack.c.h.b16 %v1835
    %v2514 = vunpack.c.l.b16 %v1836
    %v2515 = vunpack.c.h.b16 %v1836
    %v2516 = vunpack.c.l.b16 %v1837
    %v2517 = vunpack.c.h.b16 %v1837
    %v2518 = vunpack.c.l.b16 %v1838
    %v2519 = vunpack.c.h.b16 %v1838
    %v2520 = vunpack.c.l.b16 %v1839
    %v2521 = vunpack.c.h.b16 %v1839
    %v2522 = vunpack.c.l.b16 %v1840
    %v2523 = vunpack.c.h.b16 %v1840
    %v2524 = vunpack.c.l.b16 %v1841
    %v2525 = vunpack.c.h.b16 %v1841
    %v2526 = vunpack.c.l.b16 %v1842
    %v2527 = vunpack.c.h.b16 %v1842
    %v2528 = vunpack.c.l.b16 %v1843
    %v2529 = vunpack.c.h.b16 %v1843
    %v2530 = vunpack.c.l.b16 %v1844
    %v2531 = vunpack.c.h.b16 %v1844
    %v2532 = vunpack.c.l.b16 %v1845
    %v2533 = vunpack.c.h.b16 %v1845
    %v2534 = vunpack.c.l.b16 %v1846
    %v2535 = vunpack.c.h.b16 %v1846
    %v2536 = vunpack.c.l.b16 %v1847
    %v2537 = vunpack.c.h.b16 %v1847
    %v2538 = vunpack.c.l.b16 %v1848
    %v2539 = vunpack.c.h.b16 %v1848
    %v2540 = vunpack.c.l.b16 %v1849
    %v2541 = vunpack.c.h.b16 %v1849
    %v2542 = vunpack.c.l.b16 %v1850
    %v2543 = vunpack.c.h.b16 %v1850
    %v2544 = vunpack.c.l.b16 %v1851
    %v2545 = vunpack.c.h.b16 %v1851
    %v2546 = vunpack.c.l.b16 %v1852
    %v2547 = vunpack.c.h.b16 %v1852
    %v2548 = vunpack.c.l.b16 %v1853
    %v2549 = vunpack.c.h.b16 %v1853
    %v2550 = vpack.c.b16 %v2498, %v2494
    %v2551 = vpack.c.b16 %v2499, %v2495
    %v2552 = vpack.c.b16 %v2500, %v2496
    %v2553 = vpack.c.b16 %v2501, %v2497
    %v2554 = vpack.c.b16 %v2506, %v2502
    %v2555 = vpack.c.b16 %v2507, %v2503
    %v2556 = vpack.c.b16 %v2508, %v2504
    %v2557 = vpack.c.b16 %v2509, %v2505
    %v2558 = vpack.c.b16 %v2514, %v2510
    %v2559 = vpack.c.b16 %v2515, %v2511
    %v2560 = vpack.c.b16 %v2516, %v2512
    %v2561 = vpack.c.b16 %v2517, %v2513
    %v2562 = vpack.c.b16 %v2522, %v2518
    %v2563 = vpack.c.b16 %v2523, %v2519
    %v2564 = vpack.c.b16 %v2524, %v2520
    %v2565 = vpack.c.b16 %v2525, %v2521
    %v2566 = vpack.c.b16 %v2530, %v2526
    %v2567 = vpack.c.b16 %v2531, %v2527
    %v2568 = vpack.c.b16 %v2532, %v2528
    %v2569 = vpack.c.b16 %v2533, %v2529
    %v2570 = vpack.c.b16 %v2538, %v2534
    %v2571 = vpack.c.b16 %v2539, %v2535
    %v2572 = vpack.c.b16 %v2540, %v2536
    %v2573 = vpack.c.b16 %v2541, %v2537
    %v2574 = vpack.c.b16 %v2546, %v2542
    %v2575 = vpack.c.b16 %v2547, %v2543
    %v2576 = vpack.c.b16 %v2548, %v2544
    %v2577 = vpack.c.b16 %v2549, %v2545
    %v2624 = vsel %vm2262, %v2553, 0
    %v2627 = vsel %vm2262, %v2557, 0
    %v2630 = vsel %vm2262, %v2561, 0
    %v2633 = vsel %vm2262, %v2565, 0
    %v2636 = vsel %vm2262, %v2569, 0
    %v2639 = vsel %vm2262, %v2573, 0
    %v2642 = vsel %vm2262, %v2577, 0
    %v2645 = vsel %vm2284, %v2187, 0
    %2647 = vmatprep.subr.bf16.mxu0 0
    %2648 = vmatpush1.bf16.msra.mxu0 %v2170
    %2649 = vmatprep.subr.bf16.mxu0 0
    %2650 = vmatpush1.bf16.msra.mxu0 %v2169
    %2651 = vmatprep.subr.bf16.mxu0 0
    %2652 = vmatpush1.bf16.msra.mxu0 %v2168
    %2653 = vmatprep.subr.bf16.mxu0 0
    %2654 = vmatpush1.bf16.msra.mxu0 %v2167
    %2655 = vmatprep.subr.bf16.mxu0 0
    %2656 = vmatpush1.bf16.msra.mxu0 %v2166
    %2657 = vmatprep.subr.bf16.mxu0 0
    %2658 = vmatpush1.bf16.msra.mxu0 %v2165
    %2659 = vmatprep.subr.bf16.mxu0 0
    %2660 = vmatpush1.bf16.msra.mxu0 %v2164
    %2661 = vmatprep.subr.bf16.mxu0 0
    %2662 = vmatpush1.bf16.msra.mxu0 %v2163
    %2663 = vmatprep.subr.bf16.mxu0 0
    %2664 = vmatpush2.bf16.msra.mxu0 %v2178
    %2665 = vmatprep.subr.bf16.mxu0 0
    %2666 = vmatpush2.bf16.msra.mxu0 %v2177
    %2667 = vmatprep.subr.bf16.mxu0 0
    %2668 = vmatpush2.bf16.msra.mxu0 %v2176
    %2669 = vmatprep.subr.bf16.mxu0 0
    %2670 = vmatpush2.bf16.msra.mxu0 %v2175
    %2671 = vmatprep.subr.bf16.mxu0 0
    %2672 = vmatpush2.bf16.msra.mxu0 %v2174
    %2673 = vmatprep.subr.bf16.mxu0 0
    %2674 = vmatpush2.bf16.msra.mxu0 %v2173
    %2675 = vmatprep.subr.bf16.mxu0 0
    %2676 = vmatpush2.bf16.msra.mxu0 %v2172
    %2677 = vmatprep.subr.bf16.mxu0 0
    %2678 = vmatpush2.bf16.msra.mxu0 %v2171
    %2679 = vmatprep.mubr.bf16.mxu0 %v2551
    %2680 = vmatmul.mubr.bf16.gmra.mxu0 %v2550
    %v2681 = vpop.f32.mrf.mxu0
    %v2682 = vadd.f32 %v2412, %v2681
    %v2683 = vpop.f32.mrf.mxu0
    %v2684 = vpop.f32.mrf.mxu0
    %v2685 = vadd.f32 %v2415, %v2684
    %v2686 = vpop.f32.mrf.mxu0
    %2687 = vmatprep.mubr.bf16.mxu0 %v2555
    %2688 = vmatmul.mubr.bf16.gmra.mxu0 %v2554
    %v2689 = vpop.f32.mrf.mxu0
    %v2690 = vadd.f32 %v2420, %v2689
    %v2691 = vpop.f32.mrf.mxu0
    %v2692 = vpop.f32.mrf.mxu0
    %v2693 = vadd.f32 %v2423, %v2692
    %v2694 = vpop.f32.mrf.mxu0
    %2695 = vmatprep.mubr.bf16.mxu0 %v2559
    %2696 = vmatmul.mubr.bf16.gmra.mxu0 %v2558
    %v2697 = vpop.f32.mrf.mxu0
    %v2698 = vadd.f32 %v2428, %v2697
    %v2699 = vpop.f32.mrf.mxu0
    %v2700 = vpop.f32.mrf.mxu0
    %v2701 = vadd.f32 %v2431, %v2700
    %v2702 = vpop.f32.mrf.mxu0
    %2703 = vmatprep.mubr.bf16.mxu0 %v2563
    %2704 = vmatmul.mubr.bf16.gmra.mxu0 %v2562
    %v2705 = vpop.f32.mrf.mxu0
    %v2706 = vadd.f32 %v2436, %v2705
    %v2707 = vpop.f32.mrf.mxu0
    %v2708 = vpop.f32.mrf.mxu0
    %v2709 = vadd.f32 %v2439, %v2708
    %v2710 = vpop.f32.mrf.mxu0
    %2711 = vmatprep.mubr.bf16.mxu0 %v2567
    %2712 = vmatmul.mubr.bf16.gmra.mxu0 %v2566
    %v2713 = vpop.f32.mrf.mxu0
    %v2714 = vadd.f32 %v2444, %v2713
    %v2715 = vpop.f32.mrf.mxu0
    %v2716 = vpop.f32.mrf.mxu0
    %v2717 = vadd.f32 %v2447, %v2716
    %v2718 = vpop.f32.mrf.mxu0
    %2719 = vmatprep.mubr.bf16.mxu0 %v2571
    %2720 = vmatmul.mubr.bf16.gmra.mxu0 %v2570
    %v2721 = vpop.f32.mrf.mxu0
    %v2722 = vadd.f32 %v2452, %v2721
    %v2723 = vpop.f32.mrf.mxu0
    %v2724 = vpop.f32.mrf.mxu0
    %v2725 = vadd.f32 %v2455, %v2724
    %v2726 = vpop.f32.mrf.mxu0
    %2727 = vmatprep.mubr.bf16.mxu0 %v2575
    %2728 = vmatmul.mubr.bf16.gmra.mxu0 %v2574
    %v2729 = vpop.f32.mrf.mxu0
    %v2730 = vadd.f32 %v2460, %v2729
    %v2731 = vpop.f32.mrf.mxu0
    %v2732 = vpop.f32.mrf.mxu0
    %v2733 = vadd.f32 %v2463, %v2732
    %v2734 = vpop.f32.mrf.mxu0
    %2735 = vdwg.mxu0
    %2736 = vmatprep.subr.bf16.mxu0 0
    %2737 = vmatpush1.bf16.msra.mxu0 %v2186
    %2738 = vmatprep.subr.bf16.mxu0 0
    %2739 = vmatpush1.bf16.msra.mxu0 %v2185
    %2740 = vmatprep.subr.bf16.mxu0 0
    %2741 = vmatpush1.bf16.msra.mxu0 %v2184
    %2742 = vmatprep.subr.bf16.mxu0 0
    %2743 = vmatpush1.bf16.msra.mxu0 %v2183
    %2744 = vmatprep.subr.bf16.mxu0 0
    %2745 = vmatpush1.bf16.msra.mxu0 %v2182
    %2746 = vmatprep.subr.bf16.mxu0 0
    %2747 = vmatpush1.bf16.msra.mxu0 %v2181
    %2748 = vmatprep.subr.bf16.mxu0 0
    %2749 = vmatpush1.bf16.msra.mxu0 %v2180
    %2750 = vmatprep.subr.bf16.mxu0 0
    %2751 = vmatpush1.bf16.msra.mxu0 %v2179
    %2752 = vmatprep.subr.bf16.mxu0 0
    %2753 = vmatpush2.bf16.msra.mxu0 0
    %2754 = vmatprep.subr.bf16.mxu0 0
    %2755 = vmatpush2.bf16.msra.mxu0 0
    %2756 = vmatprep.subr.bf16.mxu0 0
    %2757 = vmatpush2.bf16.msra.mxu0 0
    %2758 = vmatprep.subr.bf16.mxu0 0
    %2759 = vmatpush2.bf16.msra.mxu0 0
    %2760 = vmatprep.subr.bf16.mxu0 0
    %2761 = vmatpush2.bf16.msra.mxu0 0
    %2762 = vmatprep.subr.bf16.mxu0 0
    %2763 = vmatpush2.bf16.msra.mxu0 0
    %2764 = vmatprep.subr.bf16.mxu0 0
    %2765 = vmatpush2.bf16.msra.mxu0 0
    %2766 = vmatprep.subr.bf16.mxu0 0
    %2767 = vmatpush2.bf16.msra.mxu0 %v2645
    %2768 = vmatprep.mubr.bf16.mxu0 %v2624
    %2769 = vmatmul.mubr.bf16.gmra.mxu0 %v2552
    %v2770 = vpop.f32.mrf.mxu0
    %v2771 = vadd.f32 %v2682, %v2770
    %v2772 = vpop.f32.mrf.mxu0
    %v2773 = vpop.f32.mrf.mxu0
    %v2774 = vadd.f32 %v2685, %v2773
    %v2775 = vpop.f32.mrf.mxu0
    %2776 = vmatprep.mubr.bf16.mxu0 %v2627
    %2777 = vmatmul.mubr.bf16.gmra.mxu0 %v2556
    %v2778 = vpop.f32.mrf.mxu0
    %v2779 = vadd.f32 %v2690, %v2778
    %v2780 = vpop.f32.mrf.mxu0
    %v2781 = vpop.f32.mrf.mxu0
    %v2782 = vadd.f32 %v2693, %v2781
    %v2783 = vpop.f32.mrf.mxu0
    %2784 = vmatprep.mubr.bf16.mxu0 %v2630
    %2785 = vmatmul.mubr.bf16.gmra.mxu0 %v2560
    %v2786 = vpop.f32.mrf.mxu0
    %v2787 = vadd.f32 %v2698, %v2786
    %v2788 = vpop.f32.mrf.mxu0
    %v2789 = vpop.f32.mrf.mxu0
    %v2790 = vadd.f32 %v2701, %v2789
    %v2791 = vpop.f32.mrf.mxu0
    %2792 = vmatprep.mubr.bf16.mxu0 %v2633
    %2793 = vmatmul.mubr.bf16.gmra.mxu0 %v2564
    %v2794 = vpop.f32.mrf.mxu0
    %v2795 = vadd.f32 %v2706, %v2794
    %v2796 = vpop.f32.mrf.mxu0
    %v2797 = vpop.f32.mrf.mxu0
    %v2798 = vadd.f32 %v2709, %v2797
    %v2799 = vpop.f32.mrf.mxu0
    %2800 = vmatprep.mubr.bf16.mxu0 %v2636
    %2801 = vmatmul.mubr.bf16.gmra.mxu0 %v2568
    %v2802 = vpop.f32.mrf.mxu0
    %v2803 = vadd.f32 %v2714, %v2802
    %v2804 = vpop.f32.mrf.mxu0
    %v2805 = vpop.f32.mrf.mxu0
    %v2806 = vadd.f32 %v2717, %v2805
    %v2807 = vpop.f32.mrf.mxu0
    %2808 = vmatprep.mubr.bf16.mxu0 %v2639
    %2809 = vmatmul.mubr.bf16.gmra.mxu0 %v2572
    %v2810 = vpop.f32.mrf.mxu0
    %v2811 = vadd.f32 %v2722, %v2810
    %v2812 = vpop.f32.mrf.mxu0
    %v2813 = vpop.f32.mrf.mxu0
    %v2814 = vadd.f32 %v2725, %v2813
    %v2815 = vpop.f32.mrf.mxu0
    %2816 = vmatprep.mubr.bf16.mxu0 %v2642
    %2817 = vmatmul.mubr.bf16.gmra.mxu0 %v2576
    %v2818 = vpop.f32.mrf.mxu0
    %v2819 = vadd.f32 %v2730, %v2818
    %v2820 = vpop.f32.mrf.mxu0
    %v2821 = vpop.f32.mrf.mxu0
    %v2822 = vadd.f32 %v2733, %v2821
    %v2823 = vpop.f32.mrf.mxu0
    %2824 = vdwg.mxu0
    %s2825 = scalar_lea.vmem %s3, 448
    %v2826 = vld [vmem:[%s2825] sm:$0xff]
    %v2827 = vld [vmem:[%s2825 + $0x8] sm:$0xff]
    %v2828 = vld [vmem:[%s2825 + $0x10] sm:$0xff]
    %v2829 = vld [vmem:[%s2825 + $0x18] sm:$0xff]
    %v2830 = vld [vmem:[%s2825 + $0x20] sm:$0xff]
    %v2831 = vld [vmem:[%s2825 + $0x28] sm:$0xff]
    %v2832 = vld [vmem:[%s2825 + $0x30] sm:$0xff]
    %v2833 = vld [vmem:[%s2825 + $0x38] sm:$0xff]
    %v2834 = vld [vmem:[%s2825 + $0x40] sm:$0xff]
    %v2835 = vld [vmem:[%s2825 + $0x48] sm:$0xff]
    %v2836 = vld [vmem:[%s2825 + $0x50] sm:$0xff]
    %v2837 = vld [vmem:[%s2825 + $0x58] sm:$0xff]
    %v2838 = vld [vmem:[%s2825 + $0x60] sm:$0xff]
    %v2839 = vld [vmem:[%s2825 + $0x68] sm:$0xff]
    %v2840 = vld [vmem:[%s2825 + $0x70] sm:$0xff]
    %v2841 = vld [vmem:[%s2825 + $0x78] sm:$0xff]
    %v2842 = vld [vmem:[%s2825 + $0x80] sm:$0xff]
    %v2843 = vld [vmem:[%s2825 + $0x88] sm:$0xff]
    %v2844 = vld [vmem:[%s2825 + $0x90] sm:$0xff]
    %v2845 = vld [vmem:[%s2825 + $0x98] sm:$0xff]
    %v2846 = vld [vmem:[%s2825 + $0xa0] sm:$0xff]
    %v2847 = vld [vmem:[%s2825 + $0xa8] sm:$0xff]
    %v2848 = vld [vmem:[%s2825 + $0xb0] sm:$0xff]
    %v2849 = vld [vmem:[%s2825 + $0xb8] sm:$0xff]
    %v2850 = vld [vmem:[%s2825 + $0xc0] sm:$0xff]
    %v2851 = vld [vmem:[%s2825 + $0xc8] sm:$0xff]
    %v2852 = vld [vmem:[%s2825 + $0xd0] sm:$0xff]
    %v2853 = vld [vmem:[%s2825 + $0xd8] sm:$0xff]
    %v2882 = vunpack.c.l.b16 %v2826
    %v2883 = vunpack.c.h.b16 %v2826
    %v2884 = vunpack.c.l.b16 %v2827
    %v2885 = vunpack.c.h.b16 %v2827
    %v2886 = vunpack.c.l.b16 %v2828
    %v2887 = vunpack.c.h.b16 %v2828
    %v2888 = vunpack.c.l.b16 %v2829
    %v2889 = vunpack.c.h.b16 %v2829
    %v2890 = vunpack.c.l.b16 %v2830
    %v2891 = vunpack.c.h.b16 %v2830
    %v2892 = vunpack.c.l.b16 %v2831
    %v2893 = vunpack.c.h.b16 %v2831
    %v2894 = vunpack.c.l.b16 %v2832
    %v2895 = vunpack.c.h.b16 %v2832
    %v2896 = vunpack.c.l.b16 %v2833
    %v2897 = vunpack.c.h.b16 %v2833
    %v2898 = vunpack.c.l.b16 %v2834
    %v2899 = vunpack.c.h.b16 %v2834
    %v2900 = vunpack.c.l.b16 %v2835
    %v2901 = vunpack.c.h.b16 %v2835
    %v2902 = vunpack.c.l.b16 %v2836
    %v2903 = vunpack.c.h.b16 %v2836
    %v2904 = vunpack.c.l.b16 %v2837
    %v2905 = vunpack.c.h.b16 %v2837
    %v2906 = vunpack.c.l.b16 %v2838
    %v2907 = vunpack.c.h.b16 %v2838
    %v2908 = vunpack.c.l.b16 %v2839
    %v2909 = vunpack.c.h.b16 %v2839
    %v2910 = vunpack.c.l.b16 %v2840
    %v2911 = vunpack.c.h.b16 %v2840
    %v2912 = vunpack.c.l.b16 %v2841
    %v2913 = vunpack.c.h.b16 %v2841
    %v2914 = vunpack.c.l.b16 %v2842
    %v2915 = vunpack.c.h.b16 %v2842
    %v2916 = vunpack.c.l.b16 %v2843
    %v2917 = vunpack.c.h.b16 %v2843
    %v2918 = vunpack.c.l.b16 %v2844
    %v2919 = vunpack.c.h.b16 %v2844
    %v2920 = vunpack.c.l.b16 %v2845
    %v2921 = vunpack.c.h.b16 %v2845
    %v2922 = vunpack.c.l.b16 %v2846
    %v2923 = vunpack.c.h.b16 %v2846
    %v2924 = vunpack.c.l.b16 %v2847
    %v2925 = vunpack.c.h.b16 %v2847
    %v2926 = vunpack.c.l.b16 %v2848
    %v2927 = vunpack.c.h.b16 %v2848
    %v2928 = vunpack.c.l.b16 %v2849
    %v2929 = vunpack.c.h.b16 %v2849
    %v2930 = vunpack.c.l.b16 %v2850
    %v2931 = vunpack.c.h.b16 %v2850
    %v2932 = vunpack.c.l.b16 %v2851
    %v2933 = vunpack.c.h.b16 %v2851
    %v2934 = vunpack.c.l.b16 %v2852
    %v2935 = vunpack.c.h.b16 %v2852
    %v2936 = vunpack.c.l.b16 %v2853
    %v2937 = vunpack.c.h.b16 %v2853
    %v2938 = vpack.c.b16 %v2886, %v2882
    %v2939 = vpack.c.b16 %v2887, %v2883
    %v2940 = vpack.c.b16 %v2888, %v2884
    %v2941 = vpack.c.b16 %v2889, %v2885
    %v2942 = vpack.c.b16 %v2894, %v2890
    %v2943 = vpack.c.b16 %v2895, %v2891
    %v2944 = vpack.c.b16 %v2896, %v2892
    %v2945 = vpack.c.b16 %v2897, %v2893
    %v2946 = vpack.c.b16 %v2902, %v2898
    %v2947 = vpack.c.b16 %v2903, %v2899
    %v2948 = vpack.c.b16 %v2904, %v2900
    %v2949 = vpack.c.b16 %v2905, %v2901
    %v2950 = vpack.c.b16 %v2910, %v2906
    %v2951 = vpack.c.b16 %v2911, %v2907
    %v2952 = vpack.c.b16 %v2912, %v2908
    %v2953 = vpack.c.b16 %v2913, %v2909
    %v2954 = vpack.c.b16 %v2918, %v2914
    %v2955 = vpack.c.b16 %v2919, %v2915
    %v2956 = vpack.c.b16 %v2920, %v2916
    %v2957 = vpack.c.b16 %v2921, %v2917
    %v2958 = vpack.c.b16 %v2926, %v2922
    %v2959 = vpack.c.b16 %v2927, %v2923
    %v2960 = vpack.c.b16 %v2928, %v2924
    %v2961 = vpack.c.b16 %v2929, %v2925
    %v2962 = vpack.c.b16 %v2934, %v2930
    %v2963 = vpack.c.b16 %v2935, %v2931
    %v2964 = vpack.c.b16 %v2936, %v2932
    %v2965 = vpack.c.b16 %v2937, %v2933
    %2987 = vrot.lane.b32.xlu0 %v2163, 64
    %v2988 = vpop.permute.xlu0 %2987
    %2989 = vrot.lane.b32.xlu0 %v2164, 64
    %v2990 = vpop.permute.xlu0 %2989
    %2991 = vrot.lane.b32.xlu0 %v2165, 64
    %v2992 = vpop.permute.xlu0 %2991
    %2993 = vrot.lane.b32.xlu0 %v2166, 64
    %v2994 = vpop.permute.xlu0 %2993
    %2995 = vrot.lane.b32.xlu0 %v2167, 64
    %v2996 = vpop.permute.xlu0 %2995
    %2997 = vrot.lane.b32.xlu0 %v2168, 64
    %v2998 = vpop.permute.xlu0 %2997
    %2999 = vrot.lane.b32.xlu0 %v2169, 64
    %v3000 = vpop.permute.xlu0 %2999
    %3001 = vrot.lane.b32.xlu0 %v2170, 64
    %v3002 = vpop.permute.xlu0 %3001
    %3003 = vrot.lane.b32.xlu0 %v2171, 64
    %v3004 = vpop.permute.xlu0 %3003
    %3005 = vrot.lane.b32.xlu0 %v2172, 64
    %v3006 = vpop.permute.xlu0 %3005
    %3007 = vrot.lane.b32.xlu0 %v2173, 64
    %v3008 = vpop.permute.xlu0 %3007
    %3009 = vrot.lane.b32.xlu0 %v2174, 64
    %v3010 = vpop.permute.xlu0 %3009
    %3011 = vrot.lane.b32.xlu0 %v2175, 64
    %v3012 = vpop.permute.xlu0 %3011
    %3013 = vrot.lane.b32.xlu0 %v2176, 64
    %v3014 = vpop.permute.xlu0 %3013
    %3015 = vrot.lane.b32.xlu0 %v2177, 64
    %v3016 = vpop.permute.xlu0 %3015
    %3017 = vrot.lane.b32.xlu0 %v2178, 64
    %v3018 = vpop.permute.xlu0 %3017
    %3019 = vrot.lane.b32.xlu0 %v2179, 64
    %v3020 = vpop.permute.xlu0 %3019
    %3021 = vrot.lane.b32.xlu0 %v2180, 64
    %v3022 = vpop.permute.xlu0 %3021
    %3023 = vrot.lane.b32.xlu0 %v2181, 64
    %v3024 = vpop.permute.xlu0 %3023
    %3025 = vrot.lane.b32.xlu0 %v2182, 64
    %v3026 = vpop.permute.xlu0 %3025
    %3027 = vrot.lane.b32.xlu0 %v2183, 64
    %v3028 = vpop.permute.xlu0 %3027
    %3029 = vrot.lane.b32.xlu0 %v2184, 64
    %v3030 = vpop.permute.xlu0 %3029
    %3031 = vrot.lane.b32.xlu0 %v2185, 64
    %v3032 = vpop.permute.xlu0 %3031
    %3033 = vrot.lane.b32.xlu0 %v2186, 64
    %v3034 = vpop.permute.xlu0 %3033
    %3035 = vrot.lane.b32.xlu0 %v2187, 64
    %v3036 = vpop.permute.xlu0 %3035
    %v3062 = vsel %vm2262, %v2941, 0
    %v3065 = vsel %vm2262, %v2945, 0
    %v3068 = vsel %vm2262, %v2949, 0
    %v3071 = vsel %vm2262, %v2953, 0
    %v3074 = vsel %vm2262, %v2957, 0
    %v3077 = vsel %vm2262, %v2961, 0
    %v3080 = vsel %vm2262, %v2965, 0
    %v3083 = vsel %vm2284, %v3036, 0
    %3085 = vmatprep.subr.bf16.mxu0 0
    %3086 = vmatpush1.bf16.msra.mxu0 %v3002
    %3087 = vmatprep.subr.bf16.mxu0 0
    %3088 = vmatpush1.bf16.msra.mxu0 %v3000
    %3089 = vmatprep.subr.bf16.mxu0 0
    %3090 = vmatpush1.bf16.msra.mxu0 %v2998
    %3091 = vmatprep.subr.bf16.mxu0 0
    %3092 = vmatpush1.bf16.msra.mxu0 %v2996
    %3093 = vmatprep.subr.bf16.mxu0 0
    %3094 = vmatpush1.bf16.msra.mxu0 %v2994
    %3095 = vmatprep.subr.bf16.mxu0 0
    %3096 = vmatpush1.bf16.msra.mxu0 %v2992
    %3097 = vmatprep.subr.bf16.mxu0 0
    %3098 = vmatpush1.bf16.msra.mxu0 %v2990
    %3099 = vmatprep.subr.bf16.mxu0 0
    %3100 = vmatpush1.bf16.msra.mxu0 %v2988
    %3101 = vmatprep.subr.bf16.mxu0 0
    %3102 = vmatpush2.bf16.msra.mxu0 %v3018
    %3103 = vmatprep.subr.bf16.mxu0 0
    %3104 = vmatpush2.bf16.msra.mxu0 %v3016
    %3105 = vmatprep.subr.bf16.mxu0 0
    %3106 = vmatpush2.bf16.msra.mxu0 %v3014
    %3107 = vmatprep.subr.bf16.mxu0 0
    %3108 = vmatpush2.bf16.msra.mxu0 %v3012
    %3109 = vmatprep.subr.bf16.mxu0 0
    %3110 = vmatpush2.bf16.msra.mxu0 %v3010
    %3111 = vmatprep.subr.bf16.mxu0 0
    %3112 = vmatpush2.bf16.msra.mxu0 %v3008
    %3113 = vmatprep.subr.bf16.mxu0 0
    %3114 = vmatpush2.bf16.msra.mxu0 %v3006
    %3115 = vmatprep.subr.bf16.mxu0 0
    %3116 = vmatpush2.bf16.msra.mxu0 %v3004
    %3117 = vmatprep.mubr.bf16.mxu0 %v2939
    %3118 = vmatmul.mubr.bf16.gmra.mxu0 %v2938
    %v3119 = vpop.f32.mrf.mxu0
    %v3120 = vadd.f32 0.0, %v3119
    %v3121 = vpop.f32.mrf.mxu0
    %v3122 = vpop.f32.mrf.mxu0
    %v3123 = vadd.f32 0.0, %v3122
    %v3124 = vpop.f32.mrf.mxu0
    %3125 = vmatprep.mubr.bf16.mxu0 %v2943
    %3126 = vmatmul.mubr.bf16.gmra.mxu0 %v2942
    %v3127 = vpop.f32.mrf.mxu0
    %v3128 = vadd.f32 0.0, %v3127
    %v3129 = vpop.f32.mrf.mxu0
    %v3130 = vpop.f32.mrf.mxu0
    %v3131 = vadd.f32 0.0, %v3130
    %v3132 = vpop.f32.mrf.mxu0
    %3133 = vmatprep.mubr.bf16.mxu0 %v2947
    %3134 = vmatmul.mubr.bf16.gmra.mxu0 %v2946
    %v3135 = vpop.f32.mrf.mxu0
    %v3136 = vadd.f32 0.0, %v3135
    %v3137 = vpop.f32.mrf.mxu0
    %v3138 = vpop.f32.mrf.mxu0
    %v3139 = vadd.f32 0.0, %v3138
    %v3140 = vpop.f32.mrf.mxu0
    %3141 = vmatprep.mubr.bf16.mxu0 %v2951
    %3142 = vmatmul.mubr.bf16.gmra.mxu0 %v2950
    %v3143 = vpop.f32.mrf.mxu0
    %v3144 = vadd.f32 0.0, %v3143
    %v3145 = vpop.f32.mrf.mxu0
    %v3146 = vpop.f32.mrf.mxu0
    %v3147 = vadd.f32 0.0, %v3146
    %v3148 = vpop.f32.mrf.mxu0
    %3149 = vmatprep.mubr.bf16.mxu0 %v2955
    %3150 = vmatmul.mubr.bf16.gmra.mxu0 %v2954
    %v3151 = vpop.f32.mrf.mxu0
    %v3152 = vadd.f32 0.0, %v3151
    %v3153 = vpop.f32.mrf.mxu0
    %v3154 = vpop.f32.mrf.mxu0
    %v3155 = vadd.f32 0.0, %v3154
    %v3156 = vpop.f32.mrf.mxu0
    %3157 = vmatprep.mubr.bf16.mxu0 %v2959
    %3158 = vmatmul.mubr.bf16.gmra.mxu0 %v2958
    %v3159 = vpop.f32.mrf.mxu0
    %v3160 = vadd.f32 0.0, %v3159
    %v3161 = vpop.f32.mrf.mxu0
    %v3162 = vpop.f32.mrf.mxu0
    %v3163 = vadd.f32 0.0, %v3162
    %v3164 = vpop.f32.mrf.mxu0
    %3165 = vmatprep.mubr.bf16.mxu0 %v2963
    %3166 = vmatmul.mubr.bf16.gmra.mxu0 %v2962
    %v3167 = vpop.f32.mrf.mxu0
    %v3168 = vadd.f32 0.0, %v3167
    %v3169 = vpop.f32.mrf.mxu0
    %v3170 = vpop.f32.mrf.mxu0
    %v3171 = vadd.f32 0.0, %v3170
    %v3172 = vpop.f32.mrf.mxu0
    %3173 = vdwg.mxu0
    %3174 = vmatprep.subr.bf16.mxu0 0
    %3175 = vmatpush1.bf16.msra.mxu0 %v3034
    %3176 = vmatprep.subr.bf16.mxu0 0
    %3177 = vmatpush1.bf16.msra.mxu0 %v3032
    %3178 = vmatprep.subr.bf16.mxu0 0
    %3179 = vmatpush1.bf16.msra.mxu0 %v3030
    %3180 = vmatprep.subr.bf16.mxu0 0
    %3181 = vmatpush1.bf16.msra.mxu0 %v3028
    %3182 = vmatprep.subr.bf16.mxu0 0
    %3183 = vmatpush1.bf16.msra.mxu0 %v3026
    %3184 = vmatprep.subr.bf16.mxu0 0
    %3185 = vmatpush1.bf16.msra.mxu0 %v3024
    %3186 = vmatprep.subr.bf16.mxu0 0
    %3187 = vmatpush1.bf16.msra.mxu0 %v3022
    %3188 = vmatprep.subr.bf16.mxu0 0
    %3189 = vmatpush1.bf16.msra.mxu0 %v3020
    %3190 = vmatprep.subr.bf16.mxu0 0
    %3191 = vmatpush2.bf16.msra.mxu0 0
    %3192 = vmatprep.subr.bf16.mxu0 0
    %3193 = vmatpush2.bf16.msra.mxu0 0
    %3194 = vmatprep.subr.bf16.mxu0 0
    %3195 = vmatpush2.bf16.msra.mxu0 0
    %3196 = vmatprep.subr.bf16.mxu0 0
    %3197 = vmatpush2.bf16.msra.mxu0 0
    %3198 = vmatprep.subr.bf16.mxu0 0
    %3199 = vmatpush2.bf16.msra.mxu0 0
    %3200 = vmatprep.subr.bf16.mxu0 0
    %3201 = vmatpush2.bf16.msra.mxu0 0
    %3202 = vmatprep.subr.bf16.mxu0 0
    %3203 = vmatpush2.bf16.msra.mxu0 0
    %3204 = vmatprep.subr.bf16.mxu0 0
    %3205 = vmatpush2.bf16.msra.mxu0 %v3083
    %3206 = vmatprep.mubr.bf16.mxu0 %v3062
    %3207 = vmatmul.mubr.bf16.gmra.mxu0 %v2940
    %v3208 = vpop.f32.mrf.mxu0
    %v3209 = vadd.f32 %v3120, %v3208
    %v3210 = vpop.f32.mrf.mxu0
    %v3211 = vpop.f32.mrf.mxu0
    %v3212 = vadd.f32 %v3123, %v3211
    %v3213 = vpop.f32.mrf.mxu0
    %3214 = vmatprep.mubr.bf16.mxu0 %v3065
    %3215 = vmatmul.mubr.bf16.gmra.mxu0 %v2944
    %v3216 = vpop.f32.mrf.mxu0
    %v3217 = vadd.f32 %v3128, %v3216
    %v3218 = vpop.f32.mrf.mxu0
    %v3219 = vpop.f32.mrf.mxu0
    %v3220 = vadd.f32 %v3131, %v3219
    %v3221 = vpop.f32.mrf.mxu0
    %3222 = vmatprep.mubr.bf16.mxu0 %v3068
    %3223 = vmatmul.mubr.bf16.gmra.mxu0 %v2948
    %v3224 = vpop.f32.mrf.mxu0
    %v3225 = vadd.f32 %v3136, %v3224
    %v3226 = vpop.f32.mrf.mxu0
    %v3227 = vpop.f32.mrf.mxu0
    %v3228 = vadd.f32 %v3139, %v3227
    %v3229 = vpop.f32.mrf.mxu0
    %3230 = vmatprep.mubr.bf16.mxu0 %v3071
    %3231 = vmatmul.mubr.bf16.gmra.mxu0 %v2952
    %v3232 = vpop.f32.mrf.mxu0
    %v3233 = vadd.f32 %v3144, %v3232
    %v3234 = vpop.f32.mrf.mxu0
    %v3235 = vpop.f32.mrf.mxu0
    %v3236 = vadd.f32 %v3147, %v3235
    %v3237 = vpop.f32.mrf.mxu0
    %3238 = vmatprep.mubr.bf16.mxu0 %v3074
    %3239 = vmatmul.mubr.bf16.gmra.mxu0 %v2956
    %v3240 = vpop.f32.mrf.mxu0
    %v3241 = vadd.f32 %v3152, %v3240
    %v3242 = vpop.f32.mrf.mxu0
    %v3243 = vpop.f32.mrf.mxu0
    %v3244 = vadd.f32 %v3155, %v3243
    %v3245 = vpop.f32.mrf.mxu0
    %3246 = vmatprep.mubr.bf16.mxu0 %v3077
    %3247 = vmatmul.mubr.bf16.gmra.mxu0 %v2960
    %v3248 = vpop.f32.mrf.mxu0
    %v3249 = vadd.f32 %v3160, %v3248
    %v3250 = vpop.f32.mrf.mxu0
    %v3251 = vpop.f32.mrf.mxu0
    %v3252 = vadd.f32 %v3163, %v3251
    %v3253 = vpop.f32.mrf.mxu0
    %3254 = vmatprep.mubr.bf16.mxu0 %v3080
    %3255 = vmatmul.mubr.bf16.gmra.mxu0 %v2964
    %v3256 = vpop.f32.mrf.mxu0
    %v3257 = vadd.f32 %v3168, %v3256
    %v3258 = vpop.f32.mrf.mxu0
    %v3259 = vpop.f32.mrf.mxu0
    %v3260 = vadd.f32 %v3171, %v3259
    %v3261 = vpop.f32.mrf.mxu0
    %3262 = vdwg.mxu0
    %v3263 = vadd.f32 %v2771, %v3209
    %v3264 = vadd.f32 %v2774, %v3212
    %v3265 = vadd.f32 %v2779, %v3217
    %v3266 = vadd.f32 %v2782, %v3220
    %v3267 = vadd.f32 %v2787, %v3225
    %v3268 = vadd.f32 %v2790, %v3228
    %v3269 = vadd.f32 %v2795, %v3233
    %v3270 = vadd.f32 %v2798, %v3236
    %v3271 = vadd.f32 %v2803, %v3241
    %v3272 = vadd.f32 %v2806, %v3244
    %v3273 = vadd.f32 %v2811, %v3249
    %v3274 = vadd.f32 %v2814, %v3252
    %v3275 = vadd.f32 %v2819, %v3257
    %v3276 = vadd.f32 %v2822, %v3260
    %s3277 = scalar_lea.vmem %s3, 672
    %v3278 = vld [vmem:[%s3277] sm:$0xff]
    %v3279 = vld [vmem:[%s3277 + $0x8] sm:$0xff]
    %v3280 = vld [vmem:[%s3277 + $0x10] sm:$0xff]
    %v3281 = vld [vmem:[%s3277 + $0x18] sm:$0xff]
    %v3282 = vld [vmem:[%s3277 + $0x20] sm:$0xff]
    %v3283 = vld [vmem:[%s3277 + $0x28] sm:$0xff]
    %v3284 = vld [vmem:[%s3277 + $0x30] sm:$0xff]
    %v3285 = vld [vmem:[%s3277 + $0x38] sm:$0xff]
    %v3286 = vld [vmem:[%s3277 + $0x40] sm:$0xff]
    %v3287 = vld [vmem:[%s3277 + $0x48] sm:$0xff]
    %v3288 = vld [vmem:[%s3277 + $0x50] sm:$0xff]
    %v3289 = vld [vmem:[%s3277 + $0x58] sm:$0xff]
    %v3290 = vld [vmem:[%s3277 + $0x60] sm:$0xff]
    %v3291 = vld [vmem:[%s3277 + $0x68] sm:$0xff]
    %v3292 = vld [vmem:[%s3277 + $0x70] sm:$0xff]
    %v3293 = vld [vmem:[%s3277 + $0x78] sm:$0xff]
    %v3294 = vld [vmem:[%s3277 + $0x80] sm:$0xff]
    %v3295 = vld [vmem:[%s3277 + $0x88] sm:$0xff]
    %v3296 = vld [vmem:[%s3277 + $0x90] sm:$0xff]
    %v3297 = vld [vmem:[%s3277 + $0x98] sm:$0xff]
    %v3298 = vld [vmem:[%s3277 + $0xa0] sm:$0xff]
    %v3299 = vld [vmem:[%s3277 + $0xa8] sm:$0xff]
    %v3300 = vld [vmem:[%s3277 + $0xb0] sm:$0xff]
    %v3301 = vld [vmem:[%s3277 + $0xb8] sm:$0xff]
    %v3302 = vld [vmem:[%s3277 + $0xc0] sm:$0xff]
    %v3303 = vld [vmem:[%s3277 + $0xc8] sm:$0xff]
    %v3304 = vld [vmem:[%s3277 + $0xd0] sm:$0xff]
    %v3305 = vld [vmem:[%s3277 + $0xd8] sm:$0xff]
    %v3334 = vunpack.c.l.b16 %v3278
    %v3335 = vunpack.c.h.b16 %v3278
    %v3336 = vunpack.c.l.b16 %v3279
    %v3337 = vunpack.c.h.b16 %v3279
    %v3338 = vunpack.c.l.b16 %v3280
    %v3339 = vunpack.c.h.b16 %v3280
    %v3340 = vunpack.c.l.b16 %v3281
    %v3341 = vunpack.c.h.b16 %v3281
    %v3342 = vunpack.c.l.b16 %v3282
    %v3343 = vunpack.c.h.b16 %v3282
    %v3344 = vunpack.c.l.b16 %v3283
    %v3345 = vunpack.c.h.b16 %v3283
    %v3346 = vunpack.c.l.b16 %v3284
    %v3347 = vunpack.c.h.b16 %v3284
    %v3348 = vunpack.c.l.b16 %v3285
    %v3349 = vunpack.c.h.b16 %v3285
    %v3350 = vunpack.c.l.b16 %v3286
    %v3351 = vunpack.c.h.b16 %v3286
    %v3352 = vunpack.c.l.b16 %v3287
    %v3353 = vunpack.c.h.b16 %v3287
    %v3354 = vunpack.c.l.b16 %v3288
    %v3355 = vunpack.c.h.b16 %v3288
    %v3356 = vunpack.c.l.b16 %v3289
    %v3357 = vunpack.c.h.b16 %v3289
    %v3358 = vunpack.c.l.b16 %v3290
    %v3359 = vunpack.c.h.b16 %v3290
    %v3360 = vunpack.c.l.b16 %v3291
    %v3361 = vunpack.c.h.b16 %v3291
    %v3362 = vunpack.c.l.b16 %v3292
    %v3363 = vunpack.c.h.b16 %v3292
    %v3364 = vunpack.c.l.b16 %v3293
    %v3365 = vunpack.c.h.b16 %v3293
    %v3366 = vunpack.c.l.b16 %v3294
    %v3367 = vunpack.c.h.b16 %v3294
    %v3368 = vunpack.c.l.b16 %v3295
    %v3369 = vunpack.c.h.b16 %v3295
    %v3370 = vunpack.c.l.b16 %v3296
    %v3371 = vunpack.c.h.b16 %v3296
    %v3372 = vunpack.c.l.b16 %v3297
    %v3373 = vunpack.c.h.b16 %v3297
    %v3374 = vunpack.c.l.b16 %v3298
    %v3375 = vunpack.c.h.b16 %v3298
    %v3376 = vunpack.c.l.b16 %v3299
    %v3377 = vunpack.c.h.b16 %v3299
    %v3378 = vunpack.c.l.b16 %v3300
    %v3379 = vunpack.c.h.b16 %v3300
    %v3380 = vunpack.c.l.b16 %v3301
    %v3381 = vunpack.c.h.b16 %v3301
    %v3382 = vunpack.c.l.b16 %v3302
    %v3383 = vunpack.c.h.b16 %v3302
    %v3384 = vunpack.c.l.b16 %v3303
    %v3385 = vunpack.c.h.b16 %v3303
    %v3386 = vunpack.c.l.b16 %v3304
    %v3387 = vunpack.c.h.b16 %v3304
    %v3388 = vunpack.c.l.b16 %v3305
    %v3389 = vunpack.c.h.b16 %v3305
    %v3390 = vpack.c.b16 %v3338, %v3334
    %v3391 = vpack.c.b16 %v3339, %v3335
    %v3392 = vpack.c.b16 %v3340, %v3336
    %v3393 = vpack.c.b16 %v3341, %v3337
    %v3394 = vpack.c.b16 %v3346, %v3342
    %v3395 = vpack.c.b16 %v3347, %v3343
    %v3396 = vpack.c.b16 %v3348, %v3344
    %v3397 = vpack.c.b16 %v3349, %v3345
    %v3398 = vpack.c.b16 %v3354, %v3350
    %v3399 = vpack.c.b16 %v3355, %v3351
    %v3400 = vpack.c.b16 %v3356, %v3352
    %v3401 = vpack.c.b16 %v3357, %v3353
    %v3402 = vpack.c.b16 %v3362, %v3358
    %v3403 = vpack.c.b16 %v3363, %v3359
    %v3404 = vpack.c.b16 %v3364, %v3360
    %v3405 = vpack.c.b16 %v3365, %v3361
    %v3406 = vpack.c.b16 %v3370, %v3366
    %v3407 = vpack.c.b16 %v3371, %v3367
    %v3408 = vpack.c.b16 %v3372, %v3368
    %v3409 = vpack.c.b16 %v3373, %v3369
    %v3410 = vpack.c.b16 %v3378, %v3374
    %v3411 = vpack.c.b16 %v3379, %v3375
    %v3412 = vpack.c.b16 %v3380, %v3376
    %v3413 = vpack.c.b16 %v3381, %v3377
    %v3414 = vpack.c.b16 %v3386, %v3382
    %v3415 = vpack.c.b16 %v3387, %v3383
    %v3416 = vpack.c.b16 %v3388, %v3384
    %v3417 = vpack.c.b16 %v3389, %v3385
    %3439 = vrot.lane.b32.xlu0 %v2163, 32
    %v3440 = vpop.permute.xlu0 %3439
    %3441 = vrot.lane.b32.xlu0 %v2164, 32
    %v3442 = vpop.permute.xlu0 %3441
    %3443 = vrot.lane.b32.xlu0 %v2165, 32
    %v3444 = vpop.permute.xlu0 %3443
    %3445 = vrot.lane.b32.xlu0 %v2166, 32
    %v3446 = vpop.permute.xlu0 %3445
    %3447 = vrot.lane.b32.xlu0 %v2167, 32
    %v3448 = vpop.permute.xlu0 %3447
    %3449 = vrot.lane.b32.xlu0 %v2168, 32
    %v3450 = vpop.permute.xlu0 %3449
    %3451 = vrot.lane.b32.xlu0 %v2169, 32
    %v3452 = vpop.permute.xlu0 %3451
    %3453 = vrot.lane.b32.xlu0 %v2170, 32
    %v3454 = vpop.permute.xlu0 %3453
    %3455 = vrot.lane.b32.xlu0 %v2171, 32
    %v3456 = vpop.permute.xlu0 %3455
    %3457 = vrot.lane.b32.xlu0 %v2172, 32
    %v3458 = vpop.permute.xlu0 %3457
    %3459 = vrot.lane.b32.xlu0 %v2173, 32
    %v3460 = vpop.permute.xlu0 %3459
    %3461 = vrot.lane.b32.xlu0 %v2174, 32
    %v3462 = vpop.permute.xlu0 %3461
    %3463 = vrot.lane.b32.xlu0 %v2175, 32
    %v3464 = vpop.permute.xlu0 %3463
    %3465 = vrot.lane.b32.xlu0 %v2176, 32
    %v3466 = vpop.permute.xlu0 %3465
    %3467 = vrot.lane.b32.xlu0 %v2177, 32
    %v3468 = vpop.permute.xlu0 %3467
    %3469 = vrot.lane.b32.xlu0 %v2178, 32
    %v3470 = vpop.permute.xlu0 %3469
    %3471 = vrot.lane.b32.xlu0 %v2179, 32
    %v3472 = vpop.permute.xlu0 %3471
    %3473 = vrot.lane.b32.xlu0 %v2180, 32
    %v3474 = vpop.permute.xlu0 %3473
    %3475 = vrot.lane.b32.xlu0 %v2181, 32
    %v3476 = vpop.permute.xlu0 %3475
    %3477 = vrot.lane.b32.xlu0 %v2182, 32
    %v3478 = vpop.permute.xlu0 %3477
    %3479 = vrot.lane.b32.xlu0 %v2183, 32
    %v3480 = vpop.permute.xlu0 %3479
    %3481 = vrot.lane.b32.xlu0 %v2184, 32
    %v3482 = vpop.permute.xlu0 %3481
    %3483 = vrot.lane.b32.xlu0 %v2185, 32
    %v3484 = vpop.permute.xlu0 %3483
    %3485 = vrot.lane.b32.xlu0 %v2186, 32
    %v3486 = vpop.permute.xlu0 %3485
    %3487 = vrot.lane.b32.xlu0 %v2187, 32
    %v3488 = vpop.permute.xlu0 %3487
    %v3514 = vsel %vm2262, %v3393, 0
    %v3517 = vsel %vm2262, %v3397, 0
    %v3520 = vsel %vm2262, %v3401, 0
    %v3523 = vsel %vm2262, %v3405, 0
    %v3526 = vsel %vm2262, %v3409, 0
    %v3529 = vsel %vm2262, %v3413, 0
    %v3532 = vsel %vm2262, %v3417, 0
    %v3535 = vsel %vm2284, %v3488, 0
    %3537 = vmatprep.subr.bf16.mxu0 0
    %3538 = vmatpush1.bf16.msra.mxu0 %v3454
    %3539 = vmatprep.subr.bf16.mxu0 0
    %3540 = vmatpush1.bf16.msra.mxu0 %v3452
    %3541 = vmatprep.subr.bf16.mxu0 0
    %3542 = vmatpush1.bf16.msra.mxu0 %v3450
    %3543 = vmatprep.subr.bf16.mxu0 0
    %3544 = vmatpush1.bf16.msra.mxu0 %v3448
    %3545 = vmatprep.subr.bf16.mxu0 0
    %3546 = vmatpush1.bf16.msra.mxu0 %v3446
    %3547 = vmatprep.subr.bf16.mxu0 0
    %3548 = vmatpush1.bf16.msra.mxu0 %v3444
    %3549 = vmatprep.subr.bf16.mxu0 0
    %3550 = vmatpush1.bf16.msra.mxu0 %v3442
    %3551 = vmatprep.subr.bf16.mxu0 0
    %3552 = vmatpush1.bf16.msra.mxu0 %v3440
    %3553 = vmatprep.subr.bf16.mxu0 0
    %3554 = vmatpush2.bf16.msra.mxu0 %v3470
    %3555 = vmatprep.subr.bf16.mxu0 0
    %3556 = vmatpush2.bf16.msra.mxu0 %v3468
    %3557 = vmatprep.subr.bf16.mxu0 0
    %3558 = vmatpush2.bf16.msra.mxu0 %v3466
    %3559 = vmatprep.subr.bf16.mxu0 0
    %3560 = vmatpush2.bf16.msra.mxu0 %v3464
    %3561 = vmatprep.subr.bf16.mxu0 0
    %3562 = vmatpush2.bf16.msra.mxu0 %v3462
    %3563 = vmatprep.subr.bf16.mxu0 0
    %3564 = vmatpush2.bf16.msra.mxu0 %v3460
    %3565 = vmatprep.subr.bf16.mxu0 0
    %3566 = vmatpush2.bf16.msra.mxu0 %v3458
    %3567 = vmatprep.subr.bf16.mxu0 0
    %3568 = vmatpush2.bf16.msra.mxu0 %v3456
    %3569 = vmatprep.mubr.bf16.mxu0 %v3391
    %3570 = vmatmul.mubr.bf16.gmra.mxu0 %v3390
    %v3571 = vpop.f32.mrf.mxu0
    %v3572 = vadd.f32 0.0, %v3571
    %v3573 = vpop.f32.mrf.mxu0
    %v3574 = vpop.f32.mrf.mxu0
    %v3575 = vadd.f32 0.0, %v3574
    %v3576 = vpop.f32.mrf.mxu0
    %3577 = vmatprep.mubr.bf16.mxu0 %v3395
    %3578 = vmatmul.mubr.bf16.gmra.mxu0 %v3394
    %v3579 = vpop.f32.mrf.mxu0
    %v3580 = vadd.f32 0.0, %v3579
    %v3581 = vpop.f32.mrf.mxu0
    %v3582 = vpop.f32.mrf.mxu0
    %v3583 = vadd.f32 0.0, %v3582
    %v3584 = vpop.f32.mrf.mxu0
    %3585 = vmatprep.mubr.bf16.mxu0 %v3399
    %3586 = vmatmul.mubr.bf16.gmra.mxu0 %v3398
    %v3587 = vpop.f32.mrf.mxu0
    %v3588 = vadd.f32 0.0, %v3587
    %v3589 = vpop.f32.mrf.mxu0
    %v3590 = vpop.f32.mrf.mxu0
    %v3591 = vadd.f32 0.0, %v3590
    %v3592 = vpop.f32.mrf.mxu0
    %3593 = vmatprep.mubr.bf16.mxu0 %v3403
    %3594 = vmatmul.mubr.bf16.gmra.mxu0 %v3402
    %v3595 = vpop.f32.mrf.mxu0
    %v3596 = vadd.f32 0.0, %v3595
    %v3597 = vpop.f32.mrf.mxu0
    %v3598 = vpop.f32.mrf.mxu0
    %v3599 = vadd.f32 0.0, %v3598
    %v3600 = vpop.f32.mrf.mxu0
    %3601 = vmatprep.mubr.bf16.mxu0 %v3407
    %3602 = vmatmul.mubr.bf16.gmra.mxu0 %v3406
    %v3603 = vpop.f32.mrf.mxu0
    %v3604 = vadd.f32 0.0, %v3603
    %v3605 = vpop.f32.mrf.mxu0
    %v3606 = vpop.f32.mrf.mxu0
    %v3607 = vadd.f32 0.0, %v3606
    %v3608 = vpop.f32.mrf.mxu0
    %3609 = vmatprep.mubr.bf16.mxu0 %v3411
    %3610 = vmatmul.mubr.bf16.gmra.mxu0 %v3410
    %v3611 = vpop.f32.mrf.mxu0
    %v3612 = vadd.f32 0.0, %v3611
    %v3613 = vpop.f32.mrf.mxu0
    %v3614 = vpop.f32.mrf.mxu0
    %v3615 = vadd.f32 0.0, %v3614
    %v3616 = vpop.f32.mrf.mxu0
    %3617 = vmatprep.mubr.bf16.mxu0 %v3415
    %3618 = vmatmul.mubr.bf16.gmra.mxu0 %v3414
    %v3619 = vpop.f32.mrf.mxu0
    %v3620 = vadd.f32 0.0, %v3619
    %v3621 = vpop.f32.mrf.mxu0
    %v3622 = vpop.f32.mrf.mxu0
    %v3623 = vadd.f32 0.0, %v3622
    %v3624 = vpop.f32.mrf.mxu0
    %3625 = vdwg.mxu0
    %3626 = vmatprep.subr.bf16.mxu0 0
    %3627 = vmatpush1.bf16.msra.mxu0 %v3486
    %3628 = vmatprep.subr.bf16.mxu0 0
    %3629 = vmatpush1.bf16.msra.mxu0 %v3484
    %3630 = vmatprep.subr.bf16.mxu0 0
    %3631 = vmatpush1.bf16.msra.mxu0 %v3482
    %3632 = vmatprep.subr.bf16.mxu0 0
    %3633 = vmatpush1.bf16.msra.mxu0 %v3480
    %3634 = vmatprep.subr.bf16.mxu0 0
    %3635 = vmatpush1.bf16.msra.mxu0 %v3478
    %3636 = vmatprep.subr.bf16.mxu0 0
    %3637 = vmatpush1.bf16.msra.mxu0 %v3476
    %3638 = vmatprep.subr.bf16.mxu0 0
    %3639 = vmatpush1.bf16.msra.mxu0 %v3474
    %3640 = vmatprep.subr.bf16.mxu0 0
    %3641 = vmatpush1.bf16.msra.mxu0 %v3472
    %3642 = vmatprep.subr.bf16.mxu0 0
    %3643 = vmatpush2.bf16.msra.mxu0 0
    %3644 = vmatprep.subr.bf16.mxu0 0
    %3645 = vmatpush2.bf16.msra.mxu0 0
    %3646 = vmatprep.subr.bf16.mxu0 0
    %3647 = vmatpush2.bf16.msra.mxu0 0
    %3648 = vmatprep.subr.bf16.mxu0 0
    %3649 = vmatpush2.bf16.msra.mxu0 0
    %3650 = vmatprep.subr.bf16.mxu0 0
    %3651 = vmatpush2.bf16.msra.mxu0 0
    %3652 = vmatprep.subr.bf16.mxu0 0
    %3653 = vmatpush2.bf16.msra.mxu0 0
    %3654 = vmatprep.subr.bf16.mxu0 0
    %3655 = vmatpush2.bf16.msra.mxu0 0
    %3656 = vmatprep.subr.bf16.mxu0 0
    %3657 = vmatpush2.bf16.msra.mxu0 %v3535
    %3658 = vmatprep.mubr.bf16.mxu0 %v3514
    %3659 = vmatmul.mubr.bf16.gmra.mxu0 %v3392
    %v3660 = vpop.f32.mrf.mxu0
    %v3661 = vadd.f32 %v3572, %v3660
    %v3662 = vpop.f32.mrf.mxu0
    %v3663 = vpop.f32.mrf.mxu0
    %v3664 = vadd.f32 %v3575, %v3663
    %v3665 = vpop.f32.mrf.mxu0
    %3666 = vmatprep.mubr.bf16.mxu0 %v3517
    %3667 = vmatmul.mubr.bf16.gmra.mxu0 %v3396
    %v3668 = vpop.f32.mrf.mxu0
    %v3669 = vadd.f32 %v3580, %v3668
    %v3670 = vpop.f32.mrf.mxu0
    %v3671 = vpop.f32.mrf.mxu0
    %v3672 = vadd.f32 %v3583, %v3671
    %v3673 = vpop.f32.mrf.mxu0
    %3674 = vmatprep.mubr.bf16.mxu0 %v3520
    %3675 = vmatmul.mubr.bf16.gmra.mxu0 %v3400
    %v3676 = vpop.f32.mrf.mxu0
    %v3677 = vadd.f32 %v3588, %v3676
    %v3678 = vpop.f32.mrf.mxu0
    %v3679 = vpop.f32.mrf.mxu0
    %v3680 = vadd.f32 %v3591, %v3679
    %v3681 = vpop.f32.mrf.mxu0
    %3682 = vmatprep.mubr.bf16.mxu0 %v3523
    %3683 = vmatmul.mubr.bf16.gmra.mxu0 %v3404
    %v3684 = vpop.f32.mrf.mxu0
    %v3685 = vadd.f32 %v3596, %v3684
    %v3686 = vpop.f32.mrf.mxu0
    %v3687 = vpop.f32.mrf.mxu0
    %v3688 = vadd.f32 %v3599, %v3687
    %v3689 = vpop.f32.mrf.mxu0
    %3690 = vmatprep.mubr.bf16.mxu0 %v3526
    %3691 = vmatmul.mubr.bf16.gmra.mxu0 %v3408
    %v3692 = vpop.f32.mrf.mxu0
    %v3693 = vadd.f32 %v3604, %v3692
    %v3694 = vpop.f32.mrf.mxu0
    %v3695 = vpop.f32.mrf.mxu0
    %v3696 = vadd.f32 %v3607, %v3695
    %v3697 = vpop.f32.mrf.mxu0
    %3698 = vmatprep.mubr.bf16.mxu0 %v3529
    %3699 = vmatmul.mubr.bf16.gmra.mxu0 %v3412
    %v3700 = vpop.f32.mrf.mxu0
    %v3701 = vadd.f32 %v3612, %v3700
    %v3702 = vpop.f32.mrf.mxu0
    %v3703 = vpop.f32.mrf.mxu0
    %v3704 = vadd.f32 %v3615, %v3703
    %v3705 = vpop.f32.mrf.mxu0
    %3706 = vmatprep.mubr.bf16.mxu0 %v3532
    %3707 = vmatmul.mubr.bf16.gmra.mxu0 %v3416
    %v3708 = vpop.f32.mrf.mxu0
    %v3709 = vadd.f32 %v3620, %v3708
    %v3710 = vpop.f32.mrf.mxu0
    %v3711 = vpop.f32.mrf.mxu0
    %v3712 = vadd.f32 %v3623, %v3711
    %v3713 = vpop.f32.mrf.mxu0
    %3714 = vdwg.mxu0
    %v3715 = vadd.f32 %v3263, %v3661
    %v3716 = vadd.f32 %v3264, %v3664
    %v3717 = vadd.f32 %v3265, %v3669
    %v3718 = vadd.f32 %v3266, %v3672
    %v3719 = vadd.f32 %v3267, %v3677
    %v3720 = vadd.f32 %v3268, %v3680
    %v3721 = vadd.f32 %v3269, %v3685
    %v3722 = vadd.f32 %v3270, %v3688
    %v3723 = vadd.f32 %v3271, %v3693
    %v3724 = vadd.f32 %v3272, %v3696
    %v3725 = vadd.f32 %v3273, %v3701
    %v3726 = vadd.f32 %v3274, %v3704
    %v3727 = vadd.f32 %v3275, %v3709
    %v3728 = vadd.f32 %v3276, %v3712
    %s3729 = scalar_lea.vmem %s3, 896
    %v3730 = vld [vmem:[%s3729] sm:$0xff]
    %v3731 = vld [vmem:[%s3729 + $0x8] sm:$0xff]
    %v3732 = vld [vmem:[%s3729 + $0x10] sm:$0xff]
    %v3733 = vld [vmem:[%s3729 + $0x18] sm:$0xff]
    %v3734 = vld [vmem:[%s3729 + $0x20] sm:$0xff]
    %v3735 = vld [vmem:[%s3729 + $0x28] sm:$0xff]
    %v3736 = vld [vmem:[%s3729 + $0x30] sm:$0xff]
    %v3737 = vld [vmem:[%s3729 + $0x38] sm:$0xff]
    %v3738 = vld [vmem:[%s3729 + $0x40] sm:$0xff]
    %v3739 = vld [vmem:[%s3729 + $0x48] sm:$0xff]
    %v3740 = vld [vmem:[%s3729 + $0x50] sm:$0xff]
    %v3741 = vld [vmem:[%s3729 + $0x58] sm:$0xff]
    %v3742 = vld [vmem:[%s3729 + $0x60] sm:$0xff]
    %v3743 = vld [vmem:[%s3729 + $0x68] sm:$0xff]
    %v3744 = vld [vmem:[%s3729 + $0x70] sm:$0xff]
    %v3745 = vld [vmem:[%s3729 + $0x78] sm:$0xff]
    %v3746 = vld [vmem:[%s3729 + $0x80] sm:$0xff]
    %v3747 = vld [vmem:[%s3729 + $0x88] sm:$0xff]
    %v3748 = vld [vmem:[%s3729 + $0x90] sm:$0xff]
    %v3749 = vld [vmem:[%s3729 + $0x98] sm:$0xff]
    %v3750 = vld [vmem:[%s3729 + $0xa0] sm:$0xff]
    %v3751 = vld [vmem:[%s3729 + $0xa8] sm:$0xff]
    %v3752 = vld [vmem:[%s3729 + $0xb0] sm:$0xff]
    %v3753 = vld [vmem:[%s3729 + $0xb8] sm:$0xff]
    %v3754 = vld [vmem:[%s3729 + $0xc0] sm:$0xff]
    %v3755 = vld [vmem:[%s3729 + $0xc8] sm:$0xff]
    %v3756 = vld [vmem:[%s3729 + $0xd0] sm:$0xff]
    %v3757 = vld [vmem:[%s3729 + $0xd8] sm:$0xff]
    %v3758 = vld [vmem:[#allocation2 + $0x4] sm:$0xf]
    %v3759 = vld [vmem:[#allocation2 + $0x10] sm:$0xf]
    %v3760 = vld [vmem:[#allocation2 + $0x1c] sm:$0xf]
    %v3761 = vld [vmem:[#allocation2 + $0x28] sm:$0xf]
    %v3762 = vld [vmem:[#allocation2 + $0x34] sm:$0xf]
    %v3763 = vld [vmem:[#allocation2 + $0x40] sm:$0xf]
    %v3764 = vld [vmem:[#allocation2 + $0x4c] sm:$0xf]
    %v3765 = vld [vmem:[#allocation2 + $0x58] sm:$0xf]
    %v3766 = vld [vmem:[#allocation2 + $0x64] sm:$0xf]
    %v3767 = vld [vmem:[#allocation2 + $0x70] sm:$0xf]
    %v3768 = vld [vmem:[#allocation2 + $0x7c] sm:$0xf]
    %v3769 = vld [vmem:[#allocation2 + $0x88] sm:$0xf]
    %v3770 = vld [vmem:[#allocation2 + $0x94] sm:$0xf]
    %v3771 = vld [vmem:[#allocation2 + $0xa0] sm:$0xf]
    %v3772 = vld [vmem:[#allocation2 + $0xac] sm:$0xf]
    %v3773 = vld [vmem:[#allocation2 + $0xb8] sm:$0xf]
    %v3774 = vld [vmem:[#allocation2 + $0xc4] sm:$0xf]
    %v3775 = vld [vmem:[#allocation2 + $0xd0] sm:$0xf]
    %v3776 = vld [vmem:[#allocation2 + $0xdc] sm:$0xf]
    %v3777 = vld [vmem:[#allocation2 + $0xe8] sm:$0xf]
    %v3778 = vld [vmem:[#allocation2 + $0xf4] sm:$0xf]
    %v3779 = vld [vmem:[#allocation2 + $0x100] sm:$0xf]
    %v3780 = vld [vmem:[#allocation2 + $0x10c] sm:$0xf]
    %v3781 = vld [vmem:[#allocation2 + $0x118] sm:$0xf]
    %v3782 = vld [vmem:[#allocation2 + $0x124] sm:$0xf]
    %v3783 = vld [vmem:[#allocation2 + $0x130] sm:$0xf]
    %v3784 = vld [vmem:[#allocation2 + $0x13c] sm:$0xf]
    %v3785 = vld [vmem:[#allocation2 + $0x148] sm:$0xf]
    %v3786 = vld [vmem:[#allocation2 + $0x154] sm:$0xf]
    %v3787 = vld [vmem:[#allocation2 + $0x160] sm:$0xf]
    %v3788 = vld [vmem:[#allocation2 + $0x16c] sm:$0xf]
    %v3789 = vld [vmem:[#allocation2 + $0x178] sm:$0xf]
    %v3790 = vld [vmem:[#allocation2 + $0x184] sm:$0xf]
    %v3791 = vld [vmem:[#allocation2 + $0x190] sm:$0xf]
    %v3792 = vld [vmem:[#allocation2 + $0x19c] sm:$0xf]
    %v3793 = vld [vmem:[#allocation2 + $0x1a8] sm:$0xf]
    %v3794 = vld [vmem:[#allocation2 + $0x1b4] sm:$0xf]
    %v3795 = vld [vmem:[#allocation2 + $0x1c0] sm:$0xf]
    %v3796 = vld [vmem:[#allocation2 + $0x1cc] sm:$0xf]
    %v3797 = vld [vmem:[#allocation2 + $0x1d8] sm:$0xf]
    %v3798 = vld [vmem:[#allocation2 + $0x1e4] sm:$0xf]
    %v3799 = vld [vmem:[#allocation2 + $0x1f0] sm:$0xf]
    %v3800 = vld [vmem:[#allocation2 + $0x1fc] sm:$0xf]
    %v3801 = vld [vmem:[#allocation2 + $0x208] sm:$0xf]
    %v3802 = vld [vmem:[#allocation2 + $0x214] sm:$0xf]
    %v3803 = vld [vmem:[#allocation2 + $0x220] sm:$0xf]
    %v3804 = vld [vmem:[#allocation2 + $0x22c] sm:$0xf]
    %v3805 = vld [vmem:[#allocation2 + $0x238] sm:$0xf]
    %v3806 = vld [vmem:[#allocation2 + $0x244] sm:$0xf]
    %v3835 = vunpack.c.l.b16 %v3730
    %v3836 = vunpack.c.h.b16 %v3730
    %v3837 = vunpack.c.l.b16 %v3731
    %v3838 = vunpack.c.h.b16 %v3731
    %v3839 = vunpack.c.l.b16 %v3732
    %v3840 = vunpack.c.h.b16 %v3732
    %v3841 = vunpack.c.l.b16 %v3733
    %v3842 = vunpack.c.h.b16 %v3733
    %v3843 = vunpack.c.l.b16 %v3734
    %v3844 = vunpack.c.h.b16 %v3734
    %v3845 = vunpack.c.l.b16 %v3735
    %v3846 = vunpack.c.h.b16 %v3735
    %v3847 = vunpack.c.l.b16 %v3736
    %v3848 = vunpack.c.h.b16 %v3736
    %v3849 = vunpack.c.l.b16 %v3737
    %v3850 = vunpack.c.h.b16 %v3737
    %v3851 = vunpack.c.l.b16 %v3738
    %v3852 = vunpack.c.h.b16 %v3738
    %v3853 = vunpack.c.l.b16 %v3739
    %v3854 = vunpack.c.h.b16 %v3739
    %v3855 = vunpack.c.l.b16 %v3740
    %v3856 = vunpack.c.h.b16 %v3740
    %v3857 = vunpack.c.l.b16 %v3741
    %v3858 = vunpack.c.h.b16 %v3741
    %v3859 = vunpack.c.l.b16 %v3742
    %v3860 = vunpack.c.h.b16 %v3742
    %v3861 = vunpack.c.l.b16 %v3743
    %v3862 = vunpack.c.h.b16 %v3743
    %v3863 = vunpack.c.l.b16 %v3744
    %v3864 = vunpack.c.h.b16 %v3744
    %v3865 = vunpack.c.l.b16 %v3745
    %v3866 = vunpack.c.h.b16 %v3745
    %v3867 = vunpack.c.l.b16 %v3746
    %v3868 = vunpack.c.h.b16 %v3746
    %v3869 = vunpack.c.l.b16 %v3747
    %v3870 = vunpack.c.h.b16 %v3747
    %v3871 = vunpack.c.l.b16 %v3748
    %v3872 = vunpack.c.h.b16 %v3748
    %v3873 = vunpack.c.l.b16 %v3749
    %v3874 = vunpack.c.h.b16 %v3749
    %v3875 = vunpack.c.l.b16 %v3750
    %v3876 = vunpack.c.h.b16 %v3750
    %v3877 = vunpack.c.l.b16 %v3751
    %v3878 = vunpack.c.h.b16 %v3751
    %v3879 = vunpack.c.l.b16 %v3752
    %v3880 = vunpack.c.h.b16 %v3752
    %v3881 = vunpack.c.l.b16 %v3753
    %v3882 = vunpack.c.h.b16 %v3753
    %v3883 = vunpack.c.l.b16 %v3754
    %v3884 = vunpack.c.h.b16 %v3754
    %v3885 = vunpack.c.l.b16 %v3755
    %v3886 = vunpack.c.h.b16 %v3755
    %v3887 = vunpack.c.l.b16 %v3756
    %v3888 = vunpack.c.h.b16 %v3756
    %v3889 = vunpack.c.l.b16 %v3757
    %v3890 = vunpack.c.h.b16 %v3757
    %v3891 = vpack.c.b16 %v3839, %v3835
    %v3892 = vpack.c.b16 %v3840, %v3836
    %v3893 = vpack.c.b16 %v3841, %v3837
    %v3894 = vpack.c.b16 %v3842, %v3838
    %v3895 = vpack.c.b16 %v3847, %v3843
    %v3896 = vpack.c.b16 %v3848, %v3844
    %v3897 = vpack.c.b16 %v3849, %v3845
    %v3898 = vpack.c.b16 %v3850, %v3846
    %v3899 = vpack.c.b16 %v3855, %v3851
    %v3900 = vpack.c.b16 %v3856, %v3852
    %v3901 = vpack.c.b16 %v3857, %v3853
    %v3902 = vpack.c.b16 %v3858, %v3854
    %v3903 = vpack.c.b16 %v3863, %v3859
    %v3904 = vpack.c.b16 %v3864, %v3860
    %v3905 = vpack.c.b16 %v3865, %v3861
    %v3906 = vpack.c.b16 %v3866, %v3862
    %v3907 = vpack.c.b16 %v3871, %v3867
    %v3908 = vpack.c.b16 %v3872, %v3868
    %v3909 = vpack.c.b16 %v3873, %v3869
    %v3910 = vpack.c.b16 %v3874, %v3870
    %v3911 = vpack.c.b16 %v3879, %v3875
    %v3912 = vpack.c.b16 %v3880, %v3876
    %v3913 = vpack.c.b16 %v3881, %v3877
    %v3914 = vpack.c.b16 %v3882, %v3878
    %v3915 = vpack.c.b16 %v3887, %v3883
    %v3916 = vpack.c.b16 %v3888, %v3884
    %v3917 = vpack.c.b16 %v3889, %v3885
    %v3918 = vpack.c.b16 %v3890, %v3886
    %v3989 = vunpack.c.l.b16 %v3758
    %v3990 = vunpack.c.l.b16 %v3759
    %v3991 = vunpack.c.l.b16 %v3760
    %v3992 = vunpack.c.l.b16 %v3761
    %v3993 = vunpack.c.l.b16 %v3762
    %v3994 = vunpack.c.l.b16 %v3763
    %v3995 = vunpack.c.l.b16 %v3764
    %v3996 = vunpack.c.l.b16 %v3765
    %v3997 = vunpack.c.l.b16 %v3766
    %v3998 = vunpack.c.l.b16 %v3767
    %v3999 = vunpack.c.l.b16 %v3768
    %v4000 = vunpack.c.l.b16 %v3769
    %v4001 = vunpack.c.l.b16 %v3770
    %v4002 = vunpack.c.l.b16 %v3771
    %v4003 = vunpack.c.l.b16 %v3772
    %v4004 = vunpack.c.l.b16 %v3773
    %v4005 = vunpack.c.l.b16 %v3774
    %v4006 = vunpack.c.l.b16 %v3775
    %v4007 = vunpack.c.l.b16 %v3776
    %v4008 = vunpack.c.l.b16 %v3777
    %v4009 = vunpack.c.l.b16 %v3778
    %v4010 = vunpack.c.l.b16 %v3779
    %v4011 = vunpack.c.l.b16 %v3780
    %v4012 = vunpack.c.l.b16 %v3781
    %v4013 = vunpack.c.l.b16 %v3782
    %v4014 = vunpack.c.l.b16 %v3783
    %v4015 = vunpack.c.l.b16 %v3784
    %v4016 = vunpack.c.l.b16 %v3785
    %v4017 = vunpack.c.l.b16 %v3786
    %v4018 = vunpack.c.l.b16 %v3787
    %v4019 = vunpack.c.l.b16 %v3788
    %v4020 = vunpack.c.l.b16 %v3789
    %v4021 = vunpack.c.l.b16 %v3790
    %v4022 = vunpack.c.l.b16 %v3791
    %v4023 = vunpack.c.l.b16 %v3792
    %v4024 = vunpack.c.l.b16 %v3793
    %v4025 = vunpack.c.l.b16 %v3794
    %v4026 = vunpack.c.l.b16 %v3795
    %v4027 = vunpack.c.l.b16 %v3796
    %v4028 = vunpack.c.l.b16 %v3797
    %v4029 = vunpack.c.l.b16 %v3798
    %v4030 = vunpack.c.l.b16 %v3799
    %v4031 = vunpack.c.l.b16 %v3800
    %v4032 = vunpack.c.l.b16 %v3801
    %v4033 = vunpack.c.l.b16 %v3802
    %v4034 = vunpack.c.l.b16 %v3803
    %v4035 = vunpack.c.l.b16 %v3804
    %v4036 = vunpack.c.l.b16 %v3805
    %v4037 = vunpack.c.l.b16 %v3806
    %v4038 = vpack.c.b16 %v3990, %v3989
    %v4039 = vpack.c.b16 %v3992, %v3991
    %v4040 = vpack.c.b16 %v3994, %v3993
    %v4041 = vpack.c.b16 %v3996, %v3995
    %v4042 = vpack.c.b16 %v3998, %v3997
    %v4043 = vpack.c.b16 %v4000, %v3999
    %v4044 = vpack.c.b16 %v4002, %v4001
    %v4045 = vpack.c.b16 %v4004, %v4003
    %v4046 = vpack.c.b16 %v4006, %v4005
    %v4047 = vpack.c.b16 %v4008, %v4007
    %v4048 = vpack.c.b16 %v4010, %v4009
    %v4049 = vpack.c.b16 %v4012, %v4011
    %v4050 = vpack.c.b16 %v4014, %v4013
    %v4051 = vpack.c.b16 %v4016, %v4015
    %v4052 = vpack.c.b16 %v4018, %v4017
    %v4053 = vpack.c.b16 %v4020, %v4019
    %v4054 = vpack.c.b16 %v4022, %v4021
    %v4055 = vpack.c.b16 %v4024, %v4023
    %v4056 = vpack.c.b16 %v4026, %v4025
    %v4057 = vpack.c.b16 %v4028, %v4027
    %v4058 = vpack.c.b16 %v4030, %v4029
    %v4059 = vpack.c.b16 %v4032, %v4031
    %v4060 = vpack.c.b16 %v4034, %v4033
    %v4061 = vpack.c.b16 %v4036, %v4035
    %v4062 = vpack.c.b16 %v4037, %v4037
    %v4088 = vsel %vm2262, %v3894, 0
    %v4091 = vsel %vm2262, %v3898, 0
    %v4094 = vsel %vm2262, %v3902, 0
    %v4097 = vsel %vm2262, %v3906, 0
    %v4100 = vsel %vm2262, %v3910, 0
    %v4103 = vsel %vm2262, %v3914, 0
    %v4106 = vsel %vm2262, %v3918, 0
    %v4109 = vsel %vm2284, %v4062, 0
    %4111 = vmatprep.subr.bf16.mxu0 0
    %4112 = vmatpush1.bf16.msra.mxu0 %v4045
    %4113 = vmatprep.subr.bf16.mxu0 0
    %4114 = vmatpush1.bf16.msra.mxu0 %v4044
    %4115 = vmatprep.subr.bf16.mxu0 0
    %4116 = vmatpush1.bf16.msra.mxu0 %v4043
    %4117 = vmatprep.subr.bf16.mxu0 0
    %4118 = vmatpush1.bf16.msra.mxu0 %v4042
    %4119 = vmatprep.subr.bf16.mxu0 0
    %4120 = vmatpush1.bf16.msra.mxu0 %v4041
    %4121 = vmatprep.subr.bf16.mxu0 0
    %4122 = vmatpush1.bf16.msra.mxu0 %v4040
    %4123 = vmatprep.subr.bf16.mxu0 0
    %4124 = vmatpush1.bf16.msra.mxu0 %v4039
    %4125 = vmatprep.subr.bf16.mxu0 0
    %4126 = vmatpush1.bf16.msra.mxu0 %v4038
    %4127 = vmatprep.subr.bf16.mxu0 0
    %4128 = vmatpush2.bf16.msra.mxu0 %v4053
    %4129 = vmatprep.subr.bf16.mxu0 0
    %4130 = vmatpush2.bf16.msra.mxu0 %v4052
    %4131 = vmatprep.subr.bf16.mxu0 0
    %4132 = vmatpush2.bf16.msra.mxu0 %v4051
    %4133 = vmatprep.subr.bf16.mxu0 0
    %4134 = vmatpush2.bf16.msra.mxu0 %v4050
    %4135 = vmatprep.subr.bf16.mxu0 0
    %4136 = vmatpush2.bf16.msra.mxu0 %v4049
    %4137 = vmatprep.subr.bf16.mxu0 0
    %4138 = vmatpush2.bf16.msra.mxu0 %v4048
    %4139 = vmatprep.subr.bf16.mxu0 0
    %4140 = vmatpush2.bf16.msra.mxu0 %v4047
    %4141 = vmatprep.subr.bf16.mxu0 0
    %4142 = vmatpush2.bf16.msra.mxu0 %v4046
    %4143 = vmatprep.mubr.bf16.mxu0 %v3892
    %4144 = vmatmul.mubr.bf16.gmra.mxu0 %v3891
    %v4145 = vpop.f32.mrf.mxu0
    %v4146 = vadd.f32 0.0, %v4145
    %v4147 = vpop.f32.mrf.mxu0
    %v4148 = vpop.f32.mrf.mxu0
    %v4149 = vadd.f32 0.0, %v4148
    %v4150 = vpop.f32.mrf.mxu0
    %4151 = vmatprep.mubr.bf16.mxu0 %v3896
    %4152 = vmatmul.mubr.bf16.gmra.mxu0 %v3895
    %v4153 = vpop.f32.mrf.mxu0
    %v4154 = vadd.f32 0.0, %v4153
    %v4155 = vpop.f32.mrf.mxu0
    %v4156 = vpop.f32.mrf.mxu0
    %v4157 = vadd.f32 0.0, %v4156
    %v4158 = vpop.f32.mrf.mxu0
    %4159 = vmatprep.mubr.bf16.mxu0 %v3900
    %4160 = vmatmul.mubr.bf16.gmra.mxu0 %v3899
    %v4161 = vpop.f32.mrf.mxu0
    %v4162 = vadd.f32 0.0, %v4161
    %v4163 = vpop.f32.mrf.mxu0
    %v4164 = vpop.f32.mrf.mxu0
    %v4165 = vadd.f32 0.0, %v4164
    %v4166 = vpop.f32.mrf.mxu0
    %4167 = vmatprep.mubr.bf16.mxu0 %v3904
    %4168 = vmatmul.mubr.bf16.gmra.mxu0 %v3903
    %v4169 = vpop.f32.mrf.mxu0
    %v4170 = vadd.f32 0.0, %v4169
    %v4171 = vpop.f32.mrf.mxu0
    %v4172 = vpop.f32.mrf.mxu0
    %v4173 = vadd.f32 0.0, %v4172
    %v4174 = vpop.f32.mrf.mxu0
    %4175 = vmatprep.mubr.bf16.mxu0 %v3908
    %4176 = vmatmul.mubr.bf16.gmra.mxu0 %v3907
    %v4177 = vpop.f32.mrf.mxu0
    %v4178 = vadd.f32 0.0, %v4177
    %v4179 = vpop.f32.mrf.mxu0
    %v4180 = vpop.f32.mrf.mxu0
    %v4181 = vadd.f32 0.0, %v4180
    %v4182 = vpop.f32.mrf.mxu0
    %4183 = vmatprep.mubr.bf16.mxu0 %v3912
    %4184 = vmatmul.mubr.bf16.gmra.mxu0 %v3911
    %v4185 = vpop.f32.mrf.mxu0
    %v4186 = vadd.f32 0.0, %v4185
    %v4187 = vpop.f32.mrf.mxu0
    %v4188 = vpop.f32.mrf.mxu0
    %v4189 = vadd.f32 0.0, %v4188
    %v4190 = vpop.f32.mrf.mxu0
    %4191 = vmatprep.mubr.bf16.mxu0 %v3916
    %4192 = vmatmul.mubr.bf16.gmra.mxu0 %v3915
    %v4193 = vpop.f32.mrf.mxu0
    %v4194 = vadd.f32 0.0, %v4193
    %v4195 = vpop.f32.mrf.mxu0
    %v4196 = vpop.f32.mrf.mxu0
    %v4197 = vadd.f32 0.0, %v4196
    %v4198 = vpop.f32.mrf.mxu0
    %4199 = vdwg.mxu0
    %4200 = vmatprep.subr.bf16.mxu0 0
    %4201 = vmatpush1.bf16.msra.mxu0 %v4061
    %4202 = vmatprep.subr.bf16.mxu0 0
    %4203 = vmatpush1.bf16.msra.mxu0 %v4060
    %4204 = vmatprep.subr.bf16.mxu0 0
    %4205 = vmatpush1.bf16.msra.mxu0 %v4059
    %4206 = vmatprep.subr.bf16.mxu0 0
    %4207 = vmatpush1.bf16.msra.mxu0 %v4058
    %4208 = vmatprep.subr.bf16.mxu0 0
    %4209 = vmatpush1.bf16.msra.mxu0 %v4057
    %4210 = vmatprep.subr.bf16.mxu0 0
    %4211 = vmatpush1.bf16.msra.mxu0 %v4056
    %4212 = vmatprep.subr.bf16.mxu0 0
    %4213 = vmatpush1.bf16.msra.mxu0 %v4055
    %4214 = vmatprep.subr.bf16.mxu0 0
    %4215 = vmatpush1.bf16.msra.mxu0 %v4054
    %4216 = vmatprep.subr.bf16.mxu0 0
    %4217 = vmatpush2.bf16.msra.mxu0 0
    %4218 = vmatprep.subr.bf16.mxu0 0
    %4219 = vmatpush2.bf16.msra.mxu0 0
    %4220 = vmatprep.subr.bf16.mxu0 0
    %4221 = vmatpush2.bf16.msra.mxu0 0
    %4222 = vmatprep.subr.bf16.mxu0 0
    %4223 = vmatpush2.bf16.msra.mxu0 0
    %4224 = vmatprep.subr.bf16.mxu0 0
    %4225 = vmatpush2.bf16.msra.mxu0 0
    %4226 = vmatprep.subr.bf16.mxu0 0
    %4227 = vmatpush2.bf16.msra.mxu0 0
    %4228 = vmatprep.subr.bf16.mxu0 0
    %4229 = vmatpush2.bf16.msra.mxu0 0
    %4230 = vmatprep.subr.bf16.mxu0 0
    %4231 = vmatpush2.bf16.msra.mxu0 %v4109
    %4232 = vmatprep.mubr.bf16.mxu0 %v4088
    %4233 = vmatmul.mubr.bf16.gmra.mxu0 %v3893
    %v4234 = vpop.f32.mrf.mxu0
    %v4235 = vadd.f32 %v4146, %v4234
    %v4236 = vpop.f32.mrf.mxu0
    %v4237 = vpop.f32.mrf.mxu0
    %v4238 = vadd.f32 %v4149, %v4237
    %v4239 = vpop.f32.mrf.mxu0
    %4240 = vmatprep.mubr.bf16.mxu0 %v4091
    %4241 = vmatmul.mubr.bf16.gmra.mxu0 %v3897
    %v4242 = vpop.f32.mrf.mxu0
    %v4243 = vadd.f32 %v4154, %v4242
    %v4244 = vpop.f32.mrf.mxu0
    %v4245 = vpop.f32.mrf.mxu0
    %v4246 = vadd.f32 %v4157, %v4245
    %v4247 = vpop.f32.mrf.mxu0
    %4248 = vmatprep.mubr.bf16.mxu0 %v4094
    %4249 = vmatmul.mubr.bf16.gmra.mxu0 %v3901
    %v4250 = vpop.f32.mrf.mxu0
    %v4251 = vadd.f32 %v4162, %v4250
    %v4252 = vpop.f32.mrf.mxu0
    %v4253 = vpop.f32.mrf.mxu0
    %v4254 = vadd.f32 %v4165, %v4253
    %v4255 = vpop.f32.mrf.mxu0
    %4256 = vmatprep.mubr.bf16.mxu0 %v4097
    %4257 = vmatmul.mubr.bf16.gmra.mxu0 %v3905
    %v4258 = vpop.f32.mrf.mxu0
    %v4259 = vadd.f32 %v4170, %v4258
    %v4260 = vpop.f32.mrf.mxu0
    %v4261 = vpop.f32.mrf.mxu0
    %v4262 = vadd.f32 %v4173, %v4261
    %v4263 = vpop.f32.mrf.mxu0
    %4264 = vmatprep.mubr.bf16.mxu0 %v4100
    %4265 = vmatmul.mubr.bf16.gmra.mxu0 %v3909
    %v4266 = vpop.f32.mrf.mxu0
    %v4267 = vadd.f32 %v4178, %v4266
    %v4268 = vpop.f32.mrf.mxu0
    %v4269 = vpop.f32.mrf.mxu0
    %v4270 = vadd.f32 %v4181, %v4269
    %v4271 = vpop.f32.mrf.mxu0
    %4272 = vmatprep.mubr.bf16.mxu0 %v4103
    %4273 = vmatmul.mubr.bf16.gmra.mxu0 %v3913
    %v4274 = vpop.f32.mrf.mxu0
    %v4275 = vadd.f32 %v4186, %v4274
    %v4276 = vpop.f32.mrf.mxu0
    %v4277 = vpop.f32.mrf.mxu0
    %v4278 = vadd.f32 %v4189, %v4277
    %v4279 = vpop.f32.mrf.mxu0
    %4280 = vmatprep.mubr.bf16.mxu0 %v4106
    %4281 = vmatmul.mubr.bf16.gmra.mxu0 %v3917
    %v4282 = vpop.f32.mrf.mxu0
    %v4283 = vadd.f32 %v4194, %v4282
    %v4284 = vpop.f32.mrf.mxu0
    %v4285 = vpop.f32.mrf.mxu0
    %v4286 = vadd.f32 %v4197, %v4285
    %v4287 = vpop.f32.mrf.mxu0
    %4288 = vdwg.mxu0
    %v4289 = vadd.f32 %v3715, %v4235
    %v4290 = vadd.f32 %v3716, %v4238
    %v4291 = vadd.f32 %v3717, %v4243
    %v4292 = vadd.f32 %v3718, %v4246
    %v4293 = vadd.f32 %v3719, %v4251
    %v4294 = vadd.f32 %v3720, %v4254
    %v4295 = vadd.f32 %v3721, %v4259
    %v4296 = vadd.f32 %v3722, %v4262
    %v4297 = vadd.f32 %v3723, %v4267
    %v4298 = vadd.f32 %v3724, %v4270
    %v4299 = vadd.f32 %v3725, %v4275
    %v4300 = vadd.f32 %v3726, %v4278
    %v4301 = vadd.f32 %v3727, %v4283
    %v4302 = vadd.f32 %v3728, %v4286
    %s4303 = scalar_lea.vmem %s3, 1120
    %v4304 = vld [vmem:[%s4303] sm:$0xff]
    %v4305 = vld [vmem:[%s4303 + $0x8] sm:$0xff]
    %v4306 = vld [vmem:[%s4303 + $0x10] sm:$0xff]
    %v4307 = vld [vmem:[%s4303 + $0x18] sm:$0xff]
    %v4308 = vld [vmem:[%s4303 + $0x20] sm:$0xff]
    %v4309 = vld [vmem:[%s4303 + $0x28] sm:$0xff]
    %v4310 = vld [vmem:[%s4303 + $0x30] sm:$0xff]
    %v4311 = vld [vmem:[%s4303 + $0x38] sm:$0xff]
    %v4312 = vld [vmem:[%s4303 + $0x40] sm:$0xff]
    %v4313 = vld [vmem:[%s4303 + $0x48] sm:$0xff]
    %v4314 = vld [vmem:[%s4303 + $0x50] sm:$0xff]
    %v4315 = vld [vmem:[%s4303 + $0x58] sm:$0xff]
    %v4316 = vld [vmem:[%s4303 + $0x60] sm:$0xff]
    %v4317 = vld [vmem:[%s4303 + $0x68] sm:$0xff]
    %v4318 = vld [vmem:[%s4303 + $0x70] sm:$0xff]
    %v4319 = vld [vmem:[%s4303 + $0x78] sm:$0xff]
    %v4320 = vld [vmem:[%s4303 + $0x80] sm:$0xff]
    %v4321 = vld [vmem:[%s4303 + $0x88] sm:$0xff]
    %v4322 = vld [vmem:[%s4303 + $0x90] sm:$0xff]
    %v4323 = vld [vmem:[%s4303 + $0x98] sm:$0xff]
    %v4324 = vld [vmem:[%s4303 + $0xa0] sm:$0xff]
    %v4325 = vld [vmem:[%s4303 + $0xa8] sm:$0xff]
    %v4326 = vld [vmem:[%s4303 + $0xb0] sm:$0xff]
    %v4327 = vld [vmem:[%s4303 + $0xb8] sm:$0xff]
    %v4328 = vld [vmem:[%s4303 + $0xc0] sm:$0xff]
    %v4329 = vld [vmem:[%s4303 + $0xc8] sm:$0xff]
    %v4330 = vld [vmem:[%s4303 + $0xd0] sm:$0xff]
    %v4331 = vld [vmem:[%s4303 + $0xd8] sm:$0xff]
    %v4360 = vunpack.c.l.b16 %v4304
    %v4361 = vunpack.c.h.b16 %v4304
    %v4362 = vunpack.c.l.b16 %v4305
    %v4363 = vunpack.c.h.b16 %v4305
    %v4364 = vunpack.c.l.b16 %v4306
    %v4365 = vunpack.c.h.b16 %v4306
    %v4366 = vunpack.c.l.b16 %v4307
    %v4367 = vunpack.c.h.b16 %v4307
    %v4368 = vunpack.c.l.b16 %v4308
    %v4369 = vunpack.c.h.b16 %v4308
    %v4370 = vunpack.c.l.b16 %v4309
    %v4371 = vunpack.c.h.b16 %v4309
    %v4372 = vunpack.c.l.b16 %v4310
    %v4373 = vunpack.c.h.b16 %v4310
    %v4374 = vunpack.c.l.b16 %v4311
    %v4375 = vunpack.c.h.b16 %v4311
    %v4376 = vunpack.c.l.b16 %v4312
    %v4377 = vunpack.c.h.b16 %v4312
    %v4378 = vunpack.c.l.b16 %v4313
    %v4379 = vunpack.c.h.b16 %v4313
    %v4380 = vunpack.c.l.b16 %v4314
    %v4381 = vunpack.c.h.b16 %v4314
    %v4382 = vunpack.c.l.b16 %v4315
    %v4383 = vunpack.c.h.b16 %v4315
    %v4384 = vunpack.c.l.b16 %v4316
    %v4385 = vunpack.c.h.b16 %v4316
    %v4386 = vunpack.c.l.b16 %v4317
    %v4387 = vunpack.c.h.b16 %v4317
    %v4388 = vunpack.c.l.b16 %v4318
    %v4389 = vunpack.c.h.b16 %v4318
    %v4390 = vunpack.c.l.b16 %v4319
    %v4391 = vunpack.c.h.b16 %v4319
    %v4392 = vunpack.c.l.b16 %v4320
    %v4393 = vunpack.c.h.b16 %v4320
    %v4394 = vunpack.c.l.b16 %v4321
    %v4395 = vunpack.c.h.b16 %v4321
    %v4396 = vunpack.c.l.b16 %v4322
    %v4397 = vunpack.c.h.b16 %v4322
    %v4398 = vunpack.c.l.b16 %v4323
    %v4399 = vunpack.c.h.b16 %v4323
    %v4400 = vunpack.c.l.b16 %v4324
    %v4401 = vunpack.c.h.b16 %v4324
    %v4402 = vunpack.c.l.b16 %v4325
    %v4403 = vunpack.c.h.b16 %v4325
    %v4404 = vunpack.c.l.b16 %v4326
    %v4405 = vunpack.c.h.b16 %v4326
    %v4406 = vunpack.c.l.b16 %v4327
    %v4407 = vunpack.c.h.b16 %v4327
    %v4408 = vunpack.c.l.b16 %v4328
    %v4409 = vunpack.c.h.b16 %v4328
    %v4410 = vunpack.c.l.b16 %v4329
    %v4411 = vunpack.c.h.b16 %v4329
    %v4412 = vunpack.c.l.b16 %v4330
    %v4413 = vunpack.c.h.b16 %v4330
    %v4414 = vunpack.c.l.b16 %v4331
    %v4415 = vunpack.c.h.b16 %v4331
    %v4416 = vpack.c.b16 %v4364, %v4360
    %v4417 = vpack.c.b16 %v4365, %v4361
    %v4418 = vpack.c.b16 %v4366, %v4362
    %v4419 = vpack.c.b16 %v4367, %v4363
    %v4420 = vpack.c.b16 %v4372, %v4368
    %v4421 = vpack.c.b16 %v4373, %v4369
    %v4422 = vpack.c.b16 %v4374, %v4370
    %v4423 = vpack.c.b16 %v4375, %v4371
    %v4424 = vpack.c.b16 %v4380, %v4376
    %v4425 = vpack.c.b16 %v4381, %v4377
    %v4426 = vpack.c.b16 %v4382, %v4378
    %v4427 = vpack.c.b16 %v4383, %v4379
    %v4428 = vpack.c.b16 %v4388, %v4384
    %v4429 = vpack.c.b16 %v4389, %v4385
    %v4430 = vpack.c.b16 %v4390, %v4386
    %v4431 = vpack.c.b16 %v4391, %v4387
    %v4432 = vpack.c.b16 %v4396, %v4392
    %v4433 = vpack.c.b16 %v4397, %v4393
    %v4434 = vpack.c.b16 %v4398, %v4394
    %v4435 = vpack.c.b16 %v4399, %v4395
    %v4436 = vpack.c.b16 %v4404, %v4400
    %v4437 = vpack.c.b16 %v4405, %v4401
    %v4438 = vpack.c.b16 %v4406, %v4402
    %v4439 = vpack.c.b16 %v4407, %v4403
    %v4440 = vpack.c.b16 %v4412, %v4408
    %v4441 = vpack.c.b16 %v4413, %v4409
    %v4442 = vpack.c.b16 %v4414, %v4410
    %v4443 = vpack.c.b16 %v4415, %v4411
    %4465 = vrot.lane.b32.xlu0 %v4038, 96
    %v4466 = vpop.permute.xlu0 %4465
    %4467 = vrot.lane.b32.xlu0 %v4039, 96
    %v4468 = vpop.permute.xlu0 %4467
    %4469 = vrot.lane.b32.xlu0 %v4040, 96
    %v4470 = vpop.permute.xlu0 %4469
    %4471 = vrot.lane.b32.xlu0 %v4041, 96
    %v4472 = vpop.permute.xlu0 %4471
    %4473 = vrot.lane.b32.xlu0 %v4042, 96
    %v4474 = vpop.permute.xlu0 %4473
    %4475 = vrot.lane.b32.xlu0 %v4043, 96
    %v4476 = vpop.permute.xlu0 %4475
    %4477 = vrot.lane.b32.xlu0 %v4044, 96
    %v4478 = vpop.permute.xlu0 %4477
    %4479 = vrot.lane.b32.xlu0 %v4045, 96
    %v4480 = vpop.permute.xlu0 %4479
    %4481 = vrot.lane.b32.xlu0 %v4046, 96
    %v4482 = vpop.permute.xlu0 %4481
    %4483 = vrot.lane.b32.xlu0 %v4047, 96
    %v4484 = vpop.permute.xlu0 %4483
    %4485 = vrot.lane.b32.xlu0 %v4048, 96
    %v4486 = vpop.permute.xlu0 %4485
    %4487 = vrot.lane.b32.xlu0 %v4049, 96
    %v4488 = vpop.permute.xlu0 %4487
    %4489 = vrot.lane.b32.xlu0 %v4050, 96
    %v4490 = vpop.permute.xlu0 %4489
    %4491 = vrot.lane.b32.xlu0 %v4051, 96
    %v4492 = vpop.permute.xlu0 %4491
    %4493 = vrot.lane.b32.xlu0 %v4052, 96
    %v4494 = vpop.permute.xlu0 %4493
    %4495 = vrot.lane.b32.xlu0 %v4053, 96
    %v4496 = vpop.permute.xlu0 %4495
    %4497 = vrot.lane.b32.xlu0 %v4054, 96
    %v4498 = vpop.permute.xlu0 %4497
    %4499 = vrot.lane.b32.xlu0 %v4055, 96
    %v4500 = vpop.permute.xlu0 %4499
    %4501 = vrot.lane.b32.xlu0 %v4056, 96
    %v4502 = vpop.permute.xlu0 %4501
    %4503 = vrot.lane.b32.xlu0 %v4057, 96
    %v4504 = vpop.permute.xlu0 %4503
    %4505 = vrot.lane.b32.xlu0 %v4058, 96
    %v4506 = vpop.permute.xlu0 %4505
    %4507 = vrot.lane.b32.xlu0 %v4059, 96
    %v4508 = vpop.permute.xlu0 %4507
    %4509 = vrot.lane.b32.xlu0 %v4060, 96
    %v4510 = vpop.permute.xlu0 %4509
    %4511 = vrot.lane.b32.xlu0 %v4061, 96
    %v4512 = vpop.permute.xlu0 %4511
    %4513 = vrot.lane.b32.xlu0 %v4062, 96
    %v4514 = vpop.permute.xlu0 %4513
    %v4540 = vsel %vm2262, %v4419, 0
    %v4543 = vsel %vm2262, %v4423, 0
    %v4546 = vsel %vm2262, %v4427, 0
    %v4549 = vsel %vm2262, %v4431, 0
    %v4552 = vsel %vm2262, %v4435, 0
    %v4555 = vsel %vm2262, %v4439, 0
    %v4558 = vsel %vm2262, %v4443, 0
    %v4561 = vsel %vm2284, %v4514, 0
    %4563 = vmatprep.subr.bf16.mxu0 0
    %4564 = vmatpush1.bf16.msra.mxu0 %v4480
    %4565 = vmatprep.subr.bf16.mxu0 0
    %4566 = vmatpush1.bf16.msra.mxu0 %v4478
    %4567 = vmatprep.subr.bf16.mxu0 0
    %4568 = vmatpush1.bf16.msra.mxu0 %v4476
    %4569 = vmatprep.subr.bf16.mxu0 0
    %4570 = vmatpush1.bf16.msra.mxu0 %v4474
    %4571 = vmatprep.subr.bf16.mxu0 0
    %4572 = vmatpush1.bf16.msra.mxu0 %v4472
    %4573 = vmatprep.subr.bf16.mxu0 0
    %4574 = vmatpush1.bf16.msra.mxu0 %v4470
    %4575 = vmatprep.subr.bf16.mxu0 0
    %4576 = vmatpush1.bf16.msra.mxu0 %v4468
    %4577 = vmatprep.subr.bf16.mxu0 0
    %4578 = vmatpush1.bf16.msra.mxu0 %v4466
    %4579 = vmatprep.subr.bf16.mxu0 0
    %4580 = vmatpush2.bf16.msra.mxu0 %v4496
    %4581 = vmatprep.subr.bf16.mxu0 0
    %4582 = vmatpush2.bf16.msra.mxu0 %v4494
    %4583 = vmatprep.subr.bf16.mxu0 0
    %4584 = vmatpush2.bf16.msra.mxu0 %v4492
    %4585 = vmatprep.subr.bf16.mxu0 0
    %4586 = vmatpush2.bf16.msra.mxu0 %v4490
    %4587 = vmatprep.subr.bf16.mxu0 0
    %4588 = vmatpush2.bf16.msra.mxu0 %v4488
    %4589 = vmatprep.subr.bf16.mxu0 0
    %4590 = vmatpush2.bf16.msra.mxu0 %v4486
    %4591 = vmatprep.subr.bf16.mxu0 0
    %4592 = vmatpush2.bf16.msra.mxu0 %v4484
    %4593 = vmatprep.subr.bf16.mxu0 0
    %4594 = vmatpush2.bf16.msra.mxu0 %v4482
    %4595 = vmatprep.mubr.bf16.mxu0 %v4417
    %4596 = vmatmul.mubr.bf16.gmra.mxu0 %v4416
    %v4597 = vpop.f32.mrf.mxu0
    %v4598 = vadd.f32 0.0, %v4597
    %v4599 = vpop.f32.mrf.mxu0
    %v4600 = vpop.f32.mrf.mxu0
    %v4601 = vadd.f32 0.0, %v4600
    %v4602 = vpop.f32.mrf.mxu0
    %4603 = vmatprep.mubr.bf16.mxu0 %v4421
    %4604 = vmatmul.mubr.bf16.gmra.mxu0 %v4420
    %v4605 = vpop.f32.mrf.mxu0
    %v4606 = vadd.f32 0.0, %v4605
    %v4607 = vpop.f32.mrf.mxu0
    %v4608 = vpop.f32.mrf.mxu0
    %v4609 = vadd.f32 0.0, %v4608
    %v4610 = vpop.f32.mrf.mxu0
    %4611 = vmatprep.mubr.bf16.mxu0 %v4425
    %4612 = vmatmul.mubr.bf16.gmra.mxu0 %v4424
    %v4613 = vpop.f32.mrf.mxu0
    %v4614 = vadd.f32 0.0, %v4613
    %v4615 = vpop.f32.mrf.mxu0
    %v4616 = vpop.f32.mrf.mxu0
    %v4617 = vadd.f32 0.0, %v4616
    %v4618 = vpop.f32.mrf.mxu0
    %4619 = vmatprep.mubr.bf16.mxu0 %v4429
    %4620 = vmatmul.mubr.bf16.gmra.mxu0 %v4428
    %v4621 = vpop.f32.mrf.mxu0
    %v4622 = vadd.f32 0.0, %v4621
    %v4623 = vpop.f32.mrf.mxu0
    %v4624 = vpop.f32.mrf.mxu0
    %v4625 = vadd.f32 0.0, %v4624
    %v4626 = vpop.f32.mrf.mxu0
    %4627 = vmatprep.mubr.bf16.mxu0 %v4433
    %4628 = vmatmul.mubr.bf16.gmra.mxu0 %v4432
    %v4629 = vpop.f32.mrf.mxu0
    %v4630 = vadd.f32 0.0, %v4629
    %v4631 = vpop.f32.mrf.mxu0
    %v4632 = vpop.f32.mrf.mxu0
    %v4633 = vadd.f32 0.0, %v4632
    %v4634 = vpop.f32.mrf.mxu0
    %4635 = vmatprep.mubr.bf16.mxu0 %v4437
    %4636 = vmatmul.mubr.bf16.gmra.mxu0 %v4436
    %v4637 = vpop.f32.mrf.mxu0
    %v4638 = vadd.f32 0.0, %v4637
    %v4639 = vpop.f32.mrf.mxu0
    %v4640 = vpop.f32.mrf.mxu0
    %v4641 = vadd.f32 0.0, %v4640
    %v4642 = vpop.f32.mrf.mxu0
    %4643 = vmatprep.mubr.bf16.mxu0 %v4441
    %4644 = vmatmul.mubr.bf16.gmra.mxu0 %v4440
    %v4645 = vpop.f32.mrf.mxu0
    %v4646 = vadd.f32 0.0, %v4645
    %v4647 = vpop.f32.mrf.mxu0
    %v4648 = vpop.f32.mrf.mxu0
    %v4649 = vadd.f32 0.0, %v4648
    %v4650 = vpop.f32.mrf.mxu0
    %4651 = vdwg.mxu0
    %4652 = vmatprep.subr.bf16.mxu0 0
    %4653 = vmatpush1.bf16.msra.mxu0 %v4512
    %4654 = vmatprep.subr.bf16.mxu0 0
    %4655 = vmatpush1.bf16.msra.mxu0 %v4510
    %4656 = vmatprep.subr.bf16.mxu0 0
    %4657 = vmatpush1.bf16.msra.mxu0 %v4508
    %4658 = vmatprep.subr.bf16.mxu0 0
    %4659 = vmatpush1.bf16.msra.mxu0 %v4506
    %4660 = vmatprep.subr.bf16.mxu0 0
    %4661 = vmatpush1.bf16.msra.mxu0 %v4504
    %4662 = vmatprep.subr.bf16.mxu0 0
    %4663 = vmatpush1.bf16.msra.mxu0 %v4502
    %4664 = vmatprep.subr.bf16.mxu0 0
    %4665 = vmatpush1.bf16.msra.mxu0 %v4500
    %4666 = vmatprep.subr.bf16.mxu0 0
    %4667 = vmatpush1.bf16.msra.mxu0 %v4498
    %4668 = vmatprep.subr.bf16.mxu0 0
    %4669 = vmatpush2.bf16.msra.mxu0 0
    %4670 = vmatprep.subr.bf16.mxu0 0
    %4671 = vmatpush2.bf16.msra.mxu0 0
    %4672 = vmatprep.subr.bf16.mxu0 0
    %4673 = vmatpush2.bf16.msra.mxu0 0
    %4674 = vmatprep.subr.bf16.mxu0 0
    %4675 = vmatpush2.bf16.msra.mxu0 0
    %4676 = vmatprep.subr.bf16.mxu0 0
    %4677 = vmatpush2.bf16.msra.mxu0 0
    %4678 = vmatprep.subr.bf16.mxu0 0
    %4679 = vmatpush2.bf16.msra.mxu0 0
    %4680 = vmatprep.subr.bf16.mxu0 0
    %4681 = vmatpush2.bf16.msra.mxu0 0
    %4682 = vmatprep.subr.bf16.mxu0 0
    %4683 = vmatpush2.bf16.msra.mxu0 %v4561
    %4684 = vmatprep.mubr.bf16.mxu0 %v4540
    %4685 = vmatmul.mubr.bf16.gmra.mxu0 %v4418
    %v4686 = vpop.f32.mrf.mxu0
    %v4687 = vadd.f32 %v4598, %v4686
    %v4688 = vpop.f32.mrf.mxu0
    %v4689 = vpop.f32.mrf.mxu0
    %v4690 = vadd.f32 %v4601, %v4689
    %v4691 = vpop.f32.mrf.mxu0
    %4692 = vmatprep.mubr.bf16.mxu0 %v4543
    %4693 = vmatmul.mubr.bf16.gmra.mxu0 %v4422
    %v4694 = vpop.f32.mrf.mxu0
    %v4695 = vadd.f32 %v4606, %v4694
    %v4696 = vpop.f32.mrf.mxu0
    %v4697 = vpop.f32.mrf.mxu0
    %v4698 = vadd.f32 %v4609, %v4697
    %v4699 = vpop.f32.mrf.mxu0
    %4700 = vmatprep.mubr.bf16.mxu0 %v4546
    %4701 = vmatmul.mubr.bf16.gmra.mxu0 %v4426
    %v4702 = vpop.f32.mrf.mxu0
    %v4703 = vadd.f32 %v4614, %v4702
    %v4704 = vpop.f32.mrf.mxu0
    %v4705 = vpop.f32.mrf.mxu0
    %v4706 = vadd.f32 %v4617, %v4705
    %v4707 = vpop.f32.mrf.mxu0
    %4708 = vmatprep.mubr.bf16.mxu0 %v4549
    %4709 = vmatmul.mubr.bf16.gmra.mxu0 %v4430
    %v4710 = vpop.f32.mrf.mxu0
    %v4711 = vadd.f32 %v4622, %v4710
    %v4712 = vpop.f32.mrf.mxu0
    %v4713 = vpop.f32.mrf.mxu0
    %v4714 = vadd.f32 %v4625, %v4713
    %v4715 = vpop.f32.mrf.mxu0
    %4716 = vmatprep.mubr.bf16.mxu0 %v4552
    %4717 = vmatmul.mubr.bf16.gmra.mxu0 %v4434
    %v4718 = vpop.f32.mrf.mxu0
    %v4719 = vadd.f32 %v4630, %v4718
    %v4720 = vpop.f32.mrf.mxu0
    %v4721 = vpop.f32.mrf.mxu0
    %v4722 = vadd.f32 %v4633, %v4721
    %v4723 = vpop.f32.mrf.mxu0
    %4724 = vmatprep.mubr.bf16.mxu0 %v4555
    %4725 = vmatmul.mubr.bf16.gmra.mxu0 %v4438
    %v4726 = vpop.f32.mrf.mxu0
    %v4727 = vadd.f32 %v4638, %v4726
    %v4728 = vpop.f32.mrf.mxu0
    %v4729 = vpop.f32.mrf.mxu0
    %v4730 = vadd.f32 %v4641, %v4729
    %v4731 = vpop.f32.mrf.mxu0
    %4732 = vmatprep.mubr.bf16.mxu0 %v4558
    %4733 = vmatmul.mubr.bf16.gmra.mxu0 %v4442
    %v4734 = vpop.f32.mrf.mxu0
    %v4735 = vadd.f32 %v4646, %v4734
    %v4736 = vpop.f32.mrf.mxu0
    %v4737 = vpop.f32.mrf.mxu0
    %v4738 = vadd.f32 %v4649, %v4737
    %v4739 = vpop.f32.mrf.mxu0
    %4740 = vdwg.mxu0
    %v4741 = vadd.f32 %v4289, %v4687
    %v4742 = vadd.f32 %v4290, %v4690
    %v4743 = vadd.f32 %v4291, %v4695
    %v4744 = vadd.f32 %v4292, %v4698
    %v4745 = vadd.f32 %v4293, %v4703
    %v4746 = vadd.f32 %v4294, %v4706
    %v4747 = vadd.f32 %v4295, %v4711
    %v4748 = vadd.f32 %v4296, %v4714
    %v4749 = vadd.f32 %v4297, %v4719
    %v4750 = vadd.f32 %v4298, %v4722
    %v4751 = vadd.f32 %v4299, %v4727
    %v4752 = vadd.f32 %v4300, %v4730
    %v4753 = vadd.f32 %v4301, %v4735
    %v4754 = vadd.f32 %v4302, %v4738
    %s4755 = scalar_lea.vmem %s3, 1344
    %v4756 = vld [vmem:[%s4755] sm:$0xff]
    %v4757 = vld [vmem:[%s4755 + $0x8] sm:$0xff]
    %v4758 = vld [vmem:[%s4755 + $0x10] sm:$0xff]
    %v4759 = vld [vmem:[%s4755 + $0x18] sm:$0xff]
    %v4760 = vld [vmem:[%s4755 + $0x20] sm:$0xff]
    %v4761 = vld [vmem:[%s4755 + $0x28] sm:$0xff]
    %v4762 = vld [vmem:[%s4755 + $0x30] sm:$0xff]
    %v4763 = vld [vmem:[%s4755 + $0x38] sm:$0xff]
    %v4764 = vld [vmem:[%s4755 + $0x40] sm:$0xff]
    %v4765 = vld [vmem:[%s4755 + $0x48] sm:$0xff]
    %v4766 = vld [vmem:[%s4755 + $0x50] sm:$0xff]
    %v4767 = vld [vmem:[%s4755 + $0x58] sm:$0xff]
    %v4768 = vld [vmem:[%s4755 + $0x60] sm:$0xff]
    %v4769 = vld [vmem:[%s4755 + $0x68] sm:$0xff]
    %v4770 = vld [vmem:[%s4755 + $0x70] sm:$0xff]
    %v4771 = vld [vmem:[%s4755 + $0x78] sm:$0xff]
    %v4772 = vld [vmem:[%s4755 + $0x80] sm:$0xff]
    %v4773 = vld [vmem:[%s4755 + $0x88] sm:$0xff]
    %v4774 = vld [vmem:[%s4755 + $0x90] sm:$0xff]
    %v4775 = vld [vmem:[%s4755 + $0x98] sm:$0xff]
    %v4776 = vld [vmem:[%s4755 + $0xa0] sm:$0xff]
    %v4777 = vld [vmem:[%s4755 + $0xa8] sm:$0xff]
    %v4778 = vld [vmem:[%s4755 + $0xb0] sm:$0xff]
    %v4779 = vld [vmem:[%s4755 + $0xb8] sm:$0xff]
    %v4780 = vld [vmem:[%s4755 + $0xc0] sm:$0xff]
    %v4781 = vld [vmem:[%s4755 + $0xc8] sm:$0xff]
    %v4782 = vld [vmem:[%s4755 + $0xd0] sm:$0xff]
    %v4783 = vld [vmem:[%s4755 + $0xd8] sm:$0xff]
    %v4812 = vunpack.c.l.b16 %v4756
    %v4813 = vunpack.c.h.b16 %v4756
    %v4814 = vunpack.c.l.b16 %v4757
    %v4815 = vunpack.c.h.b16 %v4757
    %v4816 = vunpack.c.l.b16 %v4758
    %v4817 = vunpack.c.h.b16 %v4758
    %v4818 = vunpack.c.l.b16 %v4759
    %v4819 = vunpack.c.h.b16 %v4759
    %v4820 = vunpack.c.l.b16 %v4760
    %v4821 = vunpack.c.h.b16 %v4760
    %v4822 = vunpack.c.l.b16 %v4761
    %v4823 = vunpack.c.h.b16 %v4761
    %v4824 = vunpack.c.l.b16 %v4762
    %v4825 = vunpack.c.h.b16 %v4762
    %v4826 = vunpack.c.l.b16 %v4763
    %v4827 = vunpack.c.h.b16 %v4763
    %v4828 = vunpack.c.l.b16 %v4764
    %v4829 = vunpack.c.h.b16 %v4764
    %v4830 = vunpack.c.l.b16 %v4765
    %v4831 = vunpack.c.h.b16 %v4765
    %v4832 = vunpack.c.l.b16 %v4766
    %v4833 = vunpack.c.h.b16 %v4766
    %v4834 = vunpack.c.l.b16 %v4767
    %v4835 = vunpack.c.h.b16 %v4767
    %v4836 = vunpack.c.l.b16 %v4768
    %v4837 = vunpack.c.h.b16 %v4768
    %v4838 = vunpack.c.l.b16 %v4769
    %v4839 = vunpack.c.h.b16 %v4769
    %v4840 = vunpack.c.l.b16 %v4770
    %v4841 = vunpack.c.h.b16 %v4770
    %v4842 = vunpack.c.l.b16 %v4771
    %v4843 = vunpack.c.h.b16 %v4771
    %v4844 = vunpack.c.l.b16 %v4772
    %v4845 = vunpack.c.h.b16 %v4772
    %v4846 = vunpack.c.l.b16 %v4773
    %v4847 = vunpack.c.h.b16 %v4773
    %v4848 = vunpack.c.l.b16 %v4774
    %v4849 = vunpack.c.h.b16 %v4774
    %v4850 = vunpack.c.l.b16 %v4775
    %v4851 = vunpack.c.h.b16 %v4775
    %v4852 = vunpack.c.l.b16 %v4776
    %v4853 = vunpack.c.h.b16 %v4776
    %v4854 = vunpack.c.l.b16 %v4777
    %v4855 = vunpack.c.h.b16 %v4777
    %v4856 = vunpack.c.l.b16 %v4778
    %v4857 = vunpack.c.h.b16 %v4778
    %v4858 = vunpack.c.l.b16 %v4779
    %v4859 = vunpack.c.h.b16 %v4779
    %v4860 = vunpack.c.l.b16 %v4780
    %v4861 = vunpack.c.h.b16 %v4780
    %v4862 = vunpack.c.l.b16 %v4781
    %v4863 = vunpack.c.h.b16 %v4781
    %v4864 = vunpack.c.l.b16 %v4782
    %v4865 = vunpack.c.h.b16 %v4782
    %v4866 = vunpack.c.l.b16 %v4783
    %v4867 = vunpack.c.h.b16 %v4783
    %v4868 = vpack.c.b16 %v4816, %v4812
    %v4869 = vpack.c.b16 %v4817, %v4813
    %v4870 = vpack.c.b16 %v4818, %v4814
    %v4871 = vpack.c.b16 %v4819, %v4815
    %v4872 = vpack.c.b16 %v4824, %v4820
    %v4873 = vpack.c.b16 %v4825, %v4821
    %v4874 = vpack.c.b16 %v4826, %v4822
    %v4875 = vpack.c.b16 %v4827, %v4823
    %v4876 = vpack.c.b16 %v4832, %v4828
    %v4877 = vpack.c.b16 %v4833, %v4829
    %v4878 = vpack.c.b16 %v4834, %v4830
    %v4879 = vpack.c.b16 %v4835, %v4831
    %v4880 = vpack.c.b16 %v4840, %v4836
    %v4881 = vpack.c.b16 %v4841, %v4837
    %v4882 = vpack.c.b16 %v4842, %v4838
    %v4883 = vpack.c.b16 %v4843, %v4839
    %v4884 = vpack.c.b16 %v4848, %v4844
    %v4885 = vpack.c.b16 %v4849, %v4845
    %v4886 = vpack.c.b16 %v4850, %v4846
    %v4887 = vpack.c.b16 %v4851, %v4847
    %v4888 = vpack.c.b16 %v4856, %v4852
    %v4889 = vpack.c.b16 %v4857, %v4853
    %v4890 = vpack.c.b16 %v4858, %v4854
    %v4891 = vpack.c.b16 %v4859, %v4855
    %v4892 = vpack.c.b16 %v4864, %v4860
    %v4893 = vpack.c.b16 %v4865, %v4861
    %v4894 = vpack.c.b16 %v4866, %v4862
    %v4895 = vpack.c.b16 %v4867, %v4863
    %4917 = vrot.lane.b32.xlu0 %v4038, 64
    %v4918 = vpop.permute.xlu0 %4917
    %4919 = vrot.lane.b32.xlu0 %v4039, 64
    %v4920 = vpop.permute.xlu0 %4919
    %4921 = vrot.lane.b32.xlu0 %v4040, 64
    %v4922 = vpop.permute.xlu0 %4921
    %4923 = vrot.lane.b32.xlu0 %v4041, 64
    %v4924 = vpop.permute.xlu0 %4923
    %4925 = vrot.lane.b32.xlu0 %v4042, 64
    %v4926 = vpop.permute.xlu0 %4925
    %4927 = vrot.lane.b32.xlu0 %v4043, 64
    %v4928 = vpop.permute.xlu0 %4927
    %4929 = vrot.lane.b32.xlu0 %v4044, 64
    %v4930 = vpop.permute.xlu0 %4929
    %4931 = vrot.lane.b32.xlu0 %v4045, 64
    %v4932 = vpop.permute.xlu0 %4931
    %4933 = vrot.lane.b32.xlu0 %v4046, 64
    %v4934 = vpop.permute.xlu0 %4933
    %4935 = vrot.lane.b32.xlu0 %v4047, 64
    %v4936 = vpop.permute.xlu0 %4935
    %4937 = vrot.lane.b32.xlu0 %v4048, 64
    %v4938 = vpop.permute.xlu0 %4937
    %4939 = vrot.lane.b32.xlu0 %v4049, 64
    %v4940 = vpop.permute.xlu0 %4939
    %4941 = vrot.lane.b32.xlu0 %v4050, 64
    %v4942 = vpop.permute.xlu0 %4941
    %4943 = vrot.lane.b32.xlu0 %v4051, 64
    %v4944 = vpop.permute.xlu0 %4943
    %4945 = vrot.lane.b32.xlu0 %v4052, 64
    %v4946 = vpop.permute.xlu0 %4945
    %4947 = vrot.lane.b32.xlu0 %v4053, 64
    %v4948 = vpop.permute.xlu0 %4947
    %4949 = vrot.lane.b32.xlu0 %v4054, 64
    %v4950 = vpop.permute.xlu0 %4949
    %4951 = vrot.lane.b32.xlu0 %v4055, 64
    %v4952 = vpop.permute.xlu0 %4951
    %4953 = vrot.lane.b32.xlu0 %v4056, 64
    %v4954 = vpop.permute.xlu0 %4953
    %4955 = vrot.lane.b32.xlu0 %v4057, 64
    %v4956 = vpop.permute.xlu0 %4955
    %4957 = vrot.lane.b32.xlu0 %v4058, 64
    %v4958 = vpop.permute.xlu0 %4957
    %4959 = vrot.lane.b32.xlu0 %v4059, 64
    %v4960 = vpop.permute.xlu0 %4959
    %4961 = vrot.lane.b32.xlu0 %v4060, 64
    %v4962 = vpop.permute.xlu0 %4961
    %4963 = vrot.lane.b32.xlu0 %v4061, 64
    %v4964 = vpop.permute.xlu0 %4963
    %4965 = vrot.lane.b32.xlu0 %v4062, 64
    %v4966 = vpop.permute.xlu0 %4965
    %v4992 = vsel %vm2262, %v4871, 0
    %v4995 = vsel %vm2262, %v4875, 0
    %v4998 = vsel %vm2262, %v4879, 0
    %v5001 = vsel %vm2262, %v4883, 0
    %v5004 = vsel %vm2262, %v4887, 0
    %v5007 = vsel %vm2262, %v4891, 0
    %v5010 = vsel %vm2262, %v4895, 0
    %v5013 = vsel %vm2284, %v4966, 0
    %5015 = vmatprep.subr.bf16.mxu0 0
    %5016 = vmatpush1.bf16.msra.mxu0 %v4932
    %5017 = vmatprep.subr.bf16.mxu0 0
    %5018 = vmatpush1.bf16.msra.mxu0 %v4930
    %5019 = vmatprep.subr.bf16.mxu0 0
    %5020 = vmatpush1.bf16.msra.mxu0 %v4928
    %5021 = vmatprep.subr.bf16.mxu0 0
    %5022 = vmatpush1.bf16.msra.mxu0 %v4926
    %5023 = vmatprep.subr.bf16.mxu0 0
    %5024 = vmatpush1.bf16.msra.mxu0 %v4924
    %5025 = vmatprep.subr.bf16.mxu0 0
    %5026 = vmatpush1.bf16.msra.mxu0 %v4922
    %5027 = vmatprep.subr.bf16.mxu0 0
    %5028 = vmatpush1.bf16.msra.mxu0 %v4920
    %5029 = vmatprep.subr.bf16.mxu0 0
    %5030 = vmatpush1.bf16.msra.mxu0 %v4918
    %5031 = vmatprep.subr.bf16.mxu0 0
    %5032 = vmatpush2.bf16.msra.mxu0 %v4948
    %5033 = vmatprep.subr.bf16.mxu0 0
    %5034 = vmatpush2.bf16.msra.mxu0 %v4946
    %5035 = vmatprep.subr.bf16.mxu0 0
    %5036 = vmatpush2.bf16.msra.mxu0 %v4944
    %5037 = vmatprep.subr.bf16.mxu0 0
    %5038 = vmatpush2.bf16.msra.mxu0 %v4942
    %5039 = vmatprep.subr.bf16.mxu0 0
    %5040 = vmatpush2.bf16.msra.mxu0 %v4940
    %5041 = vmatprep.subr.bf16.mxu0 0
    %5042 = vmatpush2.bf16.msra.mxu0 %v4938
    %5043 = vmatprep.subr.bf16.mxu0 0
    %5044 = vmatpush2.bf16.msra.mxu0 %v4936
    %5045 = vmatprep.subr.bf16.mxu0 0
    %5046 = vmatpush2.bf16.msra.mxu0 %v4934
    %5047 = vmatprep.mubr.bf16.mxu0 %v4869
    %5048 = vmatmul.mubr.bf16.gmra.mxu0 %v4868
    %v5049 = vpop.f32.mrf.mxu0
    %v5050 = vadd.f32 0.0, %v5049
    %v5051 = vpop.f32.mrf.mxu0
    %v5052 = vpop.f32.mrf.mxu0
    %v5053 = vadd.f32 0.0, %v5052
    %v5054 = vpop.f32.mrf.mxu0
    %5055 = vmatprep.mubr.bf16.mxu0 %v4873
    %5056 = vmatmul.mubr.bf16.gmra.mxu0 %v4872
    %v5057 = vpop.f32.mrf.mxu0
    %v5058 = vadd.f32 0.0, %v5057
    %v5059 = vpop.f32.mrf.mxu0
    %v5060 = vpop.f32.mrf.mxu0
    %v5061 = vadd.f32 0.0, %v5060
    %v5062 = vpop.f32.mrf.mxu0
    %5063 = vmatprep.mubr.bf16.mxu0 %v4877
    %5064 = vmatmul.mubr.bf16.gmra.mxu0 %v4876
    %v5065 = vpop.f32.mrf.mxu0
    %v5066 = vadd.f32 0.0, %v5065
    %v5067 = vpop.f32.mrf.mxu0
    %v5068 = vpop.f32.mrf.mxu0
    %v5069 = vadd.f32 0.0, %v5068
    %v5070 = vpop.f32.mrf.mxu0
    %5071 = vmatprep.mubr.bf16.mxu0 %v4881
    %5072 = vmatmul.mubr.bf16.gmra.mxu0 %v4880
    %v5073 = vpop.f32.mrf.mxu0
    %v5074 = vadd.f32 0.0, %v5073
    %v5075 = vpop.f32.mrf.mxu0
    %v5076 = vpop.f32.mrf.mxu0
    %v5077 = vadd.f32 0.0, %v5076
    %v5078 = vpop.f32.mrf.mxu0
    %5079 = vmatprep.mubr.bf16.mxu0 %v4885
    %5080 = vmatmul.mubr.bf16.gmra.mxu0 %v4884
    %v5081 = vpop.f32.mrf.mxu0
    %v5082 = vadd.f32 0.0, %v5081
    %v5083 = vpop.f32.mrf.mxu0
    %v5084 = vpop.f32.mrf.mxu0
    %v5085 = vadd.f32 0.0, %v5084
    %v5086 = vpop.f32.mrf.mxu0
    %5087 = vmatprep.mubr.bf16.mxu0 %v4889
    %5088 = vmatmul.mubr.bf16.gmra.mxu0 %v4888
    %v5089 = vpop.f32.mrf.mxu0
    %v5090 = vadd.f32 0.0, %v5089
    %v5091 = vpop.f32.mrf.mxu0
    %v5092 = vpop.f32.mrf.mxu0
    %v5093 = vadd.f32 0.0, %v5092
    %v5094 = vpop.f32.mrf.mxu0
    %5095 = vmatprep.mubr.bf16.mxu0 %v4893
    %5096 = vmatmul.mubr.bf16.gmra.mxu0 %v4892
    %v5097 = vpop.f32.mrf.mxu0
    %v5098 = vadd.f32 0.0, %v5097
    %v5099 = vpop.f32.mrf.mxu0
    %v5100 = vpop.f32.mrf.mxu0
    %v5101 = vadd.f32 0.0, %v5100
    %v5102 = vpop.f32.mrf.mxu0
    %5103 = vdwg.mxu0
    %5104 = vmatprep.subr.bf16.mxu0 0
    %5105 = vmatpush1.bf16.msra.mxu0 %v4964
    %5106 = vmatprep.subr.bf16.mxu0 0
    %5107 = vmatpush1.bf16.msra.mxu0 %v4962
    %5108 = vmatprep.subr.bf16.mxu0 0
    %5109 = vmatpush1.bf16.msra.mxu0 %v4960
    %5110 = vmatprep.subr.bf16.mxu0 0
    %5111 = vmatpush1.bf16.msra.mxu0 %v4958
    %5112 = vmatprep.subr.bf16.mxu0 0
    %5113 = vmatpush1.bf16.msra.mxu0 %v4956
    %5114 = vmatprep.subr.bf16.mxu0 0
    %5115 = vmatpush1.bf16.msra.mxu0 %v4954
    %5116 = vmatprep.subr.bf16.mxu0 0
    %5117 = vmatpush1.bf16.msra.mxu0 %v4952
    %5118 = vmatprep.subr.bf16.mxu0 0
    %5119 = vmatpush1.bf16.msra.mxu0 %v4950
    %5120 = vmatprep.subr.bf16.mxu0 0
    %5121 = vmatpush2.bf16.msra.mxu0 0
    %5122 = vmatprep.subr.bf16.mxu0 0
    %5123 = vmatpush2.bf16.msra.mxu0 0
    %5124 = vmatprep.subr.bf16.mxu0 0
    %5125 = vmatpush2.bf16.msra.mxu0 0
    %5126 = vmatprep.subr.bf16.mxu0 0
    %5127 = vmatpush2.bf16.msra.mxu0 0
    %5128 = vmatprep.subr.bf16.mxu0 0
    %5129 = vmatpush2.bf16.msra.mxu0 0
    %5130 = vmatprep.subr.bf16.mxu0 0
    %5131 = vmatpush2.bf16.msra.mxu0 0
    %5132 = vmatprep.subr.bf16.mxu0 0
    %5133 = vmatpush2.bf16.msra.mxu0 0
    %5134 = vmatprep.subr.bf16.mxu0 0
    %5135 = vmatpush2.bf16.msra.mxu0 %v5013
    %5136 = vmatprep.mubr.bf16.mxu0 %v4992
    %5137 = vmatmul.mubr.bf16.gmra.mxu0 %v4870
    %v5138 = vpop.f32.mrf.mxu0
    %v5139 = vadd.f32 %v5050, %v5138
    %v5140 = vpop.f32.mrf.mxu0
    %v5141 = vpop.f32.mrf.mxu0
    %v5142 = vadd.f32 %v5053, %v5141
    %v5143 = vpop.f32.mrf.mxu0
    %5144 = vmatprep.mubr.bf16.mxu0 %v4995
    %5145 = vmatmul.mubr.bf16.gmra.mxu0 %v4874
    %v5146 = vpop.f32.mrf.mxu0
    %v5147 = vadd.f32 %v5058, %v5146
    %v5148 = vpop.f32.mrf.mxu0
    %v5149 = vpop.f32.mrf.mxu0
    %v5150 = vadd.f32 %v5061, %v5149
    %v5151 = vpop.f32.mrf.mxu0
    %5152 = vmatprep.mubr.bf16.mxu0 %v4998
    %5153 = vmatmul.mubr.bf16.gmra.mxu0 %v4878
    %v5154 = vpop.f32.mrf.mxu0
    %v5155 = vadd.f32 %v5066, %v5154
    %v5156 = vpop.f32.mrf.mxu0
    %v5157 = vpop.f32.mrf.mxu0
    %v5158 = vadd.f32 %v5069, %v5157
    %v5159 = vpop.f32.mrf.mxu0
    %5160 = vmatprep.mubr.bf16.mxu0 %v5001
    %5161 = vmatmul.mubr.bf16.gmra.mxu0 %v4882
    %v5162 = vpop.f32.mrf.mxu0
    %v5163 = vadd.f32 %v5074, %v5162
    %v5164 = vpop.f32.mrf.mxu0
    %v5165 = vpop.f32.mrf.mxu0
    %v5166 = vadd.f32 %v5077, %v5165
    %v5167 = vpop.f32.mrf.mxu0
    %5168 = vmatprep.mubr.bf16.mxu0 %v5004
    %5169 = vmatmul.mubr.bf16.gmra.mxu0 %v4886
    %v5170 = vpop.f32.mrf.mxu0
    %v5171 = vadd.f32 %v5082, %v5170
    %v5172 = vpop.f32.mrf.mxu0
    %v5173 = vpop.f32.mrf.mxu0
    %v5174 = vadd.f32 %v5085, %v5173
    %v5175 = vpop.f32.mrf.mxu0
    %5176 = vmatprep.mubr.bf16.mxu0 %v5007
    %5177 = vmatmul.mubr.bf16.gmra.mxu0 %v4890
    %v5178 = vpop.f32.mrf.mxu0
    %v5179 = vadd.f32 %v5090, %v5178
    %v5180 = vpop.f32.mrf.mxu0
    %v5181 = vpop.f32.mrf.mxu0
    %v5182 = vadd.f32 %v5093, %v5181
    %v5183 = vpop.f32.mrf.mxu0
    %5184 = vmatprep.mubr.bf16.mxu0 %v5010
    %5185 = vmatmul.mubr.bf16.gmra.mxu0 %v4894
    %v5186 = vpop.f32.mrf.mxu0
    %v5187 = vadd.f32 %v5098, %v5186
    %v5188 = vpop.f32.mrf.mxu0
    %v5189 = vpop.f32.mrf.mxu0
    %v5190 = vadd.f32 %v5101, %v5189
    %v5191 = vpop.f32.mrf.mxu0
    %5192 = vdwg.mxu0
    %v5193 = vadd.f32 %v4741, %v5139
    %v5194 = vadd.f32 %v4742, %v5142
    %v5195 = vadd.f32 %v4743, %v5147
    %v5196 = vadd.f32 %v4744, %v5150
    %v5197 = vadd.f32 %v4745, %v5155
    %v5198 = vadd.f32 %v4746, %v5158
    %v5199 = vadd.f32 %v4747, %v5163
    %v5200 = vadd.f32 %v4748, %v5166
    %v5201 = vadd.f32 %v4749, %v5171
    %v5202 = vadd.f32 %v4750, %v5174
    %v5203 = vadd.f32 %v4751, %v5179
    %v5204 = vadd.f32 %v4752, %v5182
    %v5205 = vadd.f32 %v4753, %v5187
    %v5206 = vadd.f32 %v4754, %v5190
    %s5207 = scalar_lea.vmem %s3, 1568
    %v5208 = vld [vmem:[%s5207] sm:$0xff]
    %v5209 = vld [vmem:[%s5207 + $0x8] sm:$0xff]
    %v5210 = vld [vmem:[%s5207 + $0x10] sm:$0xff]
    %v5211 = vld [vmem:[%s5207 + $0x18] sm:$0xff]
    %v5212 = vld [vmem:[%s5207 + $0x20] sm:$0xff]
    %v5213 = vld [vmem:[%s5207 + $0x28] sm:$0xff]
    %v5214 = vld [vmem:[%s5207 + $0x30] sm:$0xff]
    %v5215 = vld [vmem:[%s5207 + $0x38] sm:$0xff]
    %v5216 = vld [vmem:[%s5207 + $0x40] sm:$0xff]
    %v5217 = vld [vmem:[%s5207 + $0x48] sm:$0xff]
    %v5218 = vld [vmem:[%s5207 + $0x50] sm:$0xff]
    %v5219 = vld [vmem:[%s5207 + $0x58] sm:$0xff]
    %v5220 = vld [vmem:[%s5207 + $0x60] sm:$0xff]
    %v5221 = vld [vmem:[%s5207 + $0x68] sm:$0xff]
    %v5222 = vld [vmem:[%s5207 + $0x70] sm:$0xff]
    %v5223 = vld [vmem:[%s5207 + $0x78] sm:$0xff]
    %v5224 = vld [vmem:[%s5207 + $0x80] sm:$0xff]
    %v5225 = vld [vmem:[%s5207 + $0x88] sm:$0xff]
    %v5226 = vld [vmem:[%s5207 + $0x90] sm:$0xff]
    %v5227 = vld [vmem:[%s5207 + $0x98] sm:$0xff]
    %v5228 = vld [vmem:[%s5207 + $0xa0] sm:$0xff]
    %v5229 = vld [vmem:[%s5207 + $0xa8] sm:$0xff]
    %v5230 = vld [vmem:[%s5207 + $0xb0] sm:$0xff]
    %v5231 = vld [vmem:[%s5207 + $0xb8] sm:$0xff]
    %v5232 = vld [vmem:[%s5207 + $0xc0] sm:$0xff]
    %v5233 = vld [vmem:[%s5207 + $0xc8] sm:$0xff]
    %v5234 = vld [vmem:[%s5207 + $0xd0] sm:$0xff]
    %v5235 = vld [vmem:[%s5207 + $0xd8] sm:$0xff]
    %v5264 = vunpack.c.l.b16 %v5208
    %v5265 = vunpack.c.h.b16 %v5208
    %v5266 = vunpack.c.l.b16 %v5209
    %v5267 = vunpack.c.h.b16 %v5209
    %v5268 = vunpack.c.l.b16 %v5210
    %v5269 = vunpack.c.h.b16 %v5210
    %v5270 = vunpack.c.l.b16 %v5211
    %v5271 = vunpack.c.h.b16 %v5211
    %v5272 = vunpack.c.l.b16 %v5212
    %v5273 = vunpack.c.h.b16 %v5212
    %v5274 = vunpack.c.l.b16 %v5213
    %v5275 = vunpack.c.h.b16 %v5213
    %v5276 = vunpack.c.l.b16 %v5214
    %v5277 = vunpack.c.h.b16 %v5214
    %v5278 = vunpack.c.l.b16 %v5215
    %v5279 = vunpack.c.h.b16 %v5215
    %v5280 = vunpack.c.l.b16 %v5216
    %v5281 = vunpack.c.h.b16 %v5216
    %v5282 = vunpack.c.l.b16 %v5217
    %v5283 = vunpack.c.h.b16 %v5217
    %v5284 = vunpack.c.l.b16 %v5218
    %v5285 = vunpack.c.h.b16 %v5218
    %v5286 = vunpack.c.l.b16 %v5219
    %v5287 = vunpack.c.h.b16 %v5219
    %v5288 = vunpack.c.l.b16 %v5220
    %v5289 = vunpack.c.h.b16 %v5220
    %v5290 = vunpack.c.l.b16 %v5221
    %v5291 = vunpack.c.h.b16 %v5221
    %v5292 = vunpack.c.l.b16 %v5222
    %v5293 = vunpack.c.h.b16 %v5222
    %v5294 = vunpack.c.l.b16 %v5223
    %v5295 = vunpack.c.h.b16 %v5223
    %v5296 = vunpack.c.l.b16 %v5224
    %v5297 = vunpack.c.h.b16 %v5224
    %v5298 = vunpack.c.l.b16 %v5225
    %v5299 = vunpack.c.h.b16 %v5225
    %v5300 = vunpack.c.l.b16 %v5226
    %v5301 = vunpack.c.h.b16 %v5226
    %v5302 = vunpack.c.l.b16 %v5227
    %v5303 = vunpack.c.h.b16 %v5227
    %v5304 = vunpack.c.l.b16 %v5228
    %v5305 = vunpack.c.h.b16 %v5228
    %v5306 = vunpack.c.l.b16 %v5229
    %v5307 = vunpack.c.h.b16 %v5229
    %v5308 = vunpack.c.l.b16 %v5230
    %v5309 = vunpack.c.h.b16 %v5230
    %v5310 = vunpack.c.l.b16 %v5231
    %v5311 = vunpack.c.h.b16 %v5231
    %v5312 = vunpack.c.l.b16 %v5232
    %v5313 = vunpack.c.h.b16 %v5232
    %v5314 = vunpack.c.l.b16 %v5233
    %v5315 = vunpack.c.h.b16 %v5233
    %v5316 = vunpack.c.l.b16 %v5234
    %v5317 = vunpack.c.h.b16 %v5234
    %v5318 = vunpack.c.l.b16 %v5235
    %v5319 = vunpack.c.h.b16 %v5235
    %v5320 = vpack.c.b16 %v5268, %v5264
    %v5321 = vpack.c.b16 %v5269, %v5265
    %v5322 = vpack.c.b16 %v5270, %v5266
    %v5323 = vpack.c.b16 %v5271, %v5267
    %v5324 = vpack.c.b16 %v5276, %v5272
    %v5325 = vpack.c.b16 %v5277, %v5273
    %v5326 = vpack.c.b16 %v5278, %v5274
    %v5327 = vpack.c.b16 %v5279, %v5275
    %v5328 = vpack.c.b16 %v5284, %v5280
    %v5329 = vpack.c.b16 %v5285, %v5281
    %v5330 = vpack.c.b16 %v5286, %v5282
    %v5331 = vpack.c.b16 %v5287, %v5283
    %v5332 = vpack.c.b16 %v5292, %v5288
    %v5333 = vpack.c.b16 %v5293, %v5289
    %v5334 = vpack.c.b16 %v5294, %v5290
    %v5335 = vpack.c.b16 %v5295, %v5291
    %v5336 = vpack.c.b16 %v5300, %v5296
    %v5337 = vpack.c.b16 %v5301, %v5297
    %v5338 = vpack.c.b16 %v5302, %v5298
    %v5339 = vpack.c.b16 %v5303, %v5299
    %v5340 = vpack.c.b16 %v5308, %v5304
    %v5341 = vpack.c.b16 %v5309, %v5305
    %v5342 = vpack.c.b16 %v5310, %v5306
    %v5343 = vpack.c.b16 %v5311, %v5307
    %v5344 = vpack.c.b16 %v5316, %v5312
    %v5345 = vpack.c.b16 %v5317, %v5313
    %v5346 = vpack.c.b16 %v5318, %v5314
    %v5347 = vpack.c.b16 %v5319, %v5315
    %5369 = vrot.lane.b32.xlu0 %v4038, 32
    %v5370 = vpop.permute.xlu0 %5369
    %5371 = vrot.lane.b32.xlu0 %v4039, 32
    %v5372 = vpop.permute.xlu0 %5371
    %5373 = vrot.lane.b32.xlu0 %v4040, 32
    %v5374 = vpop.permute.xlu0 %5373
    %5375 = vrot.lane.b32.xlu0 %v4041, 32
    %v5376 = vpop.permute.xlu0 %5375
    %5377 = vrot.lane.b32.xlu0 %v4042, 32
    %v5378 = vpop.permute.xlu0 %5377
    %5379 = vrot.lane.b32.xlu0 %v4043, 32
    %v5380 = vpop.permute.xlu0 %5379
    %5381 = vrot.lane.b32.xlu0 %v4044, 32
    %v5382 = vpop.permute.xlu0 %5381
    %5383 = vrot.lane.b32.xlu0 %v4045, 32
    %v5384 = vpop.permute.xlu0 %5383
    %5385 = vrot.lane.b32.xlu0 %v4046, 32
    %v5386 = vpop.permute.xlu0 %5385
    %5387 = vrot.lane.b32.xlu0 %v4047, 32
    %v5388 = vpop.permute.xlu0 %5387
    %5389 = vrot.lane.b32.xlu0 %v4048, 32
    %v5390 = vpop.permute.xlu0 %5389
    %5391 = vrot.lane.b32.xlu0 %v4049, 32
    %v5392 = vpop.permute.xlu0 %5391
    %5393 = vrot.lane.b32.xlu0 %v4050, 32
    %v5394 = vpop.permute.xlu0 %5393
    %5395 = vrot.lane.b32.xlu0 %v4051, 32
    %v5396 = vpop.permute.xlu0 %5395
    %5397 = vrot.lane.b32.xlu0 %v4052, 32
    %v5398 = vpop.permute.xlu0 %5397
    %5399 = vrot.lane.b32.xlu0 %v4053, 32
    %v5400 = vpop.permute.xlu0 %5399
    %5401 = vrot.lane.b32.xlu0 %v4054, 32
    %v5402 = vpop.permute.xlu0 %5401
    %5403 = vrot.lane.b32.xlu0 %v4055, 32
    %v5404 = vpop.permute.xlu0 %5403
    %5405 = vrot.lane.b32.xlu0 %v4056, 32
    %v5406 = vpop.permute.xlu0 %5405
    %5407 = vrot.lane.b32.xlu0 %v4057, 32
    %v5408 = vpop.permute.xlu0 %5407
    %5409 = vrot.lane.b32.xlu0 %v4058, 32
    %v5410 = vpop.permute.xlu0 %5409
    %5411 = vrot.lane.b32.xlu0 %v4059, 32
    %v5412 = vpop.permute.xlu0 %5411
    %5413 = vrot.lane.b32.xlu0 %v4060, 32
    %v5414 = vpop.permute.xlu0 %5413
    %5415 = vrot.lane.b32.xlu0 %v4061, 32
    %v5416 = vpop.permute.xlu0 %5415
    %5417 = vrot.lane.b32.xlu0 %v4062, 32
    %v5418 = vpop.permute.xlu0 %5417
    %v5444 = vsel %vm2262, %v5323, 0
    %v5447 = vsel %vm2262, %v5327, 0
    %v5450 = vsel %vm2262, %v5331, 0
    %v5453 = vsel %vm2262, %v5335, 0
    %v5456 = vsel %vm2262, %v5339, 0
    %v5459 = vsel %vm2262, %v5343, 0
    %v5462 = vsel %vm2262, %v5347, 0
    %v5465 = vsel %vm2284, %v5418, 0
    %5467 = vmatprep.subr.bf16.mxu0 0
    %5468 = vmatpush1.bf16.msra.mxu0 %v5384
    %5469 = vmatprep.subr.bf16.mxu0 0
    %5470 = vmatpush1.bf16.msra.mxu0 %v5382
    %5471 = vmatprep.subr.bf16.mxu0 0
    %5472 = vmatpush1.bf16.msra.mxu0 %v5380
    %5473 = vmatprep.subr.bf16.mxu0 0
    %5474 = vmatpush1.bf16.msra.mxu0 %v5378
    %5475 = vmatprep.subr.bf16.mxu0 0
    %5476 = vmatpush1.bf16.msra.mxu0 %v5376
    %5477 = vmatprep.subr.bf16.mxu0 0
    %5478 = vmatpush1.bf16.msra.mxu0 %v5374
    %5479 = vmatprep.subr.bf16.mxu0 0
    %5480 = vmatpush1.bf16.msra.mxu0 %v5372
    %5481 = vmatprep.subr.bf16.mxu0 0
    %5482 = vmatpush1.bf16.msra.mxu0 %v5370
    %5483 = vmatprep.subr.bf16.mxu0 0
    %5484 = vmatpush2.bf16.msra.mxu0 %v5400
    %5485 = vmatprep.subr.bf16.mxu0 0
    %5486 = vmatpush2.bf16.msra.mxu0 %v5398
    %5487 = vmatprep.subr.bf16.mxu0 0
    %5488 = vmatpush2.bf16.msra.mxu0 %v5396
    %5489 = vmatprep.subr.bf16.mxu0 0
    %5490 = vmatpush2.bf16.msra.mxu0 %v5394
    %5491 = vmatprep.subr.bf16.mxu0 0
    %5492 = vmatpush2.bf16.msra.mxu0 %v5392
    %5493 = vmatprep.subr.bf16.mxu0 0
    %5494 = vmatpush2.bf16.msra.mxu0 %v5390
    %5495 = vmatprep.subr.bf16.mxu0 0
    %5496 = vmatpush2.bf16.msra.mxu0 %v5388
    %5497 = vmatprep.subr.bf16.mxu0 0
    %5498 = vmatpush2.bf16.msra.mxu0 %v5386
    %5499 = vmatprep.mubr.bf16.mxu0 %v5321
    %5500 = vmatmul.mubr.bf16.gmra.mxu0 %v5320
    %v5501 = vpop.f32.mrf.mxu0
    %v5502 = vadd.f32 0.0, %v5501
    %v5503 = vpop.f32.mrf.mxu0
    %v5504 = vpop.f32.mrf.mxu0
    %v5505 = vadd.f32 0.0, %v5504
    %v5506 = vpop.f32.mrf.mxu0
    %5507 = vmatprep.mubr.bf16.mxu0 %v5325
    %5508 = vmatmul.mubr.bf16.gmra.mxu0 %v5324
    %v5509 = vpop.f32.mrf.mxu0
    %v5510 = vadd.f32 0.0, %v5509
    %v5511 = vpop.f32.mrf.mxu0
    %v5512 = vpop.f32.mrf.mxu0
    %v5513 = vadd.f32 0.0, %v5512
    %v5514 = vpop.f32.mrf.mxu0
    %5515 = vmatprep.mubr.bf16.mxu0 %v5329
    %5516 = vmatmul.mubr.bf16.gmra.mxu0 %v5328
    %v5517 = vpop.f32.mrf.mxu0
    %v5518 = vadd.f32 0.0, %v5517
    %v5519 = vpop.f32.mrf.mxu0
    %v5520 = vpop.f32.mrf.mxu0
    %v5521 = vadd.f32 0.0, %v5520
    %v5522 = vpop.f32.mrf.mxu0
    %5523 = vmatprep.mubr.bf16.mxu0 %v5333
    %5524 = vmatmul.mubr.bf16.gmra.mxu0 %v5332
    %v5525 = vpop.f32.mrf.mxu0
    %v5526 = vadd.f32 0.0, %v5525
    %v5527 = vpop.f32.mrf.mxu0
    %v5528 = vpop.f32.mrf.mxu0
    %v5529 = vadd.f32 0.0, %v5528
    %v5530 = vpop.f32.mrf.mxu0
    %5531 = vmatprep.mubr.bf16.mxu0 %v5337
    %5532 = vmatmul.mubr.bf16.gmra.mxu0 %v5336
    %v5533 = vpop.f32.mrf.mxu0
    %v5534 = vadd.f32 0.0, %v5533
    %v5535 = vpop.f32.mrf.mxu0
    %v5536 = vpop.f32.mrf.mxu0
    %v5537 = vadd.f32 0.0, %v5536
    %v5538 = vpop.f32.mrf.mxu0
    %5539 = vmatprep.mubr.bf16.mxu0 %v5341
    %5540 = vmatmul.mubr.bf16.gmra.mxu0 %v5340
    %v5541 = vpop.f32.mrf.mxu0
    %v5542 = vadd.f32 0.0, %v5541
    %v5543 = vpop.f32.mrf.mxu0
    %v5544 = vpop.f32.mrf.mxu0
    %v5545 = vadd.f32 0.0, %v5544
    %v5546 = vpop.f32.mrf.mxu0
    %5547 = vmatprep.mubr.bf16.mxu0 %v5345
    %5548 = vmatmul.mubr.bf16.gmra.mxu0 %v5344
    %v5549 = vpop.f32.mrf.mxu0
    %v5550 = vadd.f32 0.0, %v5549
    %v5551 = vpop.f32.mrf.mxu0
    %v5552 = vpop.f32.mrf.mxu0
    %v5553 = vadd.f32 0.0, %v5552
    %v5554 = vpop.f32.mrf.mxu0
    %5555 = vdwg.mxu0
    %5556 = vmatprep.subr.bf16.mxu0 0
    %5557 = vmatpush1.bf16.msra.mxu0 %v5416
    %5558 = vmatprep.subr.bf16.mxu0 0
    %5559 = vmatpush1.bf16.msra.mxu0 %v5414
    %5560 = vmatprep.subr.bf16.mxu0 0
    %5561 = vmatpush1.bf16.msra.mxu0 %v5412
    %5562 = vmatprep.subr.bf16.mxu0 0
    %5563 = vmatpush1.bf16.msra.mxu0 %v5410
    %5564 = vmatprep.subr.bf16.mxu0 0
    %5565 = vmatpush1.bf16.msra.mxu0 %v5408
    %5566 = vmatprep.subr.bf16.mxu0 0
    %5567 = vmatpush1.bf16.msra.mxu0 %v5406
    %5568 = vmatprep.subr.bf16.mxu0 0
    %5569 = vmatpush1.bf16.msra.mxu0 %v5404
    %5570 = vmatprep.subr.bf16.mxu0 0
    %5571 = vmatpush1.bf16.msra.mxu0 %v5402
    %5572 = vmatprep.subr.bf16.mxu0 0
    %5573 = vmatpush2.bf16.msra.mxu0 0
    %5574 = vmatprep.subr.bf16.mxu0 0
    %5575 = vmatpush2.bf16.msra.mxu0 0
    %5576 = vmatprep.subr.bf16.mxu0 0
    %5577 = vmatpush2.bf16.msra.mxu0 0
    %5578 = vmatprep.subr.bf16.mxu0 0
    %5579 = vmatpush2.bf16.msra.mxu0 0
    %5580 = vmatprep.subr.bf16.mxu0 0
    %5581 = vmatpush2.bf16.msra.mxu0 0
    %5582 = vmatprep.subr.bf16.mxu0 0
    %5583 = vmatpush2.bf16.msra.mxu0 0
    %5584 = vmatprep.subr.bf16.mxu0 0
    %5585 = vmatpush2.bf16.msra.mxu0 0
    %5586 = vmatprep.subr.bf16.mxu0 0
    %5587 = vmatpush2.bf16.msra.mxu0 %v5465
    %5588 = vmatprep.mubr.bf16.mxu0 %v5444
    %5589 = vmatmul.mubr.bf16.gmra.mxu0 %v5322
    %v5590 = vpop.f32.mrf.mxu0
    %v5591 = vadd.f32 %v5502, %v5590
    %v5592 = vpop.f32.mrf.mxu0
    %v5593 = vpop.f32.mrf.mxu0
    %v5594 = vadd.f32 %v5505, %v5593
    %v5595 = vpop.f32.mrf.mxu0
    %5596 = vmatprep.mubr.bf16.mxu0 %v5447
    %5597 = vmatmul.mubr.bf16.gmra.mxu0 %v5326
    %v5598 = vpop.f32.mrf.mxu0
    %v5599 = vadd.f32 %v5510, %v5598
    %v5600 = vpop.f32.mrf.mxu0
    %v5601 = vpop.f32.mrf.mxu0
    %v5602 = vadd.f32 %v5513, %v5601
    %v5603 = vpop.f32.mrf.mxu0
    %5604 = vmatprep.mubr.bf16.mxu0 %v5450
    %5605 = vmatmul.mubr.bf16.gmra.mxu0 %v5330
    %v5606 = vpop.f32.mrf.mxu0
    %v5607 = vadd.f32 %v5518, %v5606
    %v5608 = vpop.f32.mrf.mxu0
    %v5609 = vpop.f32.mrf.mxu0
    %v5610 = vadd.f32 %v5521, %v5609
    %v5611 = vpop.f32.mrf.mxu0
    %5612 = vmatprep.mubr.bf16.mxu0 %v5453
    %5613 = vmatmul.mubr.bf16.gmra.mxu0 %v5334
    %v5614 = vpop.f32.mrf.mxu0
    %v5615 = vadd.f32 %v5526, %v5614
    %v5616 = vpop.f32.mrf.mxu0
    %v5617 = vpop.f32.mrf.mxu0
    %v5618 = vadd.f32 %v5529, %v5617
    %v5619 = vpop.f32.mrf.mxu0
    %5620 = vmatprep.mubr.bf16.mxu0 %v5456
    %5621 = vmatmul.mubr.bf16.gmra.mxu0 %v5338
    %v5622 = vpop.f32.mrf.mxu0
    %v5623 = vadd.f32 %v5534, %v5622
    %v5624 = vpop.f32.mrf.mxu0
    %v5625 = vpop.f32.mrf.mxu0
    %v5626 = vadd.f32 %v5537, %v5625
    %v5627 = vpop.f32.mrf.mxu0
    %5628 = vmatprep.mubr.bf16.mxu0 %v5459
    %5629 = vmatmul.mubr.bf16.gmra.mxu0 %v5342
    %v5630 = vpop.f32.mrf.mxu0
    %v5631 = vadd.f32 %v5542, %v5630
    %v5632 = vpop.f32.mrf.mxu0
    %v5633 = vpop.f32.mrf.mxu0
    %v5634 = vadd.f32 %v5545, %v5633
    %v5635 = vpop.f32.mrf.mxu0
    %5636 = vmatprep.mubr.bf16.mxu0 %v5462
    %5637 = vmatmul.mubr.bf16.gmra.mxu0 %v5346
    %v5638 = vpop.f32.mrf.mxu0
    %v5639 = vadd.f32 %v5550, %v5638
    %v5640 = vpop.f32.mrf.mxu0
    %v5641 = vpop.f32.mrf.mxu0
    %v5642 = vadd.f32 %v5553, %v5641
    %v5643 = vpop.f32.mrf.mxu0
    %5644 = vdwg.mxu0
    %v5645 = vadd.f32 %v5193, %v5591
    %v5646 = vadd.f32 %v5194, %v5594
    %v5647 = vadd.f32 %v5195, %v5599
    %v5648 = vadd.f32 %v5196, %v5602
    %v5649 = vadd.f32 %v5197, %v5607
    %v5650 = vadd.f32 %v5198, %v5610
    %v5651 = vadd.f32 %v5199, %v5615
    %v5652 = vadd.f32 %v5200, %v5618
    %v5653 = vadd.f32 %v5201, %v5623
    %v5654 = vadd.f32 %v5202, %v5626
    %v5655 = vadd.f32 %v5203, %v5631
    %v5656 = vadd.f32 %v5204, %v5634
    %v5657 = vadd.f32 %v5205, %v5639
    %v5658 = vadd.f32 %v5206, %v5642
    %s5659 = scalar_lea.vmem %s3, 1792
    %v5660 = vld [vmem:[%s5659] sm:$0xff]
    %v5661 = vld [vmem:[%s5659 + $0x8] sm:$0xff]
    %v5662 = vld [vmem:[%s5659 + $0x10] sm:$0xff]
    %v5663 = vld [vmem:[%s5659 + $0x18] sm:$0xff]
    %v5664 = vld [vmem:[%s5659 + $0x20] sm:$0xff]
    %v5665 = vld [vmem:[%s5659 + $0x28] sm:$0xff]
    %v5666 = vld [vmem:[%s5659 + $0x30] sm:$0xff]
    %v5667 = vld [vmem:[%s5659 + $0x38] sm:$0xff]
    %v5668 = vld [vmem:[%s5659 + $0x40] sm:$0xff]
    %v5669 = vld [vmem:[%s5659 + $0x48] sm:$0xff]
    %v5670 = vld [vmem:[%s5659 + $0x50] sm:$0xff]
    %v5671 = vld [vmem:[%s5659 + $0x58] sm:$0xff]
    %v5672 = vld [vmem:[%s5659 + $0x60] sm:$0xff]
    %v5673 = vld [vmem:[%s5659 + $0x68] sm:$0xff]
    %v5674 = vld [vmem:[%s5659 + $0x70] sm:$0xff]
    %v5675 = vld [vmem:[%s5659 + $0x78] sm:$0xff]
    %v5676 = vld [vmem:[%s5659 + $0x80] sm:$0xff]
    %v5677 = vld [vmem:[%s5659 + $0x88] sm:$0xff]
    %v5678 = vld [vmem:[%s5659 + $0x90] sm:$0xff]
    %v5679 = vld [vmem:[%s5659 + $0x98] sm:$0xff]
    %v5680 = vld [vmem:[%s5659 + $0xa0] sm:$0xff]
    %v5681 = vld [vmem:[%s5659 + $0xa8] sm:$0xff]
    %v5682 = vld [vmem:[%s5659 + $0xb0] sm:$0xff]
    %v5683 = vld [vmem:[%s5659 + $0xb8] sm:$0xff]
    %v5684 = vld [vmem:[%s5659 + $0xc0] sm:$0xff]
    %v5685 = vld [vmem:[%s5659 + $0xc8] sm:$0xff]
    %v5686 = vld [vmem:[%s5659 + $0xd0] sm:$0xff]
    %v5687 = vld [vmem:[%s5659 + $0xd8] sm:$0xff]
    %v5688 = vld [vmem:[#allocation2 + $0x8] sm:$0xf]
    %v5689 = vld [vmem:[#allocation2 + $0x14] sm:$0xf]
    %v5690 = vld [vmem:[#allocation2 + $0x20] sm:$0xf]
    %v5691 = vld [vmem:[#allocation2 + $0x2c] sm:$0xf]
    %v5692 = vld [vmem:[#allocation2 + $0x38] sm:$0xf]
    %v5693 = vld [vmem:[#allocation2 + $0x44] sm:$0xf]
    %v5694 = vld [vmem:[#allocation2 + $0x50] sm:$0xf]
    %v5695 = vld [vmem:[#allocation2 + $0x5c] sm:$0xf]
    %v5696 = vld [vmem:[#allocation2 + $0x68] sm:$0xf]
    %v5697 = vld [vmem:[#allocation2 + $0x74] sm:$0xf]
    %v5698 = vld [vmem:[#allocation2 + $0x80] sm:$0xf]
    %v5699 = vld [vmem:[#allocation2 + $0x8c] sm:$0xf]
    %v5700 = vld [vmem:[#allocation2 + $0x98] sm:$0xf]
    %v5701 = vld [vmem:[#allocation2 + $0xa4] sm:$0xf]
    %v5702 = vld [vmem:[#allocation2 + $0xb0] sm:$0xf]
    %v5703 = vld [vmem:[#allocation2 + $0xbc] sm:$0xf]
    %v5704 = vld [vmem:[#allocation2 + $0xc8] sm:$0xf]
    %v5705 = vld [vmem:[#allocation2 + $0xd4] sm:$0xf]
    %v5706 = vld [vmem:[#allocation2 + $0xe0] sm:$0xf]
    %v5707 = vld [vmem:[#allocation2 + $0xec] sm:$0xf]
    %v5708 = vld [vmem:[#allocation2 + $0xf8] sm:$0xf]
    %v5709 = vld [vmem:[#allocation2 + $0x104] sm:$0xf]
    %v5710 = vld [vmem:[#allocation2 + $0x110] sm:$0xf]
    %v5711 = vld [vmem:[#allocation2 + $0x11c] sm:$0xf]
    %v5712 = vld [vmem:[#allocation2 + $0x128] sm:$0xf]
    %v5713 = vld [vmem:[#allocation2 + $0x134] sm:$0xf]
    %v5714 = vld [vmem:[#allocation2 + $0x140] sm:$0xf]
    %v5715 = vld [vmem:[#allocation2 + $0x14c] sm:$0xf]
    %v5716 = vld [vmem:[#allocation2 + $0x158] sm:$0xf]
    %v5717 = vld [vmem:[#allocation2 + $0x164] sm:$0xf]
    %v5718 = vld [vmem:[#allocation2 + $0x170] sm:$0xf]
    %v5719 = vld [vmem:[#allocation2 + $0x17c] sm:$0xf]
    %v5720 = vld [vmem:[#allocation2 + $0x188] sm:$0xf]
    %v5721 = vld [vmem:[#allocation2 + $0x194] sm:$0xf]
    %v5722 = vld [vmem:[#allocation2 + $0x1a0] sm:$0xf]
    %v5723 = vld [vmem:[#allocation2 + $0x1ac] sm:$0xf]
    %v5724 = vld [vmem:[#allocation2 + $0x1b8] sm:$0xf]
    %v5725 = vld [vmem:[#allocation2 + $0x1c4] sm:$0xf]
    %v5726 = vld [vmem:[#allocation2 + $0x1d0] sm:$0xf]
    %v5727 = vld [vmem:[#allocation2 + $0x1dc] sm:$0xf]
    %v5728 = vld [vmem:[#allocation2 + $0x1e8] sm:$0xf]
    %v5729 = vld [vmem:[#allocation2 + $0x1f4] sm:$0xf]
    %v5730 = vld [vmem:[#allocation2 + $0x200] sm:$0xf]
    %v5731 = vld [vmem:[#allocation2 + $0x20c] sm:$0xf]
    %v5732 = vld [vmem:[#allocation2 + $0x218] sm:$0xf]
    %v5733 = vld [vmem:[#allocation2 + $0x224] sm:$0xf]
    %v5734 = vld [vmem:[#allocation2 + $0x230] sm:$0xf]
    %v5735 = vld [vmem:[#allocation2 + $0x23c] sm:$0xf]
    %v5736 = vld [vmem:[#allocation2 + $0x248] sm:$0xf]
    %v5765 = vunpack.c.l.b16 %v5660
    %v5766 = vunpack.c.h.b16 %v5660
    %v5767 = vunpack.c.l.b16 %v5661
    %v5768 = vunpack.c.h.b16 %v5661
    %v5769 = vunpack.c.l.b16 %v5662
    %v5770 = vunpack.c.h.b16 %v5662
    %v5771 = vunpack.c.l.b16 %v5663
    %v5772 = vunpack.c.h.b16 %v5663
    %v5773 = vunpack.c.l.b16 %v5664
    %v5774 = vunpack.c.h.b16 %v5664
    %v5775 = vunpack.c.l.b16 %v5665
    %v5776 = vunpack.c.h.b16 %v5665
    %v5777 = vunpack.c.l.b16 %v5666
    %v5778 = vunpack.c.h.b16 %v5666
    %v5779 = vunpack.c.l.b16 %v5667
    %v5780 = vunpack.c.h.b16 %v5667
    %v5781 = vunpack.c.l.b16 %v5668
    %v5782 = vunpack.c.h.b16 %v5668
    %v5783 = vunpack.c.l.b16 %v5669
    %v5784 = vunpack.c.h.b16 %v5669
    %v5785 = vunpack.c.l.b16 %v5670
    %v5786 = vunpack.c.h.b16 %v5670
    %v5787 = vunpack.c.l.b16 %v5671
    %v5788 = vunpack.c.h.b16 %v5671
    %v5789 = vunpack.c.l.b16 %v5672
    %v5790 = vunpack.c.h.b16 %v5672
    %v5791 = vunpack.c.l.b16 %v5673
    %v5792 = vunpack.c.h.b16 %v5673
    %v5793 = vunpack.c.l.b16 %v5674
    %v5794 = vunpack.c.h.b16 %v5674
    %v5795 = vunpack.c.l.b16 %v5675
    %v5796 = vunpack.c.h.b16 %v5675
    %v5797 = vunpack.c.l.b16 %v5676
    %v5798 = vunpack.c.h.b16 %v5676
    %v5799 = vunpack.c.l.b16 %v5677
    %v5800 = vunpack.c.h.b16 %v5677
    %v5801 = vunpack.c.l.b16 %v5678
    %v5802 = vunpack.c.h.b16 %v5678
    %v5803 = vunpack.c.l.b16 %v5679
    %v5804 = vunpack.c.h.b16 %v5679
    %v5805 = vunpack.c.l.b16 %v5680
    %v5806 = vunpack.c.h.b16 %v5680
    %v5807 = vunpack.c.l.b16 %v5681
    %v5808 = vunpack.c.h.b16 %v5681
    %v5809 = vunpack.c.l.b16 %v5682
    %v5810 = vunpack.c.h.b16 %v5682
    %v5811 = vunpack.c.l.b16 %v5683
    %v5812 = vunpack.c.h.b16 %v5683
    %v5813 = vunpack.c.l.b16 %v5684
    %v5814 = vunpack.c.h.b16 %v5684
    %v5815 = vunpack.c.l.b16 %v5685
    %v5816 = vunpack.c.h.b16 %v5685
    %v5817 = vunpack.c.l.b16 %v5686
    %v5818 = vunpack.c.h.b16 %v5686
    %v5819 = vunpack.c.l.b16 %v5687
    %v5820 = vunpack.c.h.b16 %v5687
    %v5821 = vpack.c.b16 %v5769, %v5765
    %v5822 = vpack.c.b16 %v5770, %v5766
    %v5823 = vpack.c.b16 %v5771, %v5767
    %v5824 = vpack.c.b16 %v5772, %v5768
    %v5825 = vpack.c.b16 %v5777, %v5773
    %v5826 = vpack.c.b16 %v5778, %v5774
    %v5827 = vpack.c.b16 %v5779, %v5775
    %v5828 = vpack.c.b16 %v5780, %v5776
    %v5829 = vpack.c.b16 %v5785, %v5781
    %v5830 = vpack.c.b16 %v5786, %v5782
    %v5831 = vpack.c.b16 %v5787, %v5783
    %v5832 = vpack.c.b16 %v5788, %v5784
    %v5833 = vpack.c.b16 %v5793, %v5789
    %v5834 = vpack.c.b16 %v5794, %v5790
    %v5835 = vpack.c.b16 %v5795, %v5791
    %v5836 = vpack.c.b16 %v5796, %v5792
    %v5837 = vpack.c.b16 %v5801, %v5797
    %v5838 = vpack.c.b16 %v5802, %v5798
    %v5839 = vpack.c.b16 %v5803, %v5799
    %v5840 = vpack.c.b16 %v5804, %v5800
    %v5841 = vpack.c.b16 %v5809, %v5805
    %v5842 = vpack.c.b16 %v5810, %v5806
    %v5843 = vpack.c.b16 %v5811, %v5807
    %v5844 = vpack.c.b16 %v5812, %v5808
    %v5845 = vpack.c.b16 %v5817, %v5813
    %v5846 = vpack.c.b16 %v5818, %v5814
    %v5847 = vpack.c.b16 %v5819, %v5815
    %v5848 = vpack.c.b16 %v5820, %v5816
    %v5919 = vunpack.c.l.b16 %v5688
    %v5920 = vunpack.c.l.b16 %v5689
    %v5921 = vunpack.c.l.b16 %v5690
    %v5922 = vunpack.c.l.b16 %v5691
    %v5923 = vunpack.c.l.b16 %v5692
    %v5924 = vunpack.c.l.b16 %v5693
    %v5925 = vunpack.c.l.b16 %v5694
    %v5926 = vunpack.c.l.b16 %v5695
    %v5927 = vunpack.c.l.b16 %v5696
    %v5928 = vunpack.c.l.b16 %v5697
    %v5929 = vunpack.c.l.b16 %v5698
    %v5930 = vunpack.c.l.b16 %v5699
    %v5931 = vunpack.c.l.b16 %v5700
    %v5932 = vunpack.c.l.b16 %v5701
    %v5933 = vunpack.c.l.b16 %v5702
    %v5934 = vunpack.c.l.b16 %v5703
    %v5935 = vunpack.c.l.b16 %v5704
    %v5936 = vunpack.c.l.b16 %v5705
    %v5937 = vunpack.c.l.b16 %v5706
    %v5938 = vunpack.c.l.b16 %v5707
    %v5939 = vunpack.c.l.b16 %v5708
    %v5940 = vunpack.c.l.b16 %v5709
    %v5941 = vunpack.c.l.b16 %v5710
    %v5942 = vunpack.c.l.b16 %v5711
    %v5943 = vunpack.c.l.b16 %v5712
    %v5944 = vunpack.c.l.b16 %v5713
    %v5945 = vunpack.c.l.b16 %v5714
    %v5946 = vunpack.c.l.b16 %v5715
    %v5947 = vunpack.c.l.b16 %v5716
    %v5948 = vunpack.c.l.b16 %v5717
    %v5949 = vunpack.c.l.b16 %v5718
    %v5950 = vunpack.c.l.b16 %v5719
    %v5951 = vunpack.c.l.b16 %v5720
    %v5952 = vunpack.c.l.b16 %v5721
    %v5953 = vunpack.c.l.b16 %v5722
    %v5954 = vunpack.c.l.b16 %v5723
    %v5955 = vunpack.c.l.b16 %v5724
    %v5956 = vunpack.c.l.b16 %v5725
    %v5957 = vunpack.c.l.b16 %v5726
    %v5958 = vunpack.c.l.b16 %v5727
    %v5959 = vunpack.c.l.b16 %v5728
    %v5960 = vunpack.c.l.b16 %v5729
    %v5961 = vunpack.c.l.b16 %v5730
    %v5962 = vunpack.c.l.b16 %v5731
    %v5963 = vunpack.c.l.b16 %v5732
    %v5964 = vunpack.c.l.b16 %v5733
    %v5965 = vunpack.c.l.b16 %v5734
    %v5966 = vunpack.c.l.b16 %v5735
    %v5967 = vunpack.c.l.b16 %v5736
    %v5968 = vpack.c.b16 %v5920, %v5919
    %v5969 = vpack.c.b16 %v5922, %v5921
    %v5970 = vpack.c.b16 %v5924, %v5923
    %v5971 = vpack.c.b16 %v5926, %v5925
    %v5972 = vpack.c.b16 %v5928, %v5927
    %v5973 = vpack.c.b16 %v5930, %v5929
    %v5974 = vpack.c.b16 %v5932, %v5931
    %v5975 = vpack.c.b16 %v5934, %v5933
    %v5976 = vpack.c.b16 %v5936, %v5935
    %v5977 = vpack.c.b16 %v5938, %v5937
    %v5978 = vpack.c.b16 %v5940, %v5939
    %v5979 = vpack.c.b16 %v5942, %v5941
    %v5980 = vpack.c.b16 %v5944, %v5943
    %v5981 = vpack.c.b16 %v5946, %v5945
    %v5982 = vpack.c.b16 %v5948, %v5947
    %v5983 = vpack.c.b16 %v5950, %v5949
    %v5984 = vpack.c.b16 %v5952, %v5951
    %v5985 = vpack.c.b16 %v5954, %v5953
    %v5986 = vpack.c.b16 %v5956, %v5955
    %v5987 = vpack.c.b16 %v5958, %v5957
    %v5988 = vpack.c.b16 %v5960, %v5959
    %v5989 = vpack.c.b16 %v5962, %v5961
    %v5990 = vpack.c.b16 %v5964, %v5963
    %v5991 = vpack.c.b16 %v5966, %v5965
    %v5992 = vpack.c.b16 %v5967, %v5967
    %v6018 = vsel %vm2262, %v5824, 0
    %v6021 = vsel %vm2262, %v5828, 0
    %v6024 = vsel %vm2262, %v5832, 0
    %v6027 = vsel %vm2262, %v5836, 0
    %v6030 = vsel %vm2262, %v5840, 0
    %v6033 = vsel %vm2262, %v5844, 0
    %v6036 = vsel %vm2262, %v5848, 0
    %v6039 = vsel %vm2284, %v5992, 0
    %6041 = vmatprep.subr.bf16.mxu0 0
    %6042 = vmatpush1.bf16.msra.mxu0 %v5975
    %6043 = vmatprep.subr.bf16.mxu0 0
    %6044 = vmatpush1.bf16.msra.mxu0 %v5974
    %6045 = vmatprep.subr.bf16.mxu0 0
    %6046 = vmatpush1.bf16.msra.mxu0 %v5973
    %6047 = vmatprep.subr.bf16.mxu0 0
    %6048 = vmatpush1.bf16.msra.mxu0 %v5972
    %6049 = vmatprep.subr.bf16.mxu0 0
    %6050 = vmatpush1.bf16.msra.mxu0 %v5971
    %6051 = vmatprep.subr.bf16.mxu0 0
    %6052 = vmatpush1.bf16.msra.mxu0 %v5970
    %6053 = vmatprep.subr.bf16.mxu0 0
    %6054 = vmatpush1.bf16.msra.mxu0 %v5969
    %6055 = vmatprep.subr.bf16.mxu0 0
    %6056 = vmatpush1.bf16.msra.mxu0 %v5968
    %6057 = vmatprep.subr.bf16.mxu0 0
    %6058 = vmatpush2.bf16.msra.mxu0 %v5983
    %6059 = vmatprep.subr.bf16.mxu0 0
    %6060 = vmatpush2.bf16.msra.mxu0 %v5982
    %6061 = vmatprep.subr.bf16.mxu0 0
    %6062 = vmatpush2.bf16.msra.mxu0 %v5981
    %6063 = vmatprep.subr.bf16.mxu0 0
    %6064 = vmatpush2.bf16.msra.mxu0 %v5980
    %6065 = vmatprep.subr.bf16.mxu0 0
    %6066 = vmatpush2.bf16.msra.mxu0 %v5979
    %6067 = vmatprep.subr.bf16.mxu0 0
    %6068 = vmatpush2.bf16.msra.mxu0 %v5978
    %6069 = vmatprep.subr.bf16.mxu0 0
    %6070 = vmatpush2.bf16.msra.mxu0 %v5977
    %6071 = vmatprep.subr.bf16.mxu0 0
    %6072 = vmatpush2.bf16.msra.mxu0 %v5976
    %6073 = vmatprep.mubr.bf16.mxu0 %v5822
    %6074 = vmatmul.mubr.bf16.gmra.mxu0 %v5821
    %v6075 = vpop.f32.mrf.mxu0
    %v6076 = vadd.f32 0.0, %v6075
    %v6077 = vpop.f32.mrf.mxu0
    %v6078 = vpop.f32.mrf.mxu0
    %v6079 = vadd.f32 0.0, %v6078
    %v6080 = vpop.f32.mrf.mxu0
    %6081 = vmatprep.mubr.bf16.mxu0 %v5826
    %6082 = vmatmul.mubr.bf16.gmra.mxu0 %v5825
    %v6083 = vpop.f32.mrf.mxu0
    %v6084 = vadd.f32 0.0, %v6083
    %v6085 = vpop.f32.mrf.mxu0
    %v6086 = vpop.f32.mrf.mxu0
    %v6087 = vadd.f32 0.0, %v6086
    %v6088 = vpop.f32.mrf.mxu0
    %6089 = vmatprep.mubr.bf16.mxu0 %v5830
    %6090 = vmatmul.mubr.bf16.gmra.mxu0 %v5829
    %v6091 = vpop.f32.mrf.mxu0
    %v6092 = vadd.f32 0.0, %v6091
    %v6093 = vpop.f32.mrf.mxu0
    %v6094 = vpop.f32.mrf.mxu0
    %v6095 = vadd.f32 0.0, %v6094
    %v6096 = vpop.f32.mrf.mxu0
    %6097 = vmatprep.mubr.bf16.mxu0 %v5834
    %6098 = vmatmul.mubr.bf16.gmra.mxu0 %v5833
    %v6099 = vpop.f32.mrf.mxu0
    %v6100 = vadd.f32 0.0, %v6099
    %v6101 = vpop.f32.mrf.mxu0
    %v6102 = vpop.f32.mrf.mxu0
    %v6103 = vadd.f32 0.0, %v6102
    %v6104 = vpop.f32.mrf.mxu0
    %6105 = vmatprep.mubr.bf16.mxu0 %v5838
    %6106 = vmatmul.mubr.bf16.gmra.mxu0 %v5837
    %v6107 = vpop.f32.mrf.mxu0
    %v6108 = vadd.f32 0.0, %v6107
    %v6109 = vpop.f32.mrf.mxu0
    %v6110 = vpop.f32.mrf.mxu0
    %v6111 = vadd.f32 0.0, %v6110
    %v6112 = vpop.f32.mrf.mxu0
    %6113 = vmatprep.mubr.bf16.mxu0 %v5842
    %6114 = vmatmul.mubr.bf16.gmra.mxu0 %v5841
    %v6115 = vpop.f32.mrf.mxu0
    %v6116 = vadd.f32 0.0, %v6115
    %v6117 = vpop.f32.mrf.mxu0
    %v6118 = vpop.f32.mrf.mxu0
    %v6119 = vadd.f32 0.0, %v6118
    %v6120 = vpop.f32.mrf.mxu0
    %6121 = vmatprep.mubr.bf16.mxu0 %v5846
    %6122 = vmatmul.mubr.bf16.gmra.mxu0 %v5845
    %v6123 = vpop.f32.mrf.mxu0
    %v6124 = vadd.f32 0.0, %v6123
    %v6125 = vpop.f32.mrf.mxu0
    %v6126 = vpop.f32.mrf.mxu0
    %v6127 = vadd.f32 0.0, %v6126
    %v6128 = vpop.f32.mrf.mxu0
    %6129 = vdwg.mxu0
    %6130 = vmatprep.subr.bf16.mxu0 0
    %6131 = vmatpush1.bf16.msra.mxu0 %v5991
    %6132 = vmatprep.subr.bf16.mxu0 0
    %6133 = vmatpush1.bf16.msra.mxu0 %v5990
    %6134 = vmatprep.subr.bf16.mxu0 0
    %6135 = vmatpush1.bf16.msra.mxu0 %v5989
    %6136 = vmatprep.subr.bf16.mxu0 0
    %6137 = vmatpush1.bf16.msra.mxu0 %v5988
    %6138 = vmatprep.subr.bf16.mxu0 0
    %6139 = vmatpush1.bf16.msra.mxu0 %v5987
    %6140 = vmatprep.subr.bf16.mxu0 0
    %6141 = vmatpush1.bf16.msra.mxu0 %v5986
    %6142 = vmatprep.subr.bf16.mxu0 0
    %6143 = vmatpush1.bf16.msra.mxu0 %v5985
    %6144 = vmatprep.subr.bf16.mxu0 0
    %6145 = vmatpush1.bf16.msra.mxu0 %v5984
    %6146 = vmatprep.subr.bf16.mxu0 0
    %6147 = vmatpush2.bf16.msra.mxu0 0
    %6148 = vmatprep.subr.bf16.mxu0 0
    %6149 = vmatpush2.bf16.msra.mxu0 0
    %6150 = vmatprep.subr.bf16.mxu0 0
    %6151 = vmatpush2.bf16.msra.mxu0 0
    %6152 = vmatprep.subr.bf16.mxu0 0
    %6153 = vmatpush2.bf16.msra.mxu0 0
    %6154 = vmatprep.subr.bf16.mxu0 0
    %6155 = vmatpush2.bf16.msra.mxu0 0
    %6156 = vmatprep.subr.bf16.mxu0 0
    %6157 = vmatpush2.bf16.msra.mxu0 0
    %6158 = vmatprep.subr.bf16.mxu0 0
    %6159 = vmatpush2.bf16.msra.mxu0 0
    %6160 = vmatprep.subr.bf16.mxu0 0
    %6161 = vmatpush2.bf16.msra.mxu0 %v6039
    %6162 = vmatprep.mubr.bf16.mxu0 %v6018
    %6163 = vmatmul.mubr.bf16.gmra.mxu0 %v5823
    %v6164 = vpop.f32.mrf.mxu0
    %v6165 = vadd.f32 %v6076, %v6164
    %v6166 = vpop.f32.mrf.mxu0
    %v6167 = vpop.f32.mrf.mxu0
    %v6168 = vadd.f32 %v6079, %v6167
    %v6169 = vpop.f32.mrf.mxu0
    %6170 = vmatprep.mubr.bf16.mxu0 %v6021
    %6171 = vmatmul.mubr.bf16.gmra.mxu0 %v5827
    %v6172 = vpop.f32.mrf.mxu0
    %v6173 = vadd.f32 %v6084, %v6172
    %v6174 = vpop.f32.mrf.mxu0
    %v6175 = vpop.f32.mrf.mxu0
    %v6176 = vadd.f32 %v6087, %v6175
    %v6177 = vpop.f32.mrf.mxu0
    %6178 = vmatprep.mubr.bf16.mxu0 %v6024
    %6179 = vmatmul.mubr.bf16.gmra.mxu0 %v5831
    %v6180 = vpop.f32.mrf.mxu0
    %v6181 = vadd.f32 %v6092, %v6180
    %v6182 = vpop.f32.mrf.mxu0
    %v6183 = vpop.f32.mrf.mxu0
    %v6184 = vadd.f32 %v6095, %v6183
    %v6185 = vpop.f32.mrf.mxu0
    %6186 = vmatprep.mubr.bf16.mxu0 %v6027
    %6187 = vmatmul.mubr.bf16.gmra.mxu0 %v5835
    %v6188 = vpop.f32.mrf.mxu0
    %v6189 = vadd.f32 %v6100, %v6188
    %v6190 = vpop.f32.mrf.mxu0
    %v6191 = vpop.f32.mrf.mxu0
    %v6192 = vadd.f32 %v6103, %v6191
    %v6193 = vpop.f32.mrf.mxu0
    %6194 = vmatprep.mubr.bf16.mxu0 %v6030
    %6195 = vmatmul.mubr.bf16.gmra.mxu0 %v5839
    %v6196 = vpop.f32.mrf.mxu0
    %v6197 = vadd.f32 %v6108, %v6196
    %v6198 = vpop.f32.mrf.mxu0
    %v6199 = vpop.f32.mrf.mxu0
    %v6200 = vadd.f32 %v6111, %v6199
    %v6201 = vpop.f32.mrf.mxu0
    %6202 = vmatprep.mubr.bf16.mxu0 %v6033
    %6203 = vmatmul.mubr.bf16.gmra.mxu0 %v5843
    %v6204 = vpop.f32.mrf.mxu0
    %v6205 = vadd.f32 %v6116, %v6204
    %v6206 = vpop.f32.mrf.mxu0
    %v6207 = vpop.f32.mrf.mxu0
    %v6208 = vadd.f32 %v6119, %v6207
    %v6209 = vpop.f32.mrf.mxu0
    %6210 = vmatprep.mubr.bf16.mxu0 %v6036
    %6211 = vmatmul.mubr.bf16.gmra.mxu0 %v5847
    %v6212 = vpop.f32.mrf.mxu0
    %v6213 = vadd.f32 %v6124, %v6212
    %v6214 = vpop.f32.mrf.mxu0
    %v6215 = vpop.f32.mrf.mxu0
    %v6216 = vadd.f32 %v6127, %v6215
    %v6217 = vpop.f32.mrf.mxu0
    %6218 = vdwg.mxu0
    %v6219 = vadd.f32 %v5645, %v6165
    %v6220 = vadd.f32 %v5646, %v6168
    %v6221 = vadd.f32 %v5647, %v6173
    %v6222 = vadd.f32 %v5648, %v6176
    %v6223 = vadd.f32 %v5649, %v6181
    %v6224 = vadd.f32 %v5650, %v6184
    %v6225 = vadd.f32 %v5651, %v6189
    %v6226 = vadd.f32 %v5652, %v6192
    %v6227 = vadd.f32 %v5653, %v6197
    %v6228 = vadd.f32 %v5654, %v6200
    %v6229 = vadd.f32 %v5655, %v6205
    %v6230 = vadd.f32 %v5656, %v6208
    %v6231 = vadd.f32 %v5657, %v6213
    %v6232 = vadd.f32 %v5658, %v6216
    %v6233 = vld [vmem:[%s5] sm:$0x1]
    %v6235 = vlaneseq
    %v6236 = vshrl.u32 %v6235, 7
    %v6237 = vsub.s32 0, %v6236
    %v6238 = vrot.slane %v6233, %v6237
    %v6240 = vadd.f32 %v6219, %v6238
    %v6241 = vadd.f32 %v6220, %v6238
    %v6242 = vadd.f32 %v6221, %v6238
    %v6243 = vadd.f32 %v6222, %v6238
    %v6244 = vadd.f32 %v6223, %v6238
    %v6245 = vadd.f32 %v6224, %v6238
    %v6246 = vadd.f32 %v6225, %v6238
    %v6247 = vadd.f32 %v6226, %v6238
    %v6248 = vadd.f32 %v6227, %v6238
    %v6249 = vadd.f32 %v6228, %v6238
    %v6250 = vadd.f32 %v6229, %v6238
    %v6251 = vadd.f32 %v6230, %v6238
    %v6252 = vadd.f32 %v6231, %v6238
    %v6253 = vadd.f32 %v6232, %v6238
    %v6254 = vmax.f32 %v6240, 0.0
    %v6255 = vmax.f32 %v6241, 0.0
    %v6256 = vmax.f32 %v6242, 0.0
    %v6257 = vmax.f32 %v6243, 0.0
    %v6258 = vmax.f32 %v6244, 0.0
    %v6259 = vmax.f32 %v6245, 0.0
    %v6260 = vmax.f32 %v6246, 0.0
    %v6261 = vmax.f32 %v6247, 0.0
    %v6262 = vmax.f32 %v6248, 0.0
    %v6263 = vmax.f32 %v6249, 0.0
    %v6264 = vmax.f32 %v6250, 0.0
    %v6265 = vmax.f32 %v6251, 0.0
    %v6266 = vmax.f32 %v6252, 0.0
    %v6267 = vmax.f32 %v6253, 0.0
    %vm6268 = vcmask 261120
    %6269 = vst.msk [vmem:[#allocation3] sm:$0xff] %vm6268, %v6254
    %6270 = vst.msk [vmem:[#allocation3 + $0x8] sm:$0xff] %vm6268, %v6255
    %6271 = vst.msk [vmem:[#allocation3 + $0x10] sm:$0xff] %vm6268, %v6256
    %6272 = vst.msk [vmem:[#allocation3 + $0x18] sm:$0xff] %vm6268, %v6257
    %6273 = vst.msk [vmem:[#allocation3 + $0x20] sm:$0xff] %vm6268, %v6258
    %6274 = vst.msk [vmem:[#allocation3 + $0x28] sm:$0xff] %vm6268, %v6259
    %6275 = vst.msk [vmem:[#allocation3 + $0x30] sm:$0xff] %vm6268, %v6260
    %6276 = vst.msk [vmem:[#allocation3 + $0x38] sm:$0xff] %vm6268, %v6261
    %6277 = vst.msk [vmem:[#allocation3 + $0x40] sm:$0xff] %vm6268, %v6262
    %6278 = vst.msk [vmem:[#allocation3 + $0x48] sm:$0xff] %vm6268, %v6263
    %6279 = vst.msk [vmem:[#allocation3 + $0x50] sm:$0xff] %vm6268, %v6264
    %6280 = vst.msk [vmem:[#allocation3 + $0x58] sm:$0xff] %vm6268, %v6265
    %6281 = vst.msk [vmem:[#allocation3 + $0x60] sm:$0xff] %vm6268, %v6266
    %6282 = vst.msk [vmem:[#allocation3 + $0x68] sm:$0xff] %vm6268, %v6267
    %v6283 = vld [vmem:[#allocation3] sm:$0x3]
    %vm6284 = vcmask 254976
    %6285 = vst.msk [vmem:[#allocation4] sm:$0x3] %vm6284, %v6283
    %v6286 = vld [vmem:[#allocation3 + $0x2] sm:$0x3]
    %v6289 = vunpack.c.l.s4 1983009808
    %v6290 = vunpack.c.0.s8 %v6289
    %v6291 = vlaneseq
    %v6292 = vshrl.u32 %v6291, 7
    %v6293 = vsub.s32 %v6290, %v6292
    %v6294 = vrot.slane %v6286, %v6293
    %6295 = vrot.lane.b32.xlu0 %v6294, 32
    %v6296 = vpop.permute.xlu0 %6295
    %vm6298 = vcmask 517376
    %6299 = vst.msk [vmem:[#allocation4] sm:$0x3] %vm6298, %v6296
    %v6300 = vld [vmem:[#allocation3 + $0x4] sm:$0x3]
    %v6303 = vunpack.c.l.s4 1983009808
    %v6304 = vunpack.c.0.s8 %v6303
    %v6305 = vlaneseq
    %v6306 = vshrl.u32 %v6305, 7
    %v6307 = vsub.s32 %v6304, %v6306
    %v6308 = vrot.slane %v6300, %v6307
    %6309 = vrot.lane.b32.xlu0 %v6308, 64
    %v6310 = vpop.permute.xlu0 %6309
    %vm6312 = vcmask 779776
    %6313 = vst.msk [vmem:[#allocation4] sm:$0x3] %vm6312, %v6310
    %v6314 = vld [vmem:[#allocation3 + $0x6] sm:$0x3]
    %v6317 = vunpack.c.l.s4 1983009808
    %v6318 = vunpack.c.0.s8 %v6317
    %v6319 = vlaneseq
    %v6320 = vshrl.u32 %v6319, 7
    %v6321 = vsub.s32 %v6318, %v6320
    %v6322 = vrot.slane %v6314, %v6321
    %6323 = vrot.lane.b32.xlu0 %v6322, 96
    %v6324 = vpop.permute.xlu0 %6323
    %vm6326 = vcmask 1042176
    %6327 = vst.msk [vmem:[#allocation4] sm:$0x3] %vm6326, %v6324
    %v6328 = vld [vmem:[#allocation3 + $0x8] sm:$0x3]
    %6329 = vst.msk [vmem:[#allocation4 + $0x2] sm:$0x3] %vm6284, %v6328
    %v6330 = vld [vmem:[#allocation3 + $0xa] sm:$0x3]
    %v6333 = vunpack.c.l.s4 1983009808
    %v6334 = vunpack.c.0.s8 %v6333
    %v6335 = vlaneseq
    %v6336 = vshrl.u32 %v6335, 7
    %v6337 = vsub.s32 %v6334, %v6336
    %v6338 = vrot.slane %v6330, %v6337
    %6339 = vrot.lane.b32.xlu0 %v6338, 32
    %v6340 = vpop.permute.xlu0 %6339
    %6342 = vst.msk [vmem:[#allocation4 + $0x2] sm:$0x3] %vm6298, %v6340
    %v6343 = vld [vmem:[#allocation3 + $0xc] sm:$0x3]
    %v6346 = vunpack.c.l.s4 1983009808
    %v6347 = vunpack.c.0.s8 %v6346
    %v6348 = vlaneseq
    %v6349 = vshrl.u32 %v6348, 7
    %v6350 = vsub.s32 %v6347, %v6349
    %v6351 = vrot.slane %v6343, %v6350
    %6352 = vrot.lane.b32.xlu0 %v6351, 64
    %v6353 = vpop.permute.xlu0 %6352
    %6355 = vst.msk [vmem:[#allocation4 + $0x2] sm:$0x3] %vm6312, %v6353
    %v6356 = vld [vmem:[#allocation3 + $0xe] sm:$0x3]
    %v6359 = vunpack.c.l.s4 1983009808
    %v6360 = vunpack.c.0.s8 %v6359
    %v6361 = vlaneseq
    %v6362 = vshrl.u32 %v6361, 7
    %v6363 = vsub.s32 %v6360, %v6362
    %v6364 = vrot.slane %v6356, %v6363
    %6365 = vrot.lane.b32.xlu0 %v6364, 96
    %v6366 = vpop.permute.xlu0 %6365
    %6368 = vst.msk [vmem:[#allocation4 + $0x2] sm:$0x3] %vm6326, %v6366
    %v6369 = vld [vmem:[#allocation3 + $0x10] sm:$0x3]
    %6370 = vst.msk [vmem:[#allocation4 + $0x4] sm:$0x3] %vm6284, %v6369
    %v6371 = vld [vmem:[#allocation3 + $0x12] sm:$0x3]
    %v6374 = vunpack.c.l.s4 1983009808
    %v6375 = vunpack.c.0.s8 %v6374
    %v6376 = vlaneseq
    %v6377 = vshrl.u32 %v6376, 7
    %v6378 = vsub.s32 %v6375, %v6377
    %v6379 = vrot.slane %v6371, %v6378
    %6380 = vrot.lane.b32.xlu0 %v6379, 32
    %v6381 = vpop.permute.xlu0 %6380
    %6383 = vst.msk [vmem:[#allocation4 + $0x4] sm:$0x3] %vm6298, %v6381
    %v6384 = vld [vmem:[#allocation3 + $0x14] sm:$0x3]
    %v6387 = vunpack.c.l.s4 1983009808
    %v6388 = vunpack.c.0.s8 %v6387
    %v6389 = vlaneseq
    %v6390 = vshrl.u32 %v6389, 7
    %v6391 = vsub.s32 %v6388, %v6390
    %v6392 = vrot.slane %v6384, %v6391
    %6393 = vrot.lane.b32.xlu0 %v6392, 64
    %v6394 = vpop.permute.xlu0 %6393
    %6396 = vst.msk [vmem:[#allocation4 + $0x4] sm:$0x3] %vm6312, %v6394
    %v6397 = vld [vmem:[#allocation3 + $0x16] sm:$0x3]
    %v6400 = vunpack.c.l.s4 1983009808
    %v6401 = vunpack.c.0.s8 %v6400
    %v6402 = vlaneseq
    %v6403 = vshrl.u32 %v6402, 7
    %v6404 = vsub.s32 %v6401, %v6403
    %v6405 = vrot.slane %v6397, %v6404
    %6406 = vrot.lane.b32.xlu0 %v6405, 96
    %v6407 = vpop.permute.xlu0 %6406
    %6409 = vst.msk [vmem:[#allocation4 + $0x4] sm:$0x3] %vm6326, %v6407
    %v6410 = vld [vmem:[#allocation3 + $0x18] sm:$0x3]
    %6411 = vst.msk [vmem:[#allocation4 + $0x6] sm:$0x3] %vm6284, %v6410
    %v6412 = vld [vmem:[#allocation3 + $0x1a] sm:$0x3]
    %v6415 = vunpack.c.l.s4 1983009808
    %v6416 = vunpack.c.0.s8 %v6415
    %v6417 = vlaneseq
    %v6418 = vshrl.u32 %v6417, 7
    %v6419 = vsub.s32 %v6416, %v6418
    %v6420 = vrot.slane %v6412, %v6419
    %6421 = vrot.lane.b32.xlu0 %v6420, 32
    %v6422 = vpop.permute.xlu0 %6421
    %6424 = vst.msk [vmem:[#allocation4 + $0x6] sm:$0x3] %vm6298, %v6422
    %v6425 = vld [vmem:[#allocation3 + $0x1c] sm:$0x3]
    %v6428 = vunpack.c.l.s4 1983009808
    %v6429 = vunpack.c.0.s8 %v6428
    %v6430 = vlaneseq
    %v6431 = vshrl.u32 %v6430, 7
    %v6432 = vsub.s32 %v6429, %v6431
    %v6433 = vrot.slane %v6425, %v6432
    %6434 = vrot.lane.b32.xlu0 %v6433, 64
    %v6435 = vpop.permute.xlu0 %6434
    %6437 = vst.msk [vmem:[#allocation4 + $0x6] sm:$0x3] %vm6312, %v6435
    %v6438 = vld [vmem:[#allocation3 + $0x1e] sm:$0x3]
    %v6441 = vunpack.c.l.s4 1983009808
    %v6442 = vunpack.c.0.s8 %v6441
    %v6443 = vlaneseq
    %v6444 = vshrl.u32 %v6443, 7
    %v6445 = vsub.s32 %v6442, %v6444
    %v6446 = vrot.slane %v6438, %v6445
    %6447 = vrot.lane.b32.xlu0 %v6446, 96
    %v6448 = vpop.permute.xlu0 %6447
    %6450 = vst.msk [vmem:[#allocation4 + $0x6] sm:$0x3] %vm6326, %v6448
    %v6451 = vld [vmem:[#allocation3 + $0x20] sm:$0x3]
    %6452 = vst.msk [vmem:[#allocation4 + $0x8] sm:$0x3] %vm6284, %v6451
    %v6453 = vld [vmem:[#allocation3 + $0x22] sm:$0x3]
    %v6456 = vunpack.c.l.s4 1983009808
    %v6457 = vunpack.c.0.s8 %v6456
    %v6458 = vlaneseq
    %v6459 = vshrl.u32 %v6458, 7
    %v6460 = vsub.s32 %v6457, %v6459
    %v6461 = vrot.slane %v6453, %v6460
    %6462 = vrot.lane.b32.xlu0 %v6461, 32
    %v6463 = vpop.permute.xlu0 %6462
    %6465 = vst.msk [vmem:[#allocation4 + $0x8] sm:$0x3] %vm6298, %v6463
    %v6466 = vld [vmem:[#allocation3 + $0x24] sm:$0x3]
    %v6469 = vunpack.c.l.s4 1983009808
    %v6470 = vunpack.c.0.s8 %v6469
    %v6471 = vlaneseq
    %v6472 = vshrl.u32 %v6471, 7
    %v6473 = vsub.s32 %v6470, %v6472
    %v6474 = vrot.slane %v6466, %v6473
    %6475 = vrot.lane.b32.xlu0 %v6474, 64
    %v6476 = vpop.permute.xlu0 %6475
    %6478 = vst.msk [vmem:[#allocation4 + $0x8] sm:$0x3] %vm6312, %v6476
    %v6479 = vld [vmem:[#allocation3 + $0x26] sm:$0x3]
    %v6482 = vunpack.c.l.s4 1983009808
    %v6483 = vunpack.c.0.s8 %v6482
    %v6484 = vlaneseq
    %v6485 = vshrl.u32 %v6484, 7
    %v6486 = vsub.s32 %v6483, %v6485
    %v6487 = vrot.slane %v6479, %v6486
    %6488 = vrot.lane.b32.xlu0 %v6487, 96
    %v6489 = vpop.permute.xlu0 %6488
    %6491 = vst.msk [vmem:[#allocation4 + $0x8] sm:$0x3] %vm6326, %v6489
    %v6492 = vld [vmem:[#allocation3 + $0x28] sm:$0x3]
    %6493 = vst.msk [vmem:[#allocation4 + $0xa] sm:$0x3] %vm6284, %v6492
    %v6494 = vld [vmem:[#allocation3 + $0x2a] sm:$0x3]
    %v6497 = vunpack.c.l.s4 1983009808
    %v6498 = vunpack.c.0.s8 %v6497
    %v6499 = vlaneseq
    %v6500 = vshrl.u32 %v6499, 7
    %v6501 = vsub.s32 %v6498, %v6500
    %v6502 = vrot.slane %v6494, %v6501
    %6503 = vrot.lane.b32.xlu0 %v6502, 32
    %v6504 = vpop.permute.xlu0 %6503
    %6506 = vst.msk [vmem:[#allocation4 + $0xa] sm:$0x3] %vm6298, %v6504
    %v6507 = vld [vmem:[#allocation3 + $0x2c] sm:$0x3]
    %v6510 = vunpack.c.l.s4 1983009808
    %v6511 = vunpack.c.0.s8 %v6510
    %v6512 = vlaneseq
    %v6513 = vshrl.u32 %v6512, 7
    %v6514 = vsub.s32 %v6511, %v6513
    %v6515 = vrot.slane %v6507, %v6514
    %6516 = vrot.lane.b32.xlu0 %v6515, 64
    %v6517 = vpop.permute.xlu0 %6516
    %6519 = vst.msk [vmem:[#allocation4 + $0xa] sm:$0x3] %vm6312, %v6517
    %v6520 = vld [vmem:[#allocation3 + $0x2e] sm:$0x3]
    %v6523 = vunpack.c.l.s4 1983009808
    %v6524 = vunpack.c.0.s8 %v6523
    %v6525 = vlaneseq
    %v6526 = vshrl.u32 %v6525, 7
    %v6527 = vsub.s32 %v6524, %v6526
    %v6528 = vrot.slane %v6520, %v6527
    %6529 = vrot.lane.b32.xlu0 %v6528, 96
    %v6530 = vpop.permute.xlu0 %6529
    %6532 = vst.msk [vmem:[#allocation4 + $0xa] sm:$0x3] %vm6326, %v6530
    %v6533 = vld [vmem:[#allocation3 + $0x30] sm:$0x3]
    %6534 = vst.msk [vmem:[#allocation4 + $0xc] sm:$0x3] %vm6284, %v6533
    %v6535 = vld [vmem:[#allocation3 + $0x32] sm:$0x3]
    %v6538 = vunpack.c.l.s4 1983009808
    %v6539 = vunpack.c.0.s8 %v6538
    %v6540 = vlaneseq
    %v6541 = vshrl.u32 %v6540, 7
    %v6542 = vsub.s32 %v6539, %v6541
    %v6543 = vrot.slane %v6535, %v6542
    %6544 = vrot.lane.b32.xlu0 %v6543, 32
    %v6545 = vpop.permute.xlu0 %6544
    %6547 = vst.msk [vmem:[#allocation4 + $0xc] sm:$0x3] %vm6298, %v6545
    %v6548 = vld [vmem:[#allocation3 + $0x34] sm:$0x3]
    %v6551 = vunpack.c.l.s4 1983009808
    %v6552 = vunpack.c.0.s8 %v6551
    %v6553 = vlaneseq
    %v6554 = vshrl.u32 %v6553, 7
    %v6555 = vsub.s32 %v6552, %v6554
    %v6556 = vrot.slane %v6548, %v6555
    %6557 = vrot.lane.b32.xlu0 %v6556, 64
    %v6558 = vpop.permute.xlu0 %6557
    %6560 = vst.msk [vmem:[#allocation4 + $0xc] sm:$0x3] %vm6312, %v6558
    %v6561 = vld [vmem:[#allocation3 + $0x36] sm:$0x3]
    %v6564 = vunpack.c.l.s4 1983009808
    %v6565 = vunpack.c.0.s8 %v6564
    %v6566 = vlaneseq
    %v6567 = vshrl.u32 %v6566, 7
    %v6568 = vsub.s32 %v6565, %v6567
    %v6569 = vrot.slane %v6561, %v6568
    %6570 = vrot.lane.b32.xlu0 %v6569, 96
    %v6571 = vpop.permute.xlu0 %6570
    %6573 = vst.msk [vmem:[#allocation4 + $0xc] sm:$0x3] %vm6326, %v6571
    %v6574 = vld [vmem:[#allocation3 + $0x38] sm:$0x3]
    %6575 = vst.msk [vmem:[#allocation4 + $0xe] sm:$0x3] %vm6284, %v6574
    %v6576 = vld [vmem:[#allocation3 + $0x3a] sm:$0x3]
    %v6579 = vunpack.c.l.s4 1983009808
    %v6580 = vunpack.c.0.s8 %v6579
    %v6581 = vlaneseq
    %v6582 = vshrl.u32 %v6581, 7
    %v6583 = vsub.s32 %v6580, %v6582
    %v6584 = vrot.slane %v6576, %v6583
    %6585 = vrot.lane.b32.xlu0 %v6584, 32
    %v6586 = vpop.permute.xlu0 %6585
    %6588 = vst.msk [vmem:[#allocation4 + $0xe] sm:$0x3] %vm6298, %v6586
    %v6589 = vld [vmem:[#allocation3 + $0x3c] sm:$0x3]
    %v6592 = vunpack.c.l.s4 1983009808
    %v6593 = vunpack.c.0.s8 %v6592
    %v6594 = vlaneseq
    %v6595 = vshrl.u32 %v6594, 7
    %v6596 = vsub.s32 %v6593, %v6595
    %v6597 = vrot.slane %v6589, %v6596
    %6598 = vrot.lane.b32.xlu0 %v6597, 64
    %v6599 = vpop.permute.xlu0 %6598
    %6601 = vst.msk [vmem:[#allocation4 + $0xe] sm:$0x3] %vm6312, %v6599
    %v6602 = vld [vmem:[#allocation3 + $0x3e] sm:$0x3]
    %v6605 = vunpack.c.l.s4 1983009808
    %v6606 = vunpack.c.0.s8 %v6605
    %v6607 = vlaneseq
    %v6608 = vshrl.u32 %v6607, 7
    %v6609 = vsub.s32 %v6606, %v6608
    %v6610 = vrot.slane %v6602, %v6609
    %6611 = vrot.lane.b32.xlu0 %v6610, 96
    %v6612 = vpop.permute.xlu0 %6611
    %6614 = vst.msk [vmem:[#allocation4 + $0xe] sm:$0x3] %vm6326, %v6612
    %v6615 = vld [vmem:[#allocation3 + $0x40] sm:$0x3]
    %6616 = vst.msk [vmem:[#allocation4 + $0x10] sm:$0x3] %vm6284, %v6615
    %v6617 = vld [vmem:[#allocation3 + $0x42] sm:$0x3]
    %v6620 = vunpack.c.l.s4 1983009808
    %v6621 = vunpack.c.0.s8 %v6620
    %v6622 = vlaneseq
    %v6623 = vshrl.u32 %v6622, 7
    %v6624 = vsub.s32 %v6621, %v6623
    %v6625 = vrot.slane %v6617, %v6624
    %6626 = vrot.lane.b32.xlu0 %v6625, 32
    %v6627 = vpop.permute.xlu0 %6626
    %6629 = vst.msk [vmem:[#allocation4 + $0x10] sm:$0x3] %vm6298, %v6627
    %v6630 = vld [vmem:[#allocation3 + $0x44] sm:$0x3]
    %v6633 = vunpack.c.l.s4 1983009808
    %v6634 = vunpack.c.0.s8 %v6633
    %v6635 = vlaneseq
    %v6636 = vshrl.u32 %v6635, 7
    %v6637 = vsub.s32 %v6634, %v6636
    %v6638 = vrot.slane %v6630, %v6637
    %6639 = vrot.lane.b32.xlu0 %v6638, 64
    %v6640 = vpop.permute.xlu0 %6639
    %6642 = vst.msk [vmem:[#allocation4 + $0x10] sm:$0x3] %vm6312, %v6640
    %v6643 = vld [vmem:[#allocation3 + $0x46] sm:$0x3]
    %v6646 = vunpack.c.l.s4 1983009808
    %v6647 = vunpack.c.0.s8 %v6646
    %v6648 = vlaneseq
    %v6649 = vshrl.u32 %v6648, 7
    %v6650 = vsub.s32 %v6647, %v6649
    %v6651 = vrot.slane %v6643, %v6650
    %6652 = vrot.lane.b32.xlu0 %v6651, 96
    %v6653 = vpop.permute.xlu0 %6652
    %6655 = vst.msk [vmem:[#allocation4 + $0x10] sm:$0x3] %vm6326, %v6653
    %v6656 = vld [vmem:[#allocation3 + $0x48] sm:$0x3]
    %6657 = vst.msk [vmem:[#allocation4 + $0x12] sm:$0x3] %vm6284, %v6656
    %v6658 = vld [vmem:[#allocation3 + $0x4a] sm:$0x3]
    %v6661 = vunpack.c.l.s4 1983009808
    %v6662 = vunpack.c.0.s8 %v6661
    %v6663 = vlaneseq
    %v6664 = vshrl.u32 %v6663, 7
    %v6665 = vsub.s32 %v6662, %v6664
    %v6666 = vrot.slane %v6658, %v6665
    %6667 = vrot.lane.b32.xlu0 %v6666, 32
    %v6668 = vpop.permute.xlu0 %6667
    %6670 = vst.msk [vmem:[#allocation4 + $0x12] sm:$0x3] %vm6298, %v6668
    %v6671 = vld [vmem:[#allocation3 + $0x4c] sm:$0x3]
    %v6674 = vunpack.c.l.s4 1983009808
    %v6675 = vunpack.c.0.s8 %v6674
    %v6676 = vlaneseq
    %v6677 = vshrl.u32 %v6676, 7
    %v6678 = vsub.s32 %v6675, %v6677
    %v6679 = vrot.slane %v6671, %v6678
    %6680 = vrot.lane.b32.xlu0 %v6679, 64
    %v6681 = vpop.permute.xlu0 %6680
    %6683 = vst.msk [vmem:[#allocation4 + $0x12] sm:$0x3] %vm6312, %v6681
    %v6684 = vld [vmem:[#allocation3 + $0x4e] sm:$0x3]
    %v6687 = vunpack.c.l.s4 1983009808
    %v6688 = vunpack.c.0.s8 %v6687
    %v6689 = vlaneseq
    %v6690 = vshrl.u32 %v6689, 7
    %v6691 = vsub.s32 %v6688, %v6690
    %v6692 = vrot.slane %v6684, %v6691
    %6693 = vrot.lane.b32.xlu0 %v6692, 96
    %v6694 = vpop.permute.xlu0 %6693
    %6696 = vst.msk [vmem:[#allocation4 + $0x12] sm:$0x3] %vm6326, %v6694
    %v6697 = vld [vmem:[#allocation3 + $0x50] sm:$0x3]
    %6698 = vst.msk [vmem:[#allocation4 + $0x14] sm:$0x3] %vm6284, %v6697
    %v6699 = vld [vmem:[#allocation3 + $0x52] sm:$0x3]
    %v6702 = vunpack.c.l.s4 1983009808
    %v6703 = vunpack.c.0.s8 %v6702
    %v6704 = vlaneseq
    %v6705 = vshrl.u32 %v6704, 7
    %v6706 = vsub.s32 %v6703, %v6705
    %v6707 = vrot.slane %v6699, %v6706
    %6708 = vrot.lane.b32.xlu0 %v6707, 32
    %v6709 = vpop.permute.xlu0 %6708
    %6711 = vst.msk [vmem:[#allocation4 + $0x14] sm:$0x3] %vm6298, %v6709
    %v6712 = vld [vmem:[#allocation3 + $0x54] sm:$0x3]
    %v6715 = vunpack.c.l.s4 1983009808
    %v6716 = vunpack.c.0.s8 %v6715
    %v6717 = vlaneseq
    %v6718 = vshrl.u32 %v6717, 7
    %v6719 = vsub.s32 %v6716, %v6718
    %v6720 = vrot.slane %v6712, %v6719
    %6721 = vrot.lane.b32.xlu0 %v6720, 64
    %v6722 = vpop.permute.xlu0 %6721
    %6724 = vst.msk [vmem:[#allocation4 + $0x14] sm:$0x3] %vm6312, %v6722
    %v6725 = vld [vmem:[#allocation3 + $0x56] sm:$0x3]
    %v6728 = vunpack.c.l.s4 1983009808
    %v6729 = vunpack.c.0.s8 %v6728
    %v6730 = vlaneseq
    %v6731 = vshrl.u32 %v6730, 7
    %v6732 = vsub.s32 %v6729, %v6731
    %v6733 = vrot.slane %v6725, %v6732
    %6734 = vrot.lane.b32.xlu0 %v6733, 96
    %v6735 = vpop.permute.xlu0 %6734
    %6737 = vst.msk [vmem:[#allocation4 + $0x14] sm:$0x3] %vm6326, %v6735
    %v6738 = vld [vmem:[#allocation3 + $0x58] sm:$0x3]
    %6739 = vst.msk [vmem:[#allocation4 + $0x16] sm:$0x3] %vm6284, %v6738
    %v6740 = vld [vmem:[#allocation3 + $0x5a] sm:$0x3]
    %v6743 = vunpack.c.l.s4 1983009808
    %v6744 = vunpack.c.0.s8 %v6743
    %v6745 = vlaneseq
    %v6746 = vshrl.u32 %v6745, 7
    %v6747 = vsub.s32 %v6744, %v6746
    %v6748 = vrot.slane %v6740, %v6747
    %6749 = vrot.lane.b32.xlu0 %v6748, 32
    %v6750 = vpop.permute.xlu0 %6749
    %6752 = vst.msk [vmem:[#allocation4 + $0x16] sm:$0x3] %vm6298, %v6750
    %v6753 = vld [vmem:[#allocation3 + $0x5c] sm:$0x3]
    %v6756 = vunpack.c.l.s4 1983009808
    %v6757 = vunpack.c.0.s8 %v6756
    %v6758 = vlaneseq
    %v6759 = vshrl.u32 %v6758, 7
    %v6760 = vsub.s32 %v6757, %v6759
    %v6761 = vrot.slane %v6753, %v6760
    %6762 = vrot.lane.b32.xlu0 %v6761, 64
    %v6763 = vpop.permute.xlu0 %6762
    %6765 = vst.msk [vmem:[#allocation4 + $0x16] sm:$0x3] %vm6312, %v6763
    %v6766 = vld [vmem:[#allocation3 + $0x5e] sm:$0x3]
    %v6769 = vunpack.c.l.s4 1983009808
    %v6770 = vunpack.c.0.s8 %v6769
    %v6771 = vlaneseq
    %v6772 = vshrl.u32 %v6771, 7
    %v6773 = vsub.s32 %v6770, %v6772
    %v6774 = vrot.slane %v6766, %v6773
    %6775 = vrot.lane.b32.xlu0 %v6774, 96
    %v6776 = vpop.permute.xlu0 %6775
    %6778 = vst.msk [vmem:[#allocation4 + $0x16] sm:$0x3] %vm6326, %v6776
    %v6779 = vld [vmem:[#allocation3 + $0x60] sm:$0x3]
    %6780 = vst.msk [vmem:[#allocation4 + $0x18] sm:$0x3] %vm6284, %v6779
    %v6781 = vld [vmem:[#allocation4] sm:$0xff]
    %v6782 = vld [vmem:[#allocation4 + $0x8] sm:$0xff]
    %v6783 = vld [vmem:[#allocation4 + $0x10] sm:$0xff]
    %v6784 = vld [vmem:[#allocation4 + $0x18] sm:$0x3]
    %v6789 = vcombine.high %v6781, %v6781
    %v6791 = vunpack.c.l.s4 1983009808
    %v6792 = vunpack.c.0.s8 %v6791
    %v6793 = vlaneseq
    %v6794 = vshrl.u32 %v6793, 7
    %v6795 = vsub.s32 %v6792, %v6794
    %v6796 = vrot.slane %v6781, %v6795
    %v6798 = vunpack.c.l.s4 1983009808
    %v6799 = vunpack.c.0.s8 %v6798
    %v6800 = vlaneseq
    %v6801 = vshrl.u32 %v6800, 7
    %v6802 = vsub.s32 %v6799, %v6801
    %v6803 = vrot.slane %v6789, %v6802
    %v6804 = vcombine.high %v6796, %v6796
    %v6805 = vcombine.high %v6803, %v6803
    %v6806 = vcombine.high %v6782, %v6782
    %v6808 = vunpack.c.l.s4 1983009808
    %v6809 = vunpack.c.0.s8 %v6808
    %v6810 = vlaneseq
    %v6811 = vshrl.u32 %v6810, 7
    %v6812 = vsub.s32 %v6809, %v6811
    %v6813 = vrot.slane %v6782, %v6812
    %v6815 = vunpack.c.l.s4 1983009808
    %v6816 = vunpack.c.0.s8 %v6815
    %v6817 = vlaneseq
    %v6818 = vshrl.u32 %v6817, 7
    %v6819 = vsub.s32 %v6816, %v6818
    %v6820 = vrot.slane %v6806, %v6819
    %v6821 = vcombine.high %v6813, %v6813
    %v6822 = vcombine.high %v6820, %v6820
    %v6823 = vcombine.high %v6783, %v6783
    %v6825 = vunpack.c.l.s4 1983009808
    %v6826 = vunpack.c.0.s8 %v6825
    %v6827 = vlaneseq
    %v6828 = vshrl.u32 %v6827, 7
    %v6829 = vsub.s32 %v6826, %v6828
    %v6830 = vrot.slane %v6783, %v6829
    %v6832 = vunpack.c.l.s4 1983009808
    %v6833 = vunpack.c.0.s8 %v6832
    %v6834 = vlaneseq
    %v6835 = vshrl.u32 %v6834, 7
    %v6836 = vsub.s32 %v6833, %v6835
    %v6837 = vrot.slane %v6823, %v6836
    %v6838 = vcombine.high %v6830, %v6830
    %v6839 = vcombine.high %v6837, %v6837
    %v6841 = vunpack.c.l.s4 1983009808
    %v6842 = vunpack.c.0.s8 %v6841
    %v6843 = vlaneseq
    %v6844 = vshrl.u32 %v6843, 7
    %v6845 = vsub.s32 %v6842, %v6844
    %v6846 = vrot.slane %v6784, %v6845
    %v6860 = vpack.c.bf16 %v6796, %v6796
    %v6861 = vpack.c.bf16 %v6804, %v6804
    %v6862 = vpack.c.bf16 %v6803, %v6803
    %v6863 = vpack.c.bf16 %v6805, %v6805
    %v6864 = vpack.c.bf16 %v6813, %v6813
    %v6865 = vpack.c.bf16 %v6821, %v6821
    %v6866 = vpack.c.bf16 %v6820, %v6820
    %v6867 = vpack.c.bf16 %v6822, %v6822
    %v6868 = vpack.c.bf16 %v6830, %v6830
    %v6869 = vpack.c.bf16 %v6838, %v6838
    %v6870 = vpack.c.bf16 %v6837, %v6837
    %v6871 = vpack.c.bf16 %v6839, %v6839
    %v6872 = vpack.c.bf16 %v6846, %v6846
    %v6873 = vld [vmem:[%s6] sm:$0xf]
    %v6874 = vld [vmem:[%s6 + $0x4] sm:$0xf]
    %v6875 = vld [vmem:[%s6 + $0x8] sm:$0xf]
    %v6876 = vld [vmem:[%s6 + $0xc] sm:$0xf]
    %v6877 = vld [vmem:[%s6 + $0x10] sm:$0xf]
    %v6878 = vld [vmem:[%s6 + $0x14] sm:$0xf]
    %v6879 = vld [vmem:[%s6 + $0x18] sm:$0xf]
    %v6880 = vld [vmem:[%s6 + $0x1c] sm:$0xf]
    %v6881 = vld [vmem:[%s6 + $0x20] sm:$0xf]
    %v6882 = vld [vmem:[%s6 + $0x24] sm:$0xf]
    %v6883 = vld [vmem:[%s6 + $0x28] sm:$0xf]
    %v6884 = vld [vmem:[%s6 + $0x2c] sm:$0xf]
    %v6885 = vld [vmem:[%s6 + $0x30] sm:$0xf]
    %v6886 = vld [vmem:[%s6 + $0x34] sm:$0xf]
    %v6887 = vld [vmem:[%s6 + $0x38] sm:$0xf]
    %v6888 = vld [vmem:[%s6 + $0x3c] sm:$0xf]
    %v6889 = vld [vmem:[%s6 + $0x40] sm:$0xf]
    %v6890 = vld [vmem:[%s6 + $0x44] sm:$0xf]
    %v6891 = vld [vmem:[%s6 + $0x48] sm:$0xf]
    %v6892 = vld [vmem:[%s6 + $0x4c] sm:$0xf]
    %v6893 = vld [vmem:[%s6 + $0x50] sm:$0xf]
    %v6894 = vld [vmem:[%s6 + $0x54] sm:$0xf]
    %v6895 = vld [vmem:[%s6 + $0x58] sm:$0xf]
    %v6896 = vld [vmem:[%s6 + $0x5c] sm:$0xf]
    %v6897 = vld [vmem:[%s6 + $0x60] sm:$0xf]
    %v6898 = vld [vmem:[%s6 + $0x64] sm:$0xf]
    %v6899 = vld [vmem:[%s6 + $0x68] sm:$0xf]
    %v6900 = vld [vmem:[%s6 + $0x6c] sm:$0xf]
    %v6901 = vld [vmem:[%s6 + $0x70] sm:$0xf]
    %v6902 = vld [vmem:[%s6 + $0x74] sm:$0xf]
    %v6903 = vld [vmem:[%s6 + $0x78] sm:$0xf]
    %v6904 = vld [vmem:[%s6 + $0x7c] sm:$0xf]
    %v6905 = vld [vmem:[%s6 + $0x80] sm:$0xf]
    %v6906 = vld [vmem:[%s6 + $0x84] sm:$0xf]
    %v6907 = vld [vmem:[%s6 + $0x88] sm:$0xf]
    %v6908 = vld [vmem:[%s6 + $0x8c] sm:$0xf]
    %v6909 = vld [vmem:[%s6 + $0x90] sm:$0xf]
    %v6910 = vld [vmem:[%s6 + $0x94] sm:$0xf]
    %v6911 = vld [vmem:[%s6 + $0x98] sm:$0xf]
    %v6912 = vld [vmem:[%s6 + $0x9c] sm:$0xf]
    %v6913 = vld [vmem:[%s6 + $0xa0] sm:$0xf]
    %v6914 = vld [vmem:[%s6 + $0xa4] sm:$0xf]
    %v6915 = vld [vmem:[%s6 + $0xa8] sm:$0xf]
    %v6916 = vld [vmem:[%s6 + $0xac] sm:$0xf]
    %v6917 = vld [vmem:[%s6 + $0xb0] sm:$0xf]
    %v6918 = vld [vmem:[%s6 + $0xb4] sm:$0xf]
    %v6919 = vld [vmem:[%s6 + $0xb8] sm:$0xf]
    %v6920 = vld [vmem:[%s6 + $0xbc] sm:$0xf]
    %v6921 = vld [vmem:[%s6 + $0xc0] sm:$0xf]
    %v6922 = vld [vmem:[%s6 + $0xc4] sm:$0xf]
    %v6923 = vld [vmem:[%s6 + $0xc8] sm:$0xf]
    %v6924 = vld [vmem:[%s6 + $0xcc] sm:$0xf]
    %v6925 = vld [vmem:[%s6 + $0xd0] sm:$0xf]
    %v6926 = vld [vmem:[%s6 + $0xd4] sm:$0xf]
    %v6927 = vld [vmem:[%s6 + $0xd8] sm:$0xf]
    %v6928 = vld [vmem:[%s6 + $0xdc] sm:$0xf]
    %v6929 = vld [vmem:[%s6 + $0xe0] sm:$0xf]
    %v6930 = vld [vmem:[%s6 + $0xe4] sm:$0xf]
    %v6931 = vld [vmem:[%s6 + $0xe8] sm:$0xf]
    %v6932 = vld [vmem:[%s6 + $0xec] sm:$0xf]
    %v6933 = vld [vmem:[%s6 + $0xf0] sm:$0xf]
    %v6934 = vld [vmem:[%s6 + $0xf4] sm:$0xf]
    %v6935 = vld [vmem:[%s6 + $0xf8] sm:$0xf]
    %v6936 = vld [vmem:[%s6 + $0xfc] sm:$0xf]
    %v6937 = vld [vmem:[%s6 + $0x100] sm:$0xf]
    %v6938 = vld [vmem:[%s6 + $0x104] sm:$0xf]
    %v6939 = vld [vmem:[%s6 + $0x108] sm:$0xf]
    %v6940 = vld [vmem:[%s6 + $0x10c] sm:$0xf]
    %v6941 = vld [vmem:[%s6 + $0x110] sm:$0xf]
    %v6942 = vld [vmem:[%s6 + $0x114] sm:$0xf]
    %v6943 = vld [vmem:[%s6 + $0x118] sm:$0xf]
    %v6944 = vld [vmem:[%s6 + $0x11c] sm:$0xf]
    %v6945 = vld [vmem:[%s6 + $0x120] sm:$0xf]
    %v6946 = vld [vmem:[%s6 + $0x124] sm:$0xf]
    %v6947 = vld [vmem:[%s6 + $0x128] sm:$0xf]
    %v6948 = vld [vmem:[%s6 + $0x12c] sm:$0xf]
    %v6949 = vld [vmem:[%s6 + $0x130] sm:$0xf]
    %v6950 = vld [vmem:[%s6 + $0x134] sm:$0xf]
    %v6951 = vld [vmem:[%s6 + $0x138] sm:$0xf]
    %v6952 = vld [vmem:[%s6 + $0x13c] sm:$0xf]
    %v6953 = vld [vmem:[%s6 + $0x140] sm:$0xf]
    %v6954 = vld [vmem:[%s6 + $0x144] sm:$0xf]
    %v6955 = vld [vmem:[%s6 + $0x148] sm:$0xf]
    %v6956 = vld [vmem:[%s6 + $0x14c] sm:$0xf]
    %v6957 = vld [vmem:[%s6 + $0x150] sm:$0xf]
    %v6958 = vld [vmem:[%s6 + $0x154] sm:$0xf]
    %v6959 = vld [vmem:[%s6 + $0x158] sm:$0xf]
    %v6960 = vld [vmem:[%s6 + $0x15c] sm:$0xf]
    %v6961 = vld [vmem:[%s6 + $0x160] sm:$0xf]
    %v6962 = vld [vmem:[%s6 + $0x164] sm:$0xf]
    %v6963 = vld [vmem:[%s6 + $0x168] sm:$0xf]
    %v6964 = vld [vmem:[%s6 + $0x16c] sm:$0xf]
    %v6965 = vld [vmem:[%s6 + $0x170] sm:$0xf]
    %v6966 = vld [vmem:[%s6 + $0x174] sm:$0xf]
    %v6967 = vld [vmem:[%s6 + $0x178] sm:$0xf]
    %v6968 = vld [vmem:[%s6 + $0x17c] sm:$0xf]
    %v6969 = vld [vmem:[%s6 + $0x180] sm:$0xf]
    %v6970 = vld [vmem:[%s6 + $0x184] sm:$0xf]
    %v6971 = vld [vmem:[%s6 + $0x188] sm:$0xf]
    %v6972 = vld [vmem:[%s6 + $0x18c] sm:$0xf]
    %v6973 = vld [vmem:[%s6 + $0x190] sm:$0xf]
    %v6974 = vld [vmem:[%s6 + $0x194] sm:$0xf]
    %v6975 = vld [vmem:[%s6 + $0x198] sm:$0xf]
    %v6976 = vld [vmem:[%s6 + $0x19c] sm:$0xf]
    %v6977 = vld [vmem:[%s6 + $0x1a0] sm:$0xf]
    %v6978 = vld [vmem:[%s6 + $0x1a4] sm:$0xf]
    %v6979 = vld [vmem:[%s6 + $0x1a8] sm:$0xf]
    %v6980 = vld [vmem:[%s6 + $0x1ac] sm:$0xf]
    %v6981 = vld [vmem:[%s6 + $0x1b0] sm:$0xf]
    %v6982 = vld [vmem:[%s6 + $0x1b4] sm:$0xf]
    %v6983 = vld [vmem:[%s6 + $0x1b8] sm:$0xf]
    %v6984 = vld [vmem:[%s6 + $0x1bc] sm:$0xf]
    %v6985 = vld [vmem:[%s6 + $0x1c0] sm:$0xf]
    %v6986 = vld [vmem:[%s6 + $0x1c4] sm:$0xf]
    %v6987 = vld [vmem:[%s6 + $0x1c8] sm:$0xf]
    %v6988 = vld [vmem:[%s6 + $0x1cc] sm:$0xf]
    %v6989 = vld [vmem:[%s6 + $0x1d0] sm:$0xf]
    %v6990 = vld [vmem:[%s6 + $0x1d4] sm:$0xf]
    %v6991 = vld [vmem:[%s6 + $0x1d8] sm:$0xf]
    %v6992 = vld [vmem:[%s6 + $0x1dc] sm:$0xf]
    %v6993 = vld [vmem:[%s6 + $0x1e0] sm:$0xf]
    %v6994 = vld [vmem:[%s6 + $0x1e4] sm:$0xf]
    %v6995 = vld [vmem:[%s6 + $0x1e8] sm:$0xf]
    %v6996 = vld [vmem:[%s6 + $0x1ec] sm:$0xf]
    %v6997 = vld [vmem:[%s6 + $0x1f0] sm:$0xf]
    %v6998 = vld [vmem:[%s6 + $0x1f4] sm:$0xf]
    %v6999 = vld [vmem:[%s6 + $0x1f8] sm:$0xf]
    %v7000 = vld [vmem:[%s6 + $0x1fc] sm:$0xf]
    %v7001 = vld [vmem:[%s6 + $0x200] sm:$0xf]
    %v7002 = vld [vmem:[%s6 + $0x204] sm:$0xf]
    %v7003 = vld [vmem:[%s6 + $0x208] sm:$0xf]
    %v7004 = vld [vmem:[%s6 + $0x20c] sm:$0xf]
    %v7005 = vld [vmem:[%s6 + $0x210] sm:$0xf]
    %v7006 = vld [vmem:[%s6 + $0x214] sm:$0xf]
    %v7007 = vld [vmem:[%s6 + $0x218] sm:$0xf]
    %v7008 = vld [vmem:[%s6 + $0x21c] sm:$0xf]
    %v7009 = vld [vmem:[%s6 + $0x220] sm:$0xf]
    %v7010 = vld [vmem:[%s6 + $0x224] sm:$0xf]
    %v7011 = vld [vmem:[%s6 + $0x228] sm:$0xf]
    %v7012 = vld [vmem:[%s6 + $0x22c] sm:$0xf]
    %v7013 = vld [vmem:[%s6 + $0x230] sm:$0xf]
    %v7014 = vld [vmem:[%s6 + $0x234] sm:$0xf]
    %v7015 = vld [vmem:[%s6 + $0x238] sm:$0xf]
    %v7016 = vld [vmem:[%s6 + $0x23c] sm:$0xf]
    %v7017 = vld [vmem:[%s6 + $0x240] sm:$0xf]
    %v7018 = vld [vmem:[%s6 + $0x244] sm:$0xf]
    %v7019 = vld [vmem:[%s6 + $0x248] sm:$0xf]
    %v7020 = vld [vmem:[%s6 + $0x24c] sm:$0xf]
    %v7021 = vld [vmem:[%s6 + $0x250] sm:$0xf]
    %v7022 = vld [vmem:[%s6 + $0x254] sm:$0xf]
    %v7023 = vld [vmem:[%s6 + $0x258] sm:$0xf]
    %v7024 = vld [vmem:[%s6 + $0x25c] sm:$0xf]
    %v7025 = vld [vmem:[%s6 + $0x260] sm:$0xf]
    %v7026 = vld [vmem:[%s6 + $0x264] sm:$0xf]
    %v7027 = vld [vmem:[%s6 + $0x268] sm:$0xf]
    %v7028 = vld [vmem:[%s6 + $0x26c] sm:$0xf]
    %v7029 = vld [vmem:[%s6 + $0x270] sm:$0xf]
    %v7030 = vld [vmem:[%s6 + $0x274] sm:$0xf]
    %v7031 = vld [vmem:[%s6 + $0x278] sm:$0xf]
    %v7032 = vld [vmem:[%s6 + $0x27c] sm:$0xf]
    %v7033 = vld [vmem:[%s6 + $0x280] sm:$0xf]
    %v7034 = vld [vmem:[%s6 + $0x284] sm:$0xf]
    %v7035 = vld [vmem:[%s6 + $0x288] sm:$0xf]
    %v7036 = vld [vmem:[%s6 + $0x28c] sm:$0xf]
    %v7037 = vld [vmem:[%s6 + $0x290] sm:$0xf]
    %v7038 = vld [vmem:[%s6 + $0x294] sm:$0xf]
    %v7039 = vld [vmem:[%s6 + $0x298] sm:$0xf]
    %v7040 = vld [vmem:[%s6 + $0x29c] sm:$0xf]
    %v7041 = vld [vmem:[%s6 + $0x2a0] sm:$0xf]
    %v7042 = vld [vmem:[%s6 + $0x2a4] sm:$0xf]
    %v7043 = vld [vmem:[%s6 + $0x2a8] sm:$0xf]
    %v7044 = vld [vmem:[%s6 + $0x2ac] sm:$0xf]
    %v7045 = vld [vmem:[%s6 + $0x2b0] sm:$0xf]
    %v7046 = vld [vmem:[%s6 + $0x2b4] sm:$0xf]
    %v7047 = vld [vmem:[%s6 + $0x2b8] sm:$0xf]
    %v7048 = vld [vmem:[%s6 + $0x2bc] sm:$0xf]
    %v7049 = vld [vmem:[%s6 + $0x2c0] sm:$0xf]
    %v7050 = vld [vmem:[%s6 + $0x2c4] sm:$0xf]
    %v7051 = vld [vmem:[%s6 + $0x2c8] sm:$0xf]
    %v7052 = vld [vmem:[%s6 + $0x2cc] sm:$0xf]
    %v7053 = vld [vmem:[%s6 + $0x2d0] sm:$0xf]
    %v7054 = vld [vmem:[%s6 + $0x2d4] sm:$0xf]
    %v7055 = vld [vmem:[%s6 + $0x2d8] sm:$0xf]
    %v7056 = vld [vmem:[%s6 + $0x2dc] sm:$0xf]
    %v7057 = vld [vmem:[%s6 + $0x2e0] sm:$0xf]
    %v7058 = vld [vmem:[%s6 + $0x2e4] sm:$0xf]
    %v7059 = vld [vmem:[%s6 + $0x2e8] sm:$0xf]
    %v7060 = vld [vmem:[%s6 + $0x2ec] sm:$0xf]
    %v7061 = vld [vmem:[%s6 + $0x2f0] sm:$0xf]
    %v7062 = vld [vmem:[%s6 + $0x2f4] sm:$0xf]
    %v7063 = vld [vmem:[%s6 + $0x2f8] sm:$0xf]
    %v7064 = vld [vmem:[%s6 + $0x2fc] sm:$0xf]
    %v7065 = vld [vmem:[%s6 + $0x300] sm:$0xf]
    %v7066 = vld [vmem:[%s6 + $0x304] sm:$0xf]
    %v7067 = vld [vmem:[%s6 + $0x308] sm:$0xf]
    %v7068 = vld [vmem:[%s6 + $0x30c] sm:$0xf]
    %v7069 = vld [vmem:[%s7] sm:$0x1]
    %v7071 = vlaneseq
    %v7072 = vshrl.u32 %v7071, 7
    %v7073 = vsub.s32 0, %v7072
    %v7074 = vrot.slane %v7069, %v7073
    %v7272 = vunpack.c.l.b16 %v6873
    %v7273 = vunpack.c.l.b16 %v6874
    %v7274 = vunpack.c.l.b16 %v6875
    %v7275 = vunpack.c.l.b16 %v6876
    %v7276 = vunpack.c.l.b16 %v6877
    %v7277 = vunpack.c.l.b16 %v6878
    %v7278 = vunpack.c.l.b16 %v6879
    %v7279 = vunpack.c.l.b16 %v6880
    %v7280 = vunpack.c.l.b16 %v6881
    %v7281 = vunpack.c.l.b16 %v6882
    %v7282 = vunpack.c.l.b16 %v6883
    %v7283 = vunpack.c.l.b16 %v6884
    %v7284 = vunpack.c.l.b16 %v6885
    %v7285 = vunpack.c.l.b16 %v6886
    %v7286 = vunpack.c.l.b16 %v6887
    %v7287 = vunpack.c.l.b16 %v6888
    %v7288 = vunpack.c.l.b16 %v6889
    %v7289 = vunpack.c.l.b16 %v6890
    %v7290 = vunpack.c.l.b16 %v6891
    %v7291 = vunpack.c.l.b16 %v6892
    %v7292 = vunpack.c.l.b16 %v6893
    %v7293 = vunpack.c.l.b16 %v6894
    %v7294 = vunpack.c.l.b16 %v6895
    %v7295 = vunpack.c.l.b16 %v6896
    %v7296 = vunpack.c.l.b16 %v6897
    %v7297 = vunpack.c.l.b16 %v6898
    %v7298 = vunpack.c.l.b16 %v6899
    %v7299 = vunpack.c.l.b16 %v6900
    %v7300 = vunpack.c.l.b16 %v6901
    %v7301 = vunpack.c.l.b16 %v6902
    %v7302 = vunpack.c.l.b16 %v6903
    %v7303 = vunpack.c.l.b16 %v6904
    %v7304 = vunpack.c.l.b16 %v6905
    %v7305 = vunpack.c.l.b16 %v6906
    %v7306 = vunpack.c.l.b16 %v6907
    %v7307 = vunpack.c.l.b16 %v6908
    %v7308 = vunpack.c.l.b16 %v6909
    %v7309 = vunpack.c.l.b16 %v6910
    %v7310 = vunpack.c.l.b16 %v6911
    %v7311 = vunpack.c.l.b16 %v6912
    %v7312 = vunpack.c.l.b16 %v6913
    %v7313 = vunpack.c.l.b16 %v6914
    %v7314 = vunpack.c.l.b16 %v6915
    %v7315 = vunpack.c.l.b16 %v6916
    %v7316 = vunpack.c.l.b16 %v6917
    %v7317 = vunpack.c.l.b16 %v6918
    %v7318 = vunpack.c.l.b16 %v6919
    %v7319 = vunpack.c.l.b16 %v6920
    %v7320 = vunpack.c.l.b16 %v6921
    %v7321 = vunpack.c.l.b16 %v6922
    %v7322 = vunpack.c.l.b16 %v6923
    %v7323 = vunpack.c.l.b16 %v6924
    %v7324 = vunpack.c.l.b16 %v6925
    %v7325 = vunpack.c.l.b16 %v6926
    %v7326 = vunpack.c.l.b16 %v6927
    %v7327 = vunpack.c.l.b16 %v6928
    %v7328 = vunpack.c.l.b16 %v6929
    %v7329 = vunpack.c.l.b16 %v6930
    %v7330 = vunpack.c.l.b16 %v6931
    %v7331 = vunpack.c.l.b16 %v6932
    %v7332 = vunpack.c.l.b16 %v6933
    %v7333 = vunpack.c.l.b16 %v6934
    %v7334 = vunpack.c.l.b16 %v6935
    %v7335 = vunpack.c.l.b16 %v6936
    %v7336 = vunpack.c.l.b16 %v6937
    %v7337 = vunpack.c.l.b16 %v6938
    %v7338 = vunpack.c.l.b16 %v6939
    %v7339 = vunpack.c.l.b16 %v6940
    %v7340 = vunpack.c.l.b16 %v6941
    %v7341 = vunpack.c.l.b16 %v6942
    %v7342 = vunpack.c.l.b16 %v6943
    %v7343 = vunpack.c.l.b16 %v6944
    %v7344 = vunpack.c.l.b16 %v6945
    %v7345 = vunpack.c.l.b16 %v6946
    %v7346 = vunpack.c.l.b16 %v6947
    %v7347 = vunpack.c.l.b16 %v6948
    %v7348 = vunpack.c.l.b16 %v6949
    %v7349 = vunpack.c.l.b16 %v6950
    %v7350 = vunpack.c.l.b16 %v6951
    %v7351 = vunpack.c.l.b16 %v6952
    %v7352 = vunpack.c.l.b16 %v6953
    %v7353 = vunpack.c.l.b16 %v6954
    %v7354 = vunpack.c.l.b16 %v6955
    %v7355 = vunpack.c.l.b16 %v6956
    %v7356 = vunpack.c.l.b16 %v6957
    %v7357 = vunpack.c.l.b16 %v6958
    %v7358 = vunpack.c.l.b16 %v6959
    %v7359 = vunpack.c.l.b16 %v6960
    %v7360 = vunpack.c.l.b16 %v6961
    %v7361 = vunpack.c.l.b16 %v6962
    %v7362 = vunpack.c.l.b16 %v6963
    %v7363 = vunpack.c.l.b16 %v6964
    %v7364 = vunpack.c.l.b16 %v6965
    %v7365 = vunpack.c.l.b16 %v6966
    %v7366 = vunpack.c.l.b16 %v6967
    %v7367 = vunpack.c.l.b16 %v6968
    %v7368 = vunpack.c.l.b16 %v6969
    %v7369 = vunpack.c.l.b16 %v6970
    %v7370 = vunpack.c.l.b16 %v6971
    %v7371 = vunpack.c.l.b16 %v6972
    %v7372 = vunpack.c.l.b16 %v6973
    %v7373 = vunpack.c.l.b16 %v6974
    %v7374 = vunpack.c.l.b16 %v6975
    %v7375 = vunpack.c.l.b16 %v6976
    %v7376 = vunpack.c.l.b16 %v6977
    %v7377 = vunpack.c.l.b16 %v6978
    %v7378 = vunpack.c.l.b16 %v6979
    %v7379 = vunpack.c.l.b16 %v6980
    %v7380 = vunpack.c.l.b16 %v6981
    %v7381 = vunpack.c.l.b16 %v6982
    %v7382 = vunpack.c.l.b16 %v6983
    %v7383 = vunpack.c.l.b16 %v6984
    %v7384 = vunpack.c.l.b16 %v6985
    %v7385 = vunpack.c.l.b16 %v6986
    %v7386 = vunpack.c.l.b16 %v6987
    %v7387 = vunpack.c.l.b16 %v6988
    %v7388 = vunpack.c.l.b16 %v6989
    %v7389 = vunpack.c.l.b16 %v6990
    %v7390 = vunpack.c.l.b16 %v6991
    %v7391 = vunpack.c.l.b16 %v6992
    %v7392 = vunpack.c.l.b16 %v6993
    %v7393 = vunpack.c.l.b16 %v6994
    %v7394 = vunpack.c.l.b16 %v6995
    %v7395 = vunpack.c.l.b16 %v6996
    %v7396 = vunpack.c.l.b16 %v6997
    %v7397 = vunpack.c.l.b16 %v6998
    %v7398 = vunpack.c.l.b16 %v6999
    %v7399 = vunpack.c.l.b16 %v7000
    %v7400 = vunpack.c.l.b16 %v7001
    %v7401 = vunpack.c.l.b16 %v7002
    %v7402 = vunpack.c.l.b16 %v7003
    %v7403 = vunpack.c.l.b16 %v7004
    %v7404 = vunpack.c.l.b16 %v7005
    %v7405 = vunpack.c.l.b16 %v7006
    %v7406 = vunpack.c.l.b16 %v7007
    %v7407 = vunpack.c.l.b16 %v7008
    %v7408 = vunpack.c.l.b16 %v7009
    %v7409 = vunpack.c.l.b16 %v7010
    %v7410 = vunpack.c.l.b16 %v7011
    %v7411 = vunpack.c.l.b16 %v7012
    %v7412 = vunpack.c.l.b16 %v7013
    %v7413 = vunpack.c.l.b16 %v7014
    %v7414 = vunpack.c.l.b16 %v7015
    %v7415 = vunpack.c.l.b16 %v7016
    %v7416 = vunpack.c.l.b16 %v7017
    %v7417 = vunpack.c.l.b16 %v7018
    %v7418 = vunpack.c.l.b16 %v7019
    %v7419 = vunpack.c.l.b16 %v7020
    %v7420 = vunpack.c.l.b16 %v7021
    %v7421 = vunpack.c.l.b16 %v7022
    %v7422 = vunpack.c.l.b16 %v7023
    %v7423 = vunpack.c.l.b16 %v7024
    %v7424 = vunpack.c.l.b16 %v7025
    %v7425 = vunpack.c.l.b16 %v7026
    %v7426 = vunpack.c.l.b16 %v7027
    %v7427 = vunpack.c.l.b16 %v7028
    %v7428 = vunpack.c.l.b16 %v7029
    %v7429 = vunpack.c.l.b16 %v7030
    %v7430 = vunpack.c.l.b16 %v7031
    %v7431 = vunpack.c.l.b16 %v7032
    %v7432 = vunpack.c.l.b16 %v7033
    %v7433 = vunpack.c.l.b16 %v7034
    %v7434 = vunpack.c.l.b16 %v7035
    %v7435 = vunpack.c.l.b16 %v7036
    %v7436 = vunpack.c.l.b16 %v7037
    %v7437 = vunpack.c.l.b16 %v7038
    %v7438 = vunpack.c.l.b16 %v7039
    %v7439 = vunpack.c.l.b16 %v7040
    %v7440 = vunpack.c.l.b16 %v7041
    %v7441 = vunpack.c.l.b16 %v7042
    %v7442 = vunpack.c.l.b16 %v7043
    %v7443 = vunpack.c.l.b16 %v7044
    %v7444 = vunpack.c.l.b16 %v7045
    %v7445 = vunpack.c.l.b16 %v7046
    %v7446 = vunpack.c.l.b16 %v7047
    %v7447 = vunpack.c.l.b16 %v7048
    %v7448 = vunpack.c.l.b16 %v7049
    %v7449 = vunpack.c.l.b16 %v7050
    %v7450 = vunpack.c.l.b16 %v7051
    %v7451 = vunpack.c.l.b16 %v7052
    %v7452 = vunpack.c.l.b16 %v7053
    %v7453 = vunpack.c.l.b16 %v7054
    %v7454 = vunpack.c.l.b16 %v7055
    %v7455 = vunpack.c.l.b16 %v7056
    %v7456 = vunpack.c.l.b16 %v7057
    %v7457 = vunpack.c.l.b16 %v7058
    %v7458 = vunpack.c.l.b16 %v7059
    %v7459 = vunpack.c.l.b16 %v7060
    %v7460 = vunpack.c.l.b16 %v7061
    %v7461 = vunpack.c.l.b16 %v7062
    %v7462 = vunpack.c.l.b16 %v7063
    %v7463 = vunpack.c.l.b16 %v7064
    %v7464 = vunpack.c.l.b16 %v7065
    %v7465 = vunpack.c.l.b16 %v7066
    %v7466 = vunpack.c.l.b16 %v7067
    %v7467 = vunpack.c.l.b16 %v7068
    %v7468 = vpack.c.b16 %v7273, %v7272
    %v7469 = vpack.c.b16 %v7275, %v7274
    %v7470 = vpack.c.b16 %v7277, %v7276
    %v7471 = vpack.c.b16 %v7279, %v7278
    %v7472 = vpack.c.b16 %v7281, %v7280
    %v7473 = vpack.c.b16 %v7283, %v7282
    %v7474 = vpack.c.b16 %v7285, %v7284
    %v7475 = vpack.c.b16 %v7287, %v7286
    %v7476 = vpack.c.b16 %v7289, %v7288
    %v7477 = vpack.c.b16 %v7291, %v7290
    %v7478 = vpack.c.b16 %v7293, %v7292
    %v7479 = vpack.c.b16 %v7295, %v7294
    %v7480 = vpack.c.b16 %v7297, %v7296
    %v7481 = vpack.c.b16 %v7299, %v7298
    %v7482 = vpack.c.b16 %v7301, %v7300
    %v7483 = vpack.c.b16 %v7303, %v7302
    %v7484 = vpack.c.b16 %v7305, %v7304
    %v7485 = vpack.c.b16 %v7307, %v7306
    %v7486 = vpack.c.b16 %v7309, %v7308
    %v7487 = vpack.c.b16 %v7311, %v7310
    %v7488 = vpack.c.b16 %v7313, %v7312
    %v7489 = vpack.c.b16 %v7315, %v7314
    %v7490 = vpack.c.b16 %v7317, %v7316
    %v7491 = vpack.c.b16 %v7319, %v7318
    %v7492 = vpack.c.b16 %v7321, %v7320
    %v7493 = vpack.c.b16 %v7323, %v7322
    %v7494 = vpack.c.b16 %v7325, %v7324
    %v7495 = vpack.c.b16 %v7327, %v7326
    %v7496 = vpack.c.b16 %v7329, %v7328
    %v7497 = vpack.c.b16 %v7331, %v7330
    %v7498 = vpack.c.b16 %v7333, %v7332
    %v7499 = vpack.c.b16 %v7335, %v7334
    %v7500 = vpack.c.b16 %v7337, %v7336
    %v7501 = vpack.c.b16 %v7339, %v7338
    %v7502 = vpack.c.b16 %v7341, %v7340
    %v7503 = vpack.c.b16 %v7343, %v7342
    %v7504 = vpack.c.b16 %v7345, %v7344
    %v7505 = vpack.c.b16 %v7347, %v7346
    %v7506 = vpack.c.b16 %v7349, %v7348
    %v7507 = vpack.c.b16 %v7351, %v7350
    %v7508 = vpack.c.b16 %v7353, %v7352
    %v7509 = vpack.c.b16 %v7355, %v7354
    %v7510 = vpack.c.b16 %v7357, %v7356
    %v7511 = vpack.c.b16 %v7359, %v7358
    %v7512 = vpack.c.b16 %v7361, %v7360
    %v7513 = vpack.c.b16 %v7363, %v7362
    %v7514 = vpack.c.b16 %v7365, %v7364
    %v7515 = vpack.c.b16 %v7367, %v7366
    %v7516 = vpack.c.b16 %v7369, %v7368
    %v7517 = vpack.c.b16 %v7371, %v7370
    %v7518 = vpack.c.b16 %v7373, %v7372
    %v7519 = vpack.c.b16 %v7375, %v7374
    %v7520 = vpack.c.b16 %v7377, %v7376
    %v7521 = vpack.c.b16 %v7379, %v7378
    %v7522 = vpack.c.b16 %v7381, %v7380
    %v7523 = vpack.c.b16 %v7383, %v7382
    %v7524 = vpack.c.b16 %v7385, %v7384
    %v7525 = vpack.c.b16 %v7387, %v7386
    %v7526 = vpack.c.b16 %v7389, %v7388
    %v7527 = vpack.c.b16 %v7391, %v7390
    %v7528 = vpack.c.b16 %v7393, %v7392
    %v7529 = vpack.c.b16 %v7395, %v7394
    %v7530 = vpack.c.b16 %v7397, %v7396
    %v7531 = vpack.c.b16 %v7399, %v7398
    %v7532 = vpack.c.b16 %v7401, %v7400
    %v7533 = vpack.c.b16 %v7403, %v7402
    %v7534 = vpack.c.b16 %v7405, %v7404
    %v7535 = vpack.c.b16 %v7407, %v7406
    %v7536 = vpack.c.b16 %v7409, %v7408
    %v7537 = vpack.c.b16 %v7411, %v7410
    %v7538 = vpack.c.b16 %v7413, %v7412
    %v7539 = vpack.c.b16 %v7415, %v7414
    %v7540 = vpack.c.b16 %v7417, %v7416
    %v7541 = vpack.c.b16 %v7419, %v7418
    %v7542 = vpack.c.b16 %v7421, %v7420
    %v7543 = vpack.c.b16 %v7423, %v7422
    %v7544 = vpack.c.b16 %v7425, %v7424
    %v7545 = vpack.c.b16 %v7427, %v7426
    %v7546 = vpack.c.b16 %v7429, %v7428
    %v7547 = vpack.c.b16 %v7431, %v7430
    %v7548 = vpack.c.b16 %v7433, %v7432
    %v7549 = vpack.c.b16 %v7435, %v7434
    %v7550 = vpack.c.b16 %v7437, %v7436
    %v7551 = vpack.c.b16 %v7439, %v7438
    %v7552 = vpack.c.b16 %v7441, %v7440
    %v7553 = vpack.c.b16 %v7443, %v7442
    %v7554 = vpack.c.b16 %v7445, %v7444
    %v7555 = vpack.c.b16 %v7447, %v7446
    %v7556 = vpack.c.b16 %v7449, %v7448
    %v7557 = vpack.c.b16 %v7451, %v7450
    %v7558 = vpack.c.b16 %v7453, %v7452
    %v7559 = vpack.c.b16 %v7455, %v7454
    %v7560 = vpack.c.b16 %v7457, %v7456
    %v7561 = vpack.c.b16 %v7459, %v7458
    %v7562 = vpack.c.b16 %v7461, %v7460
    %v7563 = vpack.c.b16 %v7463, %v7462
    %v7564 = vpack.c.b16 %v7465, %v7464
    %v7565 = vpack.c.b16 %v7467, %v7466
    %v7665 = vsel %vm6268, %v6872, 0
    %7667 = vmatprep.subr.bf16.mxu0 0
    %7668 = vmatpush1.bf16.msra.mxu0 %v7475
    %7669 = vmatprep.subr.bf16.mxu0 0
    %7670 = vmatpush1.bf16.msra.mxu0 %v7474
    %7671 = vmatprep.subr.bf16.mxu0 0
    %7672 = vmatpush1.bf16.msra.mxu0 %v7473
    %7673 = vmatprep.subr.bf16.mxu0 0
    %7674 = vmatpush1.bf16.msra.mxu0 %v7472
    %7675 = vmatprep.subr.bf16.mxu0 0
    %7676 = vmatpush1.bf16.msra.mxu0 %v7471
    %7677 = vmatprep.subr.bf16.mxu0 0
    %7678 = vmatpush1.bf16.msra.mxu0 %v7470
    %7679 = vmatprep.subr.bf16.mxu0 0
    %7680 = vmatpush1.bf16.msra.mxu0 %v7469
    %7681 = vmatprep.subr.bf16.mxu0 0
    %7682 = vmatpush1.bf16.msra.mxu0 %v7468
    %7683 = vmatprep.subr.bf16.mxu0 0
    %7684 = vmatpush2.bf16.msra.mxu0 %v7483
    %7685 = vmatprep.subr.bf16.mxu0 0
    %7686 = vmatpush2.bf16.msra.mxu0 %v7482
    %7687 = vmatprep.subr.bf16.mxu0 0
    %7688 = vmatpush2.bf16.msra.mxu0 %v7481
    %7689 = vmatprep.subr.bf16.mxu0 0
    %7690 = vmatpush2.bf16.msra.mxu0 %v7480
    %7691 = vmatprep.subr.bf16.mxu0 0
    %7692 = vmatpush2.bf16.msra.mxu0 %v7479
    %7693 = vmatprep.subr.bf16.mxu0 0
    %7694 = vmatpush2.bf16.msra.mxu0 %v7478
    %7695 = vmatprep.subr.bf16.mxu0 0
    %7696 = vmatpush2.bf16.msra.mxu0 %v7477
    %7697 = vmatprep.subr.bf16.mxu0 0
    %7698 = vmatpush2.bf16.msra.mxu0 %v7476
    %7699 = vmatprep.mubr.bf16.mxu0 %v6861
    %7700 = vmatmul.mubr.bf16.gmra.mxu0 %v6860
    %v7701 = vpop.f32.mrf.mxu0
    %v7702 = vadd.f32 %v7074, %v7701
    %v7703 = vpop.f32.mrf.mxu0
    %v7704 = vpop.f32.mrf.mxu0
    %v7705 = vpop.f32.mrf.mxu0
    %7706 = vdwg.mxu0
    %7707 = vmatprep.subr.bf16.mxu0 0
    %7708 = vmatpush1.bf16.msra.mxu0 %v7491
    %7709 = vmatprep.subr.bf16.mxu0 0
    %7710 = vmatpush1.bf16.msra.mxu0 %v7490
    %7711 = vmatprep.subr.bf16.mxu0 0
    %7712 = vmatpush1.bf16.msra.mxu0 %v7489
    %7713 = vmatprep.subr.bf16.mxu0 0
    %7714 = vmatpush1.bf16.msra.mxu0 %v7488
    %7715 = vmatprep.subr.bf16.mxu0 0
    %7716 = vmatpush1.bf16.msra.mxu0 %v7487
    %7717 = vmatprep.subr.bf16.mxu0 0
    %7718 = vmatpush1.bf16.msra.mxu0 %v7486
    %7719 = vmatprep.subr.bf16.mxu0 0
    %7720 = vmatpush1.bf16.msra.mxu0 %v7485
    %7721 = vmatprep.subr.bf16.mxu0 0
    %7722 = vmatpush1.bf16.msra.mxu0 %v7484
    %7723 = vmatprep.subr.bf16.mxu0 0
    %7724 = vmatpush2.bf16.msra.mxu0 %v7499
    %7725 = vmatprep.subr.bf16.mxu0 0
    %7726 = vmatpush2.bf16.msra.mxu0 %v7498
    %7727 = vmatprep.subr.bf16.mxu0 0
    %7728 = vmatpush2.bf16.msra.mxu0 %v7497
    %7729 = vmatprep.subr.bf16.mxu0 0
    %7730 = vmatpush2.bf16.msra.mxu0 %v7496
    %7731 = vmatprep.subr.bf16.mxu0 0
    %7732 = vmatpush2.bf16.msra.mxu0 %v7495
    %7733 = vmatprep.subr.bf16.mxu0 0
    %7734 = vmatpush2.bf16.msra.mxu0 %v7494
    %7735 = vmatprep.subr.bf16.mxu0 0
    %7736 = vmatpush2.bf16.msra.mxu0 %v7493
    %7737 = vmatprep.subr.bf16.mxu0 0
    %7738 = vmatpush2.bf16.msra.mxu0 %v7492
    %7739 = vmatprep.mubr.bf16.mxu0 %v6863
    %7740 = vmatmul.mubr.bf16.gmra.mxu0 %v6862
    %v7741 = vpop.f32.mrf.mxu0
    %v7742 = vadd.f32 %v7702, %v7741
    %v7743 = vpop.f32.mrf.mxu0
    %v7744 = vpop.f32.mrf.mxu0
    %v7745 = vpop.f32.mrf.mxu0
    %7746 = vdwg.mxu0
    %7747 = vmatprep.subr.bf16.mxu0 0
    %7748 = vmatpush1.bf16.msra.mxu0 %v7507
    %7749 = vmatprep.subr.bf16.mxu0 0
    %7750 = vmatpush1.bf16.msra.mxu0 %v7506
    %7751 = vmatprep.subr.bf16.mxu0 0
    %7752 = vmatpush1.bf16.msra.mxu0 %v7505
    %7753 = vmatprep.subr.bf16.mxu0 0
    %7754 = vmatpush1.bf16.msra.mxu0 %v7504
    %7755 = vmatprep.subr.bf16.mxu0 0
    %7756 = vmatpush1.bf16.msra.mxu0 %v7503
    %7757 = vmatprep.subr.bf16.mxu0 0
    %7758 = vmatpush1.bf16.msra.mxu0 %v7502
    %7759 = vmatprep.subr.bf16.mxu0 0
    %7760 = vmatpush1.bf16.msra.mxu0 %v7501
    %7761 = vmatprep.subr.bf16.mxu0 0
    %7762 = vmatpush1.bf16.msra.mxu0 %v7500
    %7763 = vmatprep.subr.bf16.mxu0 0
    %7764 = vmatpush2.bf16.msra.mxu0 %v7515
    %7765 = vmatprep.subr.bf16.mxu0 0
    %7766 = vmatpush2.bf16.msra.mxu0 %v7514
    %7767 = vmatprep.subr.bf16.mxu0 0
    %7768 = vmatpush2.bf16.msra.mxu0 %v7513
    %7769 = vmatprep.subr.bf16.mxu0 0
    %7770 = vmatpush2.bf16.msra.mxu0 %v7512
    %7771 = vmatprep.subr.bf16.mxu0 0
    %7772 = vmatpush2.bf16.msra.mxu0 %v7511
    %7773 = vmatprep.subr.bf16.mxu0 0
    %7774 = vmatpush2.bf16.msra.mxu0 %v7510
    %7775 = vmatprep.subr.bf16.mxu0 0
    %7776 = vmatpush2.bf16.msra.mxu0 %v7509
    %7777 = vmatprep.subr.bf16.mxu0 0
    %7778 = vmatpush2.bf16.msra.mxu0 %v7508
    %7779 = vmatprep.mubr.bf16.mxu0 %v6865
    %7780 = vmatmul.mubr.bf16.gmra.mxu0 %v6864
    %v7781 = vpop.f32.mrf.mxu0
    %v7782 = vadd.f32 %v7742, %v7781
    %v7783 = vpop.f32.mrf.mxu0
    %v7784 = vpop.f32.mrf.mxu0
    %v7785 = vpop.f32.mrf.mxu0
    %7786 = vdwg.mxu0
    %7787 = vmatprep.subr.bf16.mxu0 0
    %7788 = vmatpush1.bf16.msra.mxu0 %v7523
    %7789 = vmatprep.subr.bf16.mxu0 0
    %7790 = vmatpush1.bf16.msra.mxu0 %v7522
    %7791 = vmatprep.subr.bf16.mxu0 0
    %7792 = vmatpush1.bf16.msra.mxu0 %v7521
    %7793 = vmatprep.subr.bf16.mxu0 0
    %7794 = vmatpush1.bf16.msra.mxu0 %v7520
    %7795 = vmatprep.subr.bf16.mxu0 0
    %7796 = vmatpush1.bf16.msra.mxu0 %v7519
    %7797 = vmatprep.subr.bf16.mxu0 0
    %7798 = vmatpush1.bf16.msra.mxu0 %v7518
    %7799 = vmatprep.subr.bf16.mxu0 0
    %7800 = vmatpush1.bf16.msra.mxu0 %v7517
    %7801 = vmatprep.subr.bf16.mxu0 0
    %7802 = vmatpush1.bf16.msra.mxu0 %v7516
    %7803 = vmatprep.subr.bf16.mxu0 0
    %7804 = vmatpush2.bf16.msra.mxu0 %v7531
    %7805 = vmatprep.subr.bf16.mxu0 0
    %7806 = vmatpush2.bf16.msra.mxu0 %v7530
    %7807 = vmatprep.subr.bf16.mxu0 0
    %7808 = vmatpush2.bf16.msra.mxu0 %v7529
    %7809 = vmatprep.subr.bf16.mxu0 0
    %7810 = vmatpush2.bf16.msra.mxu0 %v7528
    %7811 = vmatprep.subr.bf16.mxu0 0
    %7812 = vmatpush2.bf16.msra.mxu0 %v7527
    %7813 = vmatprep.subr.bf16.mxu0 0
    %7814 = vmatpush2.bf16.msra.mxu0 %v7526
    %7815 = vmatprep.subr.bf16.mxu0 0
    %7816 = vmatpush2.bf16.msra.mxu0 %v7525
    %7817 = vmatprep.subr.bf16.mxu0 0
    %7818 = vmatpush2.bf16.msra.mxu0 %v7524
    %7819 = vmatprep.mubr.bf16.mxu0 %v6867
    %7820 = vmatmul.mubr.bf16.gmra.mxu0 %v6866
    %v7821 = vpop.f32.mrf.mxu0
    %v7822 = vadd.f32 %v7782, %v7821
    %v7823 = vpop.f32.mrf.mxu0
    %v7824 = vpop.f32.mrf.mxu0
    %v7825 = vpop.f32.mrf.mxu0
    %7826 = vdwg.mxu0
    %7827 = vmatprep.subr.bf16.mxu0 0
    %7828 = vmatpush1.bf16.msra.mxu0 %v7539
    %7829 = vmatprep.subr.bf16.mxu0 0
    %7830 = vmatpush1.bf16.msra.mxu0 %v7538
    %7831 = vmatprep.subr.bf16.mxu0 0
    %7832 = vmatpush1.bf16.msra.mxu0 %v7537
    %7833 = vmatprep.subr.bf16.mxu0 0
    %7834 = vmatpush1.bf16.msra.mxu0 %v7536
    %7835 = vmatprep.subr.bf16.mxu0 0
    %7836 = vmatpush1.bf16.msra.mxu0 %v7535
    %7837 = vmatprep.subr.bf16.mxu0 0
    %7838 = vmatpush1.bf16.msra.mxu0 %v7534
    %7839 = vmatprep.subr.bf16.mxu0 0
    %7840 = vmatpush1.bf16.msra.mxu0 %v7533
    %7841 = vmatprep.subr.bf16.mxu0 0
    %7842 = vmatpush1.bf16.msra.mxu0 %v7532
    %7843 = vmatprep.subr.bf16.mxu0 0
    %7844 = vmatpush2.bf16.msra.mxu0 %v7547
    %7845 = vmatprep.subr.bf16.mxu0 0
    %7846 = vmatpush2.bf16.msra.mxu0 %v7546
    %7847 = vmatprep.subr.bf16.mxu0 0
    %7848 = vmatpush2.bf16.msra.mxu0 %v7545
    %7849 = vmatprep.subr.bf16.mxu0 0
    %7850 = vmatpush2.bf16.msra.mxu0 %v7544
    %7851 = vmatprep.subr.bf16.mxu0 0
    %7852 = vmatpush2.bf16.msra.mxu0 %v7543
    %7853 = vmatprep.subr.bf16.mxu0 0
    %7854 = vmatpush2.bf16.msra.mxu0 %v7542
    %7855 = vmatprep.subr.bf16.mxu0 0
    %7856 = vmatpush2.bf16.msra.mxu0 %v7541
    %7857 = vmatprep.subr.bf16.mxu0 0
    %7858 = vmatpush2.bf16.msra.mxu0 %v7540
    %7859 = vmatprep.mubr.bf16.mxu0 %v6869
    %7860 = vmatmul.mubr.bf16.gmra.mxu0 %v6868
    %v7861 = vpop.f32.mrf.mxu0
    %v7862 = vadd.f32 %v7822, %v7861
    %v7863 = vpop.f32.mrf.mxu0
    %v7864 = vpop.f32.mrf.mxu0
    %v7865 = vpop.f32.mrf.mxu0
    %7866 = vdwg.mxu0
    %7867 = vmatprep.subr.bf16.mxu0 0
    %7868 = vmatpush1.bf16.msra.mxu0 %v7555
    %7869 = vmatprep.subr.bf16.mxu0 0
    %7870 = vmatpush1.bf16.msra.mxu0 %v7554
    %7871 = vmatprep.subr.bf16.mxu0 0
    %7872 = vmatpush1.bf16.msra.mxu0 %v7553
    %7873 = vmatprep.subr.bf16.mxu0 0
    %7874 = vmatpush1.bf16.msra.mxu0 %v7552
    %7875 = vmatprep.subr.bf16.mxu0 0
    %7876 = vmatpush1.bf16.msra.mxu0 %v7551
    %7877 = vmatprep.subr.bf16.mxu0 0
    %7878 = vmatpush1.bf16.msra.mxu0 %v7550
    %7879 = vmatprep.subr.bf16.mxu0 0
    %7880 = vmatpush1.bf16.msra.mxu0 %v7549
    %7881 = vmatprep.subr.bf16.mxu0 0
    %7882 = vmatpush1.bf16.msra.mxu0 %v7548
    %7883 = vmatprep.subr.bf16.mxu0 0
    %7884 = vmatpush2.bf16.msra.mxu0 %v7563
    %7885 = vmatprep.subr.bf16.mxu0 0
    %7886 = vmatpush2.bf16.msra.mxu0 %v7562
    %7887 = vmatprep.subr.bf16.mxu0 0
    %7888 = vmatpush2.bf16.msra.mxu0 %v7561
    %7889 = vmatprep.subr.bf16.mxu0 0
    %7890 = vmatpush2.bf16.msra.mxu0 %v7560
    %7891 = vmatprep.subr.bf16.mxu0 0
    %7892 = vmatpush2.bf16.msra.mxu0 %v7559
    %7893 = vmatprep.subr.bf16.mxu0 0
    %7894 = vmatpush2.bf16.msra.mxu0 %v7558
    %7895 = vmatprep.subr.bf16.mxu0 0
    %7896 = vmatpush2.bf16.msra.mxu0 %v7557
    %7897 = vmatprep.subr.bf16.mxu0 0
    %7898 = vmatpush2.bf16.msra.mxu0 %v7556
    %7899 = vmatprep.mubr.bf16.mxu0 %v6871
    %7900 = vmatmul.mubr.bf16.gmra.mxu0 %v6870
    %v7901 = vpop.f32.mrf.mxu0
    %v7902 = vadd.f32 %v7862, %v7901
    %v7903 = vpop.f32.mrf.mxu0
    %v7904 = vpop.f32.mrf.mxu0
    %v7905 = vpop.f32.mrf.mxu0
    %7906 = vdwg.mxu0
    %7907 = vmatprep.subr.bf16.mxu0 0
    %7908 = vmatpush1.bf16.msra.mxu0 0
    %7909 = vmatprep.subr.bf16.mxu0 0
    %7910 = vmatpush1.bf16.msra.mxu0 0
    %7911 = vmatprep.subr.bf16.mxu0 0
    %7912 = vmatpush1.bf16.msra.mxu0 0
    %7913 = vmatprep.subr.bf16.mxu0 0
    %7914 = vmatpush1.bf16.msra.mxu0 0
    %7915 = vmatprep.subr.bf16.mxu0 0
    %7916 = vmatpush1.bf16.msra.mxu0 0
    %7917 = vmatprep.subr.bf16.mxu0 0
    %7918 = vmatpush1.bf16.msra.mxu0 0
    %7919 = vmatprep.subr.bf16.mxu0 0
    %7920 = vmatpush1.bf16.msra.mxu0 %v7565
    %7921 = vmatprep.subr.bf16.mxu0 0
    %7922 = vmatpush1.bf16.msra.mxu0 %v7564
    %7923 = vmatprep.subr.bf16.mxu0 0
    %7924 = vmatpush2.bf16.msra.mxu0 0
    %7925 = vmatprep.subr.bf16.mxu0 0
    %7926 = vmatpush2.bf16.msra.mxu0 0
    %7927 = vmatprep.subr.bf16.mxu0 0
    %7928 = vmatpush2.bf16.msra.mxu0 0
    %7929 = vmatprep.subr.bf16.mxu0 0
    %7930 = vmatpush2.bf16.msra.mxu0 0
    %7931 = vmatprep.subr.bf16.mxu0 0
    %7932 = vmatpush2.bf16.msra.mxu0 0
    %7933 = vmatprep.subr.bf16.mxu0 0
    %7934 = vmatpush2.bf16.msra.mxu0 0
    %7935 = vmatprep.subr.bf16.mxu0 0
    %7936 = vmatpush2.bf16.msra.mxu0 0
    %7937 = vmatprep.subr.bf16.mxu0 0
    %7938 = vmatpush2.bf16.msra.mxu0 0
    %7939 = vmatprep.mubr.bf16.mxu0 0
    %7940 = vmatmul.mubr.bf16.gmra.mxu0 %v7665
    %v7941 = vpop.f32.mrf.mxu0
    %v7942 = vadd.f32 %v7902, %v7941
    %v7943 = vpop.f32.mrf.mxu0
    %v7944 = vpop.f32.mrf.mxu0
    %v7945 = vpop.f32.mrf.mxu0
    %7946 = vdwg.mxu0
    %vm7947 = vcmask 517120
    %7948 = vst.msk [vmem:[#allocation5] sm:$0x3] %vm7947, %v7942
    // Predicated region
    $region34: #{encoder_forward.1} parent=1 // pred_check
      _
    $region35: #{encoder_forward.1} parent=1 // pred_check_branch
      %7950 = sbr.rel (0) target = $region37
    $region36: #{encoder_forward.1} parent=1 // pred_region
      %s7952 = ssub.s32 32, 32
      %7953 = vsyncadd [#allocation6], %s7952
      %s7955 = sshll.u32 [#allocation5], 4
      %s7956 = int_to_ptr.vmem [resolvable:$true] %s7955
      %7958 = dma.vmem_to_hbm [thread:$0]  %s7956, 32, %s8, [#allocation6]
    $region37: #{encoder_forward.1} parent=1 // pred_fallthru
      _
    // Predicated region
    $region38: #{encoder_forward.1} parent=1 // pred_check
      _
    $region39: #{encoder_forward.1} parent=1 // pred_check_branch
      %7960 = sbr.rel (0) target = $region41
    $region40: #{encoder_forward.1} parent=1 // pred_region
      %7961 = dma.done [#allocation6], 32
    $region41: #{encoder_forward.1} parent=1 // pred_fallthru
      _
    %7962 = vsyncpa [#allocation6], 1

</llo_original>
